<compile_context>
chip_gen: v7x
topology: tpu7x:2x2x1
jax: 0.10.0
libtpu: 0.0.40
codegen_flags: <defaults>
</compile_context>

<pallas_src>
import jax
import jax.numpy as jnp
from jax.experimental import pallas as pl
from jax.experimental.pallas import tpu as pltpu


_VMEM_LIMIT = 32 * 1024 * 1024  # raise v5e's 16 MiB scoped default; safe on v6e/v7x


# ---------------------------------------------------------------------------
# Pallas kernels
# ---------------------------------------------------------------------------
def conv_bn_relu_pool_kernel(p_ref, w_ref, g_ref, beta_ref, o_ref):
    """(M, K)bf16 @ (K, O)bf16 -> f32, batch-stat BN + ReLU (one FMA pass),
    then fused 2x2 max-pool (rows are pre-grouped into 4 corner blocks)."""
    y = jnp.dot(p_ref[...], w_ref[...], preferred_element_type=jnp.float32)  # (M, O)
    m = y.shape[0]
    inv_m = 1.0 / m
    # Single stats traversal: per-channel sum and sum of squares.
    s = jnp.sum(y, axis=0, keepdims=True)
    ss = jnp.sum(y * y, axis=0, keepdims=True)
    mean = s * inv_m
    var = ss * inv_m - mean * mean          # E[y^2] - E[y]^2 (see header note)
    scale = g_ref[...] * jax.lax.rsqrt(var + 1e-5)
    shift = beta_ref[...] - mean * scale
    z = jnp.maximum(y * scale + shift, 0.0)  # single FMA + ReLU pass
    # Fused max-pool: rows [q*Mq:(q+1)*Mq] are corner q of every 2x2 window,
    # each block already in (n, h/2, w/2) order.
    mq = m // 4
    pooled = jnp.maximum(jnp.maximum(z[0:mq], z[mq:2 * mq]),
                         jnp.maximum(z[2 * mq:3 * mq], z[3 * mq:4 * mq]))
    o_ref[...] = pooled.astype(o_ref.dtype)


def mlp_kernel(x_ref, w1_ref, b1_ref, w2_ref, b2_ref, o_ref):
    """fc1 + ReLU + fc2, fused.  bf16 matmul operands, f32 accumulation."""
    h = jnp.dot(x_ref[...], w1_ref[...], preferred_element_type=jnp.float32)
    h = jnp.maximum(h + b1_ref[...], 0.0)
    o_ref[...] = jnp.dot(h.astype(w2_ref.dtype), w2_ref[...],
                         preferred_element_type=jnp.float32) + b2_ref[...]


# ---------------------------------------------------------------------------
# pallas_call wrappers (single grid step; every operand fits VMEM easily here)
# ---------------------------------------------------------------------------
def _full_spec(shape):
    return pl.BlockSpec(shape, lambda i: (0,) * len(shape))


def _compiler_params():
    return pltpu.CompilerParams(dimension_semantics=("arbitrary",),
                                vmem_limit_bytes=_VMEM_LIMIT)


def _pool_grouped_patches(x_nhwc, k_padded):
    """3x3 / stride-1 / pad-1 im2col whose rows are grouped by pooling corner.

    Returns (4*N*(H/2)*(W/2), k_padded) bf16.  Rows [q*Mq:(q+1)*Mq] hold corner
    q = 2*dh + dw of every 2x2 pooling window, each block in (n, h2, w2) order,
    so the kernel pools with a max over 4 contiguous slices and its output is
    directly the NHWC-flattened pooled activation.
    """
    n, h, w, c = x_nhwc.shape
    xp = jnp.pad(x_nhwc, ((0, 0), (1, 1), (1, 1), (0, 0)))
    cols = [xp[:, kh:kh + h, kw:kw + w, :] for kh in range(3) for kw in range(3)]
    patches = jnp.concatenate(cols, axis=-1)            # (N, H, W, 9*C), taps (kh, kw, c)
    k = 9 * c
    if k_padded > k:                                     # 8-align K (27 -> 32 for conv1)
        patches = jnp.pad(patches, ((0, 0), (0, 0), (0, 0), (0, k_padded - k)))
    ho, wo = h // 2, w // 2
    patches = patches.reshape(n, ho, 2, wo, 2, k_padded)
    patches = jnp.transpose(patches, (2, 4, 0, 1, 3, 5))  # (dh, dw, n, h2, w2, K)
    return patches.reshape(4 * n * ho * wo, k_padded).astype(jnp.bfloat16)


def conv_bn_relu_pool(x_nhwc, wmat, gamma, beta):
    n, h, w, _ = x_nhwc.shape
    k, cout = wmat.shape
    patches = _pool_grouped_patches(x_nhwc, k)           # (M, K) bf16
    m = patches.shape[0]
    mq = m // 4
    out = pl.pallas_call(
        conv_bn_relu_pool_kernel,
        out_shape=jax.ShapeDtypeStruct((mq, cout), jnp.bfloat16),
        grid=(1,),
        in_specs=[_full_spec((m, k)), _full_spec((k, cout)),
                  _full_spec((1, cout)), _full_spec((1, cout))],
        out_specs=_full_spec((mq, cout)),
        compiler_params=_compiler_params(),
    )(patches, wmat, gamma, beta)
    return out.reshape(n, h // 2, w // 2, cout)          # pooled NHWC


def classifier_head(x_flat, w1, b1, w2, b2):
    n, k = x_flat.shape
    h1 = w1.shape[1]
    nout = w2.shape[1]
    return pl.pallas_call(
        mlp_kernel,
        out_shape=jax.ShapeDtypeStruct((n, nout), jnp.float32),
        grid=(1,),
        in_specs=[_full_spec((n, k)), _full_spec((k, h1)), _full_spec((1, h1)),
                  _full_spec((h1, nout)), _full_spec((1, nout))],
        out_specs=_full_spec((n, nout)),
        compiler_params=_compiler_params(),
    )(x_flat, w1, b1, w2, b2)


# ---------------------------------------------------------------------------
# Parameters: PyTorch-layout init + one-time kernel-layout preparation
# ---------------------------------------------------------------------------
def init_params(key):
    ks = jax.random.split(key, 10)

    def normal(k, shape, scale):
        return scale * jax.random.normal(k, shape, dtype=jnp.float32)

    p = {}
    p["conv1_w"] = normal(ks[0], (32, 3, 3, 3), 0.1)     # OIHW
    p["conv1_b"] = normal(ks[1], (32,), 0.01)
    p["conv2_w"] = normal(ks[2], (64, 32, 3, 3), 0.05)
    p["conv2_b"] = normal(ks[3], (64,), 0.01)
    p["conv3_w"] = normal(ks[4], (128, 64, 3, 3), 0.05)
    p["conv3_b"] = normal(ks[5], (128,), 0.01)
    for i, c in zip((1, 2, 3), (32, 64, 128)):
        p[f"bn{i}_g"] = jnp.ones((c,), jnp.float32)
        p[f"bn{i}_b"] = jnp.zeros((c,), jnp.float32)
    p["fc1_w"] = normal(ks[6], (256, 128 * 4 * 4), 0.02)  # (out, in), PyTorch layout
    p["fc1_b"] = normal(ks[7], (256,), 0.01)
    p["fc2_w"] = normal(ks[8], (10, 256), 0.05)
    p["fc2_b"] = normal(ks[9], (10,), 0.01)
    return p


def _round_up(v, m):
    return (v + m - 1) // m * m


def prepare_params(p):
    """One-time layout prep (outside the jitted forward): conv weights to
    (9*Cin, Cout) matmul layout in bf16 (K 8-aligned), fc weights transposed,
    PyTorch's NCHW flatten order folded into fc1's columns.  Conv biases are
    intentionally dropped: they cancel exactly under batch-stat BatchNorm."""
    pp = {}
    for i, cin, cout in ((1, 3, 32), (2, 32, 64), (3, 64, 128)):
        w = jnp.transpose(p[f"conv{i}_w"], (2, 3, 1, 0)).reshape(9 * cin, cout)  # (kh,kw,ci,o)
        kp = _round_up(9 * cin, 8)
        if kp > 9 * cin:
            w = jnp.pad(w, ((0, kp - 9 * cin), (0, 0)))
        pp[f"conv{i}_w"] = w.astype(jnp.bfloat16)
        pp[f"bn{i}_g"] = p[f"bn{i}_g"].reshape(1, cout)
        pp[f"bn{i}_b"] = p[f"bn{i}_b"].reshape(1, cout)
    w1 = p["fc1_w"].reshape(256, 128, 4, 4)                       # (o, c, h, w)
    w1 = jnp.transpose(w1, (2, 3, 1, 0)).reshape(4 * 4 * 128, 256)  # ((h,w,c), o)
    pp["fc1_w"] = w1.astype(jnp.bfloat16)
    pp["fc1_b"] = p["fc1_b"].reshape(1, 256)
    pp["fc2_w"] = p["fc2_w"].T.astype(jnp.bfloat16)               # (256, 10)
    pp["fc2_b"] = p["fc2_b"].reshape(1, 10)
    return pp


# ---------------------------------------------------------------------------
# Forward
# ---------------------------------------------------------------------------
@jax.jit
def student_forward(x_nchw, pp):
    x = jnp.transpose(x_nchw, (0, 2, 3, 1)).astype(jnp.float32)        # NCHW -> NHWC
    x = conv_bn_relu_pool(x, pp["conv1_w"], pp["bn1_g"], pp["bn1_b"])  # (N,16,16,32)
    x = conv_bn_relu_pool(x, pp["conv2_w"], pp["bn2_g"], pp["bn2_b"])  # (N, 8, 8,64)
    x = conv_bn_relu_pool(x, pp["conv3_w"], pp["bn3_g"], pp["bn3_b"])  # (N, 4, 4,128)
    n = x.shape[0]
    x_flat = x.reshape(n, -1)   # NHWC flatten; fc1 columns were pre-permuted to match
    return classifier_head(x_flat, pp["fc1_w"], pp["fc1_b"],
                           pp["fc2_w"], pp["fc2_b"])                   # (N, 10) f32


# ---------------------------------------------------------------------------
# Pure-JAX f32 reference (PyTorch semantics, incl. conv bias) for correctness
# ---------------------------------------------------------------------------
def reference_forward(x_nchw, p):
    def conv(x, w, b):
        y = jax.lax.conv_general_dilated(x, w, (1, 1), ((1, 1), (1, 1)),
                                         dimension_numbers=("NCHW", "OIHW", "NCHW"))
        return y + b[None, :, None, None]

    def bn_relu(x, g, b):
        mean = jnp.mean(x, axis=(0, 2, 3), keepdims=True)
        var = jnp.mean((x - mean) ** 2, axis=(0, 2, 3), keepdims=True)
        y = (x - mean) * jax.lax.rsqrt(var + 1e-5)
        return jnp.maximum(y * g[None, :, None, None] + b[None, :, None, None], 0.0)

    def pool(x):
        n, c, h, w = x.shape
        return x.reshape(n, c, h // 2, 2, w // 2, 2).max(axis=(3, 5))

    x = pool(bn_relu(conv(x_nchw, p["conv1_w"], p["conv1_b"]), p["bn1_g"], p["bn1_b"]))
    x = pool(bn_relu(conv(x, p["conv2_w"], p["conv2_b"]), p["bn2_g"], p["bn2_b"]))
    x = pool(bn_relu(conv(x, p["conv3_w"], p["conv3_b"]), p["bn3_g"], p["bn3_b"]))
    x = x.reshape(x.shape[0], -1)
    x = jnp.maximum(x @ p["fc1_w"].T + p["fc1_b"], 0.0)
    return x @ p["fc2_w"].T + p["fc2_b"]


if __name__ == "__main__":
    key = jax.random.PRNGKey(0)
    k_x, k_p = jax.random.split(key)
    # CIFAR-10 sized input (fc1 fixes spatial size to 32x32), small batch.
    x = jax.random.normal(k_x, (2, 3, 32, 32), dtype=jnp.float32)
    params = init_params(k_p)
    pp = prepare_params(params)          # one-time layout prep (not per-forward)

    out = jax.block_until_ready(student_forward(x, pp))
    assert out.shape == (2, 10), out.shape

    ref = jax.block_until_ready(reference_forward(x, params))
    err = float(jnp.max(jnp.abs(out - ref)))
    # bf16 matmul operands -> slightly looser tolerance than the pure-f32 v1.
    assert jnp.allclose(out, ref, atol=5e-2, rtol=5e-2), err

    print("KERNEL_OK")
</pallas_src>

<mosaic_0001>
module attributes {stable_mosaic.version = 11 : i64} {
  func.func @conv_bn_relu_pool_kernel(%arg0: i32, %arg1: memref<2048x32xbf16, #tpu.memory_space<vmem>>, %arg2: memref<32x32xbf16, #tpu.memory_space<vmem>>, %arg3: memref<1x32xf32, #tpu.memory_space<vmem>>, %arg4: memref<1x32xf32, #tpu.memory_space<vmem>>, %arg5: memref<512x32xbf16, #tpu.memory_space<vmem>>) attributes {dimension_semantics = [#tpu.dimension_semantics<arbitrary>], iteration_bounds = array<i64: 1>, scalar_prefetch = 0 : i64, scratch_operands = 0 : i64, tpu.core_type = #tpu.core_type<tc>, window_params = [{pipeline_mode = #tpu.pipeline_mode<synchronous>, transform_indices = @transform_0, window_bounds = array<i64: 2048, 32>}, {pipeline_mode = #tpu.pipeline_mode<synchronous>, transform_indices = @transform_1, window_bounds = array<i64: 32, 32>}, {pipeline_mode = #tpu.pipeline_mode<synchronous>, transform_indices = @transform_2, window_bounds = array<i64: 1, 32>}, {pipeline_mode = #tpu.pipeline_mode<synchronous>, transform_indices = @transform_3, window_bounds = array<i64: 1, 32>}, {pipeline_mode = #tpu.pipeline_mode<synchronous>, transform_indices = @transform_4, window_bounds = array<i64: 512, 32>}]} {
    %c0 = arith.constant 0 : index
    %c0_0 = arith.constant 0 : index
    %0 = vector.load %arg1[%c0, %c0_0] : memref<2048x32xbf16, #tpu.memory_space<vmem>>, vector<2048x32xbf16>
    %c0_1 = arith.constant 0 : index
    %c0_2 = arith.constant 0 : index
    %1 = vector.load %arg2[%c0_1, %c0_2] : memref<32x32xbf16, #tpu.memory_space<vmem>>, vector<32x32xbf16>
    %cst = arith.constant dense<0.000000e+00> : vector<2048x32xf32>
    %2 = tpu.matmul %0, %1, %cst {dimension_numbers = #tpu.dot_dimension_numbers<[1], [0], [0], [1], [0, 0, 1, 1], [], []>} : vector<2048x32xbf16>, vector<32x32xbf16>, vector<2048x32xf32> -> vector<2048x32xf32>
    %cst_3 = arith.constant dense<0.000000e+00> : vector<32xf32>
    %3 = vector.multi_reduction <add>, %2, %cst_3 [0] : vector<2048x32xf32> to vector<32xf32>
    %4 = vector.shape_cast %3 : vector<32xf32> to vector<1x32xf32>
    %5 = arith.mulf %2, %2 : vector<2048x32xf32>
    %cst_4 = arith.constant dense<0.000000e+00> : vector<32xf32>
    %6 = vector.multi_reduction <add>, %5, %cst_4 [0] : vector<2048x32xf32> to vector<32xf32>
    %7 = vector.shape_cast %6 : vector<32xf32> to vector<1x32xf32>
    %cst_5 = arith.constant 4.8828125E-4 : f32
    %8 = vector.broadcast %cst_5 : f32 to vector<1x32xf32>
    %9 = arith.mulf %4, %8 : vector<1x32xf32>
    %cst_6 = arith.constant 4.8828125E-4 : f32
    %10 = vector.broadcast %cst_6 : f32 to vector<1x32xf32>
    %11 = arith.mulf %7, %10 : vector<1x32xf32>
    %12 = arith.mulf %9, %9 : vector<1x32xf32>
    %13 = arith.subf %11, %12 : vector<1x32xf32>
    %c0_7 = arith.constant 0 : index
    %c0_8 = arith.constant 0 : index
    %14 = vector.load %arg3[%c0_7, %c0_8] : memref<1x32xf32, #tpu.memory_space<vmem>>, vector<1x32xf32>
    %cst_9 = arith.constant 9.99999974E-6 : f32
    %15 = vector.broadcast %cst_9 : f32 to vector<1x32xf32>
    %16 = arith.addf %13, %15 : vector<1x32xf32>
    %17 = math.rsqrt %16 : vector<1x32xf32>
    %18 = arith.mulf %14, %17 : vector<1x32xf32>
    %c0_10 = arith.constant 0 : index
    %c0_11 = arith.constant 0 : index
    %19 = vector.load %arg4[%c0_10, %c0_11] : memref<1x32xf32, #tpu.memory_space<vmem>>, vector<1x32xf32>
    %20 = arith.mulf %9, %18 : vector<1x32xf32>
    %21 = arith.subf %19, %20 : vector<1x32xf32>
    %22 = vector.broadcast %18 : vector<1x32xf32> to vector<2048x32xf32>
    %23 = arith.mulf %2, %22 : vector<2048x32xf32>
    %24 = vector.broadcast %21 : vector<1x32xf32> to vector<2048x32xf32>
    %25 = arith.addf %23, %24 : vector<2048x32xf32>
    %cst_12 = arith.constant 0.000000e+00 : f32
    %26 = vector.broadcast %cst_12 : f32 to vector<2048x32xf32>
    %27 = arith.maximumf %25, %26 : vector<2048x32xf32>
    %28 = vector.extract_strided_slice %27 {offsets = [0, 0], sizes = [512, 32], strides = [1, 1]} : vector<2048x32xf32> to vector<512x32xf32>
    %29 = vector.extract_strided_slice %27 {offsets = [512, 0], sizes = [512, 32], strides = [1, 1]} : vector<2048x32xf32> to vector<512x32xf32>
    %30 = arith.maximumf %28, %29 : vector<512x32xf32>
    %31 = vector.extract_strided_slice %27 {offsets = [1024, 0], sizes = [512, 32], strides = [1, 1]} : vector<2048x32xf32> to vector<512x32xf32>
    %32 = vector.extract_strided_slice %27 {offsets = [1536, 0], sizes = [512, 32], strides = [1, 1]} : vector<2048x32xf32> to vector<512x32xf32>
    %33 = arith.maximumf %31, %32 : vector<512x32xf32>
    %34 = arith.maximumf %30, %33 : vector<512x32xf32>
    %35 = arith.truncf %34 : vector<512x32xf32> to vector<512x32xbf16>
    %c0_13 = arith.constant 0 : index
    %c0_14 = arith.constant 0 : index
    %36 = vector.load %arg5[%c0_13, %c0_14] : memref<512x32xbf16, #tpu.memory_space<vmem>>, vector<512x32xbf16>
    tpu.vector_store %arg5[%c0_13, %c0_14], %35 {strides = array<i32>} : memref<512x32xbf16, #tpu.memory_space<vmem>>, vector<512x32xbf16>,
    return
  }
  func.func @transform_0(%arg0: i32) -> (i32, i32) {
    %c0_i32 = arith.constant 0 : i32
    %c0_i32_0 = arith.constant 0 : i32
    %c0_i32_1 = arith.constant 0 : i32
    return %c0_i32, %c0_i32_0 : i32, i32
  }
  func.func @transform_1(%arg0: i32) -> (i32, i32) {
    %c0_i32 = arith.constant 0 : i32
    %c0_i32_0 = arith.constant 0 : i32
    %c0_i32_1 = arith.constant 0 : i32
    return %c0_i32, %c0_i32_0 : i32, i32
  }
  func.func @transform_2(%arg0: i32) -> (i32, i32) {
    %c0_i32 = arith.constant 0 : i32
    %c0_i32_0 = arith.constant 0 : i32
    %c0_i32_1 = arith.constant 0 : i32
    return %c0_i32, %c0_i32_0 : i32, i32
  }
  func.func @transform_3(%arg0: i32) -> (i32, i32) {
    %c0_i32 = arith.constant 0 : i32
    %c0_i32_0 = arith.constant 0 : i32
    %c0_i32_1 = arith.constant 0 : i32
    return %c0_i32, %c0_i32_0 : i32, i32
  }
  func.func @transform_4(%arg0: i32) -> (i32, i32) {
    %c0_i32 = arith.constant 0 : i32
    %c0_i32_0 = arith.constant 0 : i32
    %c0_i32_1 = arith.constant 0 : i32
    return %c0_i32, %c0_i32_0 : i32, i32
  }
}

module attributes {stable_mosaic.version = 11 : i64} {
  func.func @conv_bn_relu_pool_kernel(%arg0: i32, %arg1: memref<512x288xbf16, #tpu.memory_space<vmem>>, %arg2: memref<288x64xbf16, #tpu.memory_space<vmem>>, %arg3: memref<1x64xf32, #tpu.memory_space<vmem>>, %arg4: memref<1x64xf32, #tpu.memory_space<vmem>>, %arg5: memref<128x64xbf16, #tpu.memory_space<vmem>>) attributes {dimension_semantics = [#tpu.dimension_semantics<arbitrary>], iteration_bounds = array<i64: 1>, scalar_prefetch = 0 : i64, scratch_operands = 0 : i64, tpu.core_type = #tpu.core_type<tc>, window_params = [{pipeline_mode = #tpu.pipeline_mode<synchronous>, transform_indices = @transform_0, window_bounds = array<i64: 512, 288>}, {pipeline_mode = #tpu.pipeline_mode<synchronous>, transform_indices = @transform_1, window_bounds = array<i64: 288, 64>}, {pipeline_mode = #tpu.pipeline_mode<synchronous>, transform_indices = @transform_2, window_bounds = array<i64: 1, 64>}, {pipeline_mode = #tpu.pipeline_mode<synchronous>, transform_indices = @transform_3, window_bounds = array<i64: 1, 64>}, {pipeline_mode = #tpu.pipeline_mode<synchronous>, transform_indices = @transform_4, window_bounds = array<i64: 128, 64>}]} {
    %c0 = arith.constant 0 : index
    %c0_0 = arith.constant 0 : index
    %0 = vector.load %arg1[%c0, %c0_0] : memref<512x288xbf16, #tpu.memory_space<vmem>>, vector<512x288xbf16>
    %c0_1 = arith.constant 0 : index
    %c0_2 = arith.constant 0 : index
    %1 = vector.load %arg2[%c0_1, %c0_2] : memref<288x64xbf16, #tpu.memory_space<vmem>>, vector<288x64xbf16>
    %cst = arith.constant dense<0.000000e+00> : vector<512x64xf32>
    %2 = tpu.matmul %0, %1, %cst {dimension_numbers = #tpu.dot_dimension_numbers<[1], [0], [0], [1], [0, 0, 1, 1], [], []>} : vector<512x288xbf16>, vector<288x64xbf16>, vector<512x64xf32> -> vector<512x64xf32>
    %cst_3 = arith.constant dense<0.000000e+00> : vector<64xf32>
    %3 = vector.multi_reduction <add>, %2, %cst_3 [0] : vector<512x64xf32> to vector<64xf32>
    %4 = vector.shape_cast %3 : vector<64xf32> to vector<1x64xf32>
    %5 = arith.mulf %2, %2 : vector<512x64xf32>
    %cst_4 = arith.constant dense<0.000000e+00> : vector<64xf32>
    %6 = vector.multi_reduction <add>, %5, %cst_4 [0] : vector<512x64xf32> to vector<64xf32>
    %7 = vector.shape_cast %6 : vector<64xf32> to vector<1x64xf32>
    %cst_5 = arith.constant 0.001953125 : f32
    %8 = vector.broadcast %cst_5 : f32 to vector<1x64xf32>
    %9 = arith.mulf %4, %8 : vector<1x64xf32>
    %cst_6 = arith.constant 0.001953125 : f32
    %10 = vector.broadcast %cst_6 : f32 to vector<1x64xf32>
    %11 = arith.mulf %7, %10 : vector<1x64xf32>
    %12 = arith.mulf %9, %9 : vector<1x64xf32>
    %13 = arith.subf %11, %12 : vector<1x64xf32>
    %c0_7 = arith.constant 0 : index
    %c0_8 = arith.constant 0 : index
    %14 = vector.load %arg3[%c0_7, %c0_8] : memref<1x64xf32, #tpu.memory_space<vmem>>, vector<1x64xf32>
    %cst_9 = arith.constant 9.99999974E-6 : f32
    %15 = vector.broadcast %cst_9 : f32 to vector<1x64xf32>
    %16 = arith.addf %13, %15 : vector<1x64xf32>
    %17 = math.rsqrt %16 : vector<1x64xf32>
    %18 = arith.mulf %14, %17 : vector<1x64xf32>
    %c0_10 = arith.constant 0 : index
    %c0_11 = arith.constant 0 : index
    %19 = vector.load %arg4[%c0_10, %c0_11] : memref<1x64xf32, #tpu.memory_space<vmem>>, vector<1x64xf32>
    %20 = arith.mulf %9, %18 : vector<1x64xf32>
    %21 = arith.subf %19, %20 : vector<1x64xf32>
    %22 = vector.broadcast %18 : vector<1x64xf32> to vector<512x64xf32>
    %23 = arith.mulf %2, %22 : vector<512x64xf32>
    %24 = vector.broadcast %21 : vector<1x64xf32> to vector<512x64xf32>
    %25 = arith.addf %23, %24 : vector<512x64xf32>
    %cst_12 = arith.constant 0.000000e+00 : f32
    %26 = vector.broadcast %cst_12 : f32 to vector<512x64xf32>
    %27 = arith.maximumf %25, %26 : vector<512x64xf32>
    %28 = vector.extract_strided_slice %27 {offsets = [0, 0], sizes = [128, 64], strides = [1, 1]} : vector<512x64xf32> to vector<128x64xf32>
    %29 = vector.extract_strided_slice %27 {offsets = [128, 0], sizes = [128, 64], strides = [1, 1]} : vector<512x64xf32> to vector<128x64xf32>
    %30 = arith.maximumf %28, %29 : vector<128x64xf32>
    %31 = vector.extract_strided_slice %27 {offsets = [256, 0], sizes = [128, 64], strides = [1, 1]} : vector<512x64xf32> to vector<128x64xf32>
    %32 = vector.extract_strided_slice %27 {offsets = [384, 0], sizes = [128, 64], strides = [1, 1]} : vector<512x64xf32> to vector<128x64xf32>
    %33 = arith.maximumf %31, %32 : vector<128x64xf32>
    %34 = arith.maximumf %30, %33 : vector<128x64xf32>
    %35 = arith.truncf %34 : vector<128x64xf32> to vector<128x64xbf16>
    %c0_13 = arith.constant 0 : index
    %c0_14 = arith.constant 0 : index
    %36 = vector.load %arg5[%c0_13, %c0_14] : memref<128x64xbf16, #tpu.memory_space<vmem>>, vector<128x64xbf16>
    tpu.vector_store %arg5[%c0_13, %c0_14], %35 {strides = array<i32>} : memref<128x64xbf16, #tpu.memory_space<vmem>>, vector<128x64xbf16>,
    return
  }
  func.func @transform_0(%arg0: i32) -> (i32, i32) {
    %c0_i32 = arith.constant 0 : i32
    %c0_i32_0 = arith.constant 0 : i32
    %c0_i32_1 = arith.constant 0 : i32
    return %c0_i32, %c0_i32_0 : i32, i32
  }
  func.func @transform_1(%arg0: i32) -> (i32, i32) {
    %c0_i32 = arith.constant 0 : i32
    %c0_i32_0 = arith.constant 0 : i32
    %c0_i32_1 = arith.constant 0 : i32
    return %c0_i32, %c0_i32_0 : i32, i32
  }
  func.func @transform_2(%arg0: i32) -> (i32, i32) {
    %c0_i32 = arith.constant 0 : i32
    %c0_i32_0 = arith.constant 0 : i32
    %c0_i32_1 = arith.constant 0 : i32
    return %c0_i32, %c0_i32_0 : i32, i32
  }
  func.func @transform_3(%arg0: i32) -> (i32, i32) {
    %c0_i32 = arith.constant 0 : i32
    %c0_i32_0 = arith.constant 0 : i32
    %c0_i32_1 = arith.constant 0 : i32
    return %c0_i32, %c0_i32_0 : i32, i32
  }
  func.func @transform_4(%arg0: i32) -> (i32, i32) {
    %c0_i32 = arith.constant 0 : i32
    %c0_i32_0 = arith.constant 0 : i32
    %c0_i32_1 = arith.constant 0 : i32
    return %c0_i32, %c0_i32_0 : i32, i32
  }
}

module attributes {stable_mosaic.version = 11 : i64} {
  func.func @conv_bn_relu_pool_kernel(%arg0: i32, %arg1: memref<128x576xbf16, #tpu.memory_space<vmem>>, %arg2: memref<576x128xbf16, #tpu.memory_space<vmem>>, %arg3: memref<1x128xf32, #tpu.memory_space<vmem>>, %arg4: memref<1x128xf32, #tpu.memory_space<vmem>>, %arg5: memref<32x128xbf16, #tpu.memory_space<vmem>>) attributes {dimension_semantics = [#tpu.dimension_semantics<arbitrary>], iteration_bounds = array<i64: 1>, scalar_prefetch = 0 : i64, scratch_operands = 0 : i64, tpu.core_type = #tpu.core_type<tc>, window_params = [{pipeline_mode = #tpu.pipeline_mode<synchronous>, transform_indices = @transform_0, window_bounds = array<i64: 128, 576>}, {pipeline_mode = #tpu.pipeline_mode<synchronous>, transform_indices = @transform_1, window_bounds = array<i64: 576, 128>}, {pipeline_mode = #tpu.pipeline_mode<synchronous>, transform_indices = @transform_2, window_bounds = array<i64: 1, 128>}, {pipeline_mode = #tpu.pipeline_mode<synchronous>, transform_indices = @transform_3, window_bounds = array<i64: 1, 128>}, {pipeline_mode = #tpu.pipeline_mode<synchronous>, transform_indices = @transform_4, window_bounds = array<i64: 32, 128>}]} {
    %c0 = arith.constant 0 : index
    %c0_0 = arith.constant 0 : index
    %0 = vector.load %arg1[%c0, %c0_0] : memref<128x576xbf16, #tpu.memory_space<vmem>>, vector<128x576xbf16>
    %c0_1 = arith.constant 0 : index
    %c0_2 = arith.constant 0 : index
    %1 = vector.load %arg2[%c0_1, %c0_2] : memref<576x128xbf16, #tpu.memory_space<vmem>>, vector<576x128xbf16>
    %cst = arith.constant dense<0.000000e+00> : vector<128x128xf32>
    %2 = tpu.matmul %0, %1, %cst {dimension_numbers = #tpu.dot_dimension_numbers<[1], [0], [0], [1], [0, 0, 1, 1], [], []>} : vector<128x576xbf16>, vector<576x128xbf16>, vector<128x128xf32> -> vector<128x128xf32>
    %cst_3 = arith.constant dense<0.000000e+00> : vector<128xf32>
    %3 = vector.multi_reduction <add>, %2, %cst_3 [0] : vector<128x128xf32> to vector<128xf32>
    %4 = vector.shape_cast %3 : vector<128xf32> to vector<1x128xf32>
    %5 = arith.mulf %2, %2 : vector<128x128xf32>
    %cst_4 = arith.constant dense<0.000000e+00> : vector<128xf32>
    %6 = vector.multi_reduction <add>, %5, %cst_4 [0] : vector<128x128xf32> to vector<128xf32>
    %7 = vector.shape_cast %6 : vector<128xf32> to vector<1x128xf32>
    %cst_5 = arith.constant 7.812500e-03 : f32
    %8 = vector.broadcast %cst_5 : f32 to vector<1x128xf32>
    %9 = arith.mulf %4, %8 : vector<1x128xf32>
    %cst_6 = arith.constant 7.812500e-03 : f32
    %10 = vector.broadcast %cst_6 : f32 to vector<1x128xf32>
    %11 = arith.mulf %7, %10 : vector<1x128xf32>
    %12 = arith.mulf %9, %9 : vector<1x128xf32>
    %13 = arith.subf %11, %12 : vector<1x128xf32>
    %c0_7 = arith.constant 0 : index
    %c0_8 = arith.constant 0 : index
    %14 = vector.load %arg3[%c0_7, %c0_8] : memref<1x128xf32, #tpu.memory_space<vmem>>, vector<1x128xf32>
    %cst_9 = arith.constant 9.99999974E-6 : f32
    %15 = vector.broadcast %cst_9 : f32 to vector<1x128xf32>
    %16 = arith.addf %13, %15 : vector<1x128xf32>
    %17 = math.rsqrt %16 : vector<1x128xf32>
    %18 = arith.mulf %14, %17 : vector<1x128xf32>
    %c0_10 = arith.constant 0 : index
    %c0_11 = arith.constant 0 : index
    %19 = vector.load %arg4[%c0_10, %c0_11] : memref<1x128xf32, #tpu.memory_space<vmem>>, vector<1x128xf32>
    %20 = arith.mulf %9, %18 : vector<1x128xf32>
    %21 = arith.subf %19, %20 : vector<1x128xf32>
    %22 = vector.broadcast %18 : vector<1x128xf32> to vector<128x128xf32>
    %23 = arith.mulf %2, %22 : vector<128x128xf32>
    %24 = vector.broadcast %21 : vector<1x128xf32> to vector<128x128xf32>
    %25 = arith.addf %23, %24 : vector<128x128xf32>
    %cst_12 = arith.constant 0.000000e+00 : f32
    %26 = vector.broadcast %cst_12 : f32 to vector<128x128xf32>
    %27 = arith.maximumf %25, %26 : vector<128x128xf32>
    %28 = vector.extract_strided_slice %27 {offsets = [0, 0], sizes = [32, 128], strides = [1, 1]} : vector<128x128xf32> to vector<32x128xf32>
    %29 = vector.extract_strided_slice %27 {offsets = [32, 0], sizes = [32, 128], strides = [1, 1]} : vector<128x128xf32> to vector<32x128xf32>
    %30 = arith.maximumf %28, %29 : vector<32x128xf32>
    %31 = vector.extract_strided_slice %27 {offsets = [64, 0], sizes = [32, 128], strides = [1, 1]} : vector<128x128xf32> to vector<32x128xf32>
    %32 = vector.extract_strided_slice %27 {offsets = [96, 0], sizes = [32, 128], strides = [1, 1]} : vector<128x128xf32> to vector<32x128xf32>
    %33 = arith.maximumf %31, %32 : vector<32x128xf32>
    %34 = arith.maximumf %30, %33 : vector<32x128xf32>
    %35 = arith.truncf %34 : vector<32x128xf32> to vector<32x128xbf16>
    %c0_13 = arith.constant 0 : index
    %c0_14 = arith.constant 0 : index
    %36 = vector.load %arg5[%c0_13, %c0_14] : memref<32x128xbf16, #tpu.memory_space<vmem>>, vector<32x128xbf16>
    tpu.vector_store %arg5[%c0_13, %c0_14], %35 {strides = array<i32>} : memref<32x128xbf16, #tpu.memory_space<vmem>>, vector<32x128xbf16>,
    return
  }
  func.func @transform_0(%arg0: i32) -> (i32, i32) {
    %c0_i32 = arith.constant 0 : i32
    %c0_i32_0 = arith.constant 0 : i32
    %c0_i32_1 = arith.constant 0 : i32
    return %c0_i32, %c0_i32_0 : i32, i32
  }
  func.func @transform_1(%arg0: i32) -> (i32, i32) {
    %c0_i32 = arith.constant 0 : i32
    %c0_i32_0 = arith.constant 0 : i32
    %c0_i32_1 = arith.constant 0 : i32
    return %c0_i32, %c0_i32_0 : i32, i32
  }
  func.func @transform_2(%arg0: i32) -> (i32, i32) {
    %c0_i32 = arith.constant 0 : i32
    %c0_i32_0 = arith.constant 0 : i32
    %c0_i32_1 = arith.constant 0 : i32
    return %c0_i32, %c0_i32_0 : i32, i32
  }
  func.func @transform_3(%arg0: i32) -> (i32, i32) {
    %c0_i32 = arith.constant 0 : i32
    %c0_i32_0 = arith.constant 0 : i32
    %c0_i32_1 = arith.constant 0 : i32
    return %c0_i32, %c0_i32_0 : i32, i32
  }
  func.func @transform_4(%arg0: i32) -> (i32, i32) {
    %c0_i32 = arith.constant 0 : i32
    %c0_i32_0 = arith.constant 0 : i32
    %c0_i32_1 = arith.constant 0 : i32
    return %c0_i32, %c0_i32_0 : i32, i32
  }
}

module attributes {stable_mosaic.version = 11 : i64} {
  func.func @mlp_kernel(%arg0: i32, %arg1: memref<2x2048xbf16, #tpu.memory_space<vmem>>, %arg2: memref<2048x256xbf16, #tpu.memory_space<vmem>>, %arg3: memref<1x256xf32, #tpu.memory_space<vmem>>, %arg4: memref<256x10xbf16, #tpu.memory_space<vmem>>, %arg5: memref<1x10xf32, #tpu.memory_space<vmem>>, %arg6: memref<2x10xf32, #tpu.memory_space<vmem>>) attributes {dimension_semantics = [#tpu.dimension_semantics<arbitrary>], iteration_bounds = array<i64: 1>, scalar_prefetch = 0 : i64, scratch_operands = 0 : i64, tpu.core_type = #tpu.core_type<tc>, window_params = [{pipeline_mode = #tpu.pipeline_mode<synchronous>, transform_indices = @transform_0, window_bounds = array<i64: 2, 2048>}, {pipeline_mode = #tpu.pipeline_mode<synchronous>, transform_indices = @transform_1, window_bounds = array<i64: 2048, 256>}, {pipeline_mode = #tpu.pipeline_mode<synchronous>, transform_indices = @transform_2, window_bounds = array<i64: 1, 256>}, {pipeline_mode = #tpu.pipeline_mode<synchronous>, transform_indices = @transform_3, window_bounds = array<i64: 256, 10>}, {pipeline_mode = #tpu.pipeline_mode<synchronous>, transform_indices = @transform_4, window_bounds = array<i64: 1, 10>}, {pipeline_mode = #tpu.pipeline_mode<synchronous>, transform_indices = @transform_5, window_bounds = array<i64: 2, 10>}]} {
    %c0 = arith.constant 0 : index
    %c0_0 = arith.constant 0 : index
    %0 = vector.load %arg1[%c0, %c0_0] : memref<2x2048xbf16, #tpu.memory_space<vmem>>, vector<2x2048xbf16>
    %c0_1 = arith.constant 0 : index
    %c0_2 = arith.constant 0 : index
    %1 = vector.load %arg2[%c0_1, %c0_2] : memref<2048x256xbf16, #tpu.memory_space<vmem>>, vector<2048x256xbf16>
    %cst = arith.constant dense<0.000000e+00> : vector<2x256xf32>
    %2 = tpu.matmul %0, %1, %cst {dimension_numbers = #tpu.dot_dimension_numbers<[1], [0], [0], [1], [0, 0, 1, 1], [], []>} : vector<2x2048xbf16>, vector<2048x256xbf16>, vector<2x256xf32> -> vector<2x256xf32>
    %c0_3 = arith.constant 0 : index
    %c0_4 = arith.constant 0 : index
    %3 = vector.load %arg3[%c0_3, %c0_4] : memref<1x256xf32, #tpu.memory_space<vmem>>, vector<1x256xf32>
    %4 = vector.broadcast %3 : vector<1x256xf32> to vector<2x256xf32>
    %5 = arith.addf %2, %4 : vector<2x256xf32>
    %cst_5 = arith.constant 0.000000e+00 : f32
    %6 = vector.broadcast %cst_5 : f32 to vector<2x256xf32>
    %7 = arith.maximumf %5, %6 : vector<2x256xf32>
    %8 = arith.truncf %7 : vector<2x256xf32> to vector<2x256xbf16>
    %c0_6 = arith.constant 0 : index
    %c0_7 = arith.constant 0 : index
    %9 = vector.load %arg4[%c0_6, %c0_7] : memref<256x10xbf16, #tpu.memory_space<vmem>>, vector<256x10xbf16>
    %cst_8 = arith.constant dense<0.000000e+00> : vector<2x10xf32>
    %10 = tpu.matmul %8, %9, %cst_8 {dimension_numbers = #tpu.dot_dimension_numbers<[1], [0], [0], [1], [0, 0, 1, 1], [], []>} : vector<2x256xbf16>, vector<256x10xbf16>, vector<2x10xf32> -> vector<2x10xf32>
    %c0_9 = arith.constant 0 : index
    %c0_10 = arith.constant 0 : index
    %11 = vector.load %arg5[%c0_9, %c0_10] : memref<1x10xf32, #tpu.memory_space<vmem>>, vector<1x10xf32>
    %12 = vector.broadcast %11 : vector<1x10xf32> to vector<2x10xf32>
    %13 = arith.addf %10, %12 : vector<2x10xf32>
    %c0_11 = arith.constant 0 : index
    %c0_12 = arith.constant 0 : index
    %14 = vector.load %arg6[%c0_11, %c0_12] : memref<2x10xf32, #tpu.memory_space<vmem>>, vector<2x10xf32>
    tpu.vector_store %arg6[%c0_11, %c0_12], %13 {strides = array<i32>} : memref<2x10xf32, #tpu.memory_space<vmem>>, vector<2x10xf32>,
    return
  }
  func.func @transform_0(%arg0: i32) -> (i32, i32) {
    %c0_i32 = arith.constant 0 : i32
    %c0_i32_0 = arith.constant 0 : i32
    %c0_i32_1 = arith.constant 0 : i32
    return %c0_i32, %c0_i32_0 : i32, i32
  }
  func.func @transform_1(%arg0: i32) -> (i32, i32) {
    %c0_i32 = arith.constant 0 : i32
    %c0_i32_0 = arith.constant 0 : i32
    %c0_i32_1 = arith.constant 0 : i32
    return %c0_i32, %c0_i32_0 : i32, i32
  }
  func.func @transform_2(%arg0: i32) -> (i32, i32) {
    %c0_i32 = arith.constant 0 : i32
    %c0_i32_0 = arith.constant 0 : i32
    %c0_i32_1 = arith.constant 0 : i32
    return %c0_i32, %c0_i32_0 : i32, i32
  }
  func.func @transform_3(%arg0: i32) -> (i32, i32) {
    %c0_i32 = arith.constant 0 : i32
    %c0_i32_0 = arith.constant 0 : i32
    %c0_i32_1 = arith.constant 0 : i32
    return %c0_i32, %c0_i32_0 : i32, i32
  }
  func.func @transform_4(%arg0: i32) -> (i32, i32) {
    %c0_i32 = arith.constant 0 : i32
    %c0_i32_0 = arith.constant 0 : i32
    %c0_i32_1 = arith.constant 0 : i32
    return %c0_i32, %c0_i32_0 : i32, i32
  }
  func.func @transform_5(%arg0: i32) -> (i32, i32) {
    %c0_i32 = arith.constant 0 : i32
    %c0_i32_0 = arith.constant 0 : i32
    %c0_i32_1 = arith.constant 0 : i32
    return %c0_i32, %c0_i32_0 : i32, i32
  }
}

</mosaic_0001>

<llo_original>
// kernel: student_forward.4
$region0: #{student_forward.4}
  #allocation0 [shape = 'u32[]', space=smem, size = 0x4, offset = 0x4, fixed_abs, tag = 'smem constant byte address 0x4 - core index']
  #allocation1 [shape = 'u32[144,128]{1,0:T(1,128)}', space=vmem, size = 0x12000, scoped, tag = 'internal scratch']
  %s0 = inlined_call_operand.vmem [shape: bf16[2048,32], index: 0, kind: input, shape index: {}]
  %s1 = inlined_call_operand.vmem [shape: bf16[32,32], index: 1, kind: input, shape index: {}]
  %s2 = inlined_call_operand.vmem [shape: f32[1,32], index: 2, kind: input, shape index: {}]
  %s3 = inlined_call_operand.vmem [shape: f32[1,32], index: 3, kind: input, shape index: {}]
  %s4 = inlined_call_operand.vmem [shape: bf16[512,32], index: 4, kind: output, shape index: {}]
  %s5 = sld [smem:[#allocation0]]
  $region26: #{student_forward.4} parent=0
    _
  %s7 = ssub.s32 1, %s5
  %s8 = scalar_select 0, %s7, %s5
  // Predicated region
  $region2: #{student_forward.4} parent=0 // pred_check
    _
  $region3: #{student_forward.4} parent=0 // pred_check_branch
    %10 = sbr.rel (0) target = $region5
  $region4: #{student_forward.4} parent=0 // pred_region
    _
  $region5: #{student_forward.4} parent=0 // pred_fallthru
    _
  // Predicated region
  $region6: #{student_forward.4} parent=0 // pred_check
    _
  $region7: #{student_forward.4} parent=0 // pred_check_branch
    %12 = sbr.rel (0) target = $region9
  $region8: #{student_forward.4} parent=0 // pred_region
    _
  $region9: #{student_forward.4} parent=0 // pred_fallthru
    _
  // Predicated region
  $region10: #{student_forward.4} parent=0 // pred_check
    _
  $region11: #{student_forward.4} parent=0 // pred_check_branch
    %14 = sbr.rel (0) target = $region13
  $region12: #{student_forward.4} parent=0 // pred_region
    _
  $region13: #{student_forward.4} parent=0 // pred_fallthru
    _
  // Predicated region
  $region14: #{student_forward.4} parent=0 // pred_check
    _
  $region15: #{student_forward.4} parent=0 // pred_check_branch
    %16 = sbr.rel (0) target = $region17
  $region16: #{student_forward.4} parent=0 // pred_region
    _
  $region17: #{student_forward.4} parent=0 // pred_fallthru
    _
  %v18 = vld [vmem:[%s0] sm:$0xf]
  %v19 = vld [vmem:[%s0 + $0x4] sm:$0xf]
  %v20 = vld [vmem:[%s0 + $0x8] sm:$0xf]
  %v21 = vld [vmem:[%s0 + $0xc] sm:$0xf]
  %v22 = vld [vmem:[%s0 + $0x10] sm:$0xf]
  %v23 = vld [vmem:[%s0 + $0x14] sm:$0xf]
  %v24 = vld [vmem:[%s0 + $0x18] sm:$0xf]
  %v25 = vld [vmem:[%s0 + $0x1c] sm:$0xf]
  %v26 = vld [vmem:[%s0 + $0x20] sm:$0xf]
  %v27 = vld [vmem:[%s0 + $0x24] sm:$0xf]
  %v28 = vld [vmem:[%s0 + $0x28] sm:$0xf]
  %v29 = vld [vmem:[%s0 + $0x2c] sm:$0xf]
  %v30 = vld [vmem:[%s0 + $0x30] sm:$0xf]
  %v31 = vld [vmem:[%s0 + $0x34] sm:$0xf]
  %v32 = vld [vmem:[%s0 + $0x38] sm:$0xf]
  %v33 = vld [vmem:[%s0 + $0x3c] sm:$0xf]
  %v34 = vld [vmem:[%s0 + $0x40] sm:$0xf]
  %v35 = vld [vmem:[%s0 + $0x44] sm:$0xf]
  %v36 = vld [vmem:[%s0 + $0x48] sm:$0xf]
  %v37 = vld [vmem:[%s0 + $0x4c] sm:$0xf]
  %v38 = vld [vmem:[%s0 + $0x50] sm:$0xf]
  %v39 = vld [vmem:[%s0 + $0x54] sm:$0xf]
  %v40 = vld [vmem:[%s0 + $0x58] sm:$0xf]
  %v41 = vld [vmem:[%s0 + $0x5c] sm:$0xf]
  %v42 = vld [vmem:[%s0 + $0x60] sm:$0xf]
  %v43 = vld [vmem:[%s0 + $0x64] sm:$0xf]
  %v44 = vld [vmem:[%s0 + $0x68] sm:$0xf]
  %v45 = vld [vmem:[%s0 + $0x6c] sm:$0xf]
  %v46 = vld [vmem:[%s0 + $0x70] sm:$0xf]
  %v47 = vld [vmem:[%s0 + $0x74] sm:$0xf]
  %v48 = vld [vmem:[%s0 + $0x78] sm:$0xf]
  %v49 = vld [vmem:[%s0 + $0x7c] sm:$0xf]
  %v50 = vld [vmem:[%s0 + $0x80] sm:$0xf]
  %v51 = vld [vmem:[%s0 + $0x84] sm:$0xf]
  %v52 = vld [vmem:[%s0 + $0x88] sm:$0xf]
  %v53 = vld [vmem:[%s0 + $0x8c] sm:$0xf]
  %v54 = vld [vmem:[%s0 + $0x90] sm:$0xf]
  %v55 = vld [vmem:[%s0 + $0x94] sm:$0xf]
  %v56 = vld [vmem:[%s0 + $0x98] sm:$0xf]
  %v57 = vld [vmem:[%s0 + $0x9c] sm:$0xf]
  %v58 = vld [vmem:[%s0 + $0xa0] sm:$0xf]
  %v59 = vld [vmem:[%s0 + $0xa4] sm:$0xf]
  %v60 = vld [vmem:[%s0 + $0xa8] sm:$0xf]
  %v61 = vld [vmem:[%s0 + $0xac] sm:$0xf]
  %v62 = vld [vmem:[%s0 + $0xb0] sm:$0xf]
  %v63 = vld [vmem:[%s0 + $0xb4] sm:$0xf]
  %v64 = vld [vmem:[%s0 + $0xb8] sm:$0xf]
  %v65 = vld [vmem:[%s0 + $0xbc] sm:$0xf]
  %v66 = vld [vmem:[%s0 + $0xc0] sm:$0xf]
  %v67 = vld [vmem:[%s0 + $0xc4] sm:$0xf]
  %v68 = vld [vmem:[%s0 + $0xc8] sm:$0xf]
  %v69 = vld [vmem:[%s0 + $0xcc] sm:$0xf]
  %v70 = vld [vmem:[%s0 + $0xd0] sm:$0xf]
  %v71 = vld [vmem:[%s0 + $0xd4] sm:$0xf]
  %v72 = vld [vmem:[%s0 + $0xd8] sm:$0xf]
  %v73 = vld [vmem:[%s0 + $0xdc] sm:$0xf]
  %v74 = vld [vmem:[%s0 + $0xe0] sm:$0xf]
  %v75 = vld [vmem:[%s0 + $0xe4] sm:$0xf]
  %v76 = vld [vmem:[%s0 + $0xe8] sm:$0xf]
  %v77 = vld [vmem:[%s0 + $0xec] sm:$0xf]
  %v78 = vld [vmem:[%s0 + $0xf0] sm:$0xf]
  %v79 = vld [vmem:[%s0 + $0xf4] sm:$0xf]
  %v80 = vld [vmem:[%s0 + $0xf8] sm:$0xf]
  %v81 = vld [vmem:[%s0 + $0xfc] sm:$0xf]
  %v82 = vld [vmem:[%s0 + $0x100] sm:$0xf]
  %v83 = vld [vmem:[%s0 + $0x104] sm:$0xf]
  %v84 = vld [vmem:[%s0 + $0x108] sm:$0xf]
  %v85 = vld [vmem:[%s0 + $0x10c] sm:$0xf]
  %v86 = vld [vmem:[%s0 + $0x110] sm:$0xf]
  %v87 = vld [vmem:[%s0 + $0x114] sm:$0xf]
  %v88 = vld [vmem:[%s0 + $0x118] sm:$0xf]
  %v89 = vld [vmem:[%s0 + $0x11c] sm:$0xf]
  %v90 = vld [vmem:[%s0 + $0x120] sm:$0xf]
  %v91 = vld [vmem:[%s0 + $0x124] sm:$0xf]
  %v92 = vld [vmem:[%s0 + $0x128] sm:$0xf]
  %v93 = vld [vmem:[%s0 + $0x12c] sm:$0xf]
  %v94 = vld [vmem:[%s0 + $0x130] sm:$0xf]
  %v95 = vld [vmem:[%s0 + $0x134] sm:$0xf]
  %v96 = vld [vmem:[%s0 + $0x138] sm:$0xf]
  %v97 = vld [vmem:[%s0 + $0x13c] sm:$0xf]
  %v98 = vld [vmem:[%s0 + $0x140] sm:$0xf]
  %v99 = vld [vmem:[%s0 + $0x144] sm:$0xf]
  %v100 = vld [vmem:[%s0 + $0x148] sm:$0xf]
  %v101 = vld [vmem:[%s0 + $0x14c] sm:$0xf]
  %v102 = vld [vmem:[%s0 + $0x150] sm:$0xf]
  %v103 = vld [vmem:[%s0 + $0x154] sm:$0xf]
  %v104 = vld [vmem:[%s0 + $0x158] sm:$0xf]
  %v105 = vld [vmem:[%s0 + $0x15c] sm:$0xf]
  %v106 = vld [vmem:[%s0 + $0x160] sm:$0xf]
  %v107 = vld [vmem:[%s0 + $0x164] sm:$0xf]
  %v108 = vld [vmem:[%s0 + $0x168] sm:$0xf]
  %v109 = vld [vmem:[%s0 + $0x16c] sm:$0xf]
  %v110 = vld [vmem:[%s0 + $0x170] sm:$0xf]
  %v111 = vld [vmem:[%s0 + $0x174] sm:$0xf]
  %v112 = vld [vmem:[%s0 + $0x178] sm:$0xf]
  %v113 = vld [vmem:[%s0 + $0x17c] sm:$0xf]
  %v114 = vld [vmem:[%s0 + $0x180] sm:$0xf]
  %v115 = vld [vmem:[%s0 + $0x184] sm:$0xf]
  %v116 = vld [vmem:[%s0 + $0x188] sm:$0xf]
  %v117 = vld [vmem:[%s0 + $0x18c] sm:$0xf]
  %v118 = vld [vmem:[%s0 + $0x190] sm:$0xf]
  %v119 = vld [vmem:[%s0 + $0x194] sm:$0xf]
  %v120 = vld [vmem:[%s0 + $0x198] sm:$0xf]
  %v121 = vld [vmem:[%s0 + $0x19c] sm:$0xf]
  %v122 = vld [vmem:[%s0 + $0x1a0] sm:$0xf]
  %v123 = vld [vmem:[%s0 + $0x1a4] sm:$0xf]
  %v124 = vld [vmem:[%s0 + $0x1a8] sm:$0xf]
  %v125 = vld [vmem:[%s0 + $0x1ac] sm:$0xf]
  %v126 = vld [vmem:[%s0 + $0x1b0] sm:$0xf]
  %v127 = vld [vmem:[%s0 + $0x1b4] sm:$0xf]
  %v128 = vld [vmem:[%s0 + $0x1b8] sm:$0xf]
  %v129 = vld [vmem:[%s0 + $0x1bc] sm:$0xf]
  %v130 = vld [vmem:[%s0 + $0x1c0] sm:$0xf]
  %v131 = vld [vmem:[%s0 + $0x1c4] sm:$0xf]
  %v132 = vld [vmem:[%s0 + $0x1c8] sm:$0xf]
  %v133 = vld [vmem:[%s0 + $0x1cc] sm:$0xf]
  %v134 = vld [vmem:[%s0 + $0x1d0] sm:$0xf]
  %v135 = vld [vmem:[%s0 + $0x1d4] sm:$0xf]
  %v136 = vld [vmem:[%s0 + $0x1d8] sm:$0xf]
  %v137 = vld [vmem:[%s0 + $0x1dc] sm:$0xf]
  %v138 = vld [vmem:[%s0 + $0x1e0] sm:$0xf]
  %v139 = vld [vmem:[%s0 + $0x1e4] sm:$0xf]
  %v140 = vld [vmem:[%s0 + $0x1e8] sm:$0xf]
  %v141 = vld [vmem:[%s0 + $0x1ec] sm:$0xf]
  %v142 = vld [vmem:[%s0 + $0x1f0] sm:$0xf]
  %v143 = vld [vmem:[%s0 + $0x1f4] sm:$0xf]
  %v144 = vld [vmem:[%s0 + $0x1f8] sm:$0xf]
  %v145 = vld [vmem:[%s0 + $0x1fc] sm:$0xf]
  %v146 = vld [vmem:[%s0 + $0x200] sm:$0xf]
  %v147 = vld [vmem:[%s0 + $0x204] sm:$0xf]
  %v148 = vld [vmem:[%s0 + $0x208] sm:$0xf]
  %v149 = vld [vmem:[%s0 + $0x20c] sm:$0xf]
  %v150 = vld [vmem:[%s0 + $0x210] sm:$0xf]
  %v151 = vld [vmem:[%s0 + $0x214] sm:$0xf]
  %v152 = vld [vmem:[%s0 + $0x218] sm:$0xf]
  %v153 = vld [vmem:[%s0 + $0x21c] sm:$0xf]
  %v154 = vld [vmem:[%s0 + $0x220] sm:$0xf]
  %v155 = vld [vmem:[%s0 + $0x224] sm:$0xf]
  %v156 = vld [vmem:[%s0 + $0x228] sm:$0xf]
  %v157 = vld [vmem:[%s0 + $0x22c] sm:$0xf]
  %v158 = vld [vmem:[%s0 + $0x230] sm:$0xf]
  %v159 = vld [vmem:[%s0 + $0x234] sm:$0xf]
  %v160 = vld [vmem:[%s0 + $0x238] sm:$0xf]
  %v161 = vld [vmem:[%s0 + $0x23c] sm:$0xf]
  %v162 = vld [vmem:[%s0 + $0x240] sm:$0xf]
  %v163 = vld [vmem:[%s0 + $0x244] sm:$0xf]
  %v164 = vld [vmem:[%s0 + $0x248] sm:$0xf]
  %v165 = vld [vmem:[%s0 + $0x24c] sm:$0xf]
  %v166 = vld [vmem:[%s0 + $0x250] sm:$0xf]
  %v167 = vld [vmem:[%s0 + $0x254] sm:$0xf]
  %v168 = vld [vmem:[%s0 + $0x258] sm:$0xf]
  %v169 = vld [vmem:[%s0 + $0x25c] sm:$0xf]
  %v170 = vld [vmem:[%s0 + $0x260] sm:$0xf]
  %v171 = vld [vmem:[%s0 + $0x264] sm:$0xf]
  %v172 = vld [vmem:[%s0 + $0x268] sm:$0xf]
  %v173 = vld [vmem:[%s0 + $0x26c] sm:$0xf]
  %v174 = vld [vmem:[%s0 + $0x270] sm:$0xf]
  %v175 = vld [vmem:[%s0 + $0x274] sm:$0xf]
  %v176 = vld [vmem:[%s0 + $0x278] sm:$0xf]
  %v177 = vld [vmem:[%s0 + $0x27c] sm:$0xf]
  %v178 = vld [vmem:[%s0 + $0x280] sm:$0xf]
  %v179 = vld [vmem:[%s0 + $0x284] sm:$0xf]
  %v180 = vld [vmem:[%s0 + $0x288] sm:$0xf]
  %v181 = vld [vmem:[%s0 + $0x28c] sm:$0xf]
  %v182 = vld [vmem:[%s0 + $0x290] sm:$0xf]
  %v183 = vld [vmem:[%s0 + $0x294] sm:$0xf]
  %v184 = vld [vmem:[%s0 + $0x298] sm:$0xf]
  %v185 = vld [vmem:[%s0 + $0x29c] sm:$0xf]
  %v186 = vld [vmem:[%s0 + $0x2a0] sm:$0xf]
  %v187 = vld [vmem:[%s0 + $0x2a4] sm:$0xf]
  %v188 = vld [vmem:[%s0 + $0x2a8] sm:$0xf]
  %v189 = vld [vmem:[%s0 + $0x2ac] sm:$0xf]
  %v190 = vld [vmem:[%s0 + $0x2b0] sm:$0xf]
  %v191 = vld [vmem:[%s0 + $0x2b4] sm:$0xf]
  %v192 = vld [vmem:[%s0 + $0x2b8] sm:$0xf]
  %v193 = vld [vmem:[%s0 + $0x2bc] sm:$0xf]
  %v194 = vld [vmem:[%s0 + $0x2c0] sm:$0xf]
  %v195 = vld [vmem:[%s0 + $0x2c4] sm:$0xf]
  %v196 = vld [vmem:[%s0 + $0x2c8] sm:$0xf]
  %v197 = vld [vmem:[%s0 + $0x2cc] sm:$0xf]
  %v198 = vld [vmem:[%s0 + $0x2d0] sm:$0xf]
  %v199 = vld [vmem:[%s0 + $0x2d4] sm:$0xf]
  %v200 = vld [vmem:[%s0 + $0x2d8] sm:$0xf]
  %v201 = vld [vmem:[%s0 + $0x2dc] sm:$0xf]
  %v202 = vld [vmem:[%s0 + $0x2e0] sm:$0xf]
  %v203 = vld [vmem:[%s0 + $0x2e4] sm:$0xf]
  %v204 = vld [vmem:[%s0 + $0x2e8] sm:$0xf]
  %v205 = vld [vmem:[%s0 + $0x2ec] sm:$0xf]
  %v206 = vld [vmem:[%s0 + $0x2f0] sm:$0xf]
  %v207 = vld [vmem:[%s0 + $0x2f4] sm:$0xf]
  %v208 = vld [vmem:[%s0 + $0x2f8] sm:$0xf]
  %v209 = vld [vmem:[%s0 + $0x2fc] sm:$0xf]
  %v210 = vld [vmem:[%s0 + $0x300] sm:$0xf]
  %v211 = vld [vmem:[%s0 + $0x304] sm:$0xf]
  %v212 = vld [vmem:[%s0 + $0x308] sm:$0xf]
  %v213 = vld [vmem:[%s0 + $0x30c] sm:$0xf]
  %v214 = vld [vmem:[%s0 + $0x310] sm:$0xf]
  %v215 = vld [vmem:[%s0 + $0x314] sm:$0xf]
  %v216 = vld [vmem:[%s0 + $0x318] sm:$0xf]
  %v217 = vld [vmem:[%s0 + $0x31c] sm:$0xf]
  %v218 = vld [vmem:[%s0 + $0x320] sm:$0xf]
  %v219 = vld [vmem:[%s0 + $0x324] sm:$0xf]
  %v220 = vld [vmem:[%s0 + $0x328] sm:$0xf]
  %v221 = vld [vmem:[%s0 + $0x32c] sm:$0xf]
  %v222 = vld [vmem:[%s0 + $0x330] sm:$0xf]
  %v223 = vld [vmem:[%s0 + $0x334] sm:$0xf]
  %v224 = vld [vmem:[%s0 + $0x338] sm:$0xf]
  %v225 = vld [vmem:[%s0 + $0x33c] sm:$0xf]
  %v226 = vld [vmem:[%s0 + $0x340] sm:$0xf]
  %v227 = vld [vmem:[%s0 + $0x344] sm:$0xf]
  %v228 = vld [vmem:[%s0 + $0x348] sm:$0xf]
  %v229 = vld [vmem:[%s0 + $0x34c] sm:$0xf]
  %v230 = vld [vmem:[%s0 + $0x350] sm:$0xf]
  %v231 = vld [vmem:[%s0 + $0x354] sm:$0xf]
  %v232 = vld [vmem:[%s0 + $0x358] sm:$0xf]
  %v233 = vld [vmem:[%s0 + $0x35c] sm:$0xf]
  %v234 = vld [vmem:[%s0 + $0x360] sm:$0xf]
  %v235 = vld [vmem:[%s0 + $0x364] sm:$0xf]
  %v236 = vld [vmem:[%s0 + $0x368] sm:$0xf]
  %v237 = vld [vmem:[%s0 + $0x36c] sm:$0xf]
  %v238 = vld [vmem:[%s0 + $0x370] sm:$0xf]
  %v239 = vld [vmem:[%s0 + $0x374] sm:$0xf]
  %v240 = vld [vmem:[%s0 + $0x378] sm:$0xf]
  %v241 = vld [vmem:[%s0 + $0x37c] sm:$0xf]
  %v242 = vld [vmem:[%s0 + $0x380] sm:$0xf]
  %v243 = vld [vmem:[%s0 + $0x384] sm:$0xf]
  %v244 = vld [vmem:[%s0 + $0x388] sm:$0xf]
  %v245 = vld [vmem:[%s0 + $0x38c] sm:$0xf]
  %v246 = vld [vmem:[%s0 + $0x390] sm:$0xf]
  %v247 = vld [vmem:[%s0 + $0x394] sm:$0xf]
  %v248 = vld [vmem:[%s0 + $0x398] sm:$0xf]
  %v249 = vld [vmem:[%s0 + $0x39c] sm:$0xf]
  %v250 = vld [vmem:[%s0 + $0x3a0] sm:$0xf]
  %v251 = vld [vmem:[%s0 + $0x3a4] sm:$0xf]
  %v252 = vld [vmem:[%s0 + $0x3a8] sm:$0xf]
  %v253 = vld [vmem:[%s0 + $0x3ac] sm:$0xf]
  %v254 = vld [vmem:[%s0 + $0x3b0] sm:$0xf]
  %v255 = vld [vmem:[%s0 + $0x3b4] sm:$0xf]
  %v256 = vld [vmem:[%s0 + $0x3b8] sm:$0xf]
  %v257 = vld [vmem:[%s0 + $0x3bc] sm:$0xf]
  %v258 = vld [vmem:[%s0 + $0x3c0] sm:$0xf]
  %v259 = vld [vmem:[%s0 + $0x3c4] sm:$0xf]
  %v260 = vld [vmem:[%s0 + $0x3c8] sm:$0xf]
  %v261 = vld [vmem:[%s0 + $0x3cc] sm:$0xf]
  %v262 = vld [vmem:[%s0 + $0x3d0] sm:$0xf]
  %v263 = vld [vmem:[%s0 + $0x3d4] sm:$0xf]
  %v264 = vld [vmem:[%s0 + $0x3d8] sm:$0xf]
  %v265 = vld [vmem:[%s0 + $0x3dc] sm:$0xf]
  %v266 = vld [vmem:[%s0 + $0x3e0] sm:$0xf]
  %v267 = vld [vmem:[%s0 + $0x3e4] sm:$0xf]
  %v268 = vld [vmem:[%s0 + $0x3e8] sm:$0xf]
  %v269 = vld [vmem:[%s0 + $0x3ec] sm:$0xf]
  %v270 = vld [vmem:[%s0 + $0x3f0] sm:$0xf]
  %v271 = vld [vmem:[%s0 + $0x3f4] sm:$0xf]
  %v272 = vld [vmem:[%s0 + $0x3f8] sm:$0xf]
  %v273 = vld [vmem:[%s0 + $0x3fc] sm:$0xf]
  %v274 = vld [vmem:[%s1] sm:$0xf]
  %v275 = vld [vmem:[%s1 + $0x4] sm:$0xf]
  %v276 = vld [vmem:[%s1 + $0x8] sm:$0xf]
  %v277 = vld [vmem:[%s1 + $0xc] sm:$0xf]
  %v534 = vunpack.c.l.b16 %v18
  %v535 = vunpack.c.l.b16 %v19
  %v536 = vunpack.c.l.b16 %v20
  %v537 = vunpack.c.l.b16 %v21
  %v538 = vunpack.c.l.b16 %v22
  %v539 = vunpack.c.l.b16 %v23
  %v540 = vunpack.c.l.b16 %v24
  %v541 = vunpack.c.l.b16 %v25
  %v542 = vunpack.c.l.b16 %v26
  %v543 = vunpack.c.l.b16 %v27
  %v544 = vunpack.c.l.b16 %v28
  %v545 = vunpack.c.l.b16 %v29
  %v546 = vunpack.c.l.b16 %v30
  %v547 = vunpack.c.l.b16 %v31
  %v548 = vunpack.c.l.b16 %v32
  %v549 = vunpack.c.l.b16 %v33
  %v550 = vunpack.c.l.b16 %v34
  %v551 = vunpack.c.l.b16 %v35
  %v552 = vunpack.c.l.b16 %v36
  %v553 = vunpack.c.l.b16 %v37
  %v554 = vunpack.c.l.b16 %v38
  %v555 = vunpack.c.l.b16 %v39
  %v556 = vunpack.c.l.b16 %v40
  %v557 = vunpack.c.l.b16 %v41
  %v558 = vunpack.c.l.b16 %v42
  %v559 = vunpack.c.l.b16 %v43
  %v560 = vunpack.c.l.b16 %v44
  %v561 = vunpack.c.l.b16 %v45
  %v562 = vunpack.c.l.b16 %v46
  %v563 = vunpack.c.l.b16 %v47
  %v564 = vunpack.c.l.b16 %v48
  %v565 = vunpack.c.l.b16 %v49
  %v566 = vunpack.c.l.b16 %v50
  %v567 = vunpack.c.l.b16 %v51
  %v568 = vunpack.c.l.b16 %v52
  %v569 = vunpack.c.l.b16 %v53
  %v570 = vunpack.c.l.b16 %v54
  %v571 = vunpack.c.l.b16 %v55
  %v572 = vunpack.c.l.b16 %v56
  %v573 = vunpack.c.l.b16 %v57
  %v574 = vunpack.c.l.b16 %v58
  %v575 = vunpack.c.l.b16 %v59
  %v576 = vunpack.c.l.b16 %v60
  %v577 = vunpack.c.l.b16 %v61
  %v578 = vunpack.c.l.b16 %v62
  %v579 = vunpack.c.l.b16 %v63
  %v580 = vunpack.c.l.b16 %v64
  %v581 = vunpack.c.l.b16 %v65
  %v582 = vunpack.c.l.b16 %v66
  %v583 = vunpack.c.l.b16 %v67
  %v584 = vunpack.c.l.b16 %v68
  %v585 = vunpack.c.l.b16 %v69
  %v586 = vunpack.c.l.b16 %v70
  %v587 = vunpack.c.l.b16 %v71
  %v588 = vunpack.c.l.b16 %v72
  %v589 = vunpack.c.l.b16 %v73
  %v590 = vunpack.c.l.b16 %v74
  %v591 = vunpack.c.l.b16 %v75
  %v592 = vunpack.c.l.b16 %v76
  %v593 = vunpack.c.l.b16 %v77
  %v594 = vunpack.c.l.b16 %v78
  %v595 = vunpack.c.l.b16 %v79
  %v596 = vunpack.c.l.b16 %v80
  %v597 = vunpack.c.l.b16 %v81
  %v598 = vunpack.c.l.b16 %v82
  %v599 = vunpack.c.l.b16 %v83
  %v600 = vunpack.c.l.b16 %v84
  %v601 = vunpack.c.l.b16 %v85
  %v602 = vunpack.c.l.b16 %v86
  %v603 = vunpack.c.l.b16 %v87
  %v604 = vunpack.c.l.b16 %v88
  %v605 = vunpack.c.l.b16 %v89
  %v606 = vunpack.c.l.b16 %v90
  %v607 = vunpack.c.l.b16 %v91
  %v608 = vunpack.c.l.b16 %v92
  %v609 = vunpack.c.l.b16 %v93
  %v610 = vunpack.c.l.b16 %v94
  %v611 = vunpack.c.l.b16 %v95
  %v612 = vunpack.c.l.b16 %v96
  %v613 = vunpack.c.l.b16 %v97
  %v614 = vunpack.c.l.b16 %v98
  %v615 = vunpack.c.l.b16 %v99
  %v616 = vunpack.c.l.b16 %v100
  %v617 = vunpack.c.l.b16 %v101
  %v618 = vunpack.c.l.b16 %v102
  %v619 = vunpack.c.l.b16 %v103
  %v620 = vunpack.c.l.b16 %v104
  %v621 = vunpack.c.l.b16 %v105
  %v622 = vunpack.c.l.b16 %v106
  %v623 = vunpack.c.l.b16 %v107
  %v624 = vunpack.c.l.b16 %v108
  %v625 = vunpack.c.l.b16 %v109
  %v626 = vunpack.c.l.b16 %v110
  %v627 = vunpack.c.l.b16 %v111
  %v628 = vunpack.c.l.b16 %v112
  %v629 = vunpack.c.l.b16 %v113
  %v630 = vunpack.c.l.b16 %v114
  %v631 = vunpack.c.l.b16 %v115
  %v632 = vunpack.c.l.b16 %v116
  %v633 = vunpack.c.l.b16 %v117
  %v634 = vunpack.c.l.b16 %v118
  %v635 = vunpack.c.l.b16 %v119
  %v636 = vunpack.c.l.b16 %v120
  %v637 = vunpack.c.l.b16 %v121
  %v638 = vunpack.c.l.b16 %v122
  %v639 = vunpack.c.l.b16 %v123
  %v640 = vunpack.c.l.b16 %v124
  %v641 = vunpack.c.l.b16 %v125
  %v642 = vunpack.c.l.b16 %v126
  %v643 = vunpack.c.l.b16 %v127
  %v644 = vunpack.c.l.b16 %v128
  %v645 = vunpack.c.l.b16 %v129
  %v646 = vunpack.c.l.b16 %v130
  %v647 = vunpack.c.l.b16 %v131
  %v648 = vunpack.c.l.b16 %v132
  %v649 = vunpack.c.l.b16 %v133
  %v650 = vunpack.c.l.b16 %v134
  %v651 = vunpack.c.l.b16 %v135
  %v652 = vunpack.c.l.b16 %v136
  %v653 = vunpack.c.l.b16 %v137
  %v654 = vunpack.c.l.b16 %v138
  %v655 = vunpack.c.l.b16 %v139
  %v656 = vunpack.c.l.b16 %v140
  %v657 = vunpack.c.l.b16 %v141
  %v658 = vunpack.c.l.b16 %v142
  %v659 = vunpack.c.l.b16 %v143
  %v660 = vunpack.c.l.b16 %v144
  %v661 = vunpack.c.l.b16 %v145
  %v662 = vunpack.c.l.b16 %v146
  %v663 = vunpack.c.l.b16 %v147
  %v664 = vunpack.c.l.b16 %v148
  %v665 = vunpack.c.l.b16 %v149
  %v666 = vunpack.c.l.b16 %v150
  %v667 = vunpack.c.l.b16 %v151
  %v668 = vunpack.c.l.b16 %v152
  %v669 = vunpack.c.l.b16 %v153
  %v670 = vunpack.c.l.b16 %v154
  %v671 = vunpack.c.l.b16 %v155
  %v672 = vunpack.c.l.b16 %v156
  %v673 = vunpack.c.l.b16 %v157
  %v674 = vunpack.c.l.b16 %v158
  %v675 = vunpack.c.l.b16 %v159
  %v676 = vunpack.c.l.b16 %v160
  %v677 = vunpack.c.l.b16 %v161
  %v678 = vunpack.c.l.b16 %v162
  %v679 = vunpack.c.l.b16 %v163
  %v680 = vunpack.c.l.b16 %v164
  %v681 = vunpack.c.l.b16 %v165
  %v682 = vunpack.c.l.b16 %v166
  %v683 = vunpack.c.l.b16 %v167
  %v684 = vunpack.c.l.b16 %v168
  %v685 = vunpack.c.l.b16 %v169
  %v686 = vunpack.c.l.b16 %v170
  %v687 = vunpack.c.l.b16 %v171
  %v688 = vunpack.c.l.b16 %v172
  %v689 = vunpack.c.l.b16 %v173
  %v690 = vunpack.c.l.b16 %v174
  %v691 = vunpack.c.l.b16 %v175
  %v692 = vunpack.c.l.b16 %v176
  %v693 = vunpack.c.l.b16 %v177
  %v694 = vunpack.c.l.b16 %v178
  %v695 = vunpack.c.l.b16 %v179
  %v696 = vunpack.c.l.b16 %v180
  %v697 = vunpack.c.l.b16 %v181
  %v698 = vunpack.c.l.b16 %v182
  %v699 = vunpack.c.l.b16 %v183
  %v700 = vunpack.c.l.b16 %v184
  %v701 = vunpack.c.l.b16 %v185
  %v702 = vunpack.c.l.b16 %v186
  %v703 = vunpack.c.l.b16 %v187
  %v704 = vunpack.c.l.b16 %v188
  %v705 = vunpack.c.l.b16 %v189
  %v706 = vunpack.c.l.b16 %v190
  %v707 = vunpack.c.l.b16 %v191
  %v708 = vunpack.c.l.b16 %v192
  %v709 = vunpack.c.l.b16 %v193
  %v710 = vunpack.c.l.b16 %v194
  %v711 = vunpack.c.l.b16 %v195
  %v712 = vunpack.c.l.b16 %v196
  %v713 = vunpack.c.l.b16 %v197
  %v714 = vunpack.c.l.b16 %v198
  %v715 = vunpack.c.l.b16 %v199
  %v716 = vunpack.c.l.b16 %v200
  %v717 = vunpack.c.l.b16 %v201
  %v718 = vunpack.c.l.b16 %v202
  %v719 = vunpack.c.l.b16 %v203
  %v720 = vunpack.c.l.b16 %v204
  %v721 = vunpack.c.l.b16 %v205
  %v722 = vunpack.c.l.b16 %v206
  %v723 = vunpack.c.l.b16 %v207
  %v724 = vunpack.c.l.b16 %v208
  %v725 = vunpack.c.l.b16 %v209
  %v726 = vunpack.c.l.b16 %v210
  %v727 = vunpack.c.l.b16 %v211
  %v728 = vunpack.c.l.b16 %v212
  %v729 = vunpack.c.l.b16 %v213
  %v730 = vunpack.c.l.b16 %v214
  %v731 = vunpack.c.l.b16 %v215
  %v732 = vunpack.c.l.b16 %v216
  %v733 = vunpack.c.l.b16 %v217
  %v734 = vunpack.c.l.b16 %v218
  %v735 = vunpack.c.l.b16 %v219
  %v736 = vunpack.c.l.b16 %v220
  %v737 = vunpack.c.l.b16 %v221
  %v738 = vunpack.c.l.b16 %v222
  %v739 = vunpack.c.l.b16 %v223
  %v740 = vunpack.c.l.b16 %v224
  %v741 = vunpack.c.l.b16 %v225
  %v742 = vunpack.c.l.b16 %v226
  %v743 = vunpack.c.l.b16 %v227
  %v744 = vunpack.c.l.b16 %v228
  %v745 = vunpack.c.l.b16 %v229
  %v746 = vunpack.c.l.b16 %v230
  %v747 = vunpack.c.l.b16 %v231
  %v748 = vunpack.c.l.b16 %v232
  %v749 = vunpack.c.l.b16 %v233
  %v750 = vunpack.c.l.b16 %v234
  %v751 = vunpack.c.l.b16 %v235
  %v752 = vunpack.c.l.b16 %v236
  %v753 = vunpack.c.l.b16 %v237
  %v754 = vunpack.c.l.b16 %v238
  %v755 = vunpack.c.l.b16 %v239
  %v756 = vunpack.c.l.b16 %v240
  %v757 = vunpack.c.l.b16 %v241
  %v758 = vunpack.c.l.b16 %v242
  %v759 = vunpack.c.l.b16 %v243
  %v760 = vunpack.c.l.b16 %v244
  %v761 = vunpack.c.l.b16 %v245
  %v762 = vunpack.c.l.b16 %v246
  %v763 = vunpack.c.l.b16 %v247
  %v764 = vunpack.c.l.b16 %v248
  %v765 = vunpack.c.l.b16 %v249
  %v766 = vunpack.c.l.b16 %v250
  %v767 = vunpack.c.l.b16 %v251
  %v768 = vunpack.c.l.b16 %v252
  %v769 = vunpack.c.l.b16 %v253
  %v770 = vunpack.c.l.b16 %v254
  %v771 = vunpack.c.l.b16 %v255
  %v772 = vunpack.c.l.b16 %v256
  %v773 = vunpack.c.l.b16 %v257
  %v774 = vunpack.c.l.b16 %v258
  %v775 = vunpack.c.l.b16 %v259
  %v776 = vunpack.c.l.b16 %v260
  %v777 = vunpack.c.l.b16 %v261
  %v778 = vunpack.c.l.b16 %v262
  %v779 = vunpack.c.l.b16 %v263
  %v780 = vunpack.c.l.b16 %v264
  %v781 = vunpack.c.l.b16 %v265
  %v782 = vunpack.c.l.b16 %v266
  %v783 = vunpack.c.l.b16 %v267
  %v784 = vunpack.c.l.b16 %v268
  %v785 = vunpack.c.l.b16 %v269
  %v786 = vunpack.c.l.b16 %v270
  %v787 = vunpack.c.l.b16 %v271
  %v788 = vunpack.c.l.b16 %v272
  %v789 = vunpack.c.l.b16 %v273
  %v790 = vpack.c.b16 %v535, %v534
  %v791 = vpack.c.b16 %v537, %v536
  %v792 = vpack.c.b16 %v539, %v538
  %v793 = vpack.c.b16 %v541, %v540
  %v794 = vpack.c.b16 %v543, %v542
  %v795 = vpack.c.b16 %v545, %v544
  %v796 = vpack.c.b16 %v547, %v546
  %v797 = vpack.c.b16 %v549, %v548
  %v798 = vpack.c.b16 %v551, %v550
  %v799 = vpack.c.b16 %v553, %v552
  %v800 = vpack.c.b16 %v555, %v554
  %v801 = vpack.c.b16 %v557, %v556
  %v802 = vpack.c.b16 %v559, %v558
  %v803 = vpack.c.b16 %v561, %v560
  %v804 = vpack.c.b16 %v563, %v562
  %v805 = vpack.c.b16 %v565, %v564
  %v806 = vpack.c.b16 %v567, %v566
  %v807 = vpack.c.b16 %v569, %v568
  %v808 = vpack.c.b16 %v571, %v570
  %v809 = vpack.c.b16 %v573, %v572
  %v810 = vpack.c.b16 %v575, %v574
  %v811 = vpack.c.b16 %v577, %v576
  %v812 = vpack.c.b16 %v579, %v578
  %v813 = vpack.c.b16 %v581, %v580
  %v814 = vpack.c.b16 %v583, %v582
  %v815 = vpack.c.b16 %v585, %v584
  %v816 = vpack.c.b16 %v587, %v586
  %v817 = vpack.c.b16 %v589, %v588
  %v818 = vpack.c.b16 %v591, %v590
  %v819 = vpack.c.b16 %v593, %v592
  %v820 = vpack.c.b16 %v595, %v594
  %v821 = vpack.c.b16 %v597, %v596
  %v822 = vpack.c.b16 %v599, %v598
  %v823 = vpack.c.b16 %v601, %v600
  %v824 = vpack.c.b16 %v603, %v602
  %v825 = vpack.c.b16 %v605, %v604
  %v826 = vpack.c.b16 %v607, %v606
  %v827 = vpack.c.b16 %v609, %v608
  %v828 = vpack.c.b16 %v611, %v610
  %v829 = vpack.c.b16 %v613, %v612
  %v830 = vpack.c.b16 %v615, %v614
  %v831 = vpack.c.b16 %v617, %v616
  %v832 = vpack.c.b16 %v619, %v618
  %v833 = vpack.c.b16 %v621, %v620
  %v834 = vpack.c.b16 %v623, %v622
  %v835 = vpack.c.b16 %v625, %v624
  %v836 = vpack.c.b16 %v627, %v626
  %v837 = vpack.c.b16 %v629, %v628
  %v838 = vpack.c.b16 %v631, %v630
  %v839 = vpack.c.b16 %v633, %v632
  %v840 = vpack.c.b16 %v635, %v634
  %v841 = vpack.c.b16 %v637, %v636
  %v842 = vpack.c.b16 %v639, %v638
  %v843 = vpack.c.b16 %v641, %v640
  %v844 = vpack.c.b16 %v643, %v642
  %v845 = vpack.c.b16 %v645, %v644
  %v846 = vpack.c.b16 %v647, %v646
  %v847 = vpack.c.b16 %v649, %v648
  %v848 = vpack.c.b16 %v651, %v650
  %v849 = vpack.c.b16 %v653, %v652
  %v850 = vpack.c.b16 %v655, %v654
  %v851 = vpack.c.b16 %v657, %v656
  %v852 = vpack.c.b16 %v659, %v658
  %v853 = vpack.c.b16 %v661, %v660
  %v854 = vpack.c.b16 %v663, %v662
  %v855 = vpack.c.b16 %v665, %v664
  %v856 = vpack.c.b16 %v667, %v666
  %v857 = vpack.c.b16 %v669, %v668
  %v858 = vpack.c.b16 %v671, %v670
  %v859 = vpack.c.b16 %v673, %v672
  %v860 = vpack.c.b16 %v675, %v674
  %v861 = vpack.c.b16 %v677, %v676
  %v862 = vpack.c.b16 %v679, %v678
  %v863 = vpack.c.b16 %v681, %v680
  %v864 = vpack.c.b16 %v683, %v682
  %v865 = vpack.c.b16 %v685, %v684
  %v866 = vpack.c.b16 %v687, %v686
  %v867 = vpack.c.b16 %v689, %v688
  %v868 = vpack.c.b16 %v691, %v690
  %v869 = vpack.c.b16 %v693, %v692
  %v870 = vpack.c.b16 %v695, %v694
  %v871 = vpack.c.b16 %v697, %v696
  %v872 = vpack.c.b16 %v699, %v698
  %v873 = vpack.c.b16 %v701, %v700
  %v874 = vpack.c.b16 %v703, %v702
  %v875 = vpack.c.b16 %v705, %v704
  %v876 = vpack.c.b16 %v707, %v706
  %v877 = vpack.c.b16 %v709, %v708
  %v878 = vpack.c.b16 %v711, %v710
  %v879 = vpack.c.b16 %v713, %v712
  %v880 = vpack.c.b16 %v715, %v714
  %v881 = vpack.c.b16 %v717, %v716
  %v882 = vpack.c.b16 %v719, %v718
  %v883 = vpack.c.b16 %v721, %v720
  %v884 = vpack.c.b16 %v723, %v722
  %v885 = vpack.c.b16 %v725, %v724
  %v886 = vpack.c.b16 %v727, %v726
  %v887 = vpack.c.b16 %v729, %v728
  %v888 = vpack.c.b16 %v731, %v730
  %v889 = vpack.c.b16 %v733, %v732
  %v890 = vpack.c.b16 %v735, %v734
  %v891 = vpack.c.b16 %v737, %v736
  %v892 = vpack.c.b16 %v739, %v738
  %v893 = vpack.c.b16 %v741, %v740
  %v894 = vpack.c.b16 %v743, %v742
  %v895 = vpack.c.b16 %v745, %v744
  %v896 = vpack.c.b16 %v747, %v746
  %v897 = vpack.c.b16 %v749, %v748
  %v898 = vpack.c.b16 %v751, %v750
  %v899 = vpack.c.b16 %v753, %v752
  %v900 = vpack.c.b16 %v755, %v754
  %v901 = vpack.c.b16 %v757, %v756
  %v902 = vpack.c.b16 %v759, %v758
  %v903 = vpack.c.b16 %v761, %v760
  %v904 = vpack.c.b16 %v763, %v762
  %v905 = vpack.c.b16 %v765, %v764
  %v906 = vpack.c.b16 %v767, %v766
  %v907 = vpack.c.b16 %v769, %v768
  %v908 = vpack.c.b16 %v771, %v770
  %v909 = vpack.c.b16 %v773, %v772
  %v910 = vpack.c.b16 %v775, %v774
  %v911 = vpack.c.b16 %v777, %v776
  %v912 = vpack.c.b16 %v779, %v778
  %v913 = vpack.c.b16 %v781, %v780
  %v914 = vpack.c.b16 %v783, %v782
  %v915 = vpack.c.b16 %v785, %v784
  %v916 = vpack.c.b16 %v787, %v786
  %v917 = vpack.c.b16 %v789, %v788
  %v922 = vunpack.c.l.b16 %v274
  %v923 = vunpack.c.l.b16 %v275
  %v924 = vunpack.c.l.b16 %v276
  %v925 = vunpack.c.l.b16 %v277
  %v926 = vpack.c.b16 %v923, %v922
  %v927 = vpack.c.b16 %v925, %v924
  %vm930 = vcmask 261120
  %v932 = vsel %vm930, %v790, 0
  %v935 = vsel %vm930, %v791, 0
  %v938 = vsel %vm930, %v792, 0
  %v941 = vsel %vm930, %v793, 0
  %v944 = vsel %vm930, %v794, 0
  %v947 = vsel %vm930, %v795, 0
  %v950 = vsel %vm930, %v796, 0
  %v953 = vsel %vm930, %v797, 0
  %v956 = vsel %vm930, %v798, 0
  %v959 = vsel %vm930, %v799, 0
  %v962 = vsel %vm930, %v800, 0
  %v965 = vsel %vm930, %v801, 0
  %v968 = vsel %vm930, %v802, 0
  %v971 = vsel %vm930, %v803, 0
  %v974 = vsel %vm930, %v804, 0
  %v977 = vsel %vm930, %v805, 0
  %v980 = vsel %vm930, %v806, 0
  %v983 = vsel %vm930, %v807, 0
  %v986 = vsel %vm930, %v808, 0
  %v989 = vsel %vm930, %v809, 0
  %v992 = vsel %vm930, %v810, 0
  %v995 = vsel %vm930, %v811, 0
  %v998 = vsel %vm930, %v812, 0
  %v1001 = vsel %vm930, %v813, 0
  %v1004 = vsel %vm930, %v814, 0
  %v1007 = vsel %vm930, %v815, 0
  %v1010 = vsel %vm930, %v816, 0
  %v1013 = vsel %vm930, %v817, 0
  %v1016 = vsel %vm930, %v818, 0
  %v1019 = vsel %vm930, %v819, 0
  %v1022 = vsel %vm930, %v820, 0
  %v1025 = vsel %vm930, %v821, 0
  %v1028 = vsel %vm930, %v822, 0
  %v1031 = vsel %vm930, %v823, 0
  %v1034 = vsel %vm930, %v824, 0
  %v1037 = vsel %vm930, %v825, 0
  %v1040 = vsel %vm930, %v826, 0
  %v1043 = vsel %vm930, %v827, 0
  %v1046 = vsel %vm930, %v828, 0
  %v1049 = vsel %vm930, %v829, 0
  %v1052 = vsel %vm930, %v830, 0
  %v1055 = vsel %vm930, %v831, 0
  %v1058 = vsel %vm930, %v832, 0
  %v1061 = vsel %vm930, %v833, 0
  %v1064 = vsel %vm930, %v834, 0
  %v1067 = vsel %vm930, %v835, 0
  %v1070 = vsel %vm930, %v836, 0
  %v1073 = vsel %vm930, %v837, 0
  %v1076 = vsel %vm930, %v838, 0
  %v1079 = vsel %vm930, %v839, 0
  %v1082 = vsel %vm930, %v840, 0
  %v1085 = vsel %vm930, %v841, 0
  %v1088 = vsel %vm930, %v842, 0
  %v1091 = vsel %vm930, %v843, 0
  %v1094 = vsel %vm930, %v844, 0
  %v1097 = vsel %vm930, %v845, 0
  %v1100 = vsel %vm930, %v846, 0
  %v1103 = vsel %vm930, %v847, 0
  %v1106 = vsel %vm930, %v848, 0
  %v1109 = vsel %vm930, %v849, 0
  %v1112 = vsel %vm930, %v850, 0
  %v1115 = vsel %vm930, %v851, 0
  %v1118 = vsel %vm930, %v852, 0
  %v1121 = vsel %vm930, %v853, 0
  %v1124 = vsel %vm930, %v854, 0
  %v1127 = vsel %vm930, %v855, 0
  %v1130 = vsel %vm930, %v856, 0
  %v1133 = vsel %vm930, %v857, 0
  %v1136 = vsel %vm930, %v858, 0
  %v1139 = vsel %vm930, %v859, 0
  %v1142 = vsel %vm930, %v860, 0
  %v1145 = vsel %vm930, %v861, 0
  %v1148 = vsel %vm930, %v862, 0
  %v1151 = vsel %vm930, %v863, 0
  %v1154 = vsel %vm930, %v864, 0
  %v1157 = vsel %vm930, %v865, 0
  %v1160 = vsel %vm930, %v866, 0
  %v1163 = vsel %vm930, %v867, 0
  %v1166 = vsel %vm930, %v868, 0
  %v1169 = vsel %vm930, %v869, 0
  %v1172 = vsel %vm930, %v870, 0
  %v1175 = vsel %vm930, %v871, 0
  %v1178 = vsel %vm930, %v872, 0
  %v1181 = vsel %vm930, %v873, 0
  %v1184 = vsel %vm930, %v874, 0
  %v1187 = vsel %vm930, %v875, 0
  %v1190 = vsel %vm930, %v876, 0
  %v1193 = vsel %vm930, %v877, 0
  %v1196 = vsel %vm930, %v878, 0
  %v1199 = vsel %vm930, %v879, 0
  %v1202 = vsel %vm930, %v880, 0
  %v1205 = vsel %vm930, %v881, 0
  %v1208 = vsel %vm930, %v882, 0
  %v1211 = vsel %vm930, %v883, 0
  %v1214 = vsel %vm930, %v884, 0
  %v1217 = vsel %vm930, %v885, 0
  %v1220 = vsel %vm930, %v886, 0
  %v1223 = vsel %vm930, %v887, 0
  %v1226 = vsel %vm930, %v888, 0
  %v1229 = vsel %vm930, %v889, 0
  %v1232 = vsel %vm930, %v890, 0
  %v1235 = vsel %vm930, %v891, 0
  %v1238 = vsel %vm930, %v892, 0
  %v1241 = vsel %vm930, %v893, 0
  %v1244 = vsel %vm930, %v894, 0
  %v1247 = vsel %vm930, %v895, 0
  %v1250 = vsel %vm930, %v896, 0
  %v1253 = vsel %vm930, %v897, 0
  %v1256 = vsel %vm930, %v898, 0
  %v1259 = vsel %vm930, %v899, 0
  %v1262 = vsel %vm930, %v900, 0
  %v1265 = vsel %vm930, %v901, 0
  %v1268 = vsel %vm930, %v902, 0
  %v1271 = vsel %vm930, %v903, 0
  %v1274 = vsel %vm930, %v904, 0
  %v1277 = vsel %vm930, %v905, 0
  %v1280 = vsel %vm930, %v906, 0
  %v1283 = vsel %vm930, %v907, 0
  %v1286 = vsel %vm930, %v908, 0
  %v1289 = vsel %vm930, %v909, 0
  %v1292 = vsel %vm930, %v910, 0
  %v1295 = vsel %vm930, %v911, 0
  %v1298 = vsel %vm930, %v912, 0
  %v1301 = vsel %vm930, %v913, 0
  %v1304 = vsel %vm930, %v914, 0
  %v1307 = vsel %vm930, %v915, 0
  %v1310 = vsel %vm930, %v916, 0
  %v1313 = vsel %vm930, %v917, 0
  %1315 = vmatprep.subr.bf16.mxu0 0
  %1316 = vmatpush1.bf16.msra.mxu0 %v926
  %1317 = vmatprep.subr.bf16.mxu0 0
  %1318 = vmatpush1.bf16.msra.mxu0 %v927
  %1319 = vmatprep.subr.bf16.mxu0 0
  %1320 = vmatpush1.bf16.msra.mxu0 0
  %1321 = vmatprep.subr.bf16.mxu0 0
  %1322 = vmatpush1.bf16.msra.mxu0 0
  %1323 = vmatprep.subr.bf16.mxu0 0
  %1324 = vmatpush1.bf16.msra.mxu0 0
  %1325 = vmatprep.subr.bf16.mxu0 0
  %1326 = vmatpush1.bf16.msra.mxu0 0
  %1327 = vmatprep.subr.bf16.mxu0 0
  %1328 = vmatpush1.bf16.msra.mxu0 0
  %1329 = vmatprep.subr.bf16.mxu0 0
  %1330 = vmatpush1.bf16.msra.mxu0 0
  %1331 = vmatprep.subr.bf16.mxu0 0
  %1332 = vmatpush1.bf16.msra.mxu0 0
  %1333 = vmatprep.subr.bf16.mxu0 0
  %1334 = vmatpush1.bf16.msra.mxu0 0
  %1335 = vmatprep.subr.bf16.mxu0 0
  %1336 = vmatpush1.bf16.msra.mxu0 0
  %1337 = vmatprep.subr.bf16.mxu0 0
  %1338 = vmatpush1.bf16.msra.mxu0 0
  %1339 = vmatprep.subr.bf16.mxu0 0
  %1340 = vmatpush1.bf16.msra.mxu0 0
  %1341 = vmatprep.subr.bf16.mxu0 0
  %1342 = vmatpush1.bf16.msra.mxu0 0
  %1343 = vmatprep.subr.bf16.mxu0 0
  %1344 = vmatpush1.bf16.msra.mxu0 0
  %1345 = vmatprep.subr.bf16.mxu0 0
  %1346 = vmatpush1.bf16.msra.mxu0 0
  %1347 = vmatprep.mubr.bf16.mxu0 0
  %1348 = vmatmul.mubr.bf16.gmra.mrb[0].mxu0 %v932
  %v1349 = vpop.f32.mrb[0].mxu0
  %v1350 = vadd.f32 0.0, %v1349
  %v1351 = vpop.f32.mrb[0].mxu0
  %v1352 = vpop.f32.mrb[0].mxu0
  %v1353 = vadd.f32 0.0, %v1352
  %v1354 = vpop.f32.mrb[0].mxu0
  %1355 = vmatprep.mubr.bf16.mxu0 0
  %1356 = vmatmul.mubr.bf16.gmra.mrb[0].mxu0 %v935
  %v1357 = vpop.f32.mrb[0].mxu0
  %v1358 = vadd.f32 0.0, %v1357
  %v1359 = vpop.f32.mrb[0].mxu0
  %v1360 = vpop.f32.mrb[0].mxu0
  %v1361 = vadd.f32 0.0, %v1360
  %v1362 = vpop.f32.mrb[0].mxu0
  %1363 = vmatprep.mubr.bf16.mxu0 0
  %1364 = vmatmul.mubr.bf16.gmra.mrb[0].mxu0 %v938
  %v1365 = vpop.f32.mrb[0].mxu0
  %v1366 = vadd.f32 0.0, %v1365
  %v1367 = vpop.f32.mrb[0].mxu0
  %v1368 = vpop.f32.mrb[0].mxu0
  %v1369 = vadd.f32 0.0, %v1368
  %v1370 = vpop.f32.mrb[0].mxu0
  %1371 = vmatprep.mubr.bf16.mxu0 0
  %1372 = vmatmul.mubr.bf16.gmra.mrb[0].mxu0 %v941
  %v1373 = vpop.f32.mrb[0].mxu0
  %v1374 = vadd.f32 0.0, %v1373
  %v1375 = vpop.f32.mrb[0].mxu0
  %v1376 = vpop.f32.mrb[0].mxu0
  %v1377 = vadd.f32 0.0, %v1376
  %v1378 = vpop.f32.mrb[0].mxu0
  %1379 = vmatprep.mubr.bf16.mxu0 0
  %1380 = vmatmul.mubr.bf16.gmra.mrb[0].mxu0 %v944
  %v1381 = vpop.f32.mrb[0].mxu0
  %v1382 = vadd.f32 0.0, %v1381
  %v1383 = vpop.f32.mrb[0].mxu0
  %v1384 = vpop.f32.mrb[0].mxu0
  %v1385 = vadd.f32 0.0, %v1384
  %v1386 = vpop.f32.mrb[0].mxu0
  %1387 = vmatprep.mubr.bf16.mxu0 0
  %1388 = vmatmul.mubr.bf16.gmra.mrb[0].mxu0 %v947
  %v1389 = vpop.f32.mrb[0].mxu0
  %v1390 = vadd.f32 0.0, %v1389
  %v1391 = vpop.f32.mrb[0].mxu0
  %v1392 = vpop.f32.mrb[0].mxu0
  %v1393 = vadd.f32 0.0, %v1392
  %v1394 = vpop.f32.mrb[0].mxu0
  %1395 = vmatprep.mubr.bf16.mxu0 0
  %1396 = vmatmul.mubr.bf16.gmra.mrb[0].mxu0 %v950
  %v1397 = vpop.f32.mrb[0].mxu0
  %v1398 = vadd.f32 0.0, %v1397
  %v1399 = vpop.f32.mrb[0].mxu0
  %v1400 = vpop.f32.mrb[0].mxu0
  %v1401 = vadd.f32 0.0, %v1400
  %v1402 = vpop.f32.mrb[0].mxu0
  %1403 = vmatprep.mubr.bf16.mxu0 0
  %1404 = vmatmul.mubr.bf16.gmra.mrb[0].mxu0 %v953
  %v1405 = vpop.f32.mrb[0].mxu0
  %v1406 = vadd.f32 0.0, %v1405
  %v1407 = vpop.f32.mrb[0].mxu0
  %v1408 = vpop.f32.mrb[0].mxu0
  %v1409 = vadd.f32 0.0, %v1408
  %v1410 = vpop.f32.mrb[0].mxu0
  %1411 = vmatprep.mubr.bf16.mxu0 0
  %1412 = vmatmul.mubr.bf16.gmra.mrb[0].mxu0 %v956
  %v1413 = vpop.f32.mrb[0].mxu0
  %v1414 = vadd.f32 0.0, %v1413
  %v1415 = vpop.f32.mrb[0].mxu0
  %v1416 = vpop.f32.mrb[0].mxu0
  %v1417 = vadd.f32 0.0, %v1416
  %v1418 = vpop.f32.mrb[0].mxu0
  %1419 = vmatprep.mubr.bf16.mxu0 0
  %1420 = vmatmul.mubr.bf16.gmra.mrb[0].mxu0 %v959
  %v1421 = vpop.f32.mrb[0].mxu0
  %v1422 = vadd.f32 0.0, %v1421
  %v1423 = vpop.f32.mrb[0].mxu0
  %v1424 = vpop.f32.mrb[0].mxu0
  %v1425 = vadd.f32 0.0, %v1424
  %v1426 = vpop.f32.mrb[0].mxu0
  %1427 = vmatprep.mubr.bf16.mxu0 0
  %1428 = vmatmul.mubr.bf16.gmra.mrb[0].mxu0 %v962
  %v1429 = vpop.f32.mrb[0].mxu0
  %v1430 = vadd.f32 0.0, %v1429
  %v1431 = vpop.f32.mrb[0].mxu0
  %v1432 = vpop.f32.mrb[0].mxu0
  %v1433 = vadd.f32 0.0, %v1432
  %v1434 = vpop.f32.mrb[0].mxu0
  %1435 = vmatprep.mubr.bf16.mxu0 0
  %1436 = vmatmul.mubr.bf16.gmra.mrb[0].mxu0 %v965
  %v1437 = vpop.f32.mrb[0].mxu0
  %v1438 = vadd.f32 0.0, %v1437
  %v1439 = vpop.f32.mrb[0].mxu0
  %v1440 = vpop.f32.mrb[0].mxu0
  %v1441 = vadd.f32 0.0, %v1440
  %v1442 = vpop.f32.mrb[0].mxu0
  %1443 = vmatprep.mubr.bf16.mxu0 0
  %1444 = vmatmul.mubr.bf16.gmra.mrb[0].mxu0 %v968
  %v1445 = vpop.f32.mrb[0].mxu0
  %v1446 = vadd.f32 0.0, %v1445
  %v1447 = vpop.f32.mrb[0].mxu0
  %v1448 = vpop.f32.mrb[0].mxu0
  %v1449 = vadd.f32 0.0, %v1448
  %v1450 = vpop.f32.mrb[0].mxu0
  %1451 = vmatprep.mubr.bf16.mxu0 0
  %1452 = vmatmul.mubr.bf16.gmra.mrb[0].mxu0 %v971
  %v1453 = vpop.f32.mrb[0].mxu0
  %v1454 = vadd.f32 0.0, %v1453
  %v1455 = vpop.f32.mrb[0].mxu0
  %v1456 = vpop.f32.mrb[0].mxu0
  %v1457 = vadd.f32 0.0, %v1456
  %v1458 = vpop.f32.mrb[0].mxu0
  %1459 = vmatprep.mubr.bf16.mxu0 0
  %1460 = vmatmul.mubr.bf16.gmra.mrb[0].mxu0 %v974
  %v1461 = vpop.f32.mrb[0].mxu0
  %v1462 = vadd.f32 0.0, %v1461
  %v1463 = vpop.f32.mrb[0].mxu0
  %v1464 = vpop.f32.mrb[0].mxu0
  %v1465 = vadd.f32 0.0, %v1464
  %v1466 = vpop.f32.mrb[0].mxu0
  %1467 = vmatprep.mubr.bf16.mxu0 0
  %1468 = vmatmul.mubr.bf16.gmra.mrb[0].mxu0 %v977
  %v1469 = vpop.f32.mrb[0].mxu0
  %v1470 = vadd.f32 0.0, %v1469
  %v1471 = vpop.f32.mrb[0].mxu0
  %v1472 = vpop.f32.mrb[0].mxu0
  %v1473 = vadd.f32 0.0, %v1472
  %v1474 = vpop.f32.mrb[0].mxu0
  %1475 = vmatprep.mubr.bf16.mxu0 0
  %1476 = vmatmul.mubr.bf16.gmra.mrb[0].mxu0 %v980
  %v1477 = vpop.f32.mrb[0].mxu0
  %v1478 = vadd.f32 0.0, %v1477
  %v1479 = vpop.f32.mrb[0].mxu0
  %v1480 = vpop.f32.mrb[0].mxu0
  %v1481 = vadd.f32 0.0, %v1480
  %v1482 = vpop.f32.mrb[0].mxu0
  %1483 = vmatprep.mubr.bf16.mxu0 0
  %1484 = vmatmul.mubr.bf16.gmra.mrb[0].mxu0 %v983
  %v1485 = vpop.f32.mrb[0].mxu0
  %v1486 = vadd.f32 0.0, %v1485
  %v1487 = vpop.f32.mrb[0].mxu0
  %v1488 = vpop.f32.mrb[0].mxu0
  %v1489 = vadd.f32 0.0, %v1488
  %v1490 = vpop.f32.mrb[0].mxu0
  %1491 = vmatprep.mubr.bf16.mxu0 0
  %1492 = vmatmul.mubr.bf16.gmra.mrb[0].mxu0 %v986
  %v1493 = vpop.f32.mrb[0].mxu0
  %v1494 = vadd.f32 0.0, %v1493
  %v1495 = vpop.f32.mrb[0].mxu0
  %v1496 = vpop.f32.mrb[0].mxu0
  %v1497 = vadd.f32 0.0, %v1496
  %v1498 = vpop.f32.mrb[0].mxu0
  %1499 = vmatprep.mubr.bf16.mxu0 0
  %1500 = vmatmul.mubr.bf16.gmra.mrb[0].mxu0 %v989
  %v1501 = vpop.f32.mrb[0].mxu0
  %v1502 = vadd.f32 0.0, %v1501
  %v1503 = vpop.f32.mrb[0].mxu0
  %v1504 = vpop.f32.mrb[0].mxu0
  %v1505 = vadd.f32 0.0, %v1504
  %v1506 = vpop.f32.mrb[0].mxu0
  %1507 = vmatprep.mubr.bf16.mxu0 0
  %1508 = vmatmul.mubr.bf16.gmra.mrb[0].mxu0 %v992
  %v1509 = vpop.f32.mrb[0].mxu0
  %v1510 = vadd.f32 0.0, %v1509
  %v1511 = vpop.f32.mrb[0].mxu0
  %v1512 = vpop.f32.mrb[0].mxu0
  %v1513 = vadd.f32 0.0, %v1512
  %v1514 = vpop.f32.mrb[0].mxu0
  %1515 = vmatprep.mubr.bf16.mxu0 0
  %1516 = vmatmul.mubr.bf16.gmra.mrb[0].mxu0 %v995
  %v1517 = vpop.f32.mrb[0].mxu0
  %v1518 = vadd.f32 0.0, %v1517
  %v1519 = vpop.f32.mrb[0].mxu0
  %v1520 = vpop.f32.mrb[0].mxu0
  %v1521 = vadd.f32 0.0, %v1520
  %v1522 = vpop.f32.mrb[0].mxu0
  %1523 = vmatprep.mubr.bf16.mxu0 0
  %1524 = vmatmul.mubr.bf16.gmra.mrb[0].mxu0 %v998
  %v1525 = vpop.f32.mrb[0].mxu0
  %v1526 = vadd.f32 0.0, %v1525
  %v1527 = vpop.f32.mrb[0].mxu0
  %v1528 = vpop.f32.mrb[0].mxu0
  %v1529 = vadd.f32 0.0, %v1528
  %v1530 = vpop.f32.mrb[0].mxu0
  %1531 = vmatprep.mubr.bf16.mxu0 0
  %1532 = vmatmul.mubr.bf16.gmra.mrb[0].mxu0 %v1001
  %v1533 = vpop.f32.mrb[0].mxu0
  %v1534 = vadd.f32 0.0, %v1533
  %v1535 = vpop.f32.mrb[0].mxu0
  %v1536 = vpop.f32.mrb[0].mxu0
  %v1537 = vadd.f32 0.0, %v1536
  %v1538 = vpop.f32.mrb[0].mxu0
  %1539 = vmatprep.mubr.bf16.mxu0 0
  %1540 = vmatmul.mubr.bf16.gmra.mrb[0].mxu0 %v1004
  %v1541 = vpop.f32.mrb[0].mxu0
  %v1542 = vadd.f32 0.0, %v1541
  %v1543 = vpop.f32.mrb[0].mxu0
  %v1544 = vpop.f32.mrb[0].mxu0
  %v1545 = vadd.f32 0.0, %v1544
  %v1546 = vpop.f32.mrb[0].mxu0
  %1547 = vmatprep.mubr.bf16.mxu0 0
  %1548 = vmatmul.mubr.bf16.gmra.mrb[0].mxu0 %v1007
  %v1549 = vpop.f32.mrb[0].mxu0
  %v1550 = vadd.f32 0.0, %v1549
  %v1551 = vpop.f32.mrb[0].mxu0
  %v1552 = vpop.f32.mrb[0].mxu0
  %v1553 = vadd.f32 0.0, %v1552
  %v1554 = vpop.f32.mrb[0].mxu0
  %1555 = vmatprep.mubr.bf16.mxu0 0
  %1556 = vmatmul.mubr.bf16.gmra.mrb[0].mxu0 %v1010
  %v1557 = vpop.f32.mrb[0].mxu0
  %v1558 = vadd.f32 0.0, %v1557
  %v1559 = vpop.f32.mrb[0].mxu0
  %v1560 = vpop.f32.mrb[0].mxu0
  %v1561 = vadd.f32 0.0, %v1560
  %v1562 = vpop.f32.mrb[0].mxu0
  %1563 = vmatprep.mubr.bf16.mxu0 0
  %1564 = vmatmul.mubr.bf16.gmra.mrb[0].mxu0 %v1013
  %v1565 = vpop.f32.mrb[0].mxu0
  %v1566 = vadd.f32 0.0, %v1565
  %v1567 = vpop.f32.mrb[0].mxu0
  %v1568 = vpop.f32.mrb[0].mxu0
  %v1569 = vadd.f32 0.0, %v1568
  %v1570 = vpop.f32.mrb[0].mxu0
  %1571 = vmatprep.mubr.bf16.mxu0 0
  %1572 = vmatmul.mubr.bf16.gmra.mrb[0].mxu0 %v1016
  %v1573 = vpop.f32.mrb[0].mxu0
  %v1574 = vadd.f32 0.0, %v1573
  %v1575 = vpop.f32.mrb[0].mxu0
  %v1576 = vpop.f32.mrb[0].mxu0
  %v1577 = vadd.f32 0.0, %v1576
  %v1578 = vpop.f32.mrb[0].mxu0
  %1579 = vmatprep.mubr.bf16.mxu0 0
  %1580 = vmatmul.mubr.bf16.gmra.mrb[0].mxu0 %v1019
  %v1581 = vpop.f32.mrb[0].mxu0
  %v1582 = vadd.f32 0.0, %v1581
  %v1583 = vpop.f32.mrb[0].mxu0
  %v1584 = vpop.f32.mrb[0].mxu0
  %v1585 = vadd.f32 0.0, %v1584
  %v1586 = vpop.f32.mrb[0].mxu0
  %1587 = vmatprep.mubr.bf16.mxu0 0
  %1588 = vmatmul.mubr.bf16.gmra.mrb[0].mxu0 %v1022
  %v1589 = vpop.f32.mrb[0].mxu0
  %v1590 = vadd.f32 0.0, %v1589
  %v1591 = vpop.f32.mrb[0].mxu0
  %v1592 = vpop.f32.mrb[0].mxu0
  %v1593 = vadd.f32 0.0, %v1592
  %v1594 = vpop.f32.mrb[0].mxu0
  %1595 = vmatprep.mubr.bf16.mxu0 0
  %1596 = vmatmul.mubr.bf16.gmra.mrb[0].mxu0 %v1025
  %v1597 = vpop.f32.mrb[0].mxu0
  %v1598 = vadd.f32 0.0, %v1597
  %v1599 = vpop.f32.mrb[0].mxu0
  %v1600 = vpop.f32.mrb[0].mxu0
  %v1601 = vadd.f32 0.0, %v1600
  %v1602 = vpop.f32.mrb[0].mxu0
  %1603 = vmatprep.mubr.bf16.mxu0 0
  %1604 = vmatmul.mubr.bf16.gmra.mrb[0].mxu0 %v1028
  %v1605 = vpop.f32.mrb[0].mxu0
  %v1606 = vadd.f32 0.0, %v1605
  %v1607 = vpop.f32.mrb[0].mxu0
  %v1608 = vpop.f32.mrb[0].mxu0
  %v1609 = vadd.f32 0.0, %v1608
  %v1610 = vpop.f32.mrb[0].mxu0
  %1611 = vmatprep.mubr.bf16.mxu0 0
  %1612 = vmatmul.mubr.bf16.gmra.mrb[0].mxu0 %v1031
  %v1613 = vpop.f32.mrb[0].mxu0
  %v1614 = vadd.f32 0.0, %v1613
  %v1615 = vpop.f32.mrb[0].mxu0
  %v1616 = vpop.f32.mrb[0].mxu0
  %v1617 = vadd.f32 0.0, %v1616
  %v1618 = vpop.f32.mrb[0].mxu0
  %1619 = vmatprep.mubr.bf16.mxu0 0
  %1620 = vmatmul.mubr.bf16.gmra.mrb[0].mxu0 %v1034
  %v1621 = vpop.f32.mrb[0].mxu0
  %v1622 = vadd.f32 0.0, %v1621
  %v1623 = vpop.f32.mrb[0].mxu0
  %v1624 = vpop.f32.mrb[0].mxu0
  %v1625 = vadd.f32 0.0, %v1624
  %v1626 = vpop.f32.mrb[0].mxu0
  %1627 = vmatprep.mubr.bf16.mxu0 0
  %1628 = vmatmul.mubr.bf16.gmra.mrb[0].mxu0 %v1037
  %v1629 = vpop.f32.mrb[0].mxu0
  %v1630 = vadd.f32 0.0, %v1629
  %v1631 = vpop.f32.mrb[0].mxu0
  %v1632 = vpop.f32.mrb[0].mxu0
  %v1633 = vadd.f32 0.0, %v1632
  %v1634 = vpop.f32.mrb[0].mxu0
  %1635 = vmatprep.mubr.bf16.mxu0 0
  %1636 = vmatmul.mubr.bf16.gmra.mrb[0].mxu0 %v1040
  %v1637 = vpop.f32.mrb[0].mxu0
  %v1638 = vadd.f32 0.0, %v1637
  %v1639 = vpop.f32.mrb[0].mxu0
  %v1640 = vpop.f32.mrb[0].mxu0
  %v1641 = vadd.f32 0.0, %v1640
  %v1642 = vpop.f32.mrb[0].mxu0
  %1643 = vmatprep.mubr.bf16.mxu0 0
  %1644 = vmatmul.mubr.bf16.gmra.mrb[0].mxu0 %v1043
  %v1645 = vpop.f32.mrb[0].mxu0
  %v1646 = vadd.f32 0.0, %v1645
  %v1647 = vpop.f32.mrb[0].mxu0
  %v1648 = vpop.f32.mrb[0].mxu0
  %v1649 = vadd.f32 0.0, %v1648
  %v1650 = vpop.f32.mrb[0].mxu0
  %1651 = vmatprep.mubr.bf16.mxu0 0
  %1652 = vmatmul.mubr.bf16.gmra.mrb[0].mxu0 %v1046
  %v1653 = vpop.f32.mrb[0].mxu0
  %v1654 = vadd.f32 0.0, %v1653
  %v1655 = vpop.f32.mrb[0].mxu0
  %v1656 = vpop.f32.mrb[0].mxu0
  %v1657 = vadd.f32 0.0, %v1656
  %v1658 = vpop.f32.mrb[0].mxu0
  %1659 = vmatprep.mubr.bf16.mxu0 0
  %1660 = vmatmul.mubr.bf16.gmra.mrb[0].mxu0 %v1049
  %v1661 = vpop.f32.mrb[0].mxu0
  %v1662 = vadd.f32 0.0, %v1661
  %v1663 = vpop.f32.mrb[0].mxu0
  %v1664 = vpop.f32.mrb[0].mxu0
  %v1665 = vadd.f32 0.0, %v1664
  %v1666 = vpop.f32.mrb[0].mxu0
  %1667 = vmatprep.mubr.bf16.mxu0 0
  %1668 = vmatmul.mubr.bf16.gmra.mrb[0].mxu0 %v1052
  %v1669 = vpop.f32.mrb[0].mxu0
  %v1670 = vadd.f32 0.0, %v1669
  %v1671 = vpop.f32.mrb[0].mxu0
  %v1672 = vpop.f32.mrb[0].mxu0
  %v1673 = vadd.f32 0.0, %v1672
  %v1674 = vpop.f32.mrb[0].mxu0
  %1675 = vmatprep.mubr.bf16.mxu0 0
  %1676 = vmatmul.mubr.bf16.gmra.mrb[0].mxu0 %v1055
  %v1677 = vpop.f32.mrb[0].mxu0
  %v1678 = vadd.f32 0.0, %v1677
  %v1679 = vpop.f32.mrb[0].mxu0
  %v1680 = vpop.f32.mrb[0].mxu0
  %v1681 = vadd.f32 0.0, %v1680
  %v1682 = vpop.f32.mrb[0].mxu0
  %1683 = vmatprep.mubr.bf16.mxu0 0
  %1684 = vmatmul.mubr.bf16.gmra.mrb[0].mxu0 %v1058
  %v1685 = vpop.f32.mrb[0].mxu0
  %v1686 = vadd.f32 0.0, %v1685
  %v1687 = vpop.f32.mrb[0].mxu0
  %v1688 = vpop.f32.mrb[0].mxu0
  %v1689 = vadd.f32 0.0, %v1688
  %v1690 = vpop.f32.mrb[0].mxu0
  %1691 = vmatprep.mubr.bf16.mxu0 0
  %1692 = vmatmul.mubr.bf16.gmra.mrb[0].mxu0 %v1061
  %v1693 = vpop.f32.mrb[0].mxu0
  %v1694 = vadd.f32 0.0, %v1693
  %v1695 = vpop.f32.mrb[0].mxu0
  %v1696 = vpop.f32.mrb[0].mxu0
  %v1697 = vadd.f32 0.0, %v1696
  %v1698 = vpop.f32.mrb[0].mxu0
  %1699 = vmatprep.mubr.bf16.mxu0 0
  %1700 = vmatmul.mubr.bf16.gmra.mrb[0].mxu0 %v1064
  %v1701 = vpop.f32.mrb[0].mxu0
  %v1702 = vadd.f32 0.0, %v1701
  %v1703 = vpop.f32.mrb[0].mxu0
  %v1704 = vpop.f32.mrb[0].mxu0
  %v1705 = vadd.f32 0.0, %v1704
  %v1706 = vpop.f32.mrb[0].mxu0
  %1707 = vmatprep.mubr.bf16.mxu0 0
  %1708 = vmatmul.mubr.bf16.gmra.mrb[0].mxu0 %v1067
  %v1709 = vpop.f32.mrb[0].mxu0
  %v1710 = vadd.f32 0.0, %v1709
  %v1711 = vpop.f32.mrb[0].mxu0
  %v1712 = vpop.f32.mrb[0].mxu0
  %v1713 = vadd.f32 0.0, %v1712
  %v1714 = vpop.f32.mrb[0].mxu0
  %1715 = vmatprep.mubr.bf16.mxu0 0
  %1716 = vmatmul.mubr.bf16.gmra.mrb[0].mxu0 %v1070
  %v1717 = vpop.f32.mrb[0].mxu0
  %v1718 = vadd.f32 0.0, %v1717
  %v1719 = vpop.f32.mrb[0].mxu0
  %v1720 = vpop.f32.mrb[0].mxu0
  %v1721 = vadd.f32 0.0, %v1720
  %v1722 = vpop.f32.mrb[0].mxu0
  %1723 = vmatprep.mubr.bf16.mxu0 0
  %1724 = vmatmul.mubr.bf16.gmra.mrb[0].mxu0 %v1073
  %v1725 = vpop.f32.mrb[0].mxu0
  %v1726 = vadd.f32 0.0, %v1725
  %v1727 = vpop.f32.mrb[0].mxu0
  %v1728 = vpop.f32.mrb[0].mxu0
  %v1729 = vadd.f32 0.0, %v1728
  %v1730 = vpop.f32.mrb[0].mxu0
  %1731 = vmatprep.mubr.bf16.mxu0 0
  %1732 = vmatmul.mubr.bf16.gmra.mrb[0].mxu0 %v1076
  %v1733 = vpop.f32.mrb[0].mxu0
  %v1734 = vadd.f32 0.0, %v1733
  %v1735 = vpop.f32.mrb[0].mxu0
  %v1736 = vpop.f32.mrb[0].mxu0
  %v1737 = vadd.f32 0.0, %v1736
  %v1738 = vpop.f32.mrb[0].mxu0
  %1739 = vmatprep.mubr.bf16.mxu0 0
  %1740 = vmatmul.mubr.bf16.gmra.mrb[0].mxu0 %v1079
  %v1741 = vpop.f32.mrb[0].mxu0
  %v1742 = vadd.f32 0.0, %v1741
  %v1743 = vpop.f32.mrb[0].mxu0
  %v1744 = vpop.f32.mrb[0].mxu0
  %v1745 = vadd.f32 0.0, %v1744
  %v1746 = vpop.f32.mrb[0].mxu0
  %1747 = vmatprep.mubr.bf16.mxu0 0
  %1748 = vmatmul.mubr.bf16.gmra.mrb[0].mxu0 %v1082
  %v1749 = vpop.f32.mrb[0].mxu0
  %v1750 = vadd.f32 0.0, %v1749
  %v1751 = vpop.f32.mrb[0].mxu0
  %v1752 = vpop.f32.mrb[0].mxu0
  %v1753 = vadd.f32 0.0, %v1752
  %v1754 = vpop.f32.mrb[0].mxu0
  %1755 = vmatprep.mubr.bf16.mxu0 0
  %1756 = vmatmul.mubr.bf16.gmra.mrb[0].mxu0 %v1085
  %v1757 = vpop.f32.mrb[0].mxu0
  %v1758 = vadd.f32 0.0, %v1757
  %v1759 = vpop.f32.mrb[0].mxu0
  %v1760 = vpop.f32.mrb[0].mxu0
  %v1761 = vadd.f32 0.0, %v1760
  %v1762 = vpop.f32.mrb[0].mxu0
  %1763 = vmatprep.mubr.bf16.mxu0 0
  %1764 = vmatmul.mubr.bf16.gmra.mrb[0].mxu0 %v1088
  %v1765 = vpop.f32.mrb[0].mxu0
  %v1766 = vadd.f32 0.0, %v1765
  %v1767 = vpop.f32.mrb[0].mxu0
  %v1768 = vpop.f32.mrb[0].mxu0
  %v1769 = vadd.f32 0.0, %v1768
  %v1770 = vpop.f32.mrb[0].mxu0
  %1771 = vmatprep.mubr.bf16.mxu0 0
  %1772 = vmatmul.mubr.bf16.gmra.mrb[0].mxu0 %v1091
  %v1773 = vpop.f32.mrb[0].mxu0
  %v1774 = vadd.f32 0.0, %v1773
  %v1775 = vpop.f32.mrb[0].mxu0
  %v1776 = vpop.f32.mrb[0].mxu0
  %v1777 = vadd.f32 0.0, %v1776
  %v1778 = vpop.f32.mrb[0].mxu0
  %1779 = vmatprep.mubr.bf16.mxu0 0
  %1780 = vmatmul.mubr.bf16.gmra.mrb[0].mxu0 %v1094
  %v1781 = vpop.f32.mrb[0].mxu0
  %v1782 = vadd.f32 0.0, %v1781
  %v1783 = vpop.f32.mrb[0].mxu0
  %v1784 = vpop.f32.mrb[0].mxu0
  %v1785 = vadd.f32 0.0, %v1784
  %v1786 = vpop.f32.mrb[0].mxu0
  %1787 = vmatprep.mubr.bf16.mxu0 0
  %1788 = vmatmul.mubr.bf16.gmra.mrb[0].mxu0 %v1097
  %v1789 = vpop.f32.mrb[0].mxu0
  %v1790 = vadd.f32 0.0, %v1789
  %v1791 = vpop.f32.mrb[0].mxu0
  %v1792 = vpop.f32.mrb[0].mxu0
  %v1793 = vadd.f32 0.0, %v1792
  %v1794 = vpop.f32.mrb[0].mxu0
  %1795 = vmatprep.mubr.bf16.mxu0 0
  %1796 = vmatmul.mubr.bf16.gmra.mrb[0].mxu0 %v1100
  %v1797 = vpop.f32.mrb[0].mxu0
  %v1798 = vadd.f32 0.0, %v1797
  %v1799 = vpop.f32.mrb[0].mxu0
  %v1800 = vpop.f32.mrb[0].mxu0
  %v1801 = vadd.f32 0.0, %v1800
  %v1802 = vpop.f32.mrb[0].mxu0
  %1803 = vmatprep.mubr.bf16.mxu0 0
  %1804 = vmatmul.mubr.bf16.gmra.mrb[0].mxu0 %v1103
  %v1805 = vpop.f32.mrb[0].mxu0
  %v1806 = vadd.f32 0.0, %v1805
  %v1807 = vpop.f32.mrb[0].mxu0
  %v1808 = vpop.f32.mrb[0].mxu0
  %v1809 = vadd.f32 0.0, %v1808
  %v1810 = vpop.f32.mrb[0].mxu0
  %1811 = vmatprep.mubr.bf16.mxu0 0
  %1812 = vmatmul.mubr.bf16.gmra.mrb[0].mxu0 %v1106
  %v1813 = vpop.f32.mrb[0].mxu0
  %v1814 = vadd.f32 0.0, %v1813
  %v1815 = vpop.f32.mrb[0].mxu0
  %v1816 = vpop.f32.mrb[0].mxu0
  %v1817 = vadd.f32 0.0, %v1816
  %v1818 = vpop.f32.mrb[0].mxu0
  %1819 = vmatprep.mubr.bf16.mxu0 0
  %1820 = vmatmul.mubr.bf16.gmra.mrb[0].mxu0 %v1109
  %v1821 = vpop.f32.mrb[0].mxu0
  %v1822 = vadd.f32 0.0, %v1821
  %v1823 = vpop.f32.mrb[0].mxu0
  %v1824 = vpop.f32.mrb[0].mxu0
  %v1825 = vadd.f32 0.0, %v1824
  %v1826 = vpop.f32.mrb[0].mxu0
  %1827 = vmatprep.mubr.bf16.mxu0 0
  %1828 = vmatmul.mubr.bf16.gmra.mrb[0].mxu0 %v1112
  %v1829 = vpop.f32.mrb[0].mxu0
  %v1830 = vadd.f32 0.0, %v1829
  %v1831 = vpop.f32.mrb[0].mxu0
  %v1832 = vpop.f32.mrb[0].mxu0
  %v1833 = vadd.f32 0.0, %v1832
  %v1834 = vpop.f32.mrb[0].mxu0
  %1835 = vmatprep.mubr.bf16.mxu0 0
  %1836 = vmatmul.mubr.bf16.gmra.mrb[0].mxu0 %v1115
  %v1837 = vpop.f32.mrb[0].mxu0
  %v1838 = vadd.f32 0.0, %v1837
  %v1839 = vpop.f32.mrb[0].mxu0
  %v1840 = vpop.f32.mrb[0].mxu0
  %v1841 = vadd.f32 0.0, %v1840
  %v1842 = vpop.f32.mrb[0].mxu0
  %1843 = vmatprep.mubr.bf16.mxu0 0
  %1844 = vmatmul.mubr.bf16.gmra.mrb[0].mxu0 %v1118
  %v1845 = vpop.f32.mrb[0].mxu0
  %v1846 = vadd.f32 0.0, %v1845
  %v1847 = vpop.f32.mrb[0].mxu0
  %v1848 = vpop.f32.mrb[0].mxu0
  %v1849 = vadd.f32 0.0, %v1848
  %v1850 = vpop.f32.mrb[0].mxu0
  %1851 = vmatprep.mubr.bf16.mxu0 0
  %1852 = vmatmul.mubr.bf16.gmra.mrb[0].mxu0 %v1121
  %v1853 = vpop.f32.mrb[0].mxu0
  %v1854 = vadd.f32 0.0, %v1853
  %v1855 = vpop.f32.mrb[0].mxu0
  %v1856 = vpop.f32.mrb[0].mxu0
  %v1857 = vadd.f32 0.0, %v1856
  %v1858 = vpop.f32.mrb[0].mxu0
  %1859 = vmatprep.mubr.bf16.mxu0 0
  %1860 = vmatmul.mubr.bf16.gmra.mrb[0].mxu0 %v1124
  %v1861 = vpop.f32.mrb[0].mxu0
  %v1862 = vadd.f32 0.0, %v1861
  %v1863 = vpop.f32.mrb[0].mxu0
  %v1864 = vpop.f32.mrb[0].mxu0
  %v1865 = vadd.f32 0.0, %v1864
  %v1866 = vpop.f32.mrb[0].mxu0
  %1867 = vmatprep.mubr.bf16.mxu0 0
  %1868 = vmatmul.mubr.bf16.gmra.mrb[0].mxu0 %v1127
  %v1869 = vpop.f32.mrb[0].mxu0
  %v1870 = vadd.f32 0.0, %v1869
  %v1871 = vpop.f32.mrb[0].mxu0
  %v1872 = vpop.f32.mrb[0].mxu0
  %v1873 = vadd.f32 0.0, %v1872
  %v1874 = vpop.f32.mrb[0].mxu0
  %1875 = vmatprep.mubr.bf16.mxu0 0
  %1876 = vmatmul.mubr.bf16.gmra.mrb[0].mxu0 %v1130
  %v1877 = vpop.f32.mrb[0].mxu0
  %v1878 = vadd.f32 0.0, %v1877
  %v1879 = vpop.f32.mrb[0].mxu0
  %v1880 = vpop.f32.mrb[0].mxu0
  %v1881 = vadd.f32 0.0, %v1880
  %v1882 = vpop.f32.mrb[0].mxu0
  %1883 = vmatprep.mubr.bf16.mxu0 0
  %1884 = vmatmul.mubr.bf16.gmra.mrb[0].mxu0 %v1133
  %v1885 = vpop.f32.mrb[0].mxu0
  %v1886 = vadd.f32 0.0, %v1885
  %v1887 = vpop.f32.mrb[0].mxu0
  %v1888 = vpop.f32.mrb[0].mxu0
  %v1889 = vadd.f32 0.0, %v1888
  %v1890 = vpop.f32.mrb[0].mxu0
  %1891 = vmatprep.mubr.bf16.mxu0 0
  %1892 = vmatmul.mubr.bf16.gmra.mrb[0].mxu0 %v1136
  %v1893 = vpop.f32.mrb[0].mxu0
  %v1894 = vadd.f32 0.0, %v1893
  %v1895 = vpop.f32.mrb[0].mxu0
  %v1896 = vpop.f32.mrb[0].mxu0
  %v1897 = vadd.f32 0.0, %v1896
  %v1898 = vpop.f32.mrb[0].mxu0
  %1899 = vmatprep.mubr.bf16.mxu0 0
  %1900 = vmatmul.mubr.bf16.gmra.mrb[0].mxu0 %v1139
  %v1901 = vpop.f32.mrb[0].mxu0
  %v1902 = vadd.f32 0.0, %v1901
  %v1903 = vpop.f32.mrb[0].mxu0
  %v1904 = vpop.f32.mrb[0].mxu0
  %v1905 = vadd.f32 0.0, %v1904
  %v1906 = vpop.f32.mrb[0].mxu0
  %1907 = vmatprep.mubr.bf16.mxu0 0
  %1908 = vmatmul.mubr.bf16.gmra.mrb[0].mxu0 %v1142
  %v1909 = vpop.f32.mrb[0].mxu0
  %v1910 = vadd.f32 0.0, %v1909
  %v1911 = vpop.f32.mrb[0].mxu0
  %v1912 = vpop.f32.mrb[0].mxu0
  %v1913 = vadd.f32 0.0, %v1912
  %v1914 = vpop.f32.mrb[0].mxu0
  %1915 = vmatprep.mubr.bf16.mxu0 0
  %1916 = vmatmul.mubr.bf16.gmra.mrb[0].mxu0 %v1145
  %v1917 = vpop.f32.mrb[0].mxu0
  %v1918 = vadd.f32 0.0, %v1917
  %v1919 = vpop.f32.mrb[0].mxu0
  %v1920 = vpop.f32.mrb[0].mxu0
  %v1921 = vadd.f32 0.0, %v1920
  %v1922 = vpop.f32.mrb[0].mxu0
  %1923 = vmatprep.mubr.bf16.mxu0 0
  %1924 = vmatmul.mubr.bf16.gmra.mrb[0].mxu0 %v1148
  %v1925 = vpop.f32.mrb[0].mxu0
  %v1926 = vadd.f32 0.0, %v1925
  %v1927 = vpop.f32.mrb[0].mxu0
  %v1928 = vpop.f32.mrb[0].mxu0
  %v1929 = vadd.f32 0.0, %v1928
  %v1930 = vpop.f32.mrb[0].mxu0
  %1931 = vmatprep.mubr.bf16.mxu0 0
  %1932 = vmatmul.mubr.bf16.gmra.mrb[0].mxu0 %v1151
  %v1933 = vpop.f32.mrb[0].mxu0
  %v1934 = vadd.f32 0.0, %v1933
  %v1935 = vpop.f32.mrb[0].mxu0
  %v1936 = vpop.f32.mrb[0].mxu0
  %v1937 = vadd.f32 0.0, %v1936
  %v1938 = vpop.f32.mrb[0].mxu0
  %1939 = vmatprep.mubr.bf16.mxu0 0
  %1940 = vmatmul.mubr.bf16.gmra.mrb[0].mxu0 %v1154
  %v1941 = vpop.f32.mrb[0].mxu0
  %v1942 = vadd.f32 0.0, %v1941
  %v1943 = vpop.f32.mrb[0].mxu0
  %v1944 = vpop.f32.mrb[0].mxu0
  %v1945 = vadd.f32 0.0, %v1944
  %v1946 = vpop.f32.mrb[0].mxu0
  %1947 = vmatprep.mubr.bf16.mxu0 0
  %1948 = vmatmul.mubr.bf16.gmra.mrb[0].mxu0 %v1157
  %v1949 = vpop.f32.mrb[0].mxu0
  %v1950 = vadd.f32 0.0, %v1949
  %v1951 = vpop.f32.mrb[0].mxu0
  %v1952 = vpop.f32.mrb[0].mxu0
  %v1953 = vadd.f32 0.0, %v1952
  %v1954 = vpop.f32.mrb[0].mxu0
  %1955 = vmatprep.mubr.bf16.mxu0 0
  %1956 = vmatmul.mubr.bf16.gmra.mrb[0].mxu0 %v1160
  %v1957 = vpop.f32.mrb[0].mxu0
  %v1958 = vadd.f32 0.0, %v1957
  %v1959 = vpop.f32.mrb[0].mxu0
  %v1960 = vpop.f32.mrb[0].mxu0
  %v1961 = vadd.f32 0.0, %v1960
  %v1962 = vpop.f32.mrb[0].mxu0
  %1963 = vmatprep.mubr.bf16.mxu0 0
  %1964 = vmatmul.mubr.bf16.gmra.mrb[0].mxu0 %v1163
  %v1965 = vpop.f32.mrb[0].mxu0
  %v1966 = vadd.f32 0.0, %v1965
  %v1967 = vpop.f32.mrb[0].mxu0
  %v1968 = vpop.f32.mrb[0].mxu0
  %v1969 = vadd.f32 0.0, %v1968
  %v1970 = vpop.f32.mrb[0].mxu0
  %1971 = vmatprep.mubr.bf16.mxu0 0
  %1972 = vmatmul.mubr.bf16.gmra.mrb[0].mxu0 %v1166
  %v1973 = vpop.f32.mrb[0].mxu0
  %v1974 = vadd.f32 0.0, %v1973
  %v1975 = vpop.f32.mrb[0].mxu0
  %v1976 = vpop.f32.mrb[0].mxu0
  %v1977 = vadd.f32 0.0, %v1976
  %v1978 = vpop.f32.mrb[0].mxu0
  %1979 = vmatprep.mubr.bf16.mxu0 0
  %1980 = vmatmul.mubr.bf16.gmra.mrb[0].mxu0 %v1169
  %v1981 = vpop.f32.mrb[0].mxu0
  %v1982 = vadd.f32 0.0, %v1981
  %v1983 = vpop.f32.mrb[0].mxu0
  %v1984 = vpop.f32.mrb[0].mxu0
  %v1985 = vadd.f32 0.0, %v1984
  %v1986 = vpop.f32.mrb[0].mxu0
  %1987 = vmatprep.mubr.bf16.mxu0 0
  %1988 = vmatmul.mubr.bf16.gmra.mrb[0].mxu0 %v1172
  %v1989 = vpop.f32.mrb[0].mxu0
  %v1990 = vadd.f32 0.0, %v1989
  %v1991 = vpop.f32.mrb[0].mxu0
  %v1992 = vpop.f32.mrb[0].mxu0
  %v1993 = vadd.f32 0.0, %v1992
  %v1994 = vpop.f32.mrb[0].mxu0
  %1995 = vmatprep.mubr.bf16.mxu0 0
  %1996 = vmatmul.mubr.bf16.gmra.mrb[0].mxu0 %v1175
  %v1997 = vpop.f32.mrb[0].mxu0
  %v1998 = vadd.f32 0.0, %v1997
  %v1999 = vpop.f32.mrb[0].mxu0
  %v2000 = vpop.f32.mrb[0].mxu0
  %v2001 = vadd.f32 0.0, %v2000
  %v2002 = vpop.f32.mrb[0].mxu0
  %2003 = vmatprep.mubr.bf16.mxu0 0
  %2004 = vmatmul.mubr.bf16.gmra.mrb[0].mxu0 %v1178
  %v2005 = vpop.f32.mrb[0].mxu0
  %v2006 = vadd.f32 0.0, %v2005
  %v2007 = vpop.f32.mrb[0].mxu0
  %v2008 = vpop.f32.mrb[0].mxu0
  %v2009 = vadd.f32 0.0, %v2008
  %v2010 = vpop.f32.mrb[0].mxu0
  %2011 = vmatprep.mubr.bf16.mxu0 0
  %2012 = vmatmul.mubr.bf16.gmra.mrb[0].mxu0 %v1181
  %v2013 = vpop.f32.mrb[0].mxu0
  %v2014 = vadd.f32 0.0, %v2013
  %v2015 = vpop.f32.mrb[0].mxu0
  %v2016 = vpop.f32.mrb[0].mxu0
  %v2017 = vadd.f32 0.0, %v2016
  %v2018 = vpop.f32.mrb[0].mxu0
  %2019 = vmatprep.mubr.bf16.mxu0 0
  %2020 = vmatmul.mubr.bf16.gmra.mrb[0].mxu0 %v1184
  %v2021 = vpop.f32.mrb[0].mxu0
  %v2022 = vadd.f32 0.0, %v2021
  %v2023 = vpop.f32.mrb[0].mxu0
  %v2024 = vpop.f32.mrb[0].mxu0
  %v2025 = vadd.f32 0.0, %v2024
  %v2026 = vpop.f32.mrb[0].mxu0
  %2027 = vmatprep.mubr.bf16.mxu0 0
  %2028 = vmatmul.mubr.bf16.gmra.mrb[0].mxu0 %v1187
  %v2029 = vpop.f32.mrb[0].mxu0
  %v2030 = vadd.f32 0.0, %v2029
  %v2031 = vpop.f32.mrb[0].mxu0
  %v2032 = vpop.f32.mrb[0].mxu0
  %v2033 = vadd.f32 0.0, %v2032
  %v2034 = vpop.f32.mrb[0].mxu0
  %2035 = vmatprep.mubr.bf16.mxu0 0
  %2036 = vmatmul.mubr.bf16.gmra.mrb[0].mxu0 %v1190
  %v2037 = vpop.f32.mrb[0].mxu0
  %v2038 = vadd.f32 0.0, %v2037
  %v2039 = vpop.f32.mrb[0].mxu0
  %v2040 = vpop.f32.mrb[0].mxu0
  %v2041 = vadd.f32 0.0, %v2040
  %v2042 = vpop.f32.mrb[0].mxu0
  %2043 = vmatprep.mubr.bf16.mxu0 0
  %2044 = vmatmul.mubr.bf16.gmra.mrb[0].mxu0 %v1193
  %v2045 = vpop.f32.mrb[0].mxu0
  %v2046 = vadd.f32 0.0, %v2045
  %v2047 = vpop.f32.mrb[0].mxu0
  %v2048 = vpop.f32.mrb[0].mxu0
  %v2049 = vadd.f32 0.0, %v2048
  %v2050 = vpop.f32.mrb[0].mxu0
  %2051 = vmatprep.mubr.bf16.mxu0 0
  %2052 = vmatmul.mubr.bf16.gmra.mrb[0].mxu0 %v1196
  %v2053 = vpop.f32.mrb[0].mxu0
  %v2054 = vadd.f32 0.0, %v2053
  %v2055 = vpop.f32.mrb[0].mxu0
  %v2056 = vpop.f32.mrb[0].mxu0
  %v2057 = vadd.f32 0.0, %v2056
  %v2058 = vpop.f32.mrb[0].mxu0
  %2059 = vmatprep.mubr.bf16.mxu0 0
  %2060 = vmatmul.mubr.bf16.gmra.mrb[0].mxu0 %v1199
  %v2061 = vpop.f32.mrb[0].mxu0
  %v2062 = vadd.f32 0.0, %v2061
  %v2063 = vpop.f32.mrb[0].mxu0
  %v2064 = vpop.f32.mrb[0].mxu0
  %v2065 = vadd.f32 0.0, %v2064
  %v2066 = vpop.f32.mrb[0].mxu0
  %2067 = vmatprep.mubr.bf16.mxu0 0
  %2068 = vmatmul.mubr.bf16.gmra.mrb[0].mxu0 %v1202
  %v2069 = vpop.f32.mrb[0].mxu0
  %v2070 = vadd.f32 0.0, %v2069
  %v2071 = vpop.f32.mrb[0].mxu0
  %v2072 = vpop.f32.mrb[0].mxu0
  %v2073 = vadd.f32 0.0, %v2072
  %v2074 = vpop.f32.mrb[0].mxu0
  %2075 = vmatprep.mubr.bf16.mxu0 0
  %2076 = vmatmul.mubr.bf16.gmra.mrb[0].mxu0 %v1205
  %v2077 = vpop.f32.mrb[0].mxu0
  %v2078 = vadd.f32 0.0, %v2077
  %v2079 = vpop.f32.mrb[0].mxu0
  %v2080 = vpop.f32.mrb[0].mxu0
  %v2081 = vadd.f32 0.0, %v2080
  %v2082 = vpop.f32.mrb[0].mxu0
  %2083 = vmatprep.mubr.bf16.mxu0 0
  %2084 = vmatmul.mubr.bf16.gmra.mrb[0].mxu0 %v1208
  %v2085 = vpop.f32.mrb[0].mxu0
  %v2086 = vadd.f32 0.0, %v2085
  %v2087 = vpop.f32.mrb[0].mxu0
  %v2088 = vpop.f32.mrb[0].mxu0
  %v2089 = vadd.f32 0.0, %v2088
  %v2090 = vpop.f32.mrb[0].mxu0
  %2091 = vmatprep.mubr.bf16.mxu0 0
  %2092 = vmatmul.mubr.bf16.gmra.mrb[0].mxu0 %v1211
  %v2093 = vpop.f32.mrb[0].mxu0
  %v2094 = vadd.f32 0.0, %v2093
  %v2095 = vpop.f32.mrb[0].mxu0
  %v2096 = vpop.f32.mrb[0].mxu0
  %v2097 = vadd.f32 0.0, %v2096
  %v2098 = vpop.f32.mrb[0].mxu0
  %2099 = vmatprep.mubr.bf16.mxu0 0
  %2100 = vmatmul.mubr.bf16.gmra.mrb[0].mxu0 %v1214
  %v2101 = vpop.f32.mrb[0].mxu0
  %v2102 = vadd.f32 0.0, %v2101
  %v2103 = vpop.f32.mrb[0].mxu0
  %v2104 = vpop.f32.mrb[0].mxu0
  %v2105 = vadd.f32 0.0, %v2104
  %v2106 = vpop.f32.mrb[0].mxu0
  %2107 = vmatprep.mubr.bf16.mxu0 0
  %2108 = vmatmul.mubr.bf16.gmra.mrb[0].mxu0 %v1217
  %v2109 = vpop.f32.mrb[0].mxu0
  %v2110 = vadd.f32 0.0, %v2109
  %v2111 = vpop.f32.mrb[0].mxu0
  %v2112 = vpop.f32.mrb[0].mxu0
  %v2113 = vadd.f32 0.0, %v2112
  %v2114 = vpop.f32.mrb[0].mxu0
  %2115 = vmatprep.mubr.bf16.mxu0 0
  %2116 = vmatmul.mubr.bf16.gmra.mrb[0].mxu0 %v1220
  %v2117 = vpop.f32.mrb[0].mxu0
  %v2118 = vadd.f32 0.0, %v2117
  %v2119 = vpop.f32.mrb[0].mxu0
  %v2120 = vpop.f32.mrb[0].mxu0
  %v2121 = vadd.f32 0.0, %v2120
  %v2122 = vpop.f32.mrb[0].mxu0
  %2123 = vmatprep.mubr.bf16.mxu0 0
  %2124 = vmatmul.mubr.bf16.gmra.mrb[0].mxu0 %v1223
  %v2125 = vpop.f32.mrb[0].mxu0
  %v2126 = vadd.f32 0.0, %v2125
  %v2127 = vpop.f32.mrb[0].mxu0
  %v2128 = vpop.f32.mrb[0].mxu0
  %v2129 = vadd.f32 0.0, %v2128
  %v2130 = vpop.f32.mrb[0].mxu0
  %2131 = vmatprep.mubr.bf16.mxu0 0
  %2132 = vmatmul.mubr.bf16.gmra.mrb[0].mxu0 %v1226
  %v2133 = vpop.f32.mrb[0].mxu0
  %v2134 = vadd.f32 0.0, %v2133
  %v2135 = vpop.f32.mrb[0].mxu0
  %v2136 = vpop.f32.mrb[0].mxu0
  %v2137 = vadd.f32 0.0, %v2136
  %v2138 = vpop.f32.mrb[0].mxu0
  %2139 = vmatprep.mubr.bf16.mxu0 0
  %2140 = vmatmul.mubr.bf16.gmra.mrb[0].mxu0 %v1229
  %v2141 = vpop.f32.mrb[0].mxu0
  %v2142 = vadd.f32 0.0, %v2141
  %v2143 = vpop.f32.mrb[0].mxu0
  %v2144 = vpop.f32.mrb[0].mxu0
  %v2145 = vadd.f32 0.0, %v2144
  %v2146 = vpop.f32.mrb[0].mxu0
  %2147 = vmatprep.mubr.bf16.mxu0 0
  %2148 = vmatmul.mubr.bf16.gmra.mrb[0].mxu0 %v1232
  %v2149 = vpop.f32.mrb[0].mxu0
  %v2150 = vadd.f32 0.0, %v2149
  %v2151 = vpop.f32.mrb[0].mxu0
  %v2152 = vpop.f32.mrb[0].mxu0
  %v2153 = vadd.f32 0.0, %v2152
  %v2154 = vpop.f32.mrb[0].mxu0
  %2155 = vmatprep.mubr.bf16.mxu0 0
  %2156 = vmatmul.mubr.bf16.gmra.mrb[0].mxu0 %v1235
  %v2157 = vpop.f32.mrb[0].mxu0
  %v2158 = vadd.f32 0.0, %v2157
  %v2159 = vpop.f32.mrb[0].mxu0
  %v2160 = vpop.f32.mrb[0].mxu0
  %v2161 = vadd.f32 0.0, %v2160
  %v2162 = vpop.f32.mrb[0].mxu0
  %2163 = vmatprep.mubr.bf16.mxu0 0
  %2164 = vmatmul.mubr.bf16.gmra.mrb[0].mxu0 %v1238
  %v2165 = vpop.f32.mrb[0].mxu0
  %v2166 = vadd.f32 0.0, %v2165
  %v2167 = vpop.f32.mrb[0].mxu0
  %v2168 = vpop.f32.mrb[0].mxu0
  %v2169 = vadd.f32 0.0, %v2168
  %v2170 = vpop.f32.mrb[0].mxu0
  %2171 = vmatprep.mubr.bf16.mxu0 0
  %2172 = vmatmul.mubr.bf16.gmra.mrb[0].mxu0 %v1241
  %v2173 = vpop.f32.mrb[0].mxu0
  %v2174 = vadd.f32 0.0, %v2173
  %v2175 = vpop.f32.mrb[0].mxu0
  %v2176 = vpop.f32.mrb[0].mxu0
  %v2177 = vadd.f32 0.0, %v2176
  %v2178 = vpop.f32.mrb[0].mxu0
  %2179 = vmatprep.mubr.bf16.mxu0 0
  %2180 = vmatmul.mubr.bf16.gmra.mrb[0].mxu0 %v1244
  %v2181 = vpop.f32.mrb[0].mxu0
  %v2182 = vadd.f32 0.0, %v2181
  %v2183 = vpop.f32.mrb[0].mxu0
  %v2184 = vpop.f32.mrb[0].mxu0
  %v2185 = vadd.f32 0.0, %v2184
  %v2186 = vpop.f32.mrb[0].mxu0
  %2187 = vmatprep.mubr.bf16.mxu0 0
  %2188 = vmatmul.mubr.bf16.gmra.mrb[0].mxu0 %v1247
  %v2189 = vpop.f32.mrb[0].mxu0
  %v2190 = vadd.f32 0.0, %v2189
  %v2191 = vpop.f32.mrb[0].mxu0
  %v2192 = vpop.f32.mrb[0].mxu0
  %v2193 = vadd.f32 0.0, %v2192
  %v2194 = vpop.f32.mrb[0].mxu0
  %2195 = vmatprep.mubr.bf16.mxu0 0
  %2196 = vmatmul.mubr.bf16.gmra.mrb[0].mxu0 %v1250
  %v2197 = vpop.f32.mrb[0].mxu0
  %v2198 = vadd.f32 0.0, %v2197
  %v2199 = vpop.f32.mrb[0].mxu0
  %v2200 = vpop.f32.mrb[0].mxu0
  %v2201 = vadd.f32 0.0, %v2200
  %v2202 = vpop.f32.mrb[0].mxu0
  %2203 = vmatprep.mubr.bf16.mxu0 0
  %2204 = vmatmul.mubr.bf16.gmra.mrb[0].mxu0 %v1253
  %v2205 = vpop.f32.mrb[0].mxu0
  %v2206 = vadd.f32 0.0, %v2205
  %v2207 = vpop.f32.mrb[0].mxu0
  %v2208 = vpop.f32.mrb[0].mxu0
  %v2209 = vadd.f32 0.0, %v2208
  %v2210 = vpop.f32.mrb[0].mxu0
  %2211 = vmatprep.mubr.bf16.mxu0 0
  %2212 = vmatmul.mubr.bf16.gmra.mrb[0].mxu0 %v1256
  %v2213 = vpop.f32.mrb[0].mxu0
  %v2214 = vadd.f32 0.0, %v2213
  %v2215 = vpop.f32.mrb[0].mxu0
  %v2216 = vpop.f32.mrb[0].mxu0
  %v2217 = vadd.f32 0.0, %v2216
  %v2218 = vpop.f32.mrb[0].mxu0
  %2219 = vmatprep.mubr.bf16.mxu0 0
  %2220 = vmatmul.mubr.bf16.gmra.mrb[0].mxu0 %v1259
  %v2221 = vpop.f32.mrb[0].mxu0
  %v2222 = vadd.f32 0.0, %v2221
  %v2223 = vpop.f32.mrb[0].mxu0
  %v2224 = vpop.f32.mrb[0].mxu0
  %v2225 = vadd.f32 0.0, %v2224
  %v2226 = vpop.f32.mrb[0].mxu0
  %2227 = vmatprep.mubr.bf16.mxu0 0
  %2228 = vmatmul.mubr.bf16.gmra.mrb[0].mxu0 %v1262
  %v2229 = vpop.f32.mrb[0].mxu0
  %v2230 = vadd.f32 0.0, %v2229
  %v2231 = vpop.f32.mrb[0].mxu0
  %v2232 = vpop.f32.mrb[0].mxu0
  %v2233 = vadd.f32 0.0, %v2232
  %v2234 = vpop.f32.mrb[0].mxu0
  %2235 = vmatprep.mubr.bf16.mxu0 0
  %2236 = vmatmul.mubr.bf16.gmra.mrb[0].mxu0 %v1265
  %v2237 = vpop.f32.mrb[0].mxu0
  %v2238 = vadd.f32 0.0, %v2237
  %v2239 = vpop.f32.mrb[0].mxu0
  %v2240 = vpop.f32.mrb[0].mxu0
  %v2241 = vadd.f32 0.0, %v2240
  %v2242 = vpop.f32.mrb[0].mxu0
  %2243 = vmatprep.mubr.bf16.mxu0 0
  %2244 = vmatmul.mubr.bf16.gmra.mrb[0].mxu0 %v1268
  %v2245 = vpop.f32.mrb[0].mxu0
  %v2246 = vadd.f32 0.0, %v2245
  %v2247 = vpop.f32.mrb[0].mxu0
  %v2248 = vpop.f32.mrb[0].mxu0
  %v2249 = vadd.f32 0.0, %v2248
  %v2250 = vpop.f32.mrb[0].mxu0
  %2251 = vmatprep.mubr.bf16.mxu0 0
  %2252 = vmatmul.mubr.bf16.gmra.mrb[0].mxu0 %v1271
  %v2253 = vpop.f32.mrb[0].mxu0
  %v2254 = vadd.f32 0.0, %v2253
  %v2255 = vpop.f32.mrb[0].mxu0
  %v2256 = vpop.f32.mrb[0].mxu0
  %v2257 = vadd.f32 0.0, %v2256
  %v2258 = vpop.f32.mrb[0].mxu0
  %2259 = vmatprep.mubr.bf16.mxu0 0
  %2260 = vmatmul.mubr.bf16.gmra.mrb[0].mxu0 %v1274
  %v2261 = vpop.f32.mrb[0].mxu0
  %v2262 = vadd.f32 0.0, %v2261
  %v2263 = vpop.f32.mrb[0].mxu0
  %v2264 = vpop.f32.mrb[0].mxu0
  %v2265 = vadd.f32 0.0, %v2264
  %v2266 = vpop.f32.mrb[0].mxu0
  %2267 = vmatprep.mubr.bf16.mxu0 0
  %2268 = vmatmul.mubr.bf16.gmra.mrb[0].mxu0 %v1277
  %v2269 = vpop.f32.mrb[0].mxu0
  %v2270 = vadd.f32 0.0, %v2269
  %v2271 = vpop.f32.mrb[0].mxu0
  %v2272 = vpop.f32.mrb[0].mxu0
  %v2273 = vadd.f32 0.0, %v2272
  %v2274 = vpop.f32.mrb[0].mxu0
  %2275 = vmatprep.mubr.bf16.mxu0 0
  %2276 = vmatmul.mubr.bf16.gmra.mrb[0].mxu0 %v1280
  %v2277 = vpop.f32.mrb[0].mxu0
  %v2278 = vadd.f32 0.0, %v2277
  %v2279 = vpop.f32.mrb[0].mxu0
  %v2280 = vpop.f32.mrb[0].mxu0
  %v2281 = vadd.f32 0.0, %v2280
  %v2282 = vpop.f32.mrb[0].mxu0
  %2283 = vmatprep.mubr.bf16.mxu0 0
  %2284 = vmatmul.mubr.bf16.gmra.mrb[0].mxu0 %v1283
  %v2285 = vpop.f32.mrb[0].mxu0
  %v2286 = vadd.f32 0.0, %v2285
  %v2287 = vpop.f32.mrb[0].mxu0
  %v2288 = vpop.f32.mrb[0].mxu0
  %v2289 = vadd.f32 0.0, %v2288
  %v2290 = vpop.f32.mrb[0].mxu0
  %2291 = vmatprep.mubr.bf16.mxu0 0
  %2292 = vmatmul.mubr.bf16.gmra.mrb[0].mxu0 %v1286
  %v2293 = vpop.f32.mrb[0].mxu0
  %v2294 = vadd.f32 0.0, %v2293
  %v2295 = vpop.f32.mrb[0].mxu0
  %v2296 = vpop.f32.mrb[0].mxu0
  %v2297 = vadd.f32 0.0, %v2296
  %v2298 = vpop.f32.mrb[0].mxu0
  %2299 = vmatprep.mubr.bf16.mxu0 0
  %2300 = vmatmul.mubr.bf16.gmra.mrb[0].mxu0 %v1289
  %v2301 = vpop.f32.mrb[0].mxu0
  %v2302 = vadd.f32 0.0, %v2301
  %v2303 = vpop.f32.mrb[0].mxu0
  %v2304 = vpop.f32.mrb[0].mxu0
  %v2305 = vadd.f32 0.0, %v2304
  %v2306 = vpop.f32.mrb[0].mxu0
  %2307 = vmatprep.mubr.bf16.mxu0 0
  %2308 = vmatmul.mubr.bf16.gmra.mrb[0].mxu0 %v1292
  %v2309 = vpop.f32.mrb[0].mxu0
  %v2310 = vadd.f32 0.0, %v2309
  %v2311 = vpop.f32.mrb[0].mxu0
  %v2312 = vpop.f32.mrb[0].mxu0
  %v2313 = vadd.f32 0.0, %v2312
  %v2314 = vpop.f32.mrb[0].mxu0
  %2315 = vmatprep.mubr.bf16.mxu0 0
  %2316 = vmatmul.mubr.bf16.gmra.mrb[0].mxu0 %v1295
  %v2317 = vpop.f32.mrb[0].mxu0
  %v2318 = vadd.f32 0.0, %v2317
  %v2319 = vpop.f32.mrb[0].mxu0
  %v2320 = vpop.f32.mrb[0].mxu0
  %v2321 = vadd.f32 0.0, %v2320
  %v2322 = vpop.f32.mrb[0].mxu0
  %2323 = vmatprep.mubr.bf16.mxu0 0
  %2324 = vmatmul.mubr.bf16.gmra.mrb[0].mxu0 %v1298
  %v2325 = vpop.f32.mrb[0].mxu0
  %v2326 = vadd.f32 0.0, %v2325
  %v2327 = vpop.f32.mrb[0].mxu0
  %v2328 = vpop.f32.mrb[0].mxu0
  %v2329 = vadd.f32 0.0, %v2328
  %v2330 = vpop.f32.mrb[0].mxu0
  %2331 = vmatprep.mubr.bf16.mxu0 0
  %2332 = vmatmul.mubr.bf16.gmra.mrb[0].mxu0 %v1301
  %v2333 = vpop.f32.mrb[0].mxu0
  %v2334 = vadd.f32 0.0, %v2333
  %v2335 = vpop.f32.mrb[0].mxu0
  %v2336 = vpop.f32.mrb[0].mxu0
  %v2337 = vadd.f32 0.0, %v2336
  %v2338 = vpop.f32.mrb[0].mxu0
  %2339 = vmatprep.mubr.bf16.mxu0 0
  %2340 = vmatmul.mubr.bf16.gmra.mrb[0].mxu0 %v1304
  %v2341 = vpop.f32.mrb[0].mxu0
  %v2342 = vadd.f32 0.0, %v2341
  %v2343 = vpop.f32.mrb[0].mxu0
  %v2344 = vpop.f32.mrb[0].mxu0
  %v2345 = vadd.f32 0.0, %v2344
  %v2346 = vpop.f32.mrb[0].mxu0
  %2347 = vmatprep.mubr.bf16.mxu0 0
  %2348 = vmatmul.mubr.bf16.gmra.mrb[0].mxu0 %v1307
  %v2349 = vpop.f32.mrb[0].mxu0
  %v2350 = vadd.f32 0.0, %v2349
  %v2351 = vpop.f32.mrb[0].mxu0
  %v2352 = vpop.f32.mrb[0].mxu0
  %v2353 = vadd.f32 0.0, %v2352
  %v2354 = vpop.f32.mrb[0].mxu0
  %2355 = vmatprep.mubr.bf16.mxu0 0
  %2356 = vmatmul.mubr.bf16.gmra.mrb[0].mxu0 %v1310
  %v2357 = vpop.f32.mrb[0].mxu0
  %v2358 = vadd.f32 0.0, %v2357
  %v2359 = vpop.f32.mrb[0].mxu0
  %v2360 = vpop.f32.mrb[0].mxu0
  %v2361 = vadd.f32 0.0, %v2360
  %v2362 = vpop.f32.mrb[0].mxu0
  %2363 = vmatprep.mubr.bf16.mxu0 0
  %2364 = vmatmul.mubr.bf16.gmra.mrb[0].mxu0 %v1313
  %v2365 = vpop.f32.mrb[0].mxu0
  %v2366 = vadd.f32 0.0, %v2365
  %v2367 = vpop.f32.mrb[0].mxu0
  %v2368 = vpop.f32.mrb[0].mxu0
  %v2369 = vadd.f32 0.0, %v2368
  %v2370 = vpop.f32.mrb[0].mxu0
  %2371 = vdwg.mxu0
  %v2372 = vsel %vm930, %v1350, 0.0
  %v2373 = vsel %vm930, %v1353, 0.0
  %v2374 = vadd.f32 %v2372, %v2373
  %v2375 = vsel %vm930, %v1358, 0.0
  %v2376 = vadd.f32 %v2374, %v2375
  %v2377 = vsel %vm930, %v1361, 0.0
  %v2378 = vadd.f32 %v2376, %v2377
  %v2379 = vsel %vm930, %v1366, 0.0
  %v2380 = vadd.f32 %v2378, %v2379
  %v2381 = vsel %vm930, %v1369, 0.0
  %v2382 = vadd.f32 %v2380, %v2381
  %v2383 = vsel %vm930, %v1374, 0.0
  %v2384 = vadd.f32 %v2382, %v2383
  %v2385 = vsel %vm930, %v1377, 0.0
  %v2386 = vadd.f32 %v2384, %v2385
  %v2387 = vsel %vm930, %v1382, 0.0
  %v2388 = vadd.f32 %v2386, %v2387
  %v2389 = vsel %vm930, %v1385, 0.0
  %v2390 = vadd.f32 %v2388, %v2389
  %v2391 = vsel %vm930, %v1390, 0.0
  %v2392 = vadd.f32 %v2390, %v2391
  %v2393 = vsel %vm930, %v1393, 0.0
  %v2394 = vadd.f32 %v2392, %v2393
  %v2395 = vsel %vm930, %v1398, 0.0
  %v2396 = vadd.f32 %v2394, %v2395
  %v2397 = vsel %vm930, %v1401, 0.0
  %v2398 = vadd.f32 %v2396, %v2397
  %v2399 = vsel %vm930, %v1406, 0.0
  %v2400 = vadd.f32 %v2398, %v2399
  %v2401 = vsel %vm930, %v1409, 0.0
  %v2402 = vadd.f32 %v2400, %v2401
  %v2403 = vsel %vm930, %v1414, 0.0
  %v2404 = vadd.f32 %v2402, %v2403
  %v2405 = vsel %vm930, %v1417, 0.0
  %v2406 = vadd.f32 %v2404, %v2405
  %v2407 = vsel %vm930, %v1422, 0.0
  %v2408 = vadd.f32 %v2406, %v2407
  %v2409 = vsel %vm930, %v1425, 0.0
  %v2410 = vadd.f32 %v2408, %v2409
  %v2411 = vsel %vm930, %v1430, 0.0
  %v2412 = vadd.f32 %v2410, %v2411
  %v2413 = vsel %vm930, %v1433, 0.0
  %v2414 = vadd.f32 %v2412, %v2413
  %v2415 = vsel %vm930, %v1438, 0.0
  %v2416 = vadd.f32 %v2414, %v2415
  %v2417 = vsel %vm930, %v1441, 0.0
  %v2418 = vadd.f32 %v2416, %v2417
  %v2419 = vsel %vm930, %v1446, 0.0
  %v2420 = vadd.f32 %v2418, %v2419
  %v2421 = vsel %vm930, %v1449, 0.0
  %v2422 = vadd.f32 %v2420, %v2421
  %v2423 = vsel %vm930, %v1454, 0.0
  %v2424 = vadd.f32 %v2422, %v2423
  %v2425 = vsel %vm930, %v1457, 0.0
  %v2426 = vadd.f32 %v2424, %v2425
  %v2427 = vsel %vm930, %v1462, 0.0
  %v2428 = vadd.f32 %v2426, %v2427
  %v2429 = vsel %vm930, %v1465, 0.0
  %v2430 = vadd.f32 %v2428, %v2429
  %v2431 = vsel %vm930, %v1470, 0.0
  %v2432 = vadd.f32 %v2430, %v2431
  %v2433 = vsel %vm930, %v1473, 0.0
  %v2434 = vadd.f32 %v2432, %v2433
  %v2435 = vsel %vm930, %v1478, 0.0
  %v2436 = vadd.f32 %v2434, %v2435
  %v2437 = vsel %vm930, %v1481, 0.0
  %v2438 = vadd.f32 %v2436, %v2437
  %v2439 = vsel %vm930, %v1486, 0.0
  %v2440 = vadd.f32 %v2438, %v2439
  %v2441 = vsel %vm930, %v1489, 0.0
  %v2442 = vadd.f32 %v2440, %v2441
  %v2443 = vsel %vm930, %v1494, 0.0
  %v2444 = vadd.f32 %v2442, %v2443
  %v2445 = vsel %vm930, %v1497, 0.0
  %v2446 = vadd.f32 %v2444, %v2445
  %v2447 = vsel %vm930, %v1502, 0.0
  %v2448 = vadd.f32 %v2446, %v2447
  %v2449 = vsel %vm930, %v1505, 0.0
  %v2450 = vadd.f32 %v2448, %v2449
  %v2451 = vsel %vm930, %v1510, 0.0
  %v2452 = vadd.f32 %v2450, %v2451
  %v2453 = vsel %vm930, %v1513, 0.0
  %v2454 = vadd.f32 %v2452, %v2453
  %v2455 = vsel %vm930, %v1518, 0.0
  %v2456 = vadd.f32 %v2454, %v2455
  %v2457 = vsel %vm930, %v1521, 0.0
  %v2458 = vadd.f32 %v2456, %v2457
  %v2459 = vsel %vm930, %v1526, 0.0
  %v2460 = vadd.f32 %v2458, %v2459
  %v2461 = vsel %vm930, %v1529, 0.0
  %v2462 = vadd.f32 %v2460, %v2461
  %v2463 = vsel %vm930, %v1534, 0.0
  %v2464 = vadd.f32 %v2462, %v2463
  %v2465 = vsel %vm930, %v1537, 0.0
  %v2466 = vadd.f32 %v2464, %v2465
  %v2467 = vsel %vm930, %v1542, 0.0
  %v2468 = vadd.f32 %v2466, %v2467
  %v2469 = vsel %vm930, %v1545, 0.0
  %v2470 = vadd.f32 %v2468, %v2469
  %v2471 = vsel %vm930, %v1550, 0.0
  %v2472 = vadd.f32 %v2470, %v2471
  %v2473 = vsel %vm930, %v1553, 0.0
  %v2474 = vadd.f32 %v2472, %v2473
  %v2475 = vsel %vm930, %v1558, 0.0
  %v2476 = vadd.f32 %v2474, %v2475
  %v2477 = vsel %vm930, %v1561, 0.0
  %v2478 = vadd.f32 %v2476, %v2477
  %v2479 = vsel %vm930, %v1566, 0.0
  %v2480 = vadd.f32 %v2478, %v2479
  %v2481 = vsel %vm930, %v1569, 0.0
  %v2482 = vadd.f32 %v2480, %v2481
  %v2483 = vsel %vm930, %v1574, 0.0
  %v2484 = vadd.f32 %v2482, %v2483
  %v2485 = vsel %vm930, %v1577, 0.0
  %v2486 = vadd.f32 %v2484, %v2485
  %v2487 = vsel %vm930, %v1582, 0.0
  %v2488 = vadd.f32 %v2486, %v2487
  %v2489 = vsel %vm930, %v1585, 0.0
  %v2490 = vadd.f32 %v2488, %v2489
  %v2491 = vsel %vm930, %v1590, 0.0
  %v2492 = vadd.f32 %v2490, %v2491
  %v2493 = vsel %vm930, %v1593, 0.0
  %v2494 = vadd.f32 %v2492, %v2493
  %v2495 = vsel %vm930, %v1598, 0.0
  %v2496 = vadd.f32 %v2494, %v2495
  %v2497 = vsel %vm930, %v1601, 0.0
  %v2498 = vadd.f32 %v2496, %v2497
  %v2499 = vsel %vm930, %v1606, 0.0
  %v2500 = vadd.f32 %v2498, %v2499
  %v2501 = vsel %vm930, %v1609, 0.0
  %v2502 = vadd.f32 %v2500, %v2501
  %v2503 = vsel %vm930, %v1614, 0.0
  %v2504 = vadd.f32 %v2502, %v2503
  %v2505 = vsel %vm930, %v1617, 0.0
  %v2506 = vadd.f32 %v2504, %v2505
  %v2507 = vsel %vm930, %v1622, 0.0
  %v2508 = vadd.f32 %v2506, %v2507
  %v2509 = vsel %vm930, %v1625, 0.0
  %v2510 = vadd.f32 %v2508, %v2509
  %v2511 = vsel %vm930, %v1630, 0.0
  %v2512 = vadd.f32 %v2510, %v2511
  %v2513 = vsel %vm930, %v1633, 0.0
  %v2514 = vadd.f32 %v2512, %v2513
  %v2515 = vsel %vm930, %v1638, 0.0
  %v2516 = vadd.f32 %v2514, %v2515
  %v2517 = vsel %vm930, %v1641, 0.0
  %v2518 = vadd.f32 %v2516, %v2517
  %v2519 = vsel %vm930, %v1646, 0.0
  %v2520 = vadd.f32 %v2518, %v2519
  %v2521 = vsel %vm930, %v1649, 0.0
  %v2522 = vadd.f32 %v2520, %v2521
  %v2523 = vsel %vm930, %v1654, 0.0
  %v2524 = vadd.f32 %v2522, %v2523
  %v2525 = vsel %vm930, %v1657, 0.0
  %v2526 = vadd.f32 %v2524, %v2525
  %v2527 = vsel %vm930, %v1662, 0.0
  %v2528 = vadd.f32 %v2526, %v2527
  %v2529 = vsel %vm930, %v1665, 0.0
  %v2530 = vadd.f32 %v2528, %v2529
  %v2531 = vsel %vm930, %v1670, 0.0
  %v2532 = vadd.f32 %v2530, %v2531
  %v2533 = vsel %vm930, %v1673, 0.0
  %v2534 = vadd.f32 %v2532, %v2533
  %v2535 = vsel %vm930, %v1678, 0.0
  %v2536 = vadd.f32 %v2534, %v2535
  %v2537 = vsel %vm930, %v1681, 0.0
  %v2538 = vadd.f32 %v2536, %v2537
  %v2539 = vsel %vm930, %v1686, 0.0
  %v2540 = vadd.f32 %v2538, %v2539
  %v2541 = vsel %vm930, %v1689, 0.0
  %v2542 = vadd.f32 %v2540, %v2541
  %v2543 = vsel %vm930, %v1694, 0.0
  %v2544 = vadd.f32 %v2542, %v2543
  %v2545 = vsel %vm930, %v1697, 0.0
  %v2546 = vadd.f32 %v2544, %v2545
  %v2547 = vsel %vm930, %v1702, 0.0
  %v2548 = vadd.f32 %v2546, %v2547
  %v2549 = vsel %vm930, %v1705, 0.0
  %v2550 = vadd.f32 %v2548, %v2549
  %v2551 = vsel %vm930, %v1710, 0.0
  %v2552 = vadd.f32 %v2550, %v2551
  %v2553 = vsel %vm930, %v1713, 0.0
  %v2554 = vadd.f32 %v2552, %v2553
  %v2555 = vsel %vm930, %v1718, 0.0
  %v2556 = vadd.f32 %v2554, %v2555
  %v2557 = vsel %vm930, %v1721, 0.0
  %v2558 = vadd.f32 %v2556, %v2557
  %v2559 = vsel %vm930, %v1726, 0.0
  %v2560 = vadd.f32 %v2558, %v2559
  %v2561 = vsel %vm930, %v1729, 0.0
  %v2562 = vadd.f32 %v2560, %v2561
  %v2563 = vsel %vm930, %v1734, 0.0
  %v2564 = vadd.f32 %v2562, %v2563
  %v2565 = vsel %vm930, %v1737, 0.0
  %v2566 = vadd.f32 %v2564, %v2565
  %v2567 = vsel %vm930, %v1742, 0.0
  %v2568 = vadd.f32 %v2566, %v2567
  %v2569 = vsel %vm930, %v1745, 0.0
  %v2570 = vadd.f32 %v2568, %v2569
  %v2571 = vsel %vm930, %v1750, 0.0
  %v2572 = vadd.f32 %v2570, %v2571
  %v2573 = vsel %vm930, %v1753, 0.0
  %v2574 = vadd.f32 %v2572, %v2573
  %v2575 = vsel %vm930, %v1758, 0.0
  %v2576 = vadd.f32 %v2574, %v2575
  %v2577 = vsel %vm930, %v1761, 0.0
  %v2578 = vadd.f32 %v2576, %v2577
  %v2579 = vsel %vm930, %v1766, 0.0
  %v2580 = vadd.f32 %v2578, %v2579
  %v2581 = vsel %vm930, %v1769, 0.0
  %v2582 = vadd.f32 %v2580, %v2581
  %v2583 = vsel %vm930, %v1774, 0.0
  %v2584 = vadd.f32 %v2582, %v2583
  %v2585 = vsel %vm930, %v1777, 0.0
  %v2586 = vadd.f32 %v2584, %v2585
  %v2587 = vsel %vm930, %v1782, 0.0
  %v2588 = vadd.f32 %v2586, %v2587
  %v2589 = vsel %vm930, %v1785, 0.0
  %v2590 = vadd.f32 %v2588, %v2589
  %v2591 = vsel %vm930, %v1790, 0.0
  %v2592 = vadd.f32 %v2590, %v2591
  %v2593 = vsel %vm930, %v1793, 0.0
  %v2594 = vadd.f32 %v2592, %v2593
  %v2595 = vsel %vm930, %v1798, 0.0
  %v2596 = vadd.f32 %v2594, %v2595
  %v2597 = vsel %vm930, %v1801, 0.0
  %v2598 = vadd.f32 %v2596, %v2597
  %v2599 = vsel %vm930, %v1806, 0.0
  %v2600 = vadd.f32 %v2598, %v2599
  %v2601 = vsel %vm930, %v1809, 0.0
  %v2602 = vadd.f32 %v2600, %v2601
  %v2603 = vsel %vm930, %v1814, 0.0
  %v2604 = vadd.f32 %v2602, %v2603
  %v2605 = vsel %vm930, %v1817, 0.0
  %v2606 = vadd.f32 %v2604, %v2605
  %v2607 = vsel %vm930, %v1822, 0.0
  %v2608 = vadd.f32 %v2606, %v2607
  %v2609 = vsel %vm930, %v1825, 0.0
  %v2610 = vadd.f32 %v2608, %v2609
  %v2611 = vsel %vm930, %v1830, 0.0
  %v2612 = vadd.f32 %v2610, %v2611
  %v2613 = vsel %vm930, %v1833, 0.0
  %v2614 = vadd.f32 %v2612, %v2613
  %v2615 = vsel %vm930, %v1838, 0.0
  %v2616 = vadd.f32 %v2614, %v2615
  %v2617 = vsel %vm930, %v1841, 0.0
  %v2618 = vadd.f32 %v2616, %v2617
  %v2619 = vsel %vm930, %v1846, 0.0
  %v2620 = vadd.f32 %v2618, %v2619
  %v2621 = vsel %vm930, %v1849, 0.0
  %v2622 = vadd.f32 %v2620, %v2621
  %v2623 = vsel %vm930, %v1854, 0.0
  %v2624 = vadd.f32 %v2622, %v2623
  %v2625 = vsel %vm930, %v1857, 0.0
  %v2626 = vadd.f32 %v2624, %v2625
  %v2627 = vsel %vm930, %v1862, 0.0
  %v2628 = vadd.f32 %v2626, %v2627
  %v2629 = vsel %vm930, %v1865, 0.0
  %v2630 = vadd.f32 %v2628, %v2629
  %v2631 = vsel %vm930, %v1870, 0.0
  %v2632 = vadd.f32 %v2630, %v2631
  %v2633 = vsel %vm930, %v1873, 0.0
  %v2634 = vadd.f32 %v2632, %v2633
  %v2635 = vsel %vm930, %v1878, 0.0
  %v2636 = vadd.f32 %v2634, %v2635
  %v2637 = vsel %vm930, %v1881, 0.0
  %v2638 = vadd.f32 %v2636, %v2637
  %v2639 = vsel %vm930, %v1886, 0.0
  %v2640 = vadd.f32 %v2638, %v2639
  %v2641 = vsel %vm930, %v1889, 0.0
  %v2642 = vadd.f32 %v2640, %v2641
  %v2643 = vsel %vm930, %v1894, 0.0
  %v2644 = vadd.f32 %v2642, %v2643
  %v2645 = vsel %vm930, %v1897, 0.0
  %v2646 = vadd.f32 %v2644, %v2645
  %v2647 = vsel %vm930, %v1902, 0.0
  %v2648 = vadd.f32 %v2646, %v2647
  %v2649 = vsel %vm930, %v1905, 0.0
  %v2650 = vadd.f32 %v2648, %v2649
  %v2651 = vsel %vm930, %v1910, 0.0
  %v2652 = vadd.f32 %v2650, %v2651
  %v2653 = vsel %vm930, %v1913, 0.0
  %v2654 = vadd.f32 %v2652, %v2653
  %v2655 = vsel %vm930, %v1918, 0.0
  %v2656 = vadd.f32 %v2654, %v2655
  %v2657 = vsel %vm930, %v1921, 0.0
  %v2658 = vadd.f32 %v2656, %v2657
  %v2659 = vsel %vm930, %v1926, 0.0
  %v2660 = vadd.f32 %v2658, %v2659
  %v2661 = vsel %vm930, %v1929, 0.0
  %v2662 = vadd.f32 %v2660, %v2661
  %v2663 = vsel %vm930, %v1934, 0.0
  %v2664 = vadd.f32 %v2662, %v2663
  %v2665 = vsel %vm930, %v1937, 0.0
  %v2666 = vadd.f32 %v2664, %v2665
  %v2667 = vsel %vm930, %v1942, 0.0
  %v2668 = vadd.f32 %v2666, %v2667
  %v2669 = vsel %vm930, %v1945, 0.0
  %v2670 = vadd.f32 %v2668, %v2669
  %v2671 = vsel %vm930, %v1950, 0.0
  %v2672 = vadd.f32 %v2670, %v2671
  %v2673 = vsel %vm930, %v1953, 0.0
  %v2674 = vadd.f32 %v2672, %v2673
  %v2675 = vsel %vm930, %v1958, 0.0
  %v2676 = vadd.f32 %v2674, %v2675
  %v2677 = vsel %vm930, %v1961, 0.0
  %v2678 = vadd.f32 %v2676, %v2677
  %v2679 = vsel %vm930, %v1966, 0.0
  %v2680 = vadd.f32 %v2678, %v2679
  %v2681 = vsel %vm930, %v1969, 0.0
  %v2682 = vadd.f32 %v2680, %v2681
  %v2683 = vsel %vm930, %v1974, 0.0
  %v2684 = vadd.f32 %v2682, %v2683
  %v2685 = vsel %vm930, %v1977, 0.0
  %v2686 = vadd.f32 %v2684, %v2685
  %v2687 = vsel %vm930, %v1982, 0.0
  %v2688 = vadd.f32 %v2686, %v2687
  %v2689 = vsel %vm930, %v1985, 0.0
  %v2690 = vadd.f32 %v2688, %v2689
  %v2691 = vsel %vm930, %v1990, 0.0
  %v2692 = vadd.f32 %v2690, %v2691
  %v2693 = vsel %vm930, %v1993, 0.0
  %v2694 = vadd.f32 %v2692, %v2693
  %v2695 = vsel %vm930, %v1998, 0.0
  %v2696 = vadd.f32 %v2694, %v2695
  %v2697 = vsel %vm930, %v2001, 0.0
  %v2698 = vadd.f32 %v2696, %v2697
  %v2699 = vsel %vm930, %v2006, 0.0
  %v2700 = vadd.f32 %v2698, %v2699
  %v2701 = vsel %vm930, %v2009, 0.0
  %v2702 = vadd.f32 %v2700, %v2701
  %v2703 = vsel %vm930, %v2014, 0.0
  %v2704 = vadd.f32 %v2702, %v2703
  %v2705 = vsel %vm930, %v2017, 0.0
  %v2706 = vadd.f32 %v2704, %v2705
  %v2707 = vsel %vm930, %v2022, 0.0
  %v2708 = vadd.f32 %v2706, %v2707
  %v2709 = vsel %vm930, %v2025, 0.0
  %v2710 = vadd.f32 %v2708, %v2709
  %v2711 = vsel %vm930, %v2030, 0.0
  %v2712 = vadd.f32 %v2710, %v2711
  %v2713 = vsel %vm930, %v2033, 0.0
  %v2714 = vadd.f32 %v2712, %v2713
  %v2715 = vsel %vm930, %v2038, 0.0
  %v2716 = vadd.f32 %v2714, %v2715
  %v2717 = vsel %vm930, %v2041, 0.0
  %v2718 = vadd.f32 %v2716, %v2717
  %v2719 = vsel %vm930, %v2046, 0.0
  %v2720 = vadd.f32 %v2718, %v2719
  %v2721 = vsel %vm930, %v2049, 0.0
  %v2722 = vadd.f32 %v2720, %v2721
  %v2723 = vsel %vm930, %v2054, 0.0
  %v2724 = vadd.f32 %v2722, %v2723
  %v2725 = vsel %vm930, %v2057, 0.0
  %v2726 = vadd.f32 %v2724, %v2725
  %v2727 = vsel %vm930, %v2062, 0.0
  %v2728 = vadd.f32 %v2726, %v2727
  %v2729 = vsel %vm930, %v2065, 0.0
  %v2730 = vadd.f32 %v2728, %v2729
  %v2731 = vsel %vm930, %v2070, 0.0
  %v2732 = vadd.f32 %v2730, %v2731
  %v2733 = vsel %vm930, %v2073, 0.0
  %v2734 = vadd.f32 %v2732, %v2733
  %v2735 = vsel %vm930, %v2078, 0.0
  %v2736 = vadd.f32 %v2734, %v2735
  %v2737 = vsel %vm930, %v2081, 0.0
  %v2738 = vadd.f32 %v2736, %v2737
  %v2739 = vsel %vm930, %v2086, 0.0
  %v2740 = vadd.f32 %v2738, %v2739
  %v2741 = vsel %vm930, %v2089, 0.0
  %v2742 = vadd.f32 %v2740, %v2741
  %v2743 = vsel %vm930, %v2094, 0.0
  %v2744 = vadd.f32 %v2742, %v2743
  %v2745 = vsel %vm930, %v2097, 0.0
  %v2746 = vadd.f32 %v2744, %v2745
  %v2747 = vsel %vm930, %v2102, 0.0
  %v2748 = vadd.f32 %v2746, %v2747
  %v2749 = vsel %vm930, %v2105, 0.0
  %v2750 = vadd.f32 %v2748, %v2749
  %v2751 = vsel %vm930, %v2110, 0.0
  %v2752 = vadd.f32 %v2750, %v2751
  %v2753 = vsel %vm930, %v2113, 0.0
  %v2754 = vadd.f32 %v2752, %v2753
  %v2755 = vsel %vm930, %v2118, 0.0
  %v2756 = vadd.f32 %v2754, %v2755
  %v2757 = vsel %vm930, %v2121, 0.0
  %v2758 = vadd.f32 %v2756, %v2757
  %v2759 = vsel %vm930, %v2126, 0.0
  %v2760 = vadd.f32 %v2758, %v2759
  %v2761 = vsel %vm930, %v2129, 0.0
  %v2762 = vadd.f32 %v2760, %v2761
  %v2763 = vsel %vm930, %v2134, 0.0
  %v2764 = vadd.f32 %v2762, %v2763
  %v2765 = vsel %vm930, %v2137, 0.0
  %v2766 = vadd.f32 %v2764, %v2765
  %v2767 = vsel %vm930, %v2142, 0.0
  %v2768 = vadd.f32 %v2766, %v2767
  %v2769 = vsel %vm930, %v2145, 0.0
  %v2770 = vadd.f32 %v2768, %v2769
  %v2771 = vsel %vm930, %v2150, 0.0
  %v2772 = vadd.f32 %v2770, %v2771
  %v2773 = vsel %vm930, %v2153, 0.0
  %v2774 = vadd.f32 %v2772, %v2773
  %v2775 = vsel %vm930, %v2158, 0.0
  %v2776 = vadd.f32 %v2774, %v2775
  %v2777 = vsel %vm930, %v2161, 0.0
  %v2778 = vadd.f32 %v2776, %v2777
  %v2779 = vsel %vm930, %v2166, 0.0
  %v2780 = vadd.f32 %v2778, %v2779
  %v2781 = vsel %vm930, %v2169, 0.0
  %v2782 = vadd.f32 %v2780, %v2781
  %v2783 = vsel %vm930, %v2174, 0.0
  %v2784 = vadd.f32 %v2782, %v2783
  %v2785 = vsel %vm930, %v2177, 0.0
  %v2786 = vadd.f32 %v2784, %v2785
  %v2787 = vsel %vm930, %v2182, 0.0
  %v2788 = vadd.f32 %v2786, %v2787
  %v2789 = vsel %vm930, %v2185, 0.0
  %v2790 = vadd.f32 %v2788, %v2789
  %v2791 = vsel %vm930, %v2190, 0.0
  %v2792 = vadd.f32 %v2790, %v2791
  %v2793 = vsel %vm930, %v2193, 0.0
  %v2794 = vadd.f32 %v2792, %v2793
  %v2795 = vsel %vm930, %v2198, 0.0
  %v2796 = vadd.f32 %v2794, %v2795
  %v2797 = vsel %vm930, %v2201, 0.0
  %v2798 = vadd.f32 %v2796, %v2797
  %v2799 = vsel %vm930, %v2206, 0.0
  %v2800 = vadd.f32 %v2798, %v2799
  %v2801 = vsel %vm930, %v2209, 0.0
  %v2802 = vadd.f32 %v2800, %v2801
  %v2803 = vsel %vm930, %v2214, 0.0
  %v2804 = vadd.f32 %v2802, %v2803
  %v2805 = vsel %vm930, %v2217, 0.0
  %v2806 = vadd.f32 %v2804, %v2805
  %v2807 = vsel %vm930, %v2222, 0.0
  %v2808 = vadd.f32 %v2806, %v2807
  %v2809 = vsel %vm930, %v2225, 0.0
  %v2810 = vadd.f32 %v2808, %v2809
  %v2811 = vsel %vm930, %v2230, 0.0
  %v2812 = vadd.f32 %v2810, %v2811
  %v2813 = vsel %vm930, %v2233, 0.0
  %v2814 = vadd.f32 %v2812, %v2813
  %v2815 = vsel %vm930, %v2238, 0.0
  %v2816 = vadd.f32 %v2814, %v2815
  %v2817 = vsel %vm930, %v2241, 0.0
  %v2818 = vadd.f32 %v2816, %v2817
  %v2819 = vsel %vm930, %v2246, 0.0
  %v2820 = vadd.f32 %v2818, %v2819
  %v2821 = vsel %vm930, %v2249, 0.0
  %v2822 = vadd.f32 %v2820, %v2821
  %v2823 = vsel %vm930, %v2254, 0.0
  %v2824 = vadd.f32 %v2822, %v2823
  %v2825 = vsel %vm930, %v2257, 0.0
  %v2826 = vadd.f32 %v2824, %v2825
  %v2827 = vsel %vm930, %v2262, 0.0
  %v2828 = vadd.f32 %v2826, %v2827
  %v2829 = vsel %vm930, %v2265, 0.0
  %v2830 = vadd.f32 %v2828, %v2829
  %v2831 = vsel %vm930, %v2270, 0.0
  %v2832 = vadd.f32 %v2830, %v2831
  %v2833 = vsel %vm930, %v2273, 0.0
  %v2834 = vadd.f32 %v2832, %v2833
  %v2835 = vsel %vm930, %v2278, 0.0
  %v2836 = vadd.f32 %v2834, %v2835
  %v2837 = vsel %vm930, %v2281, 0.0
  %v2838 = vadd.f32 %v2836, %v2837
  %v2839 = vsel %vm930, %v2286, 0.0
  %v2840 = vadd.f32 %v2838, %v2839
  %v2841 = vsel %vm930, %v2289, 0.0
  %v2842 = vadd.f32 %v2840, %v2841
  %v2843 = vsel %vm930, %v2294, 0.0
  %v2844 = vadd.f32 %v2842, %v2843
  %v2845 = vsel %vm930, %v2297, 0.0
  %v2846 = vadd.f32 %v2844, %v2845
  %v2847 = vsel %vm930, %v2302, 0.0
  %v2848 = vadd.f32 %v2846, %v2847
  %v2849 = vsel %vm930, %v2305, 0.0
  %v2850 = vadd.f32 %v2848, %v2849
  %v2851 = vsel %vm930, %v2310, 0.0
  %v2852 = vadd.f32 %v2850, %v2851
  %v2853 = vsel %vm930, %v2313, 0.0
  %v2854 = vadd.f32 %v2852, %v2853
  %v2855 = vsel %vm930, %v2318, 0.0
  %v2856 = vadd.f32 %v2854, %v2855
  %v2857 = vsel %vm930, %v2321, 0.0
  %v2858 = vadd.f32 %v2856, %v2857
  %v2859 = vsel %vm930, %v2326, 0.0
  %v2860 = vadd.f32 %v2858, %v2859
  %v2861 = vsel %vm930, %v2329, 0.0
  %v2862 = vadd.f32 %v2860, %v2861
  %v2863 = vsel %vm930, %v2334, 0.0
  %v2864 = vadd.f32 %v2862, %v2863
  %v2865 = vsel %vm930, %v2337, 0.0
  %v2866 = vadd.f32 %v2864, %v2865
  %v2867 = vsel %vm930, %v2342, 0.0
  %v2868 = vadd.f32 %v2866, %v2867
  %v2869 = vsel %vm930, %v2345, 0.0
  %v2870 = vadd.f32 %v2868, %v2869
  %v2871 = vsel %vm930, %v2350, 0.0
  %v2872 = vadd.f32 %v2870, %v2871
  %v2873 = vsel %vm930, %v2353, 0.0
  %v2874 = vadd.f32 %v2872, %v2873
  %v2875 = vsel %vm930, %v2358, 0.0
  %v2876 = vadd.f32 %v2874, %v2875
  %v2877 = vsel %vm930, %v2361, 0.0
  %v2878 = vadd.f32 %v2876, %v2877
  %v2879 = vsel %vm930, %v2366, 0.0
  %v2880 = vadd.f32 %v2878, %v2879
  %v2881 = vsel %vm930, %v2369, 0.0
  %v2882 = vadd.f32 %v2880, %v2881
  %v2883 = vrot.slane %v2882, 4
  %v2884 = vadd.f32 %v2882, %v2883
  %v2885 = vrot.slane %v2884, 2
  %v2886 = vadd.f32 %v2884, %v2885
  %v2887 = vrot.slane %v2886, 1
  %v2888 = vadd.f32 %v2886, %v2887
  %v2889 = vmul.f32 %v1350, %v1350
  %v2890 = vmul.f32 %v1353, %v1353
  %v2891 = vmul.f32 %v1358, %v1358
  %v2892 = vmul.f32 %v1361, %v1361
  %v2893 = vmul.f32 %v1366, %v1366
  %v2894 = vmul.f32 %v1369, %v1369
  %v2895 = vmul.f32 %v1374, %v1374
  %v2896 = vmul.f32 %v1377, %v1377
  %v2897 = vmul.f32 %v1382, %v1382
  %v2898 = vmul.f32 %v1385, %v1385
  %v2899 = vmul.f32 %v1390, %v1390
  %v2900 = vmul.f32 %v1393, %v1393
  %v2901 = vmul.f32 %v1398, %v1398
  %v2902 = vmul.f32 %v1401, %v1401
  %v2903 = vmul.f32 %v1406, %v1406
  %v2904 = vmul.f32 %v1409, %v1409
  %v2905 = vmul.f32 %v1414, %v1414
  %v2906 = vmul.f32 %v1417, %v1417
  %v2907 = vmul.f32 %v1422, %v1422
  %v2908 = vmul.f32 %v1425, %v1425
  %v2909 = vmul.f32 %v1430, %v1430
  %v2910 = vmul.f32 %v1433, %v1433
  %v2911 = vmul.f32 %v1438, %v1438
  %v2912 = vmul.f32 %v1441, %v1441
  %v2913 = vmul.f32 %v1446, %v1446
  %v2914 = vmul.f32 %v1449, %v1449
  %v2915 = vmul.f32 %v1454, %v1454
  %v2916 = vmul.f32 %v1457, %v1457
  %v2917 = vmul.f32 %v1462, %v1462
  %v2918 = vmul.f32 %v1465, %v1465
  %v2919 = vmul.f32 %v1470, %v1470
  %v2920 = vmul.f32 %v1473, %v1473
  %v2921 = vmul.f32 %v1478, %v1478
  %v2922 = vmul.f32 %v1481, %v1481
  %v2923 = vmul.f32 %v1486, %v1486
  %v2924 = vmul.f32 %v1489, %v1489
  %v2925 = vmul.f32 %v1494, %v1494
  %v2926 = vmul.f32 %v1497, %v1497
  %v2927 = vmul.f32 %v1502, %v1502
  %v2928 = vmul.f32 %v1505, %v1505
  %v2929 = vmul.f32 %v1510, %v1510
  %v2930 = vmul.f32 %v1513, %v1513
  %v2931 = vmul.f32 %v1518, %v1518
  %v2932 = vmul.f32 %v1521, %v1521
  %v2933 = vmul.f32 %v1526, %v1526
  %v2934 = vmul.f32 %v1529, %v1529
  %v2935 = vmul.f32 %v1534, %v1534
  %v2936 = vmul.f32 %v1537, %v1537
  %v2937 = vmul.f32 %v1542, %v1542
  %v2938 = vmul.f32 %v1545, %v1545
  %v2939 = vmul.f32 %v1550, %v1550
  %v2940 = vmul.f32 %v1553, %v1553
  %v2941 = vmul.f32 %v1558, %v1558
  %v2942 = vmul.f32 %v1561, %v1561
  %v2943 = vmul.f32 %v1566, %v1566
  %v2944 = vmul.f32 %v1569, %v1569
  %v2945 = vmul.f32 %v1574, %v1574
  %v2946 = vmul.f32 %v1577, %v1577
  %v2947 = vmul.f32 %v1582, %v1582
  %v2948 = vmul.f32 %v1585, %v1585
  %v2949 = vmul.f32 %v1590, %v1590
  %v2950 = vmul.f32 %v1593, %v1593
  %v2951 = vmul.f32 %v1598, %v1598
  %v2952 = vmul.f32 %v1601, %v1601
  %v2953 = vmul.f32 %v1606, %v1606
  %v2954 = vmul.f32 %v1609, %v1609
  %v2955 = vmul.f32 %v1614, %v1614
  %v2956 = vmul.f32 %v1617, %v1617
  %v2957 = vmul.f32 %v1622, %v1622
  %v2958 = vmul.f32 %v1625, %v1625
  %v2959 = vmul.f32 %v1630, %v1630
  %v2960 = vmul.f32 %v1633, %v1633
  %v2961 = vmul.f32 %v1638, %v1638
  %v2962 = vmul.f32 %v1641, %v1641
  %v2963 = vmul.f32 %v1646, %v1646
  %v2964 = vmul.f32 %v1649, %v1649
  %v2965 = vmul.f32 %v1654, %v1654
  %v2966 = vmul.f32 %v1657, %v1657
  %v2967 = vmul.f32 %v1662, %v1662
  %v2968 = vmul.f32 %v1665, %v1665
  %v2969 = vmul.f32 %v1670, %v1670
  %v2970 = vmul.f32 %v1673, %v1673
  %v2971 = vmul.f32 %v1678, %v1678
  %v2972 = vmul.f32 %v1681, %v1681
  %v2973 = vmul.f32 %v1686, %v1686
  %v2974 = vmul.f32 %v1689, %v1689
  %v2975 = vmul.f32 %v1694, %v1694
  %v2976 = vmul.f32 %v1697, %v1697
  %v2977 = vmul.f32 %v1702, %v1702
  %v2978 = vmul.f32 %v1705, %v1705
  %v2979 = vmul.f32 %v1710, %v1710
  %v2980 = vmul.f32 %v1713, %v1713
  %v2981 = vmul.f32 %v1718, %v1718
  %v2982 = vmul.f32 %v1721, %v1721
  %v2983 = vmul.f32 %v1726, %v1726
  %v2984 = vmul.f32 %v1729, %v1729
  %v2985 = vmul.f32 %v1734, %v1734
  %v2986 = vmul.f32 %v1737, %v1737
  %v2987 = vmul.f32 %v1742, %v1742
  %v2988 = vmul.f32 %v1745, %v1745
  %v2989 = vmul.f32 %v1750, %v1750
  %v2990 = vmul.f32 %v1753, %v1753
  %v2991 = vmul.f32 %v1758, %v1758
  %v2992 = vmul.f32 %v1761, %v1761
  %v2993 = vmul.f32 %v1766, %v1766
  %v2994 = vmul.f32 %v1769, %v1769
  %v2995 = vmul.f32 %v1774, %v1774
  %v2996 = vmul.f32 %v1777, %v1777
  %v2997 = vmul.f32 %v1782, %v1782
  %v2998 = vmul.f32 %v1785, %v1785
  %v2999 = vmul.f32 %v1790, %v1790
  %v3000 = vmul.f32 %v1793, %v1793
  %v3001 = vmul.f32 %v1798, %v1798
  %v3002 = vmul.f32 %v1801, %v1801
  %v3003 = vmul.f32 %v1806, %v1806
  %v3004 = vmul.f32 %v1809, %v1809
  %v3005 = vmul.f32 %v1814, %v1814
  %v3006 = vmul.f32 %v1817, %v1817
  %v3007 = vmul.f32 %v1822, %v1822
  %v3008 = vmul.f32 %v1825, %v1825
  %v3009 = vmul.f32 %v1830, %v1830
  %v3010 = vmul.f32 %v1833, %v1833
  %v3011 = vmul.f32 %v1838, %v1838
  %v3012 = vmul.f32 %v1841, %v1841
  %v3013 = vmul.f32 %v1846, %v1846
  %v3014 = vmul.f32 %v1849, %v1849
  %v3015 = vmul.f32 %v1854, %v1854
  %v3016 = vmul.f32 %v1857, %v1857
  %v3017 = vmul.f32 %v1862, %v1862
  %v3018 = vmul.f32 %v1865, %v1865
  %v3019 = vmul.f32 %v1870, %v1870
  %v3020 = vmul.f32 %v1873, %v1873
  %v3021 = vmul.f32 %v1878, %v1878
  %v3022 = vmul.f32 %v1881, %v1881
  %v3023 = vmul.f32 %v1886, %v1886
  %v3024 = vmul.f32 %v1889, %v1889
  %v3025 = vmul.f32 %v1894, %v1894
  %v3026 = vmul.f32 %v1897, %v1897
  %v3027 = vmul.f32 %v1902, %v1902
  %v3028 = vmul.f32 %v1905, %v1905
  %v3029 = vmul.f32 %v1910, %v1910
  %v3030 = vmul.f32 %v1913, %v1913
  %v3031 = vmul.f32 %v1918, %v1918
  %v3032 = vmul.f32 %v1921, %v1921
  %v3033 = vmul.f32 %v1926, %v1926
  %v3034 = vmul.f32 %v1929, %v1929
  %v3035 = vmul.f32 %v1934, %v1934
  %v3036 = vmul.f32 %v1937, %v1937
  %v3037 = vmul.f32 %v1942, %v1942
  %v3038 = vmul.f32 %v1945, %v1945
  %v3039 = vmul.f32 %v1950, %v1950
  %v3040 = vmul.f32 %v1953, %v1953
  %v3041 = vmul.f32 %v1958, %v1958
  %v3042 = vmul.f32 %v1961, %v1961
  %v3043 = vmul.f32 %v1966, %v1966
  %v3044 = vmul.f32 %v1969, %v1969
  %v3045 = vmul.f32 %v1974, %v1974
  %v3046 = vmul.f32 %v1977, %v1977
  %v3047 = vmul.f32 %v1982, %v1982
  %v3048 = vmul.f32 %v1985, %v1985
  %v3049 = vmul.f32 %v1990, %v1990
  %v3050 = vmul.f32 %v1993, %v1993
  %v3051 = vmul.f32 %v1998, %v1998
  %v3052 = vmul.f32 %v2001, %v2001
  %v3053 = vmul.f32 %v2006, %v2006
  %v3054 = vmul.f32 %v2009, %v2009
  %v3055 = vmul.f32 %v2014, %v2014
  %v3056 = vmul.f32 %v2017, %v2017
  %v3057 = vmul.f32 %v2022, %v2022
  %v3058 = vmul.f32 %v2025, %v2025
  %v3059 = vmul.f32 %v2030, %v2030
  %v3060 = vmul.f32 %v2033, %v2033
  %v3061 = vmul.f32 %v2038, %v2038
  %v3062 = vmul.f32 %v2041, %v2041
  %v3063 = vmul.f32 %v2046, %v2046
  %v3064 = vmul.f32 %v2049, %v2049
  %v3065 = vmul.f32 %v2054, %v2054
  %v3066 = vmul.f32 %v2057, %v2057
  %v3067 = vmul.f32 %v2062, %v2062
  %v3068 = vmul.f32 %v2065, %v2065
  %v3069 = vmul.f32 %v2070, %v2070
  %v3070 = vmul.f32 %v2073, %v2073
  %v3071 = vmul.f32 %v2078, %v2078
  %v3072 = vmul.f32 %v2081, %v2081
  %v3073 = vmul.f32 %v2086, %v2086
  %v3074 = vmul.f32 %v2089, %v2089
  %v3075 = vmul.f32 %v2094, %v2094
  %v3076 = vmul.f32 %v2097, %v2097
  %v3077 = vmul.f32 %v2102, %v2102
  %v3078 = vmul.f32 %v2105, %v2105
  %v3079 = vmul.f32 %v2110, %v2110
  %v3080 = vmul.f32 %v2113, %v2113
  %v3081 = vmul.f32 %v2118, %v2118
  %v3082 = vmul.f32 %v2121, %v2121
  %v3083 = vmul.f32 %v2126, %v2126
  %v3084 = vmul.f32 %v2129, %v2129
  %v3085 = vmul.f32 %v2134, %v2134
  %v3086 = vmul.f32 %v2137, %v2137
  %v3087 = vmul.f32 %v2142, %v2142
  %v3088 = vmul.f32 %v2145, %v2145
  %v3089 = vmul.f32 %v2150, %v2150
  %v3090 = vmul.f32 %v2153, %v2153
  %v3091 = vmul.f32 %v2158, %v2158
  %v3092 = vmul.f32 %v2161, %v2161
  %v3093 = vmul.f32 %v2166, %v2166
  %v3094 = vmul.f32 %v2169, %v2169
  %v3095 = vmul.f32 %v2174, %v2174
  %v3096 = vmul.f32 %v2177, %v2177
  %v3097 = vmul.f32 %v2182, %v2182
  %v3098 = vmul.f32 %v2185, %v2185
  %v3099 = vmul.f32 %v2190, %v2190
  %v3100 = vmul.f32 %v2193, %v2193
  %v3101 = vmul.f32 %v2198, %v2198
  %v3102 = vmul.f32 %v2201, %v2201
  %v3103 = vmul.f32 %v2206, %v2206
  %v3104 = vmul.f32 %v2209, %v2209
  %v3105 = vmul.f32 %v2214, %v2214
  %v3106 = vmul.f32 %v2217, %v2217
  %v3107 = vmul.f32 %v2222, %v2222
  %v3108 = vmul.f32 %v2225, %v2225
  %v3109 = vmul.f32 %v2230, %v2230
  %v3110 = vmul.f32 %v2233, %v2233
  %v3111 = vmul.f32 %v2238, %v2238
  %v3112 = vmul.f32 %v2241, %v2241
  %v3113 = vmul.f32 %v2246, %v2246
  %v3114 = vmul.f32 %v2249, %v2249
  %v3115 = vmul.f32 %v2254, %v2254
  %v3116 = vmul.f32 %v2257, %v2257
  %v3117 = vmul.f32 %v2262, %v2262
  %v3118 = vmul.f32 %v2265, %v2265
  %v3119 = vmul.f32 %v2270, %v2270
  %v3120 = vmul.f32 %v2273, %v2273
  %v3121 = vmul.f32 %v2278, %v2278
  %v3122 = vmul.f32 %v2281, %v2281
  %v3123 = vmul.f32 %v2286, %v2286
  %v3124 = vmul.f32 %v2289, %v2289
  %v3125 = vmul.f32 %v2294, %v2294
  %v3126 = vmul.f32 %v2297, %v2297
  %v3127 = vmul.f32 %v2302, %v2302
  %v3128 = vmul.f32 %v2305, %v2305
  %v3129 = vmul.f32 %v2310, %v2310
  %v3130 = vmul.f32 %v2313, %v2313
  %v3131 = vmul.f32 %v2318, %v2318
  %v3132 = vmul.f32 %v2321, %v2321
  %v3133 = vmul.f32 %v2326, %v2326
  %v3134 = vmul.f32 %v2329, %v2329
  %v3135 = vmul.f32 %v2334, %v2334
  %v3136 = vmul.f32 %v2337, %v2337
  %v3137 = vmul.f32 %v2342, %v2342
  %v3138 = vmul.f32 %v2345, %v2345
  %v3139 = vmul.f32 %v2350, %v2350
  %v3140 = vmul.f32 %v2353, %v2353
  %v3141 = vmul.f32 %v2358, %v2358
  %v3142 = vmul.f32 %v2361, %v2361
  %v3143 = vmul.f32 %v2366, %v2366
  %v3144 = vmul.f32 %v2369, %v2369
  %v3145 = vsel %vm930, %v2889, 0.0
  %v3146 = vsel %vm930, %v2890, 0.0
  %v3147 = vadd.f32 %v3145, %v3146
  %v3148 = vsel %vm930, %v2891, 0.0
  %v3149 = vadd.f32 %v3147, %v3148
  %v3150 = vsel %vm930, %v2892, 0.0
  %v3151 = vadd.f32 %v3149, %v3150
  %v3152 = vsel %vm930, %v2893, 0.0
  %v3153 = vadd.f32 %v3151, %v3152
  %v3154 = vsel %vm930, %v2894, 0.0
  %v3155 = vadd.f32 %v3153, %v3154
  %v3156 = vsel %vm930, %v2895, 0.0
  %v3157 = vadd.f32 %v3155, %v3156
  %v3158 = vsel %vm930, %v2896, 0.0
  %v3159 = vadd.f32 %v3157, %v3158
  %v3160 = vsel %vm930, %v2897, 0.0
  %v3161 = vadd.f32 %v3159, %v3160
  %v3162 = vsel %vm930, %v2898, 0.0
  %v3163 = vadd.f32 %v3161, %v3162
  %v3164 = vsel %vm930, %v2899, 0.0
  %v3165 = vadd.f32 %v3163, %v3164
  %v3166 = vsel %vm930, %v2900, 0.0
  %v3167 = vadd.f32 %v3165, %v3166
  %v3168 = vsel %vm930, %v2901, 0.0
  %v3169 = vadd.f32 %v3167, %v3168
  %v3170 = vsel %vm930, %v2902, 0.0
  %v3171 = vadd.f32 %v3169, %v3170
  %v3172 = vsel %vm930, %v2903, 0.0
  %v3173 = vadd.f32 %v3171, %v3172
  %v3174 = vsel %vm930, %v2904, 0.0
  %v3175 = vadd.f32 %v3173, %v3174
  %v3176 = vsel %vm930, %v2905, 0.0
  %v3177 = vadd.f32 %v3175, %v3176
  %v3178 = vsel %vm930, %v2906, 0.0
  %v3179 = vadd.f32 %v3177, %v3178
  %v3180 = vsel %vm930, %v2907, 0.0
  %v3181 = vadd.f32 %v3179, %v3180
  %v3182 = vsel %vm930, %v2908, 0.0
  %v3183 = vadd.f32 %v3181, %v3182
  %v3184 = vsel %vm930, %v2909, 0.0
  %v3185 = vadd.f32 %v3183, %v3184
  %v3186 = vsel %vm930, %v2910, 0.0
  %v3187 = vadd.f32 %v3185, %v3186
  %v3188 = vsel %vm930, %v2911, 0.0
  %v3189 = vadd.f32 %v3187, %v3188
  %v3190 = vsel %vm930, %v2912, 0.0
  %v3191 = vadd.f32 %v3189, %v3190
  %v3192 = vsel %vm930, %v2913, 0.0
  %v3193 = vadd.f32 %v3191, %v3192
  %v3194 = vsel %vm930, %v2914, 0.0
  %v3195 = vadd.f32 %v3193, %v3194
  %v3196 = vsel %vm930, %v2915, 0.0
  %v3197 = vadd.f32 %v3195, %v3196
  %v3198 = vsel %vm930, %v2916, 0.0
  %v3199 = vadd.f32 %v3197, %v3198
  %v3200 = vsel %vm930, %v2917, 0.0
  %v3201 = vadd.f32 %v3199, %v3200
  %v3202 = vsel %vm930, %v2918, 0.0
  %v3203 = vadd.f32 %v3201, %v3202
  %v3204 = vsel %vm930, %v2919, 0.0
  %v3205 = vadd.f32 %v3203, %v3204
  %v3206 = vsel %vm930, %v2920, 0.0
  %v3207 = vadd.f32 %v3205, %v3206
  %v3208 = vsel %vm930, %v2921, 0.0
  %v3209 = vadd.f32 %v3207, %v3208
  %v3210 = vsel %vm930, %v2922, 0.0
  %v3211 = vadd.f32 %v3209, %v3210
  %v3212 = vsel %vm930, %v2923, 0.0
  %v3213 = vadd.f32 %v3211, %v3212
  %v3214 = vsel %vm930, %v2924, 0.0
  %v3215 = vadd.f32 %v3213, %v3214
  %v3216 = vsel %vm930, %v2925, 0.0
  %v3217 = vadd.f32 %v3215, %v3216
  %v3218 = vsel %vm930, %v2926, 0.0
  %v3219 = vadd.f32 %v3217, %v3218
  %v3220 = vsel %vm930, %v2927, 0.0
  %v3221 = vadd.f32 %v3219, %v3220
  %v3222 = vsel %vm930, %v2928, 0.0
  %v3223 = vadd.f32 %v3221, %v3222
  %v3224 = vsel %vm930, %v2929, 0.0
  %v3225 = vadd.f32 %v3223, %v3224
  %v3226 = vsel %vm930, %v2930, 0.0
  %v3227 = vadd.f32 %v3225, %v3226
  %v3228 = vsel %vm930, %v2931, 0.0
  %v3229 = vadd.f32 %v3227, %v3228
  %v3230 = vsel %vm930, %v2932, 0.0
  %v3231 = vadd.f32 %v3229, %v3230
  %v3232 = vsel %vm930, %v2933, 0.0
  %v3233 = vadd.f32 %v3231, %v3232
  %v3234 = vsel %vm930, %v2934, 0.0
  %v3235 = vadd.f32 %v3233, %v3234
  %v3236 = vsel %vm930, %v2935, 0.0
  %v3237 = vadd.f32 %v3235, %v3236
  %v3238 = vsel %vm930, %v2936, 0.0
  %v3239 = vadd.f32 %v3237, %v3238
  %v3240 = vsel %vm930, %v2937, 0.0
  %v3241 = vadd.f32 %v3239, %v3240
  %v3242 = vsel %vm930, %v2938, 0.0
  %v3243 = vadd.f32 %v3241, %v3242
  %v3244 = vsel %vm930, %v2939, 0.0
  %v3245 = vadd.f32 %v3243, %v3244
  %v3246 = vsel %vm930, %v2940, 0.0
  %v3247 = vadd.f32 %v3245, %v3246
  %v3248 = vsel %vm930, %v2941, 0.0
  %v3249 = vadd.f32 %v3247, %v3248
  %v3250 = vsel %vm930, %v2942, 0.0
  %v3251 = vadd.f32 %v3249, %v3250
  %v3252 = vsel %vm930, %v2943, 0.0
  %v3253 = vadd.f32 %v3251, %v3252
  %v3254 = vsel %vm930, %v2944, 0.0
  %v3255 = vadd.f32 %v3253, %v3254
  %v3256 = vsel %vm930, %v2945, 0.0
  %v3257 = vadd.f32 %v3255, %v3256
  %v3258 = vsel %vm930, %v2946, 0.0
  %v3259 = vadd.f32 %v3257, %v3258
  %v3260 = vsel %vm930, %v2947, 0.0
  %v3261 = vadd.f32 %v3259, %v3260
  %v3262 = vsel %vm930, %v2948, 0.0
  %v3263 = vadd.f32 %v3261, %v3262
  %v3264 = vsel %vm930, %v2949, 0.0
  %v3265 = vadd.f32 %v3263, %v3264
  %v3266 = vsel %vm930, %v2950, 0.0
  %v3267 = vadd.f32 %v3265, %v3266
  %v3268 = vsel %vm930, %v2951, 0.0
  %v3269 = vadd.f32 %v3267, %v3268
  %v3270 = vsel %vm930, %v2952, 0.0
  %v3271 = vadd.f32 %v3269, %v3270
  %v3272 = vsel %vm930, %v2953, 0.0
  %v3273 = vadd.f32 %v3271, %v3272
  %v3274 = vsel %vm930, %v2954, 0.0
  %v3275 = vadd.f32 %v3273, %v3274
  %v3276 = vsel %vm930, %v2955, 0.0
  %v3277 = vadd.f32 %v3275, %v3276
  %v3278 = vsel %vm930, %v2956, 0.0
  %v3279 = vadd.f32 %v3277, %v3278
  %v3280 = vsel %vm930, %v2957, 0.0
  %v3281 = vadd.f32 %v3279, %v3280
  %v3282 = vsel %vm930, %v2958, 0.0
  %v3283 = vadd.f32 %v3281, %v3282
  %v3284 = vsel %vm930, %v2959, 0.0
  %v3285 = vadd.f32 %v3283, %v3284
  %v3286 = vsel %vm930, %v2960, 0.0
  %v3287 = vadd.f32 %v3285, %v3286
  %v3288 = vsel %vm930, %v2961, 0.0
  %v3289 = vadd.f32 %v3287, %v3288
  %v3290 = vsel %vm930, %v2962, 0.0
  %v3291 = vadd.f32 %v3289, %v3290
  %v3292 = vsel %vm930, %v2963, 0.0
  %v3293 = vadd.f32 %v3291, %v3292
  %v3294 = vsel %vm930, %v2964, 0.0
  %v3295 = vadd.f32 %v3293, %v3294
  %v3296 = vsel %vm930, %v2965, 0.0
  %v3297 = vadd.f32 %v3295, %v3296
  %v3298 = vsel %vm930, %v2966, 0.0
  %v3299 = vadd.f32 %v3297, %v3298
  %v3300 = vsel %vm930, %v2967, 0.0
  %v3301 = vadd.f32 %v3299, %v3300
  %v3302 = vsel %vm930, %v2968, 0.0
  %v3303 = vadd.f32 %v3301, %v3302
  %v3304 = vsel %vm930, %v2969, 0.0
  %v3305 = vadd.f32 %v3303, %v3304
  %v3306 = vsel %vm930, %v2970, 0.0
  %v3307 = vadd.f32 %v3305, %v3306
  %v3308 = vsel %vm930, %v2971, 0.0
  %v3309 = vadd.f32 %v3307, %v3308
  %v3310 = vsel %vm930, %v2972, 0.0
  %v3311 = vadd.f32 %v3309, %v3310
  %v3312 = vsel %vm930, %v2973, 0.0
  %v3313 = vadd.f32 %v3311, %v3312
  %v3314 = vsel %vm930, %v2974, 0.0
  %v3315 = vadd.f32 %v3313, %v3314
  %v3316 = vsel %vm930, %v2975, 0.0
  %v3317 = vadd.f32 %v3315, %v3316
  %v3318 = vsel %vm930, %v2976, 0.0
  %v3319 = vadd.f32 %v3317, %v3318
  %v3320 = vsel %vm930, %v2977, 0.0
  %v3321 = vadd.f32 %v3319, %v3320
  %v3322 = vsel %vm930, %v2978, 0.0
  %v3323 = vadd.f32 %v3321, %v3322
  %v3324 = vsel %vm930, %v2979, 0.0
  %v3325 = vadd.f32 %v3323, %v3324
  %v3326 = vsel %vm930, %v2980, 0.0
  %v3327 = vadd.f32 %v3325, %v3326
  %v3328 = vsel %vm930, %v2981, 0.0
  %v3329 = vadd.f32 %v3327, %v3328
  %v3330 = vsel %vm930, %v2982, 0.0
  %v3331 = vadd.f32 %v3329, %v3330
  %v3332 = vsel %vm930, %v2983, 0.0
  %v3333 = vadd.f32 %v3331, %v3332
  %v3334 = vsel %vm930, %v2984, 0.0
  %v3335 = vadd.f32 %v3333, %v3334
  %v3336 = vsel %vm930, %v2985, 0.0
  %v3337 = vadd.f32 %v3335, %v3336
  %v3338 = vsel %vm930, %v2986, 0.0
  %v3339 = vadd.f32 %v3337, %v3338
  %v3340 = vsel %vm930, %v2987, 0.0
  %v3341 = vadd.f32 %v3339, %v3340
  %v3342 = vsel %vm930, %v2988, 0.0
  %v3343 = vadd.f32 %v3341, %v3342
  %v3344 = vsel %vm930, %v2989, 0.0
  %v3345 = vadd.f32 %v3343, %v3344
  %v3346 = vsel %vm930, %v2990, 0.0
  %v3347 = vadd.f32 %v3345, %v3346
  %v3348 = vsel %vm930, %v2991, 0.0
  %v3349 = vadd.f32 %v3347, %v3348
  %v3350 = vsel %vm930, %v2992, 0.0
  %v3351 = vadd.f32 %v3349, %v3350
  %v3352 = vsel %vm930, %v2993, 0.0
  %v3353 = vadd.f32 %v3351, %v3352
  %v3354 = vsel %vm930, %v2994, 0.0
  %v3355 = vadd.f32 %v3353, %v3354
  %v3356 = vsel %vm930, %v2995, 0.0
  %v3357 = vadd.f32 %v3355, %v3356
  %v3358 = vsel %vm930, %v2996, 0.0
  %v3359 = vadd.f32 %v3357, %v3358
  %v3360 = vsel %vm930, %v2997, 0.0
  %v3361 = vadd.f32 %v3359, %v3360
  %v3362 = vsel %vm930, %v2998, 0.0
  %v3363 = vadd.f32 %v3361, %v3362
  %v3364 = vsel %vm930, %v2999, 0.0
  %v3365 = vadd.f32 %v3363, %v3364
  %v3366 = vsel %vm930, %v3000, 0.0
  %v3367 = vadd.f32 %v3365, %v3366
  %v3368 = vsel %vm930, %v3001, 0.0
  %v3369 = vadd.f32 %v3367, %v3368
  %v3370 = vsel %vm930, %v3002, 0.0
  %v3371 = vadd.f32 %v3369, %v3370
  %v3372 = vsel %vm930, %v3003, 0.0
  %v3373 = vadd.f32 %v3371, %v3372
  %v3374 = vsel %vm930, %v3004, 0.0
  %v3375 = vadd.f32 %v3373, %v3374
  %v3376 = vsel %vm930, %v3005, 0.0
  %v3377 = vadd.f32 %v3375, %v3376
  %v3378 = vsel %vm930, %v3006, 0.0
  %v3379 = vadd.f32 %v3377, %v3378
  %v3380 = vsel %vm930, %v3007, 0.0
  %v3381 = vadd.f32 %v3379, %v3380
  %v3382 = vsel %vm930, %v3008, 0.0
  %v3383 = vadd.f32 %v3381, %v3382
  %v3384 = vsel %vm930, %v3009, 0.0
  %v3385 = vadd.f32 %v3383, %v3384
  %v3386 = vsel %vm930, %v3010, 0.0
  %v3387 = vadd.f32 %v3385, %v3386
  %v3388 = vsel %vm930, %v3011, 0.0
  %v3389 = vadd.f32 %v3387, %v3388
  %v3390 = vsel %vm930, %v3012, 0.0
  %v3391 = vadd.f32 %v3389, %v3390
  %v3392 = vsel %vm930, %v3013, 0.0
  %v3393 = vadd.f32 %v3391, %v3392
  %v3394 = vsel %vm930, %v3014, 0.0
  %v3395 = vadd.f32 %v3393, %v3394
  %v3396 = vsel %vm930, %v3015, 0.0
  %v3397 = vadd.f32 %v3395, %v3396
  %v3398 = vsel %vm930, %v3016, 0.0
  %v3399 = vadd.f32 %v3397, %v3398
  %v3400 = vsel %vm930, %v3017, 0.0
  %v3401 = vadd.f32 %v3399, %v3400
  %v3402 = vsel %vm930, %v3018, 0.0
  %v3403 = vadd.f32 %v3401, %v3402
  %v3404 = vsel %vm930, %v3019, 0.0
  %v3405 = vadd.f32 %v3403, %v3404
  %v3406 = vsel %vm930, %v3020, 0.0
  %v3407 = vadd.f32 %v3405, %v3406
  %v3408 = vsel %vm930, %v3021, 0.0
  %v3409 = vadd.f32 %v3407, %v3408
  %v3410 = vsel %vm930, %v3022, 0.0
  %v3411 = vadd.f32 %v3409, %v3410
  %v3412 = vsel %vm930, %v3023, 0.0
  %v3413 = vadd.f32 %v3411, %v3412
  %v3414 = vsel %vm930, %v3024, 0.0
  %v3415 = vadd.f32 %v3413, %v3414
  %v3416 = vsel %vm930, %v3025, 0.0
  %v3417 = vadd.f32 %v3415, %v3416
  %v3418 = vsel %vm930, %v3026, 0.0
  %v3419 = vadd.f32 %v3417, %v3418
  %v3420 = vsel %vm930, %v3027, 0.0
  %v3421 = vadd.f32 %v3419, %v3420
  %v3422 = vsel %vm930, %v3028, 0.0
  %v3423 = vadd.f32 %v3421, %v3422
  %v3424 = vsel %vm930, %v3029, 0.0
  %v3425 = vadd.f32 %v3423, %v3424
  %v3426 = vsel %vm930, %v3030, 0.0
  %v3427 = vadd.f32 %v3425, %v3426
  %v3428 = vsel %vm930, %v3031, 0.0
  %v3429 = vadd.f32 %v3427, %v3428
  %v3430 = vsel %vm930, %v3032, 0.0
  %v3431 = vadd.f32 %v3429, %v3430
  %v3432 = vsel %vm930, %v3033, 0.0
  %v3433 = vadd.f32 %v3431, %v3432
  %v3434 = vsel %vm930, %v3034, 0.0
  %v3435 = vadd.f32 %v3433, %v3434
  %v3436 = vsel %vm930, %v3035, 0.0
  %v3437 = vadd.f32 %v3435, %v3436
  %v3438 = vsel %vm930, %v3036, 0.0
  %v3439 = vadd.f32 %v3437, %v3438
  %v3440 = vsel %vm930, %v3037, 0.0
  %v3441 = vadd.f32 %v3439, %v3440
  %v3442 = vsel %vm930, %v3038, 0.0
  %v3443 = vadd.f32 %v3441, %v3442
  %v3444 = vsel %vm930, %v3039, 0.0
  %v3445 = vadd.f32 %v3443, %v3444
  %v3446 = vsel %vm930, %v3040, 0.0
  %v3447 = vadd.f32 %v3445, %v3446
  %v3448 = vsel %vm930, %v3041, 0.0
  %v3449 = vadd.f32 %v3447, %v3448
  %v3450 = vsel %vm930, %v3042, 0.0
  %v3451 = vadd.f32 %v3449, %v3450
  %v3452 = vsel %vm930, %v3043, 0.0
  %v3453 = vadd.f32 %v3451, %v3452
  %v3454 = vsel %vm930, %v3044, 0.0
  %v3455 = vadd.f32 %v3453, %v3454
  %v3456 = vsel %vm930, %v3045, 0.0
  %v3457 = vadd.f32 %v3455, %v3456
  %v3458 = vsel %vm930, %v3046, 0.0
  %v3459 = vadd.f32 %v3457, %v3458
  %v3460 = vsel %vm930, %v3047, 0.0
  %v3461 = vadd.f32 %v3459, %v3460
  %v3462 = vsel %vm930, %v3048, 0.0
  %v3463 = vadd.f32 %v3461, %v3462
  %v3464 = vsel %vm930, %v3049, 0.0
  %v3465 = vadd.f32 %v3463, %v3464
  %v3466 = vsel %vm930, %v3050, 0.0
  %v3467 = vadd.f32 %v3465, %v3466
  %v3468 = vsel %vm930, %v3051, 0.0
  %v3469 = vadd.f32 %v3467, %v3468
  %v3470 = vsel %vm930, %v3052, 0.0
  %v3471 = vadd.f32 %v3469, %v3470
  %v3472 = vsel %vm930, %v3053, 0.0
  %v3473 = vadd.f32 %v3471, %v3472
  %v3474 = vsel %vm930, %v3054, 0.0
  %v3475 = vadd.f32 %v3473, %v3474
  %v3476 = vsel %vm930, %v3055, 0.0
  %v3477 = vadd.f32 %v3475, %v3476
  %v3478 = vsel %vm930, %v3056, 0.0
  %v3479 = vadd.f32 %v3477, %v3478
  %v3480 = vsel %vm930, %v3057, 0.0
  %v3481 = vadd.f32 %v3479, %v3480
  %v3482 = vsel %vm930, %v3058, 0.0
  %v3483 = vadd.f32 %v3481, %v3482
  %v3484 = vsel %vm930, %v3059, 0.0
  %v3485 = vadd.f32 %v3483, %v3484
  %v3486 = vsel %vm930, %v3060, 0.0
  %v3487 = vadd.f32 %v3485, %v3486
  %v3488 = vsel %vm930, %v3061, 0.0
  %v3489 = vadd.f32 %v3487, %v3488
  %v3490 = vsel %vm930, %v3062, 0.0
  %v3491 = vadd.f32 %v3489, %v3490
  %v3492 = vsel %vm930, %v3063, 0.0
  %v3493 = vadd.f32 %v3491, %v3492
  %v3494 = vsel %vm930, %v3064, 0.0
  %v3495 = vadd.f32 %v3493, %v3494
  %v3496 = vsel %vm930, %v3065, 0.0
  %v3497 = vadd.f32 %v3495, %v3496
  %v3498 = vsel %vm930, %v3066, 0.0
  %v3499 = vadd.f32 %v3497, %v3498
  %v3500 = vsel %vm930, %v3067, 0.0
  %v3501 = vadd.f32 %v3499, %v3500
  %v3502 = vsel %vm930, %v3068, 0.0
  %v3503 = vadd.f32 %v3501, %v3502
  %v3504 = vsel %vm930, %v3069, 0.0
  %v3505 = vadd.f32 %v3503, %v3504
  %v3506 = vsel %vm930, %v3070, 0.0
  %v3507 = vadd.f32 %v3505, %v3506
  %v3508 = vsel %vm930, %v3071, 0.0
  %v3509 = vadd.f32 %v3507, %v3508
  %v3510 = vsel %vm930, %v3072, 0.0
  %v3511 = vadd.f32 %v3509, %v3510
  %v3512 = vsel %vm930, %v3073, 0.0
  %v3513 = vadd.f32 %v3511, %v3512
  %v3514 = vsel %vm930, %v3074, 0.0
  %v3515 = vadd.f32 %v3513, %v3514
  %v3516 = vsel %vm930, %v3075, 0.0
  %v3517 = vadd.f32 %v3515, %v3516
  %v3518 = vsel %vm930, %v3076, 0.0
  %v3519 = vadd.f32 %v3517, %v3518
  %v3520 = vsel %vm930, %v3077, 0.0
  %v3521 = vadd.f32 %v3519, %v3520
  %v3522 = vsel %vm930, %v3078, 0.0
  %v3523 = vadd.f32 %v3521, %v3522
  %v3524 = vsel %vm930, %v3079, 0.0
  %v3525 = vadd.f32 %v3523, %v3524
  %v3526 = vsel %vm930, %v3080, 0.0
  %v3527 = vadd.f32 %v3525, %v3526
  %v3528 = vsel %vm930, %v3081, 0.0
  %v3529 = vadd.f32 %v3527, %v3528
  %v3530 = vsel %vm930, %v3082, 0.0
  %v3531 = vadd.f32 %v3529, %v3530
  %v3532 = vsel %vm930, %v3083, 0.0
  %v3533 = vadd.f32 %v3531, %v3532
  %v3534 = vsel %vm930, %v3084, 0.0
  %v3535 = vadd.f32 %v3533, %v3534
  %v3536 = vsel %vm930, %v3085, 0.0
  %v3537 = vadd.f32 %v3535, %v3536
  %v3538 = vsel %vm930, %v3086, 0.0
  %v3539 = vadd.f32 %v3537, %v3538
  %v3540 = vsel %vm930, %v3087, 0.0
  %v3541 = vadd.f32 %v3539, %v3540
  %v3542 = vsel %vm930, %v3088, 0.0
  %v3543 = vadd.f32 %v3541, %v3542
  %v3544 = vsel %vm930, %v3089, 0.0
  %v3545 = vadd.f32 %v3543, %v3544
  %v3546 = vsel %vm930, %v3090, 0.0
  %v3547 = vadd.f32 %v3545, %v3546
  %v3548 = vsel %vm930, %v3091, 0.0
  %v3549 = vadd.f32 %v3547, %v3548
  %v3550 = vsel %vm930, %v3092, 0.0
  %v3551 = vadd.f32 %v3549, %v3550
  %v3552 = vsel %vm930, %v3093, 0.0
  %v3553 = vadd.f32 %v3551, %v3552
  %v3554 = vsel %vm930, %v3094, 0.0
  %v3555 = vadd.f32 %v3553, %v3554
  %v3556 = vsel %vm930, %v3095, 0.0
  %v3557 = vadd.f32 %v3555, %v3556
  %v3558 = vsel %vm930, %v3096, 0.0
  %v3559 = vadd.f32 %v3557, %v3558
  %v3560 = vsel %vm930, %v3097, 0.0
  %v3561 = vadd.f32 %v3559, %v3560
  %v3562 = vsel %vm930, %v3098, 0.0
  %v3563 = vadd.f32 %v3561, %v3562
  %v3564 = vsel %vm930, %v3099, 0.0
  %v3565 = vadd.f32 %v3563, %v3564
  %v3566 = vsel %vm930, %v3100, 0.0
  %v3567 = vadd.f32 %v3565, %v3566
  %v3568 = vsel %vm930, %v3101, 0.0
  %v3569 = vadd.f32 %v3567, %v3568
  %v3570 = vsel %vm930, %v3102, 0.0
  %v3571 = vadd.f32 %v3569, %v3570
  %v3572 = vsel %vm930, %v3103, 0.0
  %v3573 = vadd.f32 %v3571, %v3572
  %v3574 = vsel %vm930, %v3104, 0.0
  %v3575 = vadd.f32 %v3573, %v3574
  %v3576 = vsel %vm930, %v3105, 0.0
  %v3577 = vadd.f32 %v3575, %v3576
  %v3578 = vsel %vm930, %v3106, 0.0
  %v3579 = vadd.f32 %v3577, %v3578
  %v3580 = vsel %vm930, %v3107, 0.0
  %v3581 = vadd.f32 %v3579, %v3580
  %v3582 = vsel %vm930, %v3108, 0.0
  %v3583 = vadd.f32 %v3581, %v3582
  %v3584 = vsel %vm930, %v3109, 0.0
  %v3585 = vadd.f32 %v3583, %v3584
  %v3586 = vsel %vm930, %v3110, 0.0
  %v3587 = vadd.f32 %v3585, %v3586
  %v3588 = vsel %vm930, %v3111, 0.0
  %v3589 = vadd.f32 %v3587, %v3588
  %v3590 = vsel %vm930, %v3112, 0.0
  %v3591 = vadd.f32 %v3589, %v3590
  %v3592 = vsel %vm930, %v3113, 0.0
  %v3593 = vadd.f32 %v3591, %v3592
  %v3594 = vsel %vm930, %v3114, 0.0
  %v3595 = vadd.f32 %v3593, %v3594
  %v3596 = vsel %vm930, %v3115, 0.0
  %v3597 = vadd.f32 %v3595, %v3596
  %v3598 = vsel %vm930, %v3116, 0.0
  %v3599 = vadd.f32 %v3597, %v3598
  %v3600 = vsel %vm930, %v3117, 0.0
  %v3601 = vadd.f32 %v3599, %v3600
  %v3602 = vsel %vm930, %v3118, 0.0
  %v3603 = vadd.f32 %v3601, %v3602
  %v3604 = vsel %vm930, %v3119, 0.0
  %v3605 = vadd.f32 %v3603, %v3604
  %v3606 = vsel %vm930, %v3120, 0.0
  %v3607 = vadd.f32 %v3605, %v3606
  %v3608 = vsel %vm930, %v3121, 0.0
  %v3609 = vadd.f32 %v3607, %v3608
  %v3610 = vsel %vm930, %v3122, 0.0
  %v3611 = vadd.f32 %v3609, %v3610
  %v3612 = vsel %vm930, %v3123, 0.0
  %v3613 = vadd.f32 %v3611, %v3612
  %v3614 = vsel %vm930, %v3124, 0.0
  %v3615 = vadd.f32 %v3613, %v3614
  %v3616 = vsel %vm930, %v3125, 0.0
  %v3617 = vadd.f32 %v3615, %v3616
  %v3618 = vsel %vm930, %v3126, 0.0
  %v3619 = vadd.f32 %v3617, %v3618
  %v3620 = vsel %vm930, %v3127, 0.0
  %v3621 = vadd.f32 %v3619, %v3620
  %v3622 = vsel %vm930, %v3128, 0.0
  %v3623 = vadd.f32 %v3621, %v3622
  %v3624 = vsel %vm930, %v3129, 0.0
  %v3625 = vadd.f32 %v3623, %v3624
  %v3626 = vsel %vm930, %v3130, 0.0
  %v3627 = vadd.f32 %v3625, %v3626
  %v3628 = vsel %vm930, %v3131, 0.0
  %v3629 = vadd.f32 %v3627, %v3628
  %v3630 = vsel %vm930, %v3132, 0.0
  %v3631 = vadd.f32 %v3629, %v3630
  %v3632 = vsel %vm930, %v3133, 0.0
  %v3633 = vadd.f32 %v3631, %v3632
  %v3634 = vsel %vm930, %v3134, 0.0
  %v3635 = vadd.f32 %v3633, %v3634
  %v3636 = vsel %vm930, %v3135, 0.0
  %v3637 = vadd.f32 %v3635, %v3636
  %v3638 = vsel %vm930, %v3136, 0.0
  %v3639 = vadd.f32 %v3637, %v3638
  %v3640 = vsel %vm930, %v3137, 0.0
  %v3641 = vadd.f32 %v3639, %v3640
  %v3642 = vsel %vm930, %v3138, 0.0
  %v3643 = vadd.f32 %v3641, %v3642
  %v3644 = vsel %vm930, %v3139, 0.0
  %v3645 = vadd.f32 %v3643, %v3644
  %v3646 = vsel %vm930, %v3140, 0.0
  %v3647 = vadd.f32 %v3645, %v3646
  %v3648 = vsel %vm930, %v3141, 0.0
  %v3649 = vadd.f32 %v3647, %v3648
  %v3650 = vsel %vm930, %v3142, 0.0
  %v3651 = vadd.f32 %v3649, %v3650
  %v3652 = vsel %vm930, %v3143, 0.0
  %v3653 = vadd.f32 %v3651, %v3652
  %v3654 = vsel %vm930, %v3144, 0.0
  %v3655 = vadd.f32 %v3653, %v3654
  %v3656 = vrot.slane %v3655, 4
  %v3657 = vadd.f32 %v3655, %v3656
  %v3658 = vrot.slane %v3657, 2
  %v3659 = vadd.f32 %v3657, %v3658
  %v3660 = vrot.slane %v3659, 1
  %v3661 = vadd.f32 %v3659, %v3660
  %v3662 = vmul.f32 %v2888, 0.00048828125
  %v3663 = vmul.f32 %v3661, 0.00048828125
  %v3664 = vmul.f32 %v3662, %v3662
  %v3665 = vsub.f32 %v3663, %v3664
  %v3666 = vld [vmem:[%s2] sm:$0x1]
  %v3667 = vadd.f32 %v3665, 1e-05
  %v3668 = vrsqrt.pop %v3667
  %v3669 = vmul.f32 %v3666, %v3668
  %v3670 = vld [vmem:[%s3] sm:$0x1]
  %v3671 = vmul.f32 %v3662, %v3669
  %v3672 = vsub.f32 %v3670, %v3671
  %v3674 = vlaneseq
  %v3675 = vshrl.u32 %v3674, 7
  %v3676 = vsub.s32 0, %v3675
  %v3677 = vrot.slane %v3669, %v3676
  %v3679 = vmul.f32 %v1350, %v3677
  %v3680 = vmul.f32 %v1353, %v3677
  %v3681 = vmul.f32 %v1358, %v3677
  %v3682 = vmul.f32 %v1361, %v3677
  %v3683 = vmul.f32 %v1366, %v3677
  %v3684 = vmul.f32 %v1369, %v3677
  %v3685 = vmul.f32 %v1374, %v3677
  %v3686 = vmul.f32 %v1377, %v3677
  %v3687 = vmul.f32 %v1382, %v3677
  %v3688 = vmul.f32 %v1385, %v3677
  %v3689 = vmul.f32 %v1390, %v3677
  %v3690 = vmul.f32 %v1393, %v3677
  %v3691 = vmul.f32 %v1398, %v3677
  %v3692 = vmul.f32 %v1401, %v3677
  %v3693 = vmul.f32 %v1406, %v3677
  %v3694 = vmul.f32 %v1409, %v3677
  %v3695 = vmul.f32 %v1414, %v3677
  %v3696 = vmul.f32 %v1417, %v3677
  %v3697 = vmul.f32 %v1422, %v3677
  %v3698 = vmul.f32 %v1425, %v3677
  %v3699 = vmul.f32 %v1430, %v3677
  %v3700 = vmul.f32 %v1433, %v3677
  %v3701 = vmul.f32 %v1438, %v3677
  %v3702 = vmul.f32 %v1441, %v3677
  %v3703 = vmul.f32 %v1446, %v3677
  %v3704 = vmul.f32 %v1449, %v3677
  %v3705 = vmul.f32 %v1454, %v3677
  %v3706 = vmul.f32 %v1457, %v3677
  %v3707 = vmul.f32 %v1462, %v3677
  %v3708 = vmul.f32 %v1465, %v3677
  %v3709 = vmul.f32 %v1470, %v3677
  %v3710 = vmul.f32 %v1473, %v3677
  %v3711 = vmul.f32 %v1478, %v3677
  %v3712 = vmul.f32 %v1481, %v3677
  %v3713 = vmul.f32 %v1486, %v3677
  %v3714 = vmul.f32 %v1489, %v3677
  %v3715 = vmul.f32 %v1494, %v3677
  %v3716 = vmul.f32 %v1497, %v3677
  %v3717 = vmul.f32 %v1502, %v3677
  %v3718 = vmul.f32 %v1505, %v3677
  %v3719 = vmul.f32 %v1510, %v3677
  %v3720 = vmul.f32 %v1513, %v3677
  %v3721 = vmul.f32 %v1518, %v3677
  %v3722 = vmul.f32 %v1521, %v3677
  %v3723 = vmul.f32 %v1526, %v3677
  %v3724 = vmul.f32 %v1529, %v3677
  %v3725 = vmul.f32 %v1534, %v3677
  %v3726 = vmul.f32 %v1537, %v3677
  %v3727 = vmul.f32 %v1542, %v3677
  %v3728 = vmul.f32 %v1545, %v3677
  %v3729 = vmul.f32 %v1550, %v3677
  %v3730 = vmul.f32 %v1553, %v3677
  %v3731 = vmul.f32 %v1558, %v3677
  %v3732 = vmul.f32 %v1561, %v3677
  %v3733 = vmul.f32 %v1566, %v3677
  %v3734 = vmul.f32 %v1569, %v3677
  %v3735 = vmul.f32 %v1574, %v3677
  %v3736 = vmul.f32 %v1577, %v3677
  %v3737 = vmul.f32 %v1582, %v3677
  %v3738 = vmul.f32 %v1585, %v3677
  %v3739 = vmul.f32 %v1590, %v3677
  %v3740 = vmul.f32 %v1593, %v3677
  %v3741 = vmul.f32 %v1598, %v3677
  %v3742 = vmul.f32 %v1601, %v3677
  %v3743 = vmul.f32 %v1606, %v3677
  %v3744 = vmul.f32 %v1609, %v3677
  %v3745 = vmul.f32 %v1614, %v3677
  %v3746 = vmul.f32 %v1617, %v3677
  %v3747 = vmul.f32 %v1622, %v3677
  %v3748 = vmul.f32 %v1625, %v3677
  %v3749 = vmul.f32 %v1630, %v3677
  %v3750 = vmul.f32 %v1633, %v3677
  %v3751 = vmul.f32 %v1638, %v3677
  %v3752 = vmul.f32 %v1641, %v3677
  %v3753 = vmul.f32 %v1646, %v3677
  %v3754 = vmul.f32 %v1649, %v3677
  %v3755 = vmul.f32 %v1654, %v3677
  %v3756 = vmul.f32 %v1657, %v3677
  %v3757 = vmul.f32 %v1662, %v3677
  %v3758 = vmul.f32 %v1665, %v3677
  %v3759 = vmul.f32 %v1670, %v3677
  %v3760 = vmul.f32 %v1673, %v3677
  %v3761 = vmul.f32 %v1678, %v3677
  %v3762 = vmul.f32 %v1681, %v3677
  %v3763 = vmul.f32 %v1686, %v3677
  %v3764 = vmul.f32 %v1689, %v3677
  %v3765 = vmul.f32 %v1694, %v3677
  %v3766 = vmul.f32 %v1697, %v3677
  %v3767 = vmul.f32 %v1702, %v3677
  %v3768 = vmul.f32 %v1705, %v3677
  %v3769 = vmul.f32 %v1710, %v3677
  %v3770 = vmul.f32 %v1713, %v3677
  %v3771 = vmul.f32 %v1718, %v3677
  %v3772 = vmul.f32 %v1721, %v3677
  %v3773 = vmul.f32 %v1726, %v3677
  %v3774 = vmul.f32 %v1729, %v3677
  %v3775 = vmul.f32 %v1734, %v3677
  %v3776 = vmul.f32 %v1737, %v3677
  %v3777 = vmul.f32 %v1742, %v3677
  %v3778 = vmul.f32 %v1745, %v3677
  %v3779 = vmul.f32 %v1750, %v3677
  %v3780 = vmul.f32 %v1753, %v3677
  %v3781 = vmul.f32 %v1758, %v3677
  %v3782 = vmul.f32 %v1761, %v3677
  %v3783 = vmul.f32 %v1766, %v3677
  %v3784 = vmul.f32 %v1769, %v3677
  %v3785 = vmul.f32 %v1774, %v3677
  %v3786 = vmul.f32 %v1777, %v3677
  %v3787 = vmul.f32 %v1782, %v3677
  %v3788 = vmul.f32 %v1785, %v3677
  %v3789 = vmul.f32 %v1790, %v3677
  %v3790 = vmul.f32 %v1793, %v3677
  %v3791 = vmul.f32 %v1798, %v3677
  %v3792 = vmul.f32 %v1801, %v3677
  %v3793 = vmul.f32 %v1806, %v3677
  %v3794 = vmul.f32 %v1809, %v3677
  %v3795 = vmul.f32 %v1814, %v3677
  %v3796 = vmul.f32 %v1817, %v3677
  %v3797 = vmul.f32 %v1822, %v3677
  %v3798 = vmul.f32 %v1825, %v3677
  %v3799 = vmul.f32 %v1830, %v3677
  %v3800 = vmul.f32 %v1833, %v3677
  %v3801 = vmul.f32 %v1838, %v3677
  %v3802 = vmul.f32 %v1841, %v3677
  %v3803 = vmul.f32 %v1846, %v3677
  %v3804 = vmul.f32 %v1849, %v3677
  %v3805 = vmul.f32 %v1854, %v3677
  %v3806 = vmul.f32 %v1857, %v3677
  %v3807 = vmul.f32 %v1862, %v3677
  %v3808 = vmul.f32 %v1865, %v3677
  %v3809 = vmul.f32 %v1870, %v3677
  %v3810 = vmul.f32 %v1873, %v3677
  %v3811 = vmul.f32 %v1878, %v3677
  %v3812 = vmul.f32 %v1881, %v3677
  %v3813 = vmul.f32 %v1886, %v3677
  %v3814 = vmul.f32 %v1889, %v3677
  %v3815 = vmul.f32 %v1894, %v3677
  %v3816 = vmul.f32 %v1897, %v3677
  %v3817 = vmul.f32 %v1902, %v3677
  %v3818 = vmul.f32 %v1905, %v3677
  %v3819 = vmul.f32 %v1910, %v3677
  %v3820 = vmul.f32 %v1913, %v3677
  %v3821 = vmul.f32 %v1918, %v3677
  %v3822 = vmul.f32 %v1921, %v3677
  %v3823 = vmul.f32 %v1926, %v3677
  %v3824 = vmul.f32 %v1929, %v3677
  %v3825 = vmul.f32 %v1934, %v3677
  %v3826 = vmul.f32 %v1937, %v3677
  %v3827 = vmul.f32 %v1942, %v3677
  %v3828 = vmul.f32 %v1945, %v3677
  %v3829 = vmul.f32 %v1950, %v3677
  %v3830 = vmul.f32 %v1953, %v3677
  %v3831 = vmul.f32 %v1958, %v3677
  %v3832 = vmul.f32 %v1961, %v3677
  %v3833 = vmul.f32 %v1966, %v3677
  %v3834 = vmul.f32 %v1969, %v3677
  %v3835 = vmul.f32 %v1974, %v3677
  %v3836 = vmul.f32 %v1977, %v3677
  %v3837 = vmul.f32 %v1982, %v3677
  %v3838 = vmul.f32 %v1985, %v3677
  %v3839 = vmul.f32 %v1990, %v3677
  %v3840 = vmul.f32 %v1993, %v3677
  %v3841 = vmul.f32 %v1998, %v3677
  %v3842 = vmul.f32 %v2001, %v3677
  %v3843 = vmul.f32 %v2006, %v3677
  %v3844 = vmul.f32 %v2009, %v3677
  %v3845 = vmul.f32 %v2014, %v3677
  %v3846 = vmul.f32 %v2017, %v3677
  %v3847 = vmul.f32 %v2022, %v3677
  %v3848 = vmul.f32 %v2025, %v3677
  %v3849 = vmul.f32 %v2030, %v3677
  %v3850 = vmul.f32 %v2033, %v3677
  %v3851 = vmul.f32 %v2038, %v3677
  %v3852 = vmul.f32 %v2041, %v3677
  %v3853 = vmul.f32 %v2046, %v3677
  %v3854 = vmul.f32 %v2049, %v3677
  %v3855 = vmul.f32 %v2054, %v3677
  %v3856 = vmul.f32 %v2057, %v3677
  %v3857 = vmul.f32 %v2062, %v3677
  %v3858 = vmul.f32 %v2065, %v3677
  %v3859 = vmul.f32 %v2070, %v3677
  %v3860 = vmul.f32 %v2073, %v3677
  %v3861 = vmul.f32 %v2078, %v3677
  %v3862 = vmul.f32 %v2081, %v3677
  %v3863 = vmul.f32 %v2086, %v3677
  %v3864 = vmul.f32 %v2089, %v3677
  %v3865 = vmul.f32 %v2094, %v3677
  %v3866 = vmul.f32 %v2097, %v3677
  %v3867 = vmul.f32 %v2102, %v3677
  %v3868 = vmul.f32 %v2105, %v3677
  %v3869 = vmul.f32 %v2110, %v3677
  %v3870 = vmul.f32 %v2113, %v3677
  %v3871 = vmul.f32 %v2118, %v3677
  %v3872 = vmul.f32 %v2121, %v3677
  %v3873 = vmul.f32 %v2126, %v3677
  %v3874 = vmul.f32 %v2129, %v3677
  %v3875 = vmul.f32 %v2134, %v3677
  %v3876 = vmul.f32 %v2137, %v3677
  %v3877 = vmul.f32 %v2142, %v3677
  %v3878 = vmul.f32 %v2145, %v3677
  %v3879 = vmul.f32 %v2150, %v3677
  %v3880 = vmul.f32 %v2153, %v3677
  %v3881 = vmul.f32 %v2158, %v3677
  %v3882 = vmul.f32 %v2161, %v3677
  %v3883 = vmul.f32 %v2166, %v3677
  %v3884 = vmul.f32 %v2169, %v3677
  %v3885 = vmul.f32 %v2174, %v3677
  %v3886 = vmul.f32 %v2177, %v3677
  %v3887 = vmul.f32 %v2182, %v3677
  %v3888 = vmul.f32 %v2185, %v3677
  %v3889 = vmul.f32 %v2190, %v3677
  %v3890 = vmul.f32 %v2193, %v3677
  %v3891 = vmul.f32 %v2198, %v3677
  %v3892 = vmul.f32 %v2201, %v3677
  %v3893 = vmul.f32 %v2206, %v3677
  %v3894 = vmul.f32 %v2209, %v3677
  %v3895 = vmul.f32 %v2214, %v3677
  %v3896 = vmul.f32 %v2217, %v3677
  %v3897 = vmul.f32 %v2222, %v3677
  %v3898 = vmul.f32 %v2225, %v3677
  %v3899 = vmul.f32 %v2230, %v3677
  %v3900 = vmul.f32 %v2233, %v3677
  %v3901 = vmul.f32 %v2238, %v3677
  %v3902 = vmul.f32 %v2241, %v3677
  %v3903 = vmul.f32 %v2246, %v3677
  %v3904 = vmul.f32 %v2249, %v3677
  %v3905 = vmul.f32 %v2254, %v3677
  %v3906 = vmul.f32 %v2257, %v3677
  %v3907 = vmul.f32 %v2262, %v3677
  %v3908 = vmul.f32 %v2265, %v3677
  %v3909 = vmul.f32 %v2270, %v3677
  %v3910 = vmul.f32 %v2273, %v3677
  %v3911 = vmul.f32 %v2278, %v3677
  %v3912 = vmul.f32 %v2281, %v3677
  %v3913 = vmul.f32 %v2286, %v3677
  %v3914 = vmul.f32 %v2289, %v3677
  %v3915 = vmul.f32 %v2294, %v3677
  %v3916 = vmul.f32 %v2297, %v3677
  %v3917 = vmul.f32 %v2302, %v3677
  %v3918 = vmul.f32 %v2305, %v3677
  %v3919 = vmul.f32 %v2310, %v3677
  %v3920 = vmul.f32 %v2313, %v3677
  %v3921 = vmul.f32 %v2318, %v3677
  %v3922 = vmul.f32 %v2321, %v3677
  %v3923 = vmul.f32 %v2326, %v3677
  %v3924 = vmul.f32 %v2329, %v3677
  %v3925 = vmul.f32 %v2334, %v3677
  %v3926 = vmul.f32 %v2337, %v3677
  %v3927 = vmul.f32 %v2342, %v3677
  %v3928 = vmul.f32 %v2345, %v3677
  %v3929 = vmul.f32 %v2350, %v3677
  %v3930 = vmul.f32 %v2353, %v3677
  %v3931 = vmul.f32 %v2358, %v3677
  %v3932 = vmul.f32 %v2361, %v3677
  %v3933 = vmul.f32 %v2366, %v3677
  %v3934 = vmul.f32 %v2369, %v3677
  %v3936 = vlaneseq
  %v3937 = vshrl.u32 %v3936, 7
  %v3938 = vsub.s32 0, %v3937
  %v3939 = vrot.slane %v3672, %v3938
  %v3941 = vadd.f32 %v3679, %v3939
  %v3942 = vadd.f32 %v3680, %v3939
  %v3943 = vadd.f32 %v3681, %v3939
  %v3944 = vadd.f32 %v3682, %v3939
  %v3945 = vadd.f32 %v3683, %v3939
  %v3946 = vadd.f32 %v3684, %v3939
  %v3947 = vadd.f32 %v3685, %v3939
  %v3948 = vadd.f32 %v3686, %v3939
  %v3949 = vadd.f32 %v3687, %v3939
  %v3950 = vadd.f32 %v3688, %v3939
  %v3951 = vadd.f32 %v3689, %v3939
  %v3952 = vadd.f32 %v3690, %v3939
  %v3953 = vadd.f32 %v3691, %v3939
  %v3954 = vadd.f32 %v3692, %v3939
  %v3955 = vadd.f32 %v3693, %v3939
  %v3956 = vadd.f32 %v3694, %v3939
  %v3957 = vadd.f32 %v3695, %v3939
  %v3958 = vadd.f32 %v3696, %v3939
  %v3959 = vadd.f32 %v3697, %v3939
  %v3960 = vadd.f32 %v3698, %v3939
  %v3961 = vadd.f32 %v3699, %v3939
  %v3962 = vadd.f32 %v3700, %v3939
  %v3963 = vadd.f32 %v3701, %v3939
  %v3964 = vadd.f32 %v3702, %v3939
  %v3965 = vadd.f32 %v3703, %v3939
  %v3966 = vadd.f32 %v3704, %v3939
  %v3967 = vadd.f32 %v3705, %v3939
  %v3968 = vadd.f32 %v3706, %v3939
  %v3969 = vadd.f32 %v3707, %v3939
  %v3970 = vadd.f32 %v3708, %v3939
  %v3971 = vadd.f32 %v3709, %v3939
  %v3972 = vadd.f32 %v3710, %v3939
  %v3973 = vadd.f32 %v3711, %v3939
  %v3974 = vadd.f32 %v3712, %v3939
  %v3975 = vadd.f32 %v3713, %v3939
  %v3976 = vadd.f32 %v3714, %v3939
  %v3977 = vadd.f32 %v3715, %v3939
  %v3978 = vadd.f32 %v3716, %v3939
  %v3979 = vadd.f32 %v3717, %v3939
  %v3980 = vadd.f32 %v3718, %v3939
  %v3981 = vadd.f32 %v3719, %v3939
  %v3982 = vadd.f32 %v3720, %v3939
  %v3983 = vadd.f32 %v3721, %v3939
  %v3984 = vadd.f32 %v3722, %v3939
  %v3985 = vadd.f32 %v3723, %v3939
  %v3986 = vadd.f32 %v3724, %v3939
  %v3987 = vadd.f32 %v3725, %v3939
  %v3988 = vadd.f32 %v3726, %v3939
  %v3989 = vadd.f32 %v3727, %v3939
  %v3990 = vadd.f32 %v3728, %v3939
  %v3991 = vadd.f32 %v3729, %v3939
  %v3992 = vadd.f32 %v3730, %v3939
  %v3993 = vadd.f32 %v3731, %v3939
  %v3994 = vadd.f32 %v3732, %v3939
  %v3995 = vadd.f32 %v3733, %v3939
  %v3996 = vadd.f32 %v3734, %v3939
  %v3997 = vadd.f32 %v3735, %v3939
  %v3998 = vadd.f32 %v3736, %v3939
  %v3999 = vadd.f32 %v3737, %v3939
  %v4000 = vadd.f32 %v3738, %v3939
  %v4001 = vadd.f32 %v3739, %v3939
  %v4002 = vadd.f32 %v3740, %v3939
  %v4003 = vadd.f32 %v3741, %v3939
  %v4004 = vadd.f32 %v3742, %v3939
  %v4005 = vadd.f32 %v3743, %v3939
  %v4006 = vadd.f32 %v3744, %v3939
  %v4007 = vadd.f32 %v3745, %v3939
  %v4008 = vadd.f32 %v3746, %v3939
  %v4009 = vadd.f32 %v3747, %v3939
  %v4010 = vadd.f32 %v3748, %v3939
  %v4011 = vadd.f32 %v3749, %v3939
  %v4012 = vadd.f32 %v3750, %v3939
  %v4013 = vadd.f32 %v3751, %v3939
  %v4014 = vadd.f32 %v3752, %v3939
  %v4015 = vadd.f32 %v3753, %v3939
  %v4016 = vadd.f32 %v3754, %v3939
  %v4017 = vadd.f32 %v3755, %v3939
  %v4018 = vadd.f32 %v3756, %v3939
  %v4019 = vadd.f32 %v3757, %v3939
  %v4020 = vadd.f32 %v3758, %v3939
  %v4021 = vadd.f32 %v3759, %v3939
  %v4022 = vadd.f32 %v3760, %v3939
  %v4023 = vadd.f32 %v3761, %v3939
  %v4024 = vadd.f32 %v3762, %v3939
  %v4025 = vadd.f32 %v3763, %v3939
  %v4026 = vadd.f32 %v3764, %v3939
  %v4027 = vadd.f32 %v3765, %v3939
  %v4028 = vadd.f32 %v3766, %v3939
  %v4029 = vadd.f32 %v3767, %v3939
  %v4030 = vadd.f32 %v3768, %v3939
  %v4031 = vadd.f32 %v3769, %v3939
  %v4032 = vadd.f32 %v3770, %v3939
  %v4033 = vadd.f32 %v3771, %v3939
  %v4034 = vadd.f32 %v3772, %v3939
  %v4035 = vadd.f32 %v3773, %v3939
  %v4036 = vadd.f32 %v3774, %v3939
  %v4037 = vadd.f32 %v3775, %v3939
  %v4038 = vadd.f32 %v3776, %v3939
  %v4039 = vadd.f32 %v3777, %v3939
  %v4040 = vadd.f32 %v3778, %v3939
  %v4041 = vadd.f32 %v3779, %v3939
  %v4042 = vadd.f32 %v3780, %v3939
  %v4043 = vadd.f32 %v3781, %v3939
  %v4044 = vadd.f32 %v3782, %v3939
  %v4045 = vadd.f32 %v3783, %v3939
  %v4046 = vadd.f32 %v3784, %v3939
  %v4047 = vadd.f32 %v3785, %v3939
  %v4048 = vadd.f32 %v3786, %v3939
  %v4049 = vadd.f32 %v3787, %v3939
  %v4050 = vadd.f32 %v3788, %v3939
  %v4051 = vadd.f32 %v3789, %v3939
  %v4052 = vadd.f32 %v3790, %v3939
  %v4053 = vadd.f32 %v3791, %v3939
  %v4054 = vadd.f32 %v3792, %v3939
  %v4055 = vadd.f32 %v3793, %v3939
  %v4056 = vadd.f32 %v3794, %v3939
  %v4057 = vadd.f32 %v3795, %v3939
  %v4058 = vadd.f32 %v3796, %v3939
  %v4059 = vadd.f32 %v3797, %v3939
  %v4060 = vadd.f32 %v3798, %v3939
  %v4061 = vadd.f32 %v3799, %v3939
  %v4062 = vadd.f32 %v3800, %v3939
  %v4063 = vadd.f32 %v3801, %v3939
  %v4064 = vadd.f32 %v3802, %v3939
  %v4065 = vadd.f32 %v3803, %v3939
  %v4066 = vadd.f32 %v3804, %v3939
  %v4067 = vadd.f32 %v3805, %v3939
  %v4068 = vadd.f32 %v3806, %v3939
  %v4069 = vadd.f32 %v3807, %v3939
  %v4070 = vadd.f32 %v3808, %v3939
  %v4071 = vadd.f32 %v3809, %v3939
  %v4072 = vadd.f32 %v3810, %v3939
  %v4073 = vadd.f32 %v3811, %v3939
  %v4074 = vadd.f32 %v3812, %v3939
  %v4075 = vadd.f32 %v3813, %v3939
  %v4076 = vadd.f32 %v3814, %v3939
  %v4077 = vadd.f32 %v3815, %v3939
  %v4078 = vadd.f32 %v3816, %v3939
  %v4079 = vadd.f32 %v3817, %v3939
  %v4080 = vadd.f32 %v3818, %v3939
  %v4081 = vadd.f32 %v3819, %v3939
  %v4082 = vadd.f32 %v3820, %v3939
  %v4083 = vadd.f32 %v3821, %v3939
  %v4084 = vadd.f32 %v3822, %v3939
  %v4085 = vadd.f32 %v3823, %v3939
  %v4086 = vadd.f32 %v3824, %v3939
  %v4087 = vadd.f32 %v3825, %v3939
  %v4088 = vadd.f32 %v3826, %v3939
  %v4089 = vadd.f32 %v3827, %v3939
  %v4090 = vadd.f32 %v3828, %v3939
  %v4091 = vadd.f32 %v3829, %v3939
  %v4092 = vadd.f32 %v3830, %v3939
  %v4093 = vadd.f32 %v3831, %v3939
  %v4094 = vadd.f32 %v3832, %v3939
  %v4095 = vadd.f32 %v3833, %v3939
  %v4096 = vadd.f32 %v3834, %v3939
  %v4097 = vadd.f32 %v3835, %v3939
  %v4098 = vadd.f32 %v3836, %v3939
  %v4099 = vadd.f32 %v3837, %v3939
  %v4100 = vadd.f32 %v3838, %v3939
  %v4101 = vadd.f32 %v3839, %v3939
  %v4102 = vadd.f32 %v3840, %v3939
  %v4103 = vadd.f32 %v3841, %v3939
  %v4104 = vadd.f32 %v3842, %v3939
  %v4105 = vadd.f32 %v3843, %v3939
  %v4106 = vadd.f32 %v3844, %v3939
  %v4107 = vadd.f32 %v3845, %v3939
  %v4108 = vadd.f32 %v3846, %v3939
  %v4109 = vadd.f32 %v3847, %v3939
  %v4110 = vadd.f32 %v3848, %v3939
  %v4111 = vadd.f32 %v3849, %v3939
  %v4112 = vadd.f32 %v3850, %v3939
  %v4113 = vadd.f32 %v3851, %v3939
  %v4114 = vadd.f32 %v3852, %v3939
  %v4115 = vadd.f32 %v3853, %v3939
  %v4116 = vadd.f32 %v3854, %v3939
  %v4117 = vadd.f32 %v3855, %v3939
  %v4118 = vadd.f32 %v3856, %v3939
  %v4119 = vadd.f32 %v3857, %v3939
  %v4120 = vadd.f32 %v3858, %v3939
  %v4121 = vadd.f32 %v3859, %v3939
  %v4122 = vadd.f32 %v3860, %v3939
  %v4123 = vadd.f32 %v3861, %v3939
  %v4124 = vadd.f32 %v3862, %v3939
  %v4125 = vadd.f32 %v3863, %v3939
  %v4126 = vadd.f32 %v3864, %v3939
  %v4127 = vadd.f32 %v3865, %v3939
  %v4128 = vadd.f32 %v3866, %v3939
  %v4129 = vadd.f32 %v3867, %v3939
  %v4130 = vadd.f32 %v3868, %v3939
  %v4131 = vadd.f32 %v3869, %v3939
  %v4132 = vadd.f32 %v3870, %v3939
  %v4133 = vadd.f32 %v3871, %v3939
  %v4134 = vadd.f32 %v3872, %v3939
  %v4135 = vadd.f32 %v3873, %v3939
  %v4136 = vadd.f32 %v3874, %v3939
  %v4137 = vadd.f32 %v3875, %v3939
  %v4138 = vadd.f32 %v3876, %v3939
  %v4139 = vadd.f32 %v3877, %v3939
  %v4140 = vadd.f32 %v3878, %v3939
  %v4141 = vadd.f32 %v3879, %v3939
  %v4142 = vadd.f32 %v3880, %v3939
  %v4143 = vadd.f32 %v3881, %v3939
  %v4144 = vadd.f32 %v3882, %v3939
  %v4145 = vadd.f32 %v3883, %v3939
  %v4146 = vadd.f32 %v3884, %v3939
  %v4147 = vadd.f32 %v3885, %v3939
  %v4148 = vadd.f32 %v3886, %v3939
  %v4149 = vadd.f32 %v3887, %v3939
  %v4150 = vadd.f32 %v3888, %v3939
  %v4151 = vadd.f32 %v3889, %v3939
  %v4152 = vadd.f32 %v3890, %v3939
  %v4153 = vadd.f32 %v3891, %v3939
  %v4154 = vadd.f32 %v3892, %v3939
  %v4155 = vadd.f32 %v3893, %v3939
  %v4156 = vadd.f32 %v3894, %v3939
  %v4157 = vadd.f32 %v3895, %v3939
  %v4158 = vadd.f32 %v3896, %v3939
  %v4159 = vadd.f32 %v3897, %v3939
  %v4160 = vadd.f32 %v3898, %v3939
  %v4161 = vadd.f32 %v3899, %v3939
  %v4162 = vadd.f32 %v3900, %v3939
  %v4163 = vadd.f32 %v3901, %v3939
  %v4164 = vadd.f32 %v3902, %v3939
  %v4165 = vadd.f32 %v3903, %v3939
  %v4166 = vadd.f32 %v3904, %v3939
  %v4167 = vadd.f32 %v3905, %v3939
  %v4168 = vadd.f32 %v3906, %v3939
  %v4169 = vadd.f32 %v3907, %v3939
  %v4170 = vadd.f32 %v3908, %v3939
  %v4171 = vadd.f32 %v3909, %v3939
  %v4172 = vadd.f32 %v3910, %v3939
  %v4173 = vadd.f32 %v3911, %v3939
  %v4174 = vadd.f32 %v3912, %v3939
  %v4175 = vadd.f32 %v3913, %v3939
  %v4176 = vadd.f32 %v3914, %v3939
  %v4177 = vadd.f32 %v3915, %v3939
  %v4178 = vadd.f32 %v3916, %v3939
  %v4179 = vadd.f32 %v3917, %v3939
  %v4180 = vadd.f32 %v3918, %v3939
  %v4181 = vadd.f32 %v3919, %v3939
  %v4182 = vadd.f32 %v3920, %v3939
  %v4183 = vadd.f32 %v3921, %v3939
  %v4184 = vadd.f32 %v3922, %v3939
  %v4185 = vadd.f32 %v3923, %v3939
  %v4186 = vadd.f32 %v3924, %v3939
  %v4187 = vadd.f32 %v3925, %v3939
  %v4188 = vadd.f32 %v3926, %v3939
  %v4189 = vadd.f32 %v3927, %v3939
  %v4190 = vadd.f32 %v3928, %v3939
  %v4191 = vadd.f32 %v3929, %v3939
  %v4192 = vadd.f32 %v3930, %v3939
  %v4193 = vadd.f32 %v3931, %v3939
  %v4194 = vadd.f32 %v3932, %v3939
  %v4195 = vadd.f32 %v3933, %v3939
  %v4196 = vadd.f32 %v3934, %v3939
  %v4197 = vmax.f32 %v3941, 0.0
  %v4198 = vmax.f32 %v3942, 0.0
  %v4199 = vmax.f32 %v3943, 0.0
  %v4200 = vmax.f32 %v3944, 0.0
  %v4201 = vmax.f32 %v3945, 0.0
  %v4202 = vmax.f32 %v3946, 0.0
  %v4203 = vmax.f32 %v3947, 0.0
  %v4204 = vmax.f32 %v3948, 0.0
  %v4205 = vmax.f32 %v3949, 0.0
  %v4206 = vmax.f32 %v3950, 0.0
  %v4207 = vmax.f32 %v3951, 0.0
  %v4208 = vmax.f32 %v3952, 0.0
  %v4209 = vmax.f32 %v3953, 0.0
  %v4210 = vmax.f32 %v3954, 0.0
  %v4211 = vmax.f32 %v3955, 0.0
  %v4212 = vmax.f32 %v3956, 0.0
  %v4213 = vmax.f32 %v3957, 0.0
  %v4214 = vmax.f32 %v3958, 0.0
  %v4215 = vmax.f32 %v3959, 0.0
  %v4216 = vmax.f32 %v3960, 0.0
  %v4217 = vmax.f32 %v3961, 0.0
  %v4218 = vmax.f32 %v3962, 0.0
  %v4219 = vmax.f32 %v3963, 0.0
  %v4220 = vmax.f32 %v3964, 0.0
  %v4221 = vmax.f32 %v3965, 0.0
  %v4222 = vmax.f32 %v3966, 0.0
  %v4223 = vmax.f32 %v3967, 0.0
  %v4224 = vmax.f32 %v3968, 0.0
  %v4225 = vmax.f32 %v3969, 0.0
  %v4226 = vmax.f32 %v3970, 0.0
  %v4227 = vmax.f32 %v3971, 0.0
  %v4228 = vmax.f32 %v3972, 0.0
  %v4229 = vmax.f32 %v3973, 0.0
  %v4230 = vmax.f32 %v3974, 0.0
  %v4231 = vmax.f32 %v3975, 0.0
  %v4232 = vmax.f32 %v3976, 0.0
  %v4233 = vmax.f32 %v3977, 0.0
  %v4234 = vmax.f32 %v3978, 0.0
  %v4235 = vmax.f32 %v3979, 0.0
  %v4236 = vmax.f32 %v3980, 0.0
  %v4237 = vmax.f32 %v3981, 0.0
  %v4238 = vmax.f32 %v3982, 0.0
  %v4239 = vmax.f32 %v3983, 0.0
  %v4240 = vmax.f32 %v3984, 0.0
  %v4241 = vmax.f32 %v3985, 0.0
  %v4242 = vmax.f32 %v3986, 0.0
  %v4243 = vmax.f32 %v3987, 0.0
  %v4244 = vmax.f32 %v3988, 0.0
  %v4245 = vmax.f32 %v3989, 0.0
  %v4246 = vmax.f32 %v3990, 0.0
  %v4247 = vmax.f32 %v3991, 0.0
  %v4248 = vmax.f32 %v3992, 0.0
  %v4249 = vmax.f32 %v3993, 0.0
  %v4250 = vmax.f32 %v3994, 0.0
  %v4251 = vmax.f32 %v3995, 0.0
  %v4252 = vmax.f32 %v3996, 0.0
  %v4253 = vmax.f32 %v3997, 0.0
  %v4254 = vmax.f32 %v3998, 0.0
  %v4255 = vmax.f32 %v3999, 0.0
  %v4256 = vmax.f32 %v4000, 0.0
  %v4257 = vmax.f32 %v4001, 0.0
  %v4258 = vmax.f32 %v4002, 0.0
  %v4259 = vmax.f32 %v4003, 0.0
  %v4260 = vmax.f32 %v4004, 0.0
  %v4261 = vmax.f32 %v4005, 0.0
  %v4262 = vmax.f32 %v4006, 0.0
  %v4263 = vmax.f32 %v4007, 0.0
  %v4264 = vmax.f32 %v4008, 0.0
  %v4265 = vmax.f32 %v4009, 0.0
  %v4266 = vmax.f32 %v4010, 0.0
  %v4267 = vmax.f32 %v4011, 0.0
  %v4268 = vmax.f32 %v4012, 0.0
  %v4269 = vmax.f32 %v4013, 0.0
  %v4270 = vmax.f32 %v4014, 0.0
  %v4271 = vmax.f32 %v4015, 0.0
  %v4272 = vmax.f32 %v4016, 0.0
  %v4273 = vmax.f32 %v4017, 0.0
  %v4274 = vmax.f32 %v4018, 0.0
  %v4275 = vmax.f32 %v4019, 0.0
  %v4276 = vmax.f32 %v4020, 0.0
  %v4277 = vmax.f32 %v4021, 0.0
  %v4278 = vmax.f32 %v4022, 0.0
  %v4279 = vmax.f32 %v4023, 0.0
  %v4280 = vmax.f32 %v4024, 0.0
  %v4281 = vmax.f32 %v4025, 0.0
  %v4282 = vmax.f32 %v4026, 0.0
  %v4283 = vmax.f32 %v4027, 0.0
  %v4284 = vmax.f32 %v4028, 0.0
  %v4285 = vmax.f32 %v4029, 0.0
  %v4286 = vmax.f32 %v4030, 0.0
  %v4287 = vmax.f32 %v4031, 0.0
  %v4288 = vmax.f32 %v4032, 0.0
  %v4289 = vmax.f32 %v4033, 0.0
  %v4290 = vmax.f32 %v4034, 0.0
  %v4291 = vmax.f32 %v4035, 0.0
  %v4292 = vmax.f32 %v4036, 0.0
  %v4293 = vmax.f32 %v4037, 0.0
  %v4294 = vmax.f32 %v4038, 0.0
  %v4295 = vmax.f32 %v4039, 0.0
  %v4296 = vmax.f32 %v4040, 0.0
  %v4297 = vmax.f32 %v4041, 0.0
  %v4298 = vmax.f32 %v4042, 0.0
  %v4299 = vmax.f32 %v4043, 0.0
  %v4300 = vmax.f32 %v4044, 0.0
  %v4301 = vmax.f32 %v4045, 0.0
  %v4302 = vmax.f32 %v4046, 0.0
  %v4303 = vmax.f32 %v4047, 0.0
  %v4304 = vmax.f32 %v4048, 0.0
  %v4305 = vmax.f32 %v4049, 0.0
  %v4306 = vmax.f32 %v4050, 0.0
  %v4307 = vmax.f32 %v4051, 0.0
  %v4308 = vmax.f32 %v4052, 0.0
  %v4309 = vmax.f32 %v4053, 0.0
  %v4310 = vmax.f32 %v4054, 0.0
  %v4311 = vmax.f32 %v4055, 0.0
  %v4312 = vmax.f32 %v4056, 0.0
  %v4313 = vmax.f32 %v4057, 0.0
  %v4314 = vmax.f32 %v4058, 0.0
  %v4315 = vmax.f32 %v4059, 0.0
  %v4316 = vmax.f32 %v4060, 0.0
  %v4317 = vmax.f32 %v4061, 0.0
  %v4318 = vmax.f32 %v4062, 0.0
  %v4319 = vmax.f32 %v4063, 0.0
  %v4320 = vmax.f32 %v4064, 0.0
  %v4321 = vmax.f32 %v4065, 0.0
  %v4322 = vmax.f32 %v4066, 0.0
  %v4323 = vmax.f32 %v4067, 0.0
  %v4324 = vmax.f32 %v4068, 0.0
  %v4325 = vmax.f32 %v4069, 0.0
  %v4326 = vmax.f32 %v4070, 0.0
  %v4327 = vmax.f32 %v4071, 0.0
  %v4328 = vmax.f32 %v4072, 0.0
  %v4329 = vmax.f32 %v4073, 0.0
  %v4330 = vmax.f32 %v4074, 0.0
  %v4331 = vmax.f32 %v4075, 0.0
  %v4332 = vmax.f32 %v4076, 0.0
  %v4333 = vmax.f32 %v4077, 0.0
  %v4334 = vmax.f32 %v4078, 0.0
  %v4335 = vmax.f32 %v4079, 0.0
  %v4336 = vmax.f32 %v4080, 0.0
  %v4337 = vmax.f32 %v4081, 0.0
  %v4338 = vmax.f32 %v4082, 0.0
  %v4339 = vmax.f32 %v4083, 0.0
  %v4340 = vmax.f32 %v4084, 0.0
  %v4341 = vmax.f32 %v4085, 0.0
  %v4342 = vmax.f32 %v4086, 0.0
  %v4343 = vmax.f32 %v4087, 0.0
  %v4344 = vmax.f32 %v4088, 0.0
  %v4345 = vmax.f32 %v4089, 0.0
  %v4346 = vmax.f32 %v4090, 0.0
  %v4347 = vmax.f32 %v4091, 0.0
  %v4348 = vmax.f32 %v4092, 0.0
  %v4349 = vmax.f32 %v4093, 0.0
  %v4350 = vmax.f32 %v4094, 0.0
  %v4351 = vmax.f32 %v4095, 0.0
  %v4352 = vmax.f32 %v4096, 0.0
  %v4353 = vmax.f32 %v4097, 0.0
  %v4354 = vmax.f32 %v4098, 0.0
  %v4355 = vmax.f32 %v4099, 0.0
  %v4356 = vmax.f32 %v4100, 0.0
  %v4357 = vmax.f32 %v4101, 0.0
  %v4358 = vmax.f32 %v4102, 0.0
  %v4359 = vmax.f32 %v4103, 0.0
  %v4360 = vmax.f32 %v4104, 0.0
  %v4361 = vmax.f32 %v4105, 0.0
  %v4362 = vmax.f32 %v4106, 0.0
  %v4363 = vmax.f32 %v4107, 0.0
  %v4364 = vmax.f32 %v4108, 0.0
  %v4365 = vmax.f32 %v4109, 0.0
  %v4366 = vmax.f32 %v4110, 0.0
  %v4367 = vmax.f32 %v4111, 0.0
  %v4368 = vmax.f32 %v4112, 0.0
  %v4369 = vmax.f32 %v4113, 0.0
  %v4370 = vmax.f32 %v4114, 0.0
  %v4371 = vmax.f32 %v4115, 0.0
  %v4372 = vmax.f32 %v4116, 0.0
  %v4373 = vmax.f32 %v4117, 0.0
  %v4374 = vmax.f32 %v4118, 0.0
  %v4375 = vmax.f32 %v4119, 0.0
  %v4376 = vmax.f32 %v4120, 0.0
  %v4377 = vmax.f32 %v4121, 0.0
  %v4378 = vmax.f32 %v4122, 0.0
  %v4379 = vmax.f32 %v4123, 0.0
  %v4380 = vmax.f32 %v4124, 0.0
  %v4381 = vmax.f32 %v4125, 0.0
  %v4382 = vmax.f32 %v4126, 0.0
  %v4383 = vmax.f32 %v4127, 0.0
  %v4384 = vmax.f32 %v4128, 0.0
  %v4385 = vmax.f32 %v4129, 0.0
  %v4386 = vmax.f32 %v4130, 0.0
  %v4387 = vmax.f32 %v4131, 0.0
  %v4388 = vmax.f32 %v4132, 0.0
  %v4389 = vmax.f32 %v4133, 0.0
  %v4390 = vmax.f32 %v4134, 0.0
  %v4391 = vmax.f32 %v4135, 0.0
  %v4392 = vmax.f32 %v4136, 0.0
  %v4393 = vmax.f32 %v4137, 0.0
  %v4394 = vmax.f32 %v4138, 0.0
  %v4395 = vmax.f32 %v4139, 0.0
  %v4396 = vmax.f32 %v4140, 0.0
  %v4397 = vmax.f32 %v4141, 0.0
  %v4398 = vmax.f32 %v4142, 0.0
  %v4399 = vmax.f32 %v4143, 0.0
  %v4400 = vmax.f32 %v4144, 0.0
  %v4401 = vmax.f32 %v4145, 0.0
  %v4402 = vmax.f32 %v4146, 0.0
  %v4403 = vmax.f32 %v4147, 0.0
  %v4404 = vmax.f32 %v4148, 0.0
  %v4405 = vmax.f32 %v4149, 0.0
  %v4406 = vmax.f32 %v4150, 0.0
  %v4407 = vmax.f32 %v4151, 0.0
  %v4408 = vmax.f32 %v4152, 0.0
  %v4409 = vmax.f32 %v4153, 0.0
  %v4410 = vmax.f32 %v4154, 0.0
  %v4411 = vmax.f32 %v4155, 0.0
  %v4412 = vmax.f32 %v4156, 0.0
  %v4413 = vmax.f32 %v4157, 0.0
  %v4414 = vmax.f32 %v4158, 0.0
  %v4415 = vmax.f32 %v4159, 0.0
  %v4416 = vmax.f32 %v4160, 0.0
  %v4417 = vmax.f32 %v4161, 0.0
  %v4418 = vmax.f32 %v4162, 0.0
  %v4419 = vmax.f32 %v4163, 0.0
  %v4420 = vmax.f32 %v4164, 0.0
  %v4421 = vmax.f32 %v4165, 0.0
  %v4422 = vmax.f32 %v4166, 0.0
  %v4423 = vmax.f32 %v4167, 0.0
  %v4424 = vmax.f32 %v4168, 0.0
  %v4425 = vmax.f32 %v4169, 0.0
  %v4426 = vmax.f32 %v4170, 0.0
  %v4427 = vmax.f32 %v4171, 0.0
  %v4428 = vmax.f32 %v4172, 0.0
  %v4429 = vmax.f32 %v4173, 0.0
  %v4430 = vmax.f32 %v4174, 0.0
  %v4431 = vmax.f32 %v4175, 0.0
  %v4432 = vmax.f32 %v4176, 0.0
  %v4433 = vmax.f32 %v4177, 0.0
  %v4434 = vmax.f32 %v4178, 0.0
  %v4435 = vmax.f32 %v4179, 0.0
  %v4436 = vmax.f32 %v4180, 0.0
  %v4437 = vmax.f32 %v4181, 0.0
  %v4438 = vmax.f32 %v4182, 0.0
  %v4439 = vmax.f32 %v4183, 0.0
  %v4440 = vmax.f32 %v4184, 0.0
  %v4441 = vmax.f32 %v4185, 0.0
  %v4442 = vmax.f32 %v4186, 0.0
  %v4443 = vmax.f32 %v4187, 0.0
  %v4444 = vmax.f32 %v4188, 0.0
  %v4445 = vmax.f32 %v4189, 0.0
  %v4446 = vmax.f32 %v4190, 0.0
  %v4447 = vmax.f32 %v4191, 0.0
  %v4448 = vmax.f32 %v4192, 0.0
  %v4449 = vmax.f32 %v4193, 0.0
  %v4450 = vmax.f32 %v4194, 0.0
  %v4451 = vmax.f32 %v4195, 0.0
  %v4452 = vmax.f32 %v4196, 0.0
  %v4453 = vmax.f32 %v4197, %v4261
  %v4454 = vmax.f32 %v4198, %v4262
  %v4455 = vmax.f32 %v4199, %v4263
  %v4456 = vmax.f32 %v4200, %v4264
  %v4457 = vmax.f32 %v4201, %v4265
  %v4458 = vmax.f32 %v4202, %v4266
  %v4459 = vmax.f32 %v4203, %v4267
  %v4460 = vmax.f32 %v4204, %v4268
  %v4461 = vmax.f32 %v4205, %v4269
  %v4462 = vmax.f32 %v4206, %v4270
  %v4463 = vmax.f32 %v4207, %v4271
  %v4464 = vmax.f32 %v4208, %v4272
  %v4465 = vmax.f32 %v4209, %v4273
  %v4466 = vmax.f32 %v4210, %v4274
  %v4467 = vmax.f32 %v4211, %v4275
  %v4468 = vmax.f32 %v4212, %v4276
  %v4469 = vmax.f32 %v4213, %v4277
  %v4470 = vmax.f32 %v4214, %v4278
  %v4471 = vmax.f32 %v4215, %v4279
  %v4472 = vmax.f32 %v4216, %v4280
  %v4473 = vmax.f32 %v4217, %v4281
  %v4474 = vmax.f32 %v4218, %v4282
  %v4475 = vmax.f32 %v4219, %v4283
  %v4476 = vmax.f32 %v4220, %v4284
  %v4477 = vmax.f32 %v4221, %v4285
  %v4478 = vmax.f32 %v4222, %v4286
  %v4479 = vmax.f32 %v4223, %v4287
  %v4480 = vmax.f32 %v4224, %v4288
  %v4481 = vmax.f32 %v4225, %v4289
  %v4482 = vmax.f32 %v4226, %v4290
  %v4483 = vmax.f32 %v4227, %v4291
  %v4484 = vmax.f32 %v4228, %v4292
  %v4485 = vmax.f32 %v4229, %v4293
  %v4486 = vmax.f32 %v4230, %v4294
  %v4487 = vmax.f32 %v4231, %v4295
  %v4488 = vmax.f32 %v4232, %v4296
  %v4489 = vmax.f32 %v4233, %v4297
  %v4490 = vmax.f32 %v4234, %v4298
  %v4491 = vmax.f32 %v4235, %v4299
  %v4492 = vmax.f32 %v4236, %v4300
  %v4493 = vmax.f32 %v4237, %v4301
  %v4494 = vmax.f32 %v4238, %v4302
  %v4495 = vmax.f32 %v4239, %v4303
  %v4496 = vmax.f32 %v4240, %v4304
  %v4497 = vmax.f32 %v4241, %v4305
  %v4498 = vmax.f32 %v4242, %v4306
  %v4499 = vmax.f32 %v4243, %v4307
  %v4500 = vmax.f32 %v4244, %v4308
  %v4501 = vmax.f32 %v4245, %v4309
  %v4502 = vmax.f32 %v4246, %v4310
  %v4503 = vmax.f32 %v4247, %v4311
  %v4504 = vmax.f32 %v4248, %v4312
  %v4505 = vmax.f32 %v4249, %v4313
  %v4506 = vmax.f32 %v4250, %v4314
  %v4507 = vmax.f32 %v4251, %v4315
  %v4508 = vmax.f32 %v4252, %v4316
  %v4509 = vmax.f32 %v4253, %v4317
  %v4510 = vmax.f32 %v4254, %v4318
  %v4511 = vmax.f32 %v4255, %v4319
  %v4512 = vmax.f32 %v4256, %v4320
  %v4513 = vmax.f32 %v4257, %v4321
  %v4514 = vmax.f32 %v4258, %v4322
  %v4515 = vmax.f32 %v4259, %v4323
  %v4516 = vmax.f32 %v4260, %v4324
  %v4517 = vmax.f32 %v4325, %v4389
  %v4518 = vmax.f32 %v4326, %v4390
  %v4519 = vmax.f32 %v4327, %v4391
  %v4520 = vmax.f32 %v4328, %v4392
  %v4521 = vmax.f32 %v4329, %v4393
  %v4522 = vmax.f32 %v4330, %v4394
  %v4523 = vmax.f32 %v4331, %v4395
  %v4524 = vmax.f32 %v4332, %v4396
  %v4525 = vmax.f32 %v4333, %v4397
  %v4526 = vmax.f32 %v4334, %v4398
  %v4527 = vmax.f32 %v4335, %v4399
  %v4528 = vmax.f32 %v4336, %v4400
  %v4529 = vmax.f32 %v4337, %v4401
  %v4530 = vmax.f32 %v4338, %v4402
  %v4531 = vmax.f32 %v4339, %v4403
  %v4532 = vmax.f32 %v4340, %v4404
  %v4533 = vmax.f32 %v4341, %v4405
  %v4534 = vmax.f32 %v4342, %v4406
  %v4535 = vmax.f32 %v4343, %v4407
  %v4536 = vmax.f32 %v4344, %v4408
  %v4537 = vmax.f32 %v4345, %v4409
  %v4538 = vmax.f32 %v4346, %v4410
  %v4539 = vmax.f32 %v4347, %v4411
  %v4540 = vmax.f32 %v4348, %v4412
  %v4541 = vmax.f32 %v4349, %v4413
  %v4542 = vmax.f32 %v4350, %v4414
  %v4543 = vmax.f32 %v4351, %v4415
  %v4544 = vmax.f32 %v4352, %v4416
  %v4545 = vmax.f32 %v4353, %v4417
  %v4546 = vmax.f32 %v4354, %v4418
  %v4547 = vmax.f32 %v4355, %v4419
  %v4548 = vmax.f32 %v4356, %v4420
  %v4549 = vmax.f32 %v4357, %v4421
  %v4550 = vmax.f32 %v4358, %v4422
  %v4551 = vmax.f32 %v4359, %v4423
  %v4552 = vmax.f32 %v4360, %v4424
  %v4553 = vmax.f32 %v4361, %v4425
  %v4554 = vmax.f32 %v4362, %v4426
  %v4555 = vmax.f32 %v4363, %v4427
  %v4556 = vmax.f32 %v4364, %v4428
  %v4557 = vmax.f32 %v4365, %v4429
  %v4558 = vmax.f32 %v4366, %v4430
  %v4559 = vmax.f32 %v4367, %v4431
  %v4560 = vmax.f32 %v4368, %v4432
  %v4561 = vmax.f32 %v4369, %v4433
  %v4562 = vmax.f32 %v4370, %v4434
  %v4563 = vmax.f32 %v4371, %v4435
  %v4564 = vmax.f32 %v4372, %v4436
  %v4565 = vmax.f32 %v4373, %v4437
  %v4566 = vmax.f32 %v4374, %v4438
  %v4567 = vmax.f32 %v4375, %v4439
  %v4568 = vmax.f32 %v4376, %v4440
  %v4569 = vmax.f32 %v4377, %v4441
  %v4570 = vmax.f32 %v4378, %v4442
  %v4571 = vmax.f32 %v4379, %v4443
  %v4572 = vmax.f32 %v4380, %v4444
  %v4573 = vmax.f32 %v4381, %v4445
  %v4574 = vmax.f32 %v4382, %v4446
  %v4575 = vmax.f32 %v4383, %v4447
  %v4576 = vmax.f32 %v4384, %v4448
  %v4577 = vmax.f32 %v4385, %v4449
  %v4578 = vmax.f32 %v4386, %v4450
  %v4579 = vmax.f32 %v4387, %v4451
  %v4580 = vmax.f32 %v4388, %v4452
  %v4581 = vmax.f32 %v4453, %v4517
  %v4582 = vmax.f32 %v4454, %v4518
  %v4583 = vmax.f32 %v4455, %v4519
  %v4584 = vmax.f32 %v4456, %v4520
  %v4585 = vmax.f32 %v4457, %v4521
  %v4586 = vmax.f32 %v4458, %v4522
  %v4587 = vmax.f32 %v4459, %v4523
  %v4588 = vmax.f32 %v4460, %v4524
  %v4589 = vmax.f32 %v4461, %v4525
  %v4590 = vmax.f32 %v4462, %v4526
  %v4591 = vmax.f32 %v4463, %v4527
  %v4592 = vmax.f32 %v4464, %v4528
  %v4593 = vmax.f32 %v4465, %v4529
  %v4594 = vmax.f32 %v4466, %v4530
  %v4595 = vmax.f32 %v4467, %v4531
  %v4596 = vmax.f32 %v4468, %v4532
  %v4597 = vmax.f32 %v4469, %v4533
  %v4598 = vmax.f32 %v4470, %v4534
  %v4599 = vmax.f32 %v4471, %v4535
  %v4600 = vmax.f32 %v4472, %v4536
  %v4601 = vmax.f32 %v4473, %v4537
  %v4602 = vmax.f32 %v4474, %v4538
  %v4603 = vmax.f32 %v4475, %v4539
  %v4604 = vmax.f32 %v4476, %v4540
  %v4605 = vmax.f32 %v4477, %v4541
  %v4606 = vmax.f32 %v4478, %v4542
  %v4607 = vmax.f32 %v4479, %v4543
  %v4608 = vmax.f32 %v4480, %v4544
  %v4609 = vmax.f32 %v4481, %v4545
  %v4610 = vmax.f32 %v4482, %v4546
  %v4611 = vmax.f32 %v4483, %v4547
  %v4612 = vmax.f32 %v4484, %v4548
  %v4613 = vmax.f32 %v4485, %v4549
  %v4614 = vmax.f32 %v4486, %v4550
  %v4615 = vmax.f32 %v4487, %v4551
  %v4616 = vmax.f32 %v4488, %v4552
  %v4617 = vmax.f32 %v4489, %v4553
  %v4618 = vmax.f32 %v4490, %v4554
  %v4619 = vmax.f32 %v4491, %v4555
  %v4620 = vmax.f32 %v4492, %v4556
  %v4621 = vmax.f32 %v4493, %v4557
  %v4622 = vmax.f32 %v4494, %v4558
  %v4623 = vmax.f32 %v4495, %v4559
  %v4624 = vmax.f32 %v4496, %v4560
  %v4625 = vmax.f32 %v4497, %v4561
  %v4626 = vmax.f32 %v4498, %v4562
  %v4627 = vmax.f32 %v4499, %v4563
  %v4628 = vmax.f32 %v4500, %v4564
  %v4629 = vmax.f32 %v4501, %v4565
  %v4630 = vmax.f32 %v4502, %v4566
  %v4631 = vmax.f32 %v4503, %v4567
  %v4632 = vmax.f32 %v4504, %v4568
  %v4633 = vmax.f32 %v4505, %v4569
  %v4634 = vmax.f32 %v4506, %v4570
  %v4635 = vmax.f32 %v4507, %v4571
  %v4636 = vmax.f32 %v4508, %v4572
  %v4637 = vmax.f32 %v4509, %v4573
  %v4638 = vmax.f32 %v4510, %v4574
  %v4639 = vmax.f32 %v4511, %v4575
  %v4640 = vmax.f32 %v4512, %v4576
  %v4641 = vmax.f32 %v4513, %v4577
  %v4642 = vmax.f32 %v4514, %v4578
  %v4643 = vmax.f32 %v4515, %v4579
  %v4644 = vmax.f32 %v4516, %v4580
  %v4645 = vpack.c.bf16 %v4582, %v4581
  %v4646 = vpack.c.bf16 %v4584, %v4583
  %v4647 = vpack.c.bf16 %v4586, %v4585
  %v4648 = vpack.c.bf16 %v4588, %v4587
  %v4649 = vpack.c.bf16 %v4590, %v4589
  %v4650 = vpack.c.bf16 %v4592, %v4591
  %v4651 = vpack.c.bf16 %v4594, %v4593
  %v4652 = vpack.c.bf16 %v4596, %v4595
  %v4653 = vpack.c.bf16 %v4598, %v4597
  %v4654 = vpack.c.bf16 %v4600, %v4599
  %v4655 = vpack.c.bf16 %v4602, %v4601
  %v4656 = vpack.c.bf16 %v4604, %v4603
  %v4657 = vpack.c.bf16 %v4606, %v4605
  %v4658 = vpack.c.bf16 %v4608, %v4607
  %v4659 = vpack.c.bf16 %v4610, %v4609
  %v4660 = vpack.c.bf16 %v4612, %v4611
  %v4661 = vpack.c.bf16 %v4614, %v4613
  %v4662 = vpack.c.bf16 %v4616, %v4615
  %v4663 = vpack.c.bf16 %v4618, %v4617
  %v4664 = vpack.c.bf16 %v4620, %v4619
  %v4665 = vpack.c.bf16 %v4622, %v4621
  %v4666 = vpack.c.bf16 %v4624, %v4623
  %v4667 = vpack.c.bf16 %v4626, %v4625
  %v4668 = vpack.c.bf16 %v4628, %v4627
  %v4669 = vpack.c.bf16 %v4630, %v4629
  %v4670 = vpack.c.bf16 %v4632, %v4631
  %v4671 = vpack.c.bf16 %v4634, %v4633
  %v4672 = vpack.c.bf16 %v4636, %v4635
  %v4673 = vpack.c.bf16 %v4638, %v4637
  %v4674 = vpack.c.bf16 %v4640, %v4639
  %v4675 = vpack.c.bf16 %v4642, %v4641
  %v4676 = vpack.c.bf16 %v4644, %v4643
  %v4709 = vunpack.c.l.b16 %v4645
  %v4710 = vunpack.c.h.b16 %v4645
  %v4711 = vunpack.c.l.b16 %v4646
  %v4712 = vunpack.c.h.b16 %v4646
  %v4713 = vunpack.c.l.b16 %v4647
  %v4714 = vunpack.c.h.b16 %v4647
  %v4715 = vunpack.c.l.b16 %v4648
  %v4716 = vunpack.c.h.b16 %v4648
  %v4717 = vunpack.c.l.b16 %v4649
  %v4718 = vunpack.c.h.b16 %v4649
  %v4719 = vunpack.c.l.b16 %v4650
  %v4720 = vunpack.c.h.b16 %v4650
  %v4721 = vunpack.c.l.b16 %v4651
  %v4722 = vunpack.c.h.b16 %v4651
  %v4723 = vunpack.c.l.b16 %v4652
  %v4724 = vunpack.c.h.b16 %v4652
  %v4725 = vunpack.c.l.b16 %v4653
  %v4726 = vunpack.c.h.b16 %v4653
  %v4727 = vunpack.c.l.b16 %v4654
  %v4728 = vunpack.c.h.b16 %v4654
  %v4729 = vunpack.c.l.b16 %v4655
  %v4730 = vunpack.c.h.b16 %v4655
  %v4731 = vunpack.c.l.b16 %v4656
  %v4732 = vunpack.c.h.b16 %v4656
  %v4733 = vunpack.c.l.b16 %v4657
  %v4734 = vunpack.c.h.b16 %v4657
  %v4735 = vunpack.c.l.b16 %v4658
  %v4736 = vunpack.c.h.b16 %v4658
  %v4737 = vunpack.c.l.b16 %v4659
  %v4738 = vunpack.c.h.b16 %v4659
  %v4739 = vunpack.c.l.b16 %v4660
  %v4740 = vunpack.c.h.b16 %v4660
  %v4741 = vunpack.c.l.b16 %v4661
  %v4742 = vunpack.c.h.b16 %v4661
  %v4743 = vunpack.c.l.b16 %v4662
  %v4744 = vunpack.c.h.b16 %v4662
  %v4745 = vunpack.c.l.b16 %v4663
  %v4746 = vunpack.c.h.b16 %v4663
  %v4747 = vunpack.c.l.b16 %v4664
  %v4748 = vunpack.c.h.b16 %v4664
  %v4749 = vunpack.c.l.b16 %v4665
  %v4750 = vunpack.c.h.b16 %v4665
  %v4751 = vunpack.c.l.b16 %v4666
  %v4752 = vunpack.c.h.b16 %v4666
  %v4753 = vunpack.c.l.b16 %v4667
  %v4754 = vunpack.c.h.b16 %v4667
  %v4755 = vunpack.c.l.b16 %v4668
  %v4756 = vunpack.c.h.b16 %v4668
  %v4757 = vunpack.c.l.b16 %v4669
  %v4758 = vunpack.c.h.b16 %v4669
  %v4759 = vunpack.c.l.b16 %v4670
  %v4760 = vunpack.c.h.b16 %v4670
  %v4761 = vunpack.c.l.b16 %v4671
  %v4762 = vunpack.c.h.b16 %v4671
  %v4763 = vunpack.c.l.b16 %v4672
  %v4764 = vunpack.c.h.b16 %v4672
  %v4765 = vunpack.c.l.b16 %v4673
  %v4766 = vunpack.c.h.b16 %v4673
  %v4767 = vunpack.c.l.b16 %v4674
  %v4768 = vunpack.c.h.b16 %v4674
  %v4769 = vunpack.c.l.b16 %v4675
  %v4770 = vunpack.c.h.b16 %v4675
  %v4771 = vunpack.c.l.b16 %v4676
  %v4772 = vunpack.c.h.b16 %v4676
  %v4773 = vpack.c.b16 %v4709, %v4709
  %v4774 = vpack.c.b16 %v4710, %v4710
  %v4775 = vpack.c.b16 %v4711, %v4711
  %v4776 = vpack.c.b16 %v4712, %v4712
  %v4777 = vpack.c.b16 %v4713, %v4713
  %v4778 = vpack.c.b16 %v4714, %v4714
  %v4779 = vpack.c.b16 %v4715, %v4715
  %v4780 = vpack.c.b16 %v4716, %v4716
  %v4781 = vpack.c.b16 %v4717, %v4717
  %v4782 = vpack.c.b16 %v4718, %v4718
  %v4783 = vpack.c.b16 %v4719, %v4719
  %v4784 = vpack.c.b16 %v4720, %v4720
  %v4785 = vpack.c.b16 %v4721, %v4721
  %v4786 = vpack.c.b16 %v4722, %v4722
  %v4787 = vpack.c.b16 %v4723, %v4723
  %v4788 = vpack.c.b16 %v4724, %v4724
  %v4789 = vpack.c.b16 %v4725, %v4725
  %v4790 = vpack.c.b16 %v4726, %v4726
  %v4791 = vpack.c.b16 %v4727, %v4727
  %v4792 = vpack.c.b16 %v4728, %v4728
  %v4793 = vpack.c.b16 %v4729, %v4729
  %v4794 = vpack.c.b16 %v4730, %v4730
  %v4795 = vpack.c.b16 %v4731, %v4731
  %v4796 = vpack.c.b16 %v4732, %v4732
  %v4797 = vpack.c.b16 %v4733, %v4733
  %v4798 = vpack.c.b16 %v4734, %v4734
  %v4799 = vpack.c.b16 %v4735, %v4735
  %v4800 = vpack.c.b16 %v4736, %v4736
  %v4801 = vpack.c.b16 %v4737, %v4737
  %v4802 = vpack.c.b16 %v4738, %v4738
  %v4803 = vpack.c.b16 %v4739, %v4739
  %v4804 = vpack.c.b16 %v4740, %v4740
  %v4805 = vpack.c.b16 %v4741, %v4741
  %v4806 = vpack.c.b16 %v4742, %v4742
  %v4807 = vpack.c.b16 %v4743, %v4743
  %v4808 = vpack.c.b16 %v4744, %v4744
  %v4809 = vpack.c.b16 %v4745, %v4745
  %v4810 = vpack.c.b16 %v4746, %v4746
  %v4811 = vpack.c.b16 %v4747, %v4747
  %v4812 = vpack.c.b16 %v4748, %v4748
  %v4813 = vpack.c.b16 %v4749, %v4749
  %v4814 = vpack.c.b16 %v4750, %v4750
  %v4815 = vpack.c.b16 %v4751, %v4751
  %v4816 = vpack.c.b16 %v4752, %v4752
  %v4817 = vpack.c.b16 %v4753, %v4753
  %v4818 = vpack.c.b16 %v4754, %v4754
  %v4819 = vpack.c.b16 %v4755, %v4755
  %v4820 = vpack.c.b16 %v4756, %v4756
  %v4821 = vpack.c.b16 %v4757, %v4757
  %v4822 = vpack.c.b16 %v4758, %v4758
  %v4823 = vpack.c.b16 %v4759, %v4759
  %v4824 = vpack.c.b16 %v4760, %v4760
  %v4825 = vpack.c.b16 %v4761, %v4761
  %v4826 = vpack.c.b16 %v4762, %v4762
  %v4827 = vpack.c.b16 %v4763, %v4763
  %v4828 = vpack.c.b16 %v4764, %v4764
  %v4829 = vpack.c.b16 %v4765, %v4765
  %v4830 = vpack.c.b16 %v4766, %v4766
  %v4831 = vpack.c.b16 %v4767, %v4767
  %v4832 = vpack.c.b16 %v4768, %v4768
  %v4833 = vpack.c.b16 %v4769, %v4769
  %v4834 = vpack.c.b16 %v4770, %v4770
  %v4835 = vpack.c.b16 %v4771, %v4771
  %v4836 = vpack.c.b16 %v4772, %v4772
  %vm4901 = vcmask 257024
  %4902 = vst.msk [vmem:[%s4] sm:$0xf] %vm4901, %v4773
  %4903 = vst.msk [vmem:[%s4 + $0x4] sm:$0xf] %vm4901, %v4774
  %4904 = vst.msk [vmem:[%s4 + $0x8] sm:$0xf] %vm4901, %v4775
  %4905 = vst.msk [vmem:[%s4 + $0xc] sm:$0xf] %vm4901, %v4776
  %4906 = vst.msk [vmem:[%s4 + $0x10] sm:$0xf] %vm4901, %v4777
  %4907 = vst.msk [vmem:[%s4 + $0x14] sm:$0xf] %vm4901, %v4778
  %4908 = vst.msk [vmem:[%s4 + $0x18] sm:$0xf] %vm4901, %v4779
  %4909 = vst.msk [vmem:[%s4 + $0x1c] sm:$0xf] %vm4901, %v4780
  %4910 = vst.msk [vmem:[%s4 + $0x20] sm:$0xf] %vm4901, %v4781
  %4911 = vst.msk [vmem:[%s4 + $0x24] sm:$0xf] %vm4901, %v4782
  %4912 = vst.msk [vmem:[%s4 + $0x28] sm:$0xf] %vm4901, %v4783
  %4913 = vst.msk [vmem:[%s4 + $0x2c] sm:$0xf] %vm4901, %v4784
  %4914 = vst.msk [vmem:[%s4 + $0x30] sm:$0xf] %vm4901, %v4785
  %4915 = vst.msk [vmem:[%s4 + $0x34] sm:$0xf] %vm4901, %v4786
  %4916 = vst.msk [vmem:[%s4 + $0x38] sm:$0xf] %vm4901, %v4787
  %4917 = vst.msk [vmem:[%s4 + $0x3c] sm:$0xf] %vm4901, %v4788
  %4918 = vst.msk [vmem:[%s4 + $0x40] sm:$0xf] %vm4901, %v4789
  %4919 = vst.msk [vmem:[%s4 + $0x44] sm:$0xf] %vm4901, %v4790
  %4920 = vst.msk [vmem:[%s4 + $0x48] sm:$0xf] %vm4901, %v4791
  %4921 = vst.msk [vmem:[%s4 + $0x4c] sm:$0xf] %vm4901, %v4792
  %4922 = vst.msk [vmem:[%s4 + $0x50] sm:$0xf] %vm4901, %v4793
  %4923 = vst.msk [vmem:[%s4 + $0x54] sm:$0xf] %vm4901, %v4794
  %4924 = vst.msk [vmem:[%s4 + $0x58] sm:$0xf] %vm4901, %v4795
  %4925 = vst.msk [vmem:[%s4 + $0x5c] sm:$0xf] %vm4901, %v4796
  %4926 = vst.msk [vmem:[%s4 + $0x60] sm:$0xf] %vm4901, %v4797
  %4927 = vst.msk [vmem:[%s4 + $0x64] sm:$0xf] %vm4901, %v4798
  %4928 = vst.msk [vmem:[%s4 + $0x68] sm:$0xf] %vm4901, %v4799
  %4929 = vst.msk [vmem:[%s4 + $0x6c] sm:$0xf] %vm4901, %v4800
  %4930 = vst.msk [vmem:[%s4 + $0x70] sm:$0xf] %vm4901, %v4801
  %4931 = vst.msk [vmem:[%s4 + $0x74] sm:$0xf] %vm4901, %v4802
  %4932 = vst.msk [vmem:[%s4 + $0x78] sm:$0xf] %vm4901, %v4803
  %4933 = vst.msk [vmem:[%s4 + $0x7c] sm:$0xf] %vm4901, %v4804
  %4934 = vst.msk [vmem:[%s4 + $0x80] sm:$0xf] %vm4901, %v4805
  %4935 = vst.msk [vmem:[%s4 + $0x84] sm:$0xf] %vm4901, %v4806
  %4936 = vst.msk [vmem:[%s4 + $0x88] sm:$0xf] %vm4901, %v4807
  %4937 = vst.msk [vmem:[%s4 + $0x8c] sm:$0xf] %vm4901, %v4808
  %4938 = vst.msk [vmem:[%s4 + $0x90] sm:$0xf] %vm4901, %v4809
  %4939 = vst.msk [vmem:[%s4 + $0x94] sm:$0xf] %vm4901, %v4810
  %4940 = vst.msk [vmem:[%s4 + $0x98] sm:$0xf] %vm4901, %v4811
  %4941 = vst.msk [vmem:[%s4 + $0x9c] sm:$0xf] %vm4901, %v4812
  %4942 = vst.msk [vmem:[%s4 + $0xa0] sm:$0xf] %vm4901, %v4813
  %4943 = vst.msk [vmem:[%s4 + $0xa4] sm:$0xf] %vm4901, %v4814
  %4944 = vst.msk [vmem:[%s4 + $0xa8] sm:$0xf] %vm4901, %v4815
  %4945 = vst.msk [vmem:[%s4 + $0xac] sm:$0xf] %vm4901, %v4816
  %4946 = vst.msk [vmem:[%s4 + $0xb0] sm:$0xf] %vm4901, %v4817
  %4947 = vst.msk [vmem:[%s4 + $0xb4] sm:$0xf] %vm4901, %v4818
  %4948 = vst.msk [vmem:[%s4 + $0xb8] sm:$0xf] %vm4901, %v4819
  %4949 = vst.msk [vmem:[%s4 + $0xbc] sm:$0xf] %vm4901, %v4820
  %4950 = vst.msk [vmem:[%s4 + $0xc0] sm:$0xf] %vm4901, %v4821
  %4951 = vst.msk [vmem:[%s4 + $0xc4] sm:$0xf] %vm4901, %v4822
  %4952 = vst.msk [vmem:[%s4 + $0xc8] sm:$0xf] %vm4901, %v4823
  %4953 = vst.msk [vmem:[%s4 + $0xcc] sm:$0xf] %vm4901, %v4824
  %4954 = vst.msk [vmem:[%s4 + $0xd0] sm:$0xf] %vm4901, %v4825
  %4955 = vst.msk [vmem:[%s4 + $0xd4] sm:$0xf] %vm4901, %v4826
  %4956 = vst.msk [vmem:[%s4 + $0xd8] sm:$0xf] %vm4901, %v4827
  %4957 = vst.msk [vmem:[%s4 + $0xdc] sm:$0xf] %vm4901, %v4828
  %4958 = vst.msk [vmem:[%s4 + $0xe0] sm:$0xf] %vm4901, %v4829
  %4959 = vst.msk [vmem:[%s4 + $0xe4] sm:$0xf] %vm4901, %v4830
  %4960 = vst.msk [vmem:[%s4 + $0xe8] sm:$0xf] %vm4901, %v4831
  %4961 = vst.msk [vmem:[%s4 + $0xec] sm:$0xf] %vm4901, %v4832
  %4962 = vst.msk [vmem:[%s4 + $0xf0] sm:$0xf] %vm4901, %v4833
  %4963 = vst.msk [vmem:[%s4 + $0xf4] sm:$0xf] %vm4901, %v4834
  %4964 = vst.msk [vmem:[%s4 + $0xf8] sm:$0xf] %vm4901, %v4835
  %4965 = vst.msk [vmem:[%s4 + $0xfc] sm:$0xf] %vm4901, %v4836
  // Predicated region
  $region18: #{student_forward.4} parent=0 // pred_check
    _
  $region19: #{student_forward.4} parent=0 // pred_check_branch
    %4967 = sbr.rel (0) target = $region21
  $region20: #{student_forward.4} parent=0 // pred_region
    _
  $region21: #{student_forward.4} parent=0 // pred_fallthru
    _
  // Predicated region
  $region22: #{student_forward.4} parent=0 // pred_check
    _
  $region23: #{student_forward.4} parent=0 // pred_check_branch
    %4969 = sbr.rel (0) target = $region25
  $region24: #{student_forward.4} parent=0 // pred_region
    _
  $region25: #{student_forward.4} parent=0 // pred_fallthru
    _

// kernel: student_forward.5
$region0: #{student_forward.5}
  #allocation0 [shape = 'u32[]', space=smem, size = 0x4, offset = 0x4, fixed_abs, tag = 'smem constant byte address 0x4 - core index']
  #allocation1 [shape = 'u32[144,128]{1,0:T(1,128)}', space=vmem, size = 0x12000, scoped, tag = 'internal scratch']
  %s0 = inlined_call_operand.vmem [shape: bf16[512,288], index: 0, kind: input, shape index: {}]
  %s1 = inlined_call_operand.vmem [shape: bf16[288,64], index: 1, kind: input, shape index: {}]
  %s2 = inlined_call_operand.vmem [shape: f32[1,64], index: 2, kind: input, shape index: {}]
  %s3 = inlined_call_operand.vmem [shape: f32[1,64], index: 3, kind: input, shape index: {}]
  %s4 = inlined_call_operand.vmem [shape: bf16[128,64], index: 4, kind: output, shape index: {}]
  %s5 = sld [smem:[#allocation0]]
  $region26: #{student_forward.5} parent=0
    _
  %s7 = ssub.s32 1, %s5
  %s8 = scalar_select 0, %s7, %s5
  // Predicated region
  $region2: #{student_forward.5} parent=0 // pred_check
    _
  $region3: #{student_forward.5} parent=0 // pred_check_branch
    %10 = sbr.rel (0) target = $region5
  $region4: #{student_forward.5} parent=0 // pred_region
    _
  $region5: #{student_forward.5} parent=0 // pred_fallthru
    _
  // Predicated region
  $region6: #{student_forward.5} parent=0 // pred_check
    _
  $region7: #{student_forward.5} parent=0 // pred_check_branch
    %12 = sbr.rel (0) target = $region9
  $region8: #{student_forward.5} parent=0 // pred_region
    _
  $region9: #{student_forward.5} parent=0 // pred_fallthru
    _
  // Predicated region
  $region10: #{student_forward.5} parent=0 // pred_check
    _
  $region11: #{student_forward.5} parent=0 // pred_check_branch
    %14 = sbr.rel (0) target = $region13
  $region12: #{student_forward.5} parent=0 // pred_region
    _
  $region13: #{student_forward.5} parent=0 // pred_fallthru
    _
  // Predicated region
  $region14: #{student_forward.5} parent=0 // pred_check
    _
  $region15: #{student_forward.5} parent=0 // pred_check_branch
    %16 = sbr.rel (0) target = $region17
  $region16: #{student_forward.5} parent=0 // pred_region
    _
  $region17: #{student_forward.5} parent=0 // pred_fallthru
    _
  %v18 = vld [vmem:[%s0] sm:$0xff]
  %v19 = vld [vmem:[%s0 + $0x8] sm:$0xf]
  %v20 = vld [vmem:[%s0 + $0xc] sm:$0xff]
  %v21 = vld [vmem:[%s0 + $0x14] sm:$0xf]
  %v22 = vld [vmem:[%s0 + $0x18] sm:$0xff]
  %v23 = vld [vmem:[%s0 + $0x20] sm:$0xf]
  %v24 = vld [vmem:[%s0 + $0x24] sm:$0xff]
  %v25 = vld [vmem:[%s0 + $0x2c] sm:$0xf]
  %v26 = vld [vmem:[%s0 + $0x30] sm:$0xff]
  %v27 = vld [vmem:[%s0 + $0x38] sm:$0xf]
  %v28 = vld [vmem:[%s0 + $0x3c] sm:$0xff]
  %v29 = vld [vmem:[%s0 + $0x44] sm:$0xf]
  %v30 = vld [vmem:[%s0 + $0x48] sm:$0xff]
  %v31 = vld [vmem:[%s0 + $0x50] sm:$0xf]
  %v32 = vld [vmem:[%s0 + $0x54] sm:$0xff]
  %v33 = vld [vmem:[%s0 + $0x5c] sm:$0xf]
  %v34 = vld [vmem:[%s0 + $0x60] sm:$0xff]
  %v35 = vld [vmem:[%s0 + $0x68] sm:$0xf]
  %v36 = vld [vmem:[%s0 + $0x6c] sm:$0xff]
  %v37 = vld [vmem:[%s0 + $0x74] sm:$0xf]
  %v38 = vld [vmem:[%s0 + $0x78] sm:$0xff]
  %v39 = vld [vmem:[%s0 + $0x80] sm:$0xf]
  %v40 = vld [vmem:[%s0 + $0x84] sm:$0xff]
  %v41 = vld [vmem:[%s0 + $0x8c] sm:$0xf]
  %v42 = vld [vmem:[%s0 + $0x90] sm:$0xff]
  %v43 = vld [vmem:[%s0 + $0x98] sm:$0xf]
  %v44 = vld [vmem:[%s0 + $0x9c] sm:$0xff]
  %v45 = vld [vmem:[%s0 + $0xa4] sm:$0xf]
  %v46 = vld [vmem:[%s0 + $0xa8] sm:$0xff]
  %v47 = vld [vmem:[%s0 + $0xb0] sm:$0xf]
  %v48 = vld [vmem:[%s0 + $0xb4] sm:$0xff]
  %v49 = vld [vmem:[%s0 + $0xbc] sm:$0xf]
  %v50 = vld [vmem:[%s0 + $0xc0] sm:$0xff]
  %v51 = vld [vmem:[%s0 + $0xc8] sm:$0xf]
  %v52 = vld [vmem:[%s0 + $0xcc] sm:$0xff]
  %v53 = vld [vmem:[%s0 + $0xd4] sm:$0xf]
  %v54 = vld [vmem:[%s0 + $0xd8] sm:$0xff]
  %v55 = vld [vmem:[%s0 + $0xe0] sm:$0xf]
  %v56 = vld [vmem:[%s0 + $0xe4] sm:$0xff]
  %v57 = vld [vmem:[%s0 + $0xec] sm:$0xf]
  %v58 = vld [vmem:[%s0 + $0xf0] sm:$0xff]
  %v59 = vld [vmem:[%s0 + $0xf8] sm:$0xf]
  %v60 = vld [vmem:[%s0 + $0xfc] sm:$0xff]
  %v61 = vld [vmem:[%s0 + $0x104] sm:$0xf]
  %v62 = vld [vmem:[%s0 + $0x108] sm:$0xff]
  %v63 = vld [vmem:[%s0 + $0x110] sm:$0xf]
  %v64 = vld [vmem:[%s0 + $0x114] sm:$0xff]
  %v65 = vld [vmem:[%s0 + $0x11c] sm:$0xf]
  %v66 = vld [vmem:[%s0 + $0x120] sm:$0xff]
  %v67 = vld [vmem:[%s0 + $0x128] sm:$0xf]
  %v68 = vld [vmem:[%s0 + $0x12c] sm:$0xff]
  %v69 = vld [vmem:[%s0 + $0x134] sm:$0xf]
  %v70 = vld [vmem:[%s0 + $0x138] sm:$0xff]
  %v71 = vld [vmem:[%s0 + $0x140] sm:$0xf]
  %v72 = vld [vmem:[%s0 + $0x144] sm:$0xff]
  %v73 = vld [vmem:[%s0 + $0x14c] sm:$0xf]
  %v74 = vld [vmem:[%s0 + $0x150] sm:$0xff]
  %v75 = vld [vmem:[%s0 + $0x158] sm:$0xf]
  %v76 = vld [vmem:[%s0 + $0x15c] sm:$0xff]
  %v77 = vld [vmem:[%s0 + $0x164] sm:$0xf]
  %v78 = vld [vmem:[%s0 + $0x168] sm:$0xff]
  %v79 = vld [vmem:[%s0 + $0x170] sm:$0xf]
  %v80 = vld [vmem:[%s0 + $0x174] sm:$0xff]
  %v81 = vld [vmem:[%s0 + $0x17c] sm:$0xf]
  %v82 = vld [vmem:[%s0 + $0x180] sm:$0xff]
  %v83 = vld [vmem:[%s0 + $0x188] sm:$0xf]
  %v84 = vld [vmem:[%s0 + $0x18c] sm:$0xff]
  %v85 = vld [vmem:[%s0 + $0x194] sm:$0xf]
  %v86 = vld [vmem:[%s0 + $0x198] sm:$0xff]
  %v87 = vld [vmem:[%s0 + $0x1a0] sm:$0xf]
  %v88 = vld [vmem:[%s0 + $0x1a4] sm:$0xff]
  %v89 = vld [vmem:[%s0 + $0x1ac] sm:$0xf]
  %v90 = vld [vmem:[%s0 + $0x1b0] sm:$0xff]
  %v91 = vld [vmem:[%s0 + $0x1b8] sm:$0xf]
  %v92 = vld [vmem:[%s0 + $0x1bc] sm:$0xff]
  %v93 = vld [vmem:[%s0 + $0x1c4] sm:$0xf]
  %v94 = vld [vmem:[%s0 + $0x1c8] sm:$0xff]
  %v95 = vld [vmem:[%s0 + $0x1d0] sm:$0xf]
  %v96 = vld [vmem:[%s0 + $0x1d4] sm:$0xff]
  %v97 = vld [vmem:[%s0 + $0x1dc] sm:$0xf]
  %v98 = vld [vmem:[%s0 + $0x1e0] sm:$0xff]
  %v99 = vld [vmem:[%s0 + $0x1e8] sm:$0xf]
  %v100 = vld [vmem:[%s0 + $0x1ec] sm:$0xff]
  %v101 = vld [vmem:[%s0 + $0x1f4] sm:$0xf]
  %v102 = vld [vmem:[%s0 + $0x1f8] sm:$0xff]
  %v103 = vld [vmem:[%s0 + $0x200] sm:$0xf]
  %v104 = vld [vmem:[%s0 + $0x204] sm:$0xff]
  %v105 = vld [vmem:[%s0 + $0x20c] sm:$0xf]
  %v106 = vld [vmem:[%s0 + $0x210] sm:$0xff]
  %v107 = vld [vmem:[%s0 + $0x218] sm:$0xf]
  %v108 = vld [vmem:[%s0 + $0x21c] sm:$0xff]
  %v109 = vld [vmem:[%s0 + $0x224] sm:$0xf]
  %v110 = vld [vmem:[%s0 + $0x228] sm:$0xff]
  %v111 = vld [vmem:[%s0 + $0x230] sm:$0xf]
  %v112 = vld [vmem:[%s0 + $0x234] sm:$0xff]
  %v113 = vld [vmem:[%s0 + $0x23c] sm:$0xf]
  %v114 = vld [vmem:[%s0 + $0x240] sm:$0xff]
  %v115 = vld [vmem:[%s0 + $0x248] sm:$0xf]
  %v116 = vld [vmem:[%s0 + $0x24c] sm:$0xff]
  %v117 = vld [vmem:[%s0 + $0x254] sm:$0xf]
  %v118 = vld [vmem:[%s0 + $0x258] sm:$0xff]
  %v119 = vld [vmem:[%s0 + $0x260] sm:$0xf]
  %v120 = vld [vmem:[%s0 + $0x264] sm:$0xff]
  %v121 = vld [vmem:[%s0 + $0x26c] sm:$0xf]
  %v122 = vld [vmem:[%s0 + $0x270] sm:$0xff]
  %v123 = vld [vmem:[%s0 + $0x278] sm:$0xf]
  %v124 = vld [vmem:[%s0 + $0x27c] sm:$0xff]
  %v125 = vld [vmem:[%s0 + $0x284] sm:$0xf]
  %v126 = vld [vmem:[%s0 + $0x288] sm:$0xff]
  %v127 = vld [vmem:[%s0 + $0x290] sm:$0xf]
  %v128 = vld [vmem:[%s0 + $0x294] sm:$0xff]
  %v129 = vld [vmem:[%s0 + $0x29c] sm:$0xf]
  %v130 = vld [vmem:[%s0 + $0x2a0] sm:$0xff]
  %v131 = vld [vmem:[%s0 + $0x2a8] sm:$0xf]
  %v132 = vld [vmem:[%s0 + $0x2ac] sm:$0xff]
  %v133 = vld [vmem:[%s0 + $0x2b4] sm:$0xf]
  %v134 = vld [vmem:[%s0 + $0x2b8] sm:$0xff]
  %v135 = vld [vmem:[%s0 + $0x2c0] sm:$0xf]
  %v136 = vld [vmem:[%s0 + $0x2c4] sm:$0xff]
  %v137 = vld [vmem:[%s0 + $0x2cc] sm:$0xf]
  %v138 = vld [vmem:[%s0 + $0x2d0] sm:$0xff]
  %v139 = vld [vmem:[%s0 + $0x2d8] sm:$0xf]
  %v140 = vld [vmem:[%s0 + $0x2dc] sm:$0xff]
  %v141 = vld [vmem:[%s0 + $0x2e4] sm:$0xf]
  %v142 = vld [vmem:[%s0 + $0x2e8] sm:$0xff]
  %v143 = vld [vmem:[%s0 + $0x2f0] sm:$0xf]
  %v144 = vld [vmem:[%s0 + $0x2f4] sm:$0xff]
  %v145 = vld [vmem:[%s0 + $0x2fc] sm:$0xf]
  %v146 = vld [vmem:[%s1] sm:$0xf]
  %v147 = vld [vmem:[%s1 + $0x4] sm:$0xf]
  %v148 = vld [vmem:[%s1 + $0x8] sm:$0xf]
  %v149 = vld [vmem:[%s1 + $0xc] sm:$0xf]
  %v150 = vld [vmem:[%s1 + $0x10] sm:$0xf]
  %v151 = vld [vmem:[%s1 + $0x14] sm:$0xf]
  %v152 = vld [vmem:[%s1 + $0x18] sm:$0xf]
  %v153 = vld [vmem:[%s1 + $0x1c] sm:$0xf]
  %v154 = vld [vmem:[%s1 + $0x20] sm:$0xf]
  %v155 = vld [vmem:[%s1 + $0x24] sm:$0xf]
  %v156 = vld [vmem:[%s1 + $0x28] sm:$0xf]
  %v157 = vld [vmem:[%s1 + $0x2c] sm:$0xf]
  %v158 = vld [vmem:[%s1 + $0x30] sm:$0xf]
  %v159 = vld [vmem:[%s1 + $0x34] sm:$0xf]
  %v160 = vld [vmem:[%s1 + $0x38] sm:$0xf]
  %v161 = vld [vmem:[%s1 + $0x3c] sm:$0xf]
  %v162 = vld [vmem:[%s1 + $0x40] sm:$0xf]
  %v163 = vld [vmem:[%s1 + $0x44] sm:$0xf]
  %v164 = vld [vmem:[%s1 + $0x48] sm:$0xf]
  %v165 = vld [vmem:[%s1 + $0x4c] sm:$0xf]
  %v166 = vld [vmem:[%s1 + $0x50] sm:$0xf]
  %v167 = vld [vmem:[%s1 + $0x54] sm:$0xf]
  %v168 = vld [vmem:[%s1 + $0x58] sm:$0xf]
  %v169 = vld [vmem:[%s1 + $0x5c] sm:$0xf]
  %v170 = vld [vmem:[%s1 + $0x60] sm:$0xf]
  %v171 = vld [vmem:[%s1 + $0x64] sm:$0xf]
  %v172 = vld [vmem:[%s1 + $0x68] sm:$0xf]
  %v173 = vld [vmem:[%s1 + $0x6c] sm:$0xf]
  %v174 = vld [vmem:[%s1 + $0x70] sm:$0xf]
  %v175 = vld [vmem:[%s1 + $0x74] sm:$0xf]
  %v176 = vld [vmem:[%s1 + $0x78] sm:$0xf]
  %v177 = vld [vmem:[%s1 + $0x7c] sm:$0xf]
  %v178 = vld [vmem:[%s1 + $0x80] sm:$0xf]
  %v179 = vld [vmem:[%s1 + $0x84] sm:$0xf]
  %v180 = vld [vmem:[%s1 + $0x88] sm:$0xf]
  %v181 = vld [vmem:[%s1 + $0x8c] sm:$0xf]
  %v310 = vunpack.c.l.b16 %v18
  %v311 = vunpack.c.h.b16 %v18
  %v312 = vunpack.c.l.b16 %v19
  %v313 = vunpack.c.l.b16 %v20
  %v314 = vunpack.c.h.b16 %v20
  %v315 = vunpack.c.l.b16 %v21
  %v316 = vunpack.c.l.b16 %v22
  %v317 = vunpack.c.h.b16 %v22
  %v318 = vunpack.c.l.b16 %v23
  %v319 = vunpack.c.l.b16 %v24
  %v320 = vunpack.c.h.b16 %v24
  %v321 = vunpack.c.l.b16 %v25
  %v322 = vunpack.c.l.b16 %v26
  %v323 = vunpack.c.h.b16 %v26
  %v324 = vunpack.c.l.b16 %v27
  %v325 = vunpack.c.l.b16 %v28
  %v326 = vunpack.c.h.b16 %v28
  %v327 = vunpack.c.l.b16 %v29
  %v328 = vunpack.c.l.b16 %v30
  %v329 = vunpack.c.h.b16 %v30
  %v330 = vunpack.c.l.b16 %v31
  %v331 = vunpack.c.l.b16 %v32
  %v332 = vunpack.c.h.b16 %v32
  %v333 = vunpack.c.l.b16 %v33
  %v334 = vunpack.c.l.b16 %v34
  %v335 = vunpack.c.h.b16 %v34
  %v336 = vunpack.c.l.b16 %v35
  %v337 = vunpack.c.l.b16 %v36
  %v338 = vunpack.c.h.b16 %v36
  %v339 = vunpack.c.l.b16 %v37
  %v340 = vunpack.c.l.b16 %v38
  %v341 = vunpack.c.h.b16 %v38
  %v342 = vunpack.c.l.b16 %v39
  %v343 = vunpack.c.l.b16 %v40
  %v344 = vunpack.c.h.b16 %v40
  %v345 = vunpack.c.l.b16 %v41
  %v346 = vunpack.c.l.b16 %v42
  %v347 = vunpack.c.h.b16 %v42
  %v348 = vunpack.c.l.b16 %v43
  %v349 = vunpack.c.l.b16 %v44
  %v350 = vunpack.c.h.b16 %v44
  %v351 = vunpack.c.l.b16 %v45
  %v352 = vunpack.c.l.b16 %v46
  %v353 = vunpack.c.h.b16 %v46
  %v354 = vunpack.c.l.b16 %v47
  %v355 = vunpack.c.l.b16 %v48
  %v356 = vunpack.c.h.b16 %v48
  %v357 = vunpack.c.l.b16 %v49
  %v358 = vunpack.c.l.b16 %v50
  %v359 = vunpack.c.h.b16 %v50
  %v360 = vunpack.c.l.b16 %v51
  %v361 = vunpack.c.l.b16 %v52
  %v362 = vunpack.c.h.b16 %v52
  %v363 = vunpack.c.l.b16 %v53
  %v364 = vunpack.c.l.b16 %v54
  %v365 = vunpack.c.h.b16 %v54
  %v366 = vunpack.c.l.b16 %v55
  %v367 = vunpack.c.l.b16 %v56
  %v368 = vunpack.c.h.b16 %v56
  %v369 = vunpack.c.l.b16 %v57
  %v370 = vunpack.c.l.b16 %v58
  %v371 = vunpack.c.h.b16 %v58
  %v372 = vunpack.c.l.b16 %v59
  %v373 = vunpack.c.l.b16 %v60
  %v374 = vunpack.c.h.b16 %v60
  %v375 = vunpack.c.l.b16 %v61
  %v376 = vunpack.c.l.b16 %v62
  %v377 = vunpack.c.h.b16 %v62
  %v378 = vunpack.c.l.b16 %v63
  %v379 = vunpack.c.l.b16 %v64
  %v380 = vunpack.c.h.b16 %v64
  %v381 = vunpack.c.l.b16 %v65
  %v382 = vunpack.c.l.b16 %v66
  %v383 = vunpack.c.h.b16 %v66
  %v384 = vunpack.c.l.b16 %v67
  %v385 = vunpack.c.l.b16 %v68
  %v386 = vunpack.c.h.b16 %v68
  %v387 = vunpack.c.l.b16 %v69
  %v388 = vunpack.c.l.b16 %v70
  %v389 = vunpack.c.h.b16 %v70
  %v390 = vunpack.c.l.b16 %v71
  %v391 = vunpack.c.l.b16 %v72
  %v392 = vunpack.c.h.b16 %v72
  %v393 = vunpack.c.l.b16 %v73
  %v394 = vunpack.c.l.b16 %v74
  %v395 = vunpack.c.h.b16 %v74
  %v396 = vunpack.c.l.b16 %v75
  %v397 = vunpack.c.l.b16 %v76
  %v398 = vunpack.c.h.b16 %v76
  %v399 = vunpack.c.l.b16 %v77
  %v400 = vunpack.c.l.b16 %v78
  %v401 = vunpack.c.h.b16 %v78
  %v402 = vunpack.c.l.b16 %v79
  %v403 = vunpack.c.l.b16 %v80
  %v404 = vunpack.c.h.b16 %v80
  %v405 = vunpack.c.l.b16 %v81
  %v406 = vunpack.c.l.b16 %v82
  %v407 = vunpack.c.h.b16 %v82
  %v408 = vunpack.c.l.b16 %v83
  %v409 = vunpack.c.l.b16 %v84
  %v410 = vunpack.c.h.b16 %v84
  %v411 = vunpack.c.l.b16 %v85
  %v412 = vunpack.c.l.b16 %v86
  %v413 = vunpack.c.h.b16 %v86
  %v414 = vunpack.c.l.b16 %v87
  %v415 = vunpack.c.l.b16 %v88
  %v416 = vunpack.c.h.b16 %v88
  %v417 = vunpack.c.l.b16 %v89
  %v418 = vunpack.c.l.b16 %v90
  %v419 = vunpack.c.h.b16 %v90
  %v420 = vunpack.c.l.b16 %v91
  %v421 = vunpack.c.l.b16 %v92
  %v422 = vunpack.c.h.b16 %v92
  %v423 = vunpack.c.l.b16 %v93
  %v424 = vunpack.c.l.b16 %v94
  %v425 = vunpack.c.h.b16 %v94
  %v426 = vunpack.c.l.b16 %v95
  %v427 = vunpack.c.l.b16 %v96
  %v428 = vunpack.c.h.b16 %v96
  %v429 = vunpack.c.l.b16 %v97
  %v430 = vunpack.c.l.b16 %v98
  %v431 = vunpack.c.h.b16 %v98
  %v432 = vunpack.c.l.b16 %v99
  %v433 = vunpack.c.l.b16 %v100
  %v434 = vunpack.c.h.b16 %v100
  %v435 = vunpack.c.l.b16 %v101
  %v436 = vunpack.c.l.b16 %v102
  %v437 = vunpack.c.h.b16 %v102
  %v438 = vunpack.c.l.b16 %v103
  %v439 = vunpack.c.l.b16 %v104
  %v440 = vunpack.c.h.b16 %v104
  %v441 = vunpack.c.l.b16 %v105
  %v442 = vunpack.c.l.b16 %v106
  %v443 = vunpack.c.h.b16 %v106
  %v444 = vunpack.c.l.b16 %v107
  %v445 = vunpack.c.l.b16 %v108
  %v446 = vunpack.c.h.b16 %v108
  %v447 = vunpack.c.l.b16 %v109
  %v448 = vunpack.c.l.b16 %v110
  %v449 = vunpack.c.h.b16 %v110
  %v450 = vunpack.c.l.b16 %v111
  %v451 = vunpack.c.l.b16 %v112
  %v452 = vunpack.c.h.b16 %v112
  %v453 = vunpack.c.l.b16 %v113
  %v454 = vunpack.c.l.b16 %v114
  %v455 = vunpack.c.h.b16 %v114
  %v456 = vunpack.c.l.b16 %v115
  %v457 = vunpack.c.l.b16 %v116
  %v458 = vunpack.c.h.b16 %v116
  %v459 = vunpack.c.l.b16 %v117
  %v460 = vunpack.c.l.b16 %v118
  %v461 = vunpack.c.h.b16 %v118
  %v462 = vunpack.c.l.b16 %v119
  %v463 = vunpack.c.l.b16 %v120
  %v464 = vunpack.c.h.b16 %v120
  %v465 = vunpack.c.l.b16 %v121
  %v466 = vunpack.c.l.b16 %v122
  %v467 = vunpack.c.h.b16 %v122
  %v468 = vunpack.c.l.b16 %v123
  %v469 = vunpack.c.l.b16 %v124
  %v470 = vunpack.c.h.b16 %v124
  %v471 = vunpack.c.l.b16 %v125
  %v472 = vunpack.c.l.b16 %v126
  %v473 = vunpack.c.h.b16 %v126
  %v474 = vunpack.c.l.b16 %v127
  %v475 = vunpack.c.l.b16 %v128
  %v476 = vunpack.c.h.b16 %v128
  %v477 = vunpack.c.l.b16 %v129
  %v478 = vunpack.c.l.b16 %v130
  %v479 = vunpack.c.h.b16 %v130
  %v480 = vunpack.c.l.b16 %v131
  %v481 = vunpack.c.l.b16 %v132
  %v482 = vunpack.c.h.b16 %v132
  %v483 = vunpack.c.l.b16 %v133
  %v484 = vunpack.c.l.b16 %v134
  %v485 = vunpack.c.h.b16 %v134
  %v486 = vunpack.c.l.b16 %v135
  %v487 = vunpack.c.l.b16 %v136
  %v488 = vunpack.c.h.b16 %v136
  %v489 = vunpack.c.l.b16 %v137
  %v490 = vunpack.c.l.b16 %v138
  %v491 = vunpack.c.h.b16 %v138
  %v492 = vunpack.c.l.b16 %v139
  %v493 = vunpack.c.l.b16 %v140
  %v494 = vunpack.c.h.b16 %v140
  %v495 = vunpack.c.l.b16 %v141
  %v496 = vunpack.c.l.b16 %v142
  %v497 = vunpack.c.h.b16 %v142
  %v498 = vunpack.c.l.b16 %v143
  %v499 = vunpack.c.l.b16 %v144
  %v500 = vunpack.c.h.b16 %v144
  %v501 = vunpack.c.l.b16 %v145
  %v502 = vpack.c.b16 %v313, %v310
  %v503 = vpack.c.b16 %v314, %v311
  %v504 = vpack.c.b16 %v315, %v312
  %v505 = vpack.c.b16 %v319, %v316
  %v506 = vpack.c.b16 %v320, %v317
  %v507 = vpack.c.b16 %v321, %v318
  %v508 = vpack.c.b16 %v325, %v322
  %v509 = vpack.c.b16 %v326, %v323
  %v510 = vpack.c.b16 %v327, %v324
  %v511 = vpack.c.b16 %v331, %v328
  %v512 = vpack.c.b16 %v332, %v329
  %v513 = vpack.c.b16 %v333, %v330
  %v514 = vpack.c.b16 %v337, %v334
  %v515 = vpack.c.b16 %v338, %v335
  %v516 = vpack.c.b16 %v339, %v336
  %v517 = vpack.c.b16 %v343, %v340
  %v518 = vpack.c.b16 %v344, %v341
  %v519 = vpack.c.b16 %v345, %v342
  %v520 = vpack.c.b16 %v349, %v346
  %v521 = vpack.c.b16 %v350, %v347
  %v522 = vpack.c.b16 %v351, %v348
  %v523 = vpack.c.b16 %v355, %v352
  %v524 = vpack.c.b16 %v356, %v353
  %v525 = vpack.c.b16 %v357, %v354
  %v526 = vpack.c.b16 %v361, %v358
  %v527 = vpack.c.b16 %v362, %v359
  %v528 = vpack.c.b16 %v363, %v360
  %v529 = vpack.c.b16 %v367, %v364
  %v530 = vpack.c.b16 %v368, %v365
  %v531 = vpack.c.b16 %v369, %v366
  %v532 = vpack.c.b16 %v373, %v370
  %v533 = vpack.c.b16 %v374, %v371
  %v534 = vpack.c.b16 %v375, %v372
  %v535 = vpack.c.b16 %v379, %v376
  %v536 = vpack.c.b16 %v380, %v377
  %v537 = vpack.c.b16 %v381, %v378
  %v538 = vpack.c.b16 %v385, %v382
  %v539 = vpack.c.b16 %v386, %v383
  %v540 = vpack.c.b16 %v387, %v384
  %v541 = vpack.c.b16 %v391, %v388
  %v542 = vpack.c.b16 %v392, %v389
  %v543 = vpack.c.b16 %v393, %v390
  %v544 = vpack.c.b16 %v397, %v394
  %v545 = vpack.c.b16 %v398, %v395
  %v546 = vpack.c.b16 %v399, %v396
  %v547 = vpack.c.b16 %v403, %v400
  %v548 = vpack.c.b16 %v404, %v401
  %v549 = vpack.c.b16 %v405, %v402
  %v550 = vpack.c.b16 %v409, %v406
  %v551 = vpack.c.b16 %v410, %v407
  %v552 = vpack.c.b16 %v411, %v408
  %v553 = vpack.c.b16 %v415, %v412
  %v554 = vpack.c.b16 %v416, %v413
  %v555 = vpack.c.b16 %v417, %v414
  %v556 = vpack.c.b16 %v421, %v418
  %v557 = vpack.c.b16 %v422, %v419
  %v558 = vpack.c.b16 %v423, %v420
  %v559 = vpack.c.b16 %v427, %v424
  %v560 = vpack.c.b16 %v428, %v425
  %v561 = vpack.c.b16 %v429, %v426
  %v562 = vpack.c.b16 %v433, %v430
  %v563 = vpack.c.b16 %v434, %v431
  %v564 = vpack.c.b16 %v435, %v432
  %v565 = vpack.c.b16 %v439, %v436
  %v566 = vpack.c.b16 %v440, %v437
  %v567 = vpack.c.b16 %v441, %v438
  %v568 = vpack.c.b16 %v445, %v442
  %v569 = vpack.c.b16 %v446, %v443
  %v570 = vpack.c.b16 %v447, %v444
  %v571 = vpack.c.b16 %v451, %v448
  %v572 = vpack.c.b16 %v452, %v449
  %v573 = vpack.c.b16 %v453, %v450
  %v574 = vpack.c.b16 %v457, %v454
  %v575 = vpack.c.b16 %v458, %v455
  %v576 = vpack.c.b16 %v459, %v456
  %v577 = vpack.c.b16 %v463, %v460
  %v578 = vpack.c.b16 %v464, %v461
  %v579 = vpack.c.b16 %v465, %v462
  %v580 = vpack.c.b16 %v469, %v466
  %v581 = vpack.c.b16 %v470, %v467
  %v582 = vpack.c.b16 %v471, %v468
  %v583 = vpack.c.b16 %v475, %v472
  %v584 = vpack.c.b16 %v476, %v473
  %v585 = vpack.c.b16 %v477, %v474
  %v586 = vpack.c.b16 %v481, %v478
  %v587 = vpack.c.b16 %v482, %v479
  %v588 = vpack.c.b16 %v483, %v480
  %v589 = vpack.c.b16 %v487, %v484
  %v590 = vpack.c.b16 %v488, %v485
  %v591 = vpack.c.b16 %v489, %v486
  %v592 = vpack.c.b16 %v493, %v490
  %v593 = vpack.c.b16 %v494, %v491
  %v594 = vpack.c.b16 %v495, %v492
  %v595 = vpack.c.b16 %v499, %v496
  %v596 = vpack.c.b16 %v500, %v497
  %v597 = vpack.c.b16 %v501, %v498
  %v698 = vunpack.c.l.b16 %v146
  %v699 = vunpack.c.l.b16 %v147
  %v700 = vunpack.c.l.b16 %v148
  %v701 = vunpack.c.l.b16 %v149
  %v702 = vunpack.c.l.b16 %v150
  %v703 = vunpack.c.l.b16 %v151
  %v704 = vunpack.c.l.b16 %v152
  %v705 = vunpack.c.l.b16 %v153
  %v706 = vunpack.c.l.b16 %v154
  %v707 = vunpack.c.l.b16 %v155
  %v708 = vunpack.c.l.b16 %v156
  %v709 = vunpack.c.l.b16 %v157
  %v710 = vunpack.c.l.b16 %v158
  %v711 = vunpack.c.l.b16 %v159
  %v712 = vunpack.c.l.b16 %v160
  %v713 = vunpack.c.l.b16 %v161
  %v714 = vunpack.c.l.b16 %v162
  %v715 = vunpack.c.l.b16 %v163
  %v716 = vunpack.c.l.b16 %v164
  %v717 = vunpack.c.l.b16 %v165
  %v718 = vunpack.c.l.b16 %v166
  %v719 = vunpack.c.l.b16 %v167
  %v720 = vunpack.c.l.b16 %v168
  %v721 = vunpack.c.l.b16 %v169
  %v722 = vunpack.c.l.b16 %v170
  %v723 = vunpack.c.l.b16 %v171
  %v724 = vunpack.c.l.b16 %v172
  %v725 = vunpack.c.l.b16 %v173
  %v726 = vunpack.c.l.b16 %v174
  %v727 = vunpack.c.l.b16 %v175
  %v728 = vunpack.c.l.b16 %v176
  %v729 = vunpack.c.l.b16 %v177
  %v730 = vunpack.c.l.b16 %v178
  %v731 = vunpack.c.l.b16 %v179
  %v732 = vunpack.c.l.b16 %v180
  %v733 = vunpack.c.l.b16 %v181
  %v734 = vpack.c.b16 %v699, %v698
  %v735 = vpack.c.b16 %v701, %v700
  %v736 = vpack.c.b16 %v703, %v702
  %v737 = vpack.c.b16 %v705, %v704
  %v738 = vpack.c.b16 %v707, %v706
  %v739 = vpack.c.b16 %v709, %v708
  %v740 = vpack.c.b16 %v711, %v710
  %v741 = vpack.c.b16 %v713, %v712
  %v742 = vpack.c.b16 %v715, %v714
  %v743 = vpack.c.b16 %v717, %v716
  %v744 = vpack.c.b16 %v719, %v718
  %v745 = vpack.c.b16 %v721, %v720
  %v746 = vpack.c.b16 %v723, %v722
  %v747 = vpack.c.b16 %v725, %v724
  %v748 = vpack.c.b16 %v727, %v726
  %v749 = vpack.c.b16 %v729, %v728
  %v750 = vpack.c.b16 %v731, %v730
  %v751 = vpack.c.b16 %v733, %v732
  %vm770 = vcmask 261120
  %v772 = vsel %vm770, %v504, 0
  %v775 = vsel %vm770, %v507, 0
  %v778 = vsel %vm770, %v510, 0
  %v781 = vsel %vm770, %v513, 0
  %v784 = vsel %vm770, %v516, 0
  %v787 = vsel %vm770, %v519, 0
  %v790 = vsel %vm770, %v522, 0
  %v793 = vsel %vm770, %v525, 0
  %v796 = vsel %vm770, %v528, 0
  %v799 = vsel %vm770, %v531, 0
  %v802 = vsel %vm770, %v534, 0
  %v805 = vsel %vm770, %v537, 0
  %v808 = vsel %vm770, %v540, 0
  %v811 = vsel %vm770, %v543, 0
  %v814 = vsel %vm770, %v546, 0
  %v817 = vsel %vm770, %v549, 0
  %v820 = vsel %vm770, %v552, 0
  %v823 = vsel %vm770, %v555, 0
  %v826 = vsel %vm770, %v558, 0
  %v829 = vsel %vm770, %v561, 0
  %v832 = vsel %vm770, %v564, 0
  %v835 = vsel %vm770, %v567, 0
  %v838 = vsel %vm770, %v570, 0
  %v841 = vsel %vm770, %v573, 0
  %v844 = vsel %vm770, %v576, 0
  %v847 = vsel %vm770, %v579, 0
  %v850 = vsel %vm770, %v582, 0
  %v853 = vsel %vm770, %v585, 0
  %v856 = vsel %vm770, %v588, 0
  %v859 = vsel %vm770, %v591, 0
  %v862 = vsel %vm770, %v594, 0
  %v865 = vsel %vm770, %v597, 0
  %867 = vmatprep.subr.bf16.mxu0 0
  %868 = vmatpush1.bf16.msra.mxu0 %v734
  %869 = vmatprep.subr.bf16.mxu0 0
  %870 = vmatpush1.bf16.msra.mxu0 %v735
  %871 = vmatprep.subr.bf16.mxu0 0
  %872 = vmatpush1.bf16.msra.mxu0 %v736
  %873 = vmatprep.subr.bf16.mxu0 0
  %874 = vmatpush1.bf16.msra.mxu0 %v737
  %875 = vmatprep.subr.bf16.mxu0 0
  %876 = vmatpush1.bf16.msra.mxu0 %v738
  %877 = vmatprep.subr.bf16.mxu0 0
  %878 = vmatpush1.bf16.msra.mxu0 %v739
  %879 = vmatprep.subr.bf16.mxu0 0
  %880 = vmatpush1.bf16.msra.mxu0 %v740
  %881 = vmatprep.subr.bf16.mxu0 0
  %882 = vmatpush1.bf16.msra.mxu0 %v741
  %883 = vmatprep.subr.bf16.mxu0 0
  %884 = vmatpush1.bf16.msra.mxu0 %v742
  %885 = vmatprep.subr.bf16.mxu0 0
  %886 = vmatpush1.bf16.msra.mxu0 %v743
  %887 = vmatprep.subr.bf16.mxu0 0
  %888 = vmatpush1.bf16.msra.mxu0 %v744
  %889 = vmatprep.subr.bf16.mxu0 0
  %890 = vmatpush1.bf16.msra.mxu0 %v745
  %891 = vmatprep.subr.bf16.mxu0 0
  %892 = vmatpush1.bf16.msra.mxu0 %v746
  %893 = vmatprep.subr.bf16.mxu0 0
  %894 = vmatpush1.bf16.msra.mxu0 %v747
  %895 = vmatprep.subr.bf16.mxu0 0
  %896 = vmatpush1.bf16.msra.mxu0 %v748
  %897 = vmatprep.subr.bf16.mxu0 0
  %898 = vmatpush1.bf16.msra.mxu0 %v749
  %899 = vmatprep.mubr.bf16.mxu0 %v503
  %900 = vmatmul.mubr.bf16.gmra.mrb[0].mxu0 %v502
  %v901 = vpop.f32.mrb[0].mxu0
  %v902 = vadd.f32 0.0, %v901
  %v903 = vpop.f32.mrb[0].mxu0
  %v904 = vpop.f32.mrb[0].mxu0
  %v905 = vadd.f32 0.0, %v904
  %v906 = vpop.f32.mrb[0].mxu0
  %907 = vmatprep.mubr.bf16.mxu0 %v506
  %908 = vmatmul.mubr.bf16.gmra.mrb[0].mxu0 %v505
  %v909 = vpop.f32.mrb[0].mxu0
  %v910 = vadd.f32 0.0, %v909
  %v911 = vpop.f32.mrb[0].mxu0
  %v912 = vpop.f32.mrb[0].mxu0
  %v913 = vadd.f32 0.0, %v912
  %v914 = vpop.f32.mrb[0].mxu0
  %915 = vmatprep.mubr.bf16.mxu0 %v509
  %916 = vmatmul.mubr.bf16.gmra.mrb[0].mxu0 %v508
  %v917 = vpop.f32.mrb[0].mxu0
  %v918 = vadd.f32 0.0, %v917
  %v919 = vpop.f32.mrb[0].mxu0
  %v920 = vpop.f32.mrb[0].mxu0
  %v921 = vadd.f32 0.0, %v920
  %v922 = vpop.f32.mrb[0].mxu0
  %923 = vmatprep.mubr.bf16.mxu0 %v512
  %924 = vmatmul.mubr.bf16.gmra.mrb[0].mxu0 %v511
  %v925 = vpop.f32.mrb[0].mxu0
  %v926 = vadd.f32 0.0, %v925
  %v927 = vpop.f32.mrb[0].mxu0
  %v928 = vpop.f32.mrb[0].mxu0
  %v929 = vadd.f32 0.0, %v928
  %v930 = vpop.f32.mrb[0].mxu0
  %931 = vmatprep.mubr.bf16.mxu0 %v515
  %932 = vmatmul.mubr.bf16.gmra.mrb[0].mxu0 %v514
  %v933 = vpop.f32.mrb[0].mxu0
  %v934 = vadd.f32 0.0, %v933
  %v935 = vpop.f32.mrb[0].mxu0
  %v936 = vpop.f32.mrb[0].mxu0
  %v937 = vadd.f32 0.0, %v936
  %v938 = vpop.f32.mrb[0].mxu0
  %939 = vmatprep.mubr.bf16.mxu0 %v518
  %940 = vmatmul.mubr.bf16.gmra.mrb[0].mxu0 %v517
  %v941 = vpop.f32.mrb[0].mxu0
  %v942 = vadd.f32 0.0, %v941
  %v943 = vpop.f32.mrb[0].mxu0
  %v944 = vpop.f32.mrb[0].mxu0
  %v945 = vadd.f32 0.0, %v944
  %v946 = vpop.f32.mrb[0].mxu0
  %947 = vmatprep.mubr.bf16.mxu0 %v521
  %948 = vmatmul.mubr.bf16.gmra.mrb[0].mxu0 %v520
  %v949 = vpop.f32.mrb[0].mxu0
  %v950 = vadd.f32 0.0, %v949
  %v951 = vpop.f32.mrb[0].mxu0
  %v952 = vpop.f32.mrb[0].mxu0
  %v953 = vadd.f32 0.0, %v952
  %v954 = vpop.f32.mrb[0].mxu0
  %955 = vmatprep.mubr.bf16.mxu0 %v524
  %956 = vmatmul.mubr.bf16.gmra.mrb[0].mxu0 %v523
  %v957 = vpop.f32.mrb[0].mxu0
  %v958 = vadd.f32 0.0, %v957
  %v959 = vpop.f32.mrb[0].mxu0
  %v960 = vpop.f32.mrb[0].mxu0
  %v961 = vadd.f32 0.0, %v960
  %v962 = vpop.f32.mrb[0].mxu0
  %963 = vmatprep.mubr.bf16.mxu0 %v527
  %964 = vmatmul.mubr.bf16.gmra.mrb[0].mxu0 %v526
  %v965 = vpop.f32.mrb[0].mxu0
  %v966 = vadd.f32 0.0, %v965
  %v967 = vpop.f32.mrb[0].mxu0
  %v968 = vpop.f32.mrb[0].mxu0
  %v969 = vadd.f32 0.0, %v968
  %v970 = vpop.f32.mrb[0].mxu0
  %971 = vmatprep.mubr.bf16.mxu0 %v530
  %972 = vmatmul.mubr.bf16.gmra.mrb[0].mxu0 %v529
  %v973 = vpop.f32.mrb[0].mxu0
  %v974 = vadd.f32 0.0, %v973
  %v975 = vpop.f32.mrb[0].mxu0
  %v976 = vpop.f32.mrb[0].mxu0
  %v977 = vadd.f32 0.0, %v976
  %v978 = vpop.f32.mrb[0].mxu0
  %979 = vmatprep.mubr.bf16.mxu0 %v533
  %980 = vmatmul.mubr.bf16.gmra.mrb[0].mxu0 %v532
  %v981 = vpop.f32.mrb[0].mxu0
  %v982 = vadd.f32 0.0, %v981
  %v983 = vpop.f32.mrb[0].mxu0
  %v984 = vpop.f32.mrb[0].mxu0
  %v985 = vadd.f32 0.0, %v984
  %v986 = vpop.f32.mrb[0].mxu0
  %987 = vmatprep.mubr.bf16.mxu0 %v536
  %988 = vmatmul.mubr.bf16.gmra.mrb[0].mxu0 %v535
  %v989 = vpop.f32.mrb[0].mxu0
  %v990 = vadd.f32 0.0, %v989
  %v991 = vpop.f32.mrb[0].mxu0
  %v992 = vpop.f32.mrb[0].mxu0
  %v993 = vadd.f32 0.0, %v992
  %v994 = vpop.f32.mrb[0].mxu0
  %995 = vmatprep.mubr.bf16.mxu0 %v539
  %996 = vmatmul.mubr.bf16.gmra.mrb[0].mxu0 %v538
  %v997 = vpop.f32.mrb[0].mxu0
  %v998 = vadd.f32 0.0, %v997
  %v999 = vpop.f32.mrb[0].mxu0
  %v1000 = vpop.f32.mrb[0].mxu0
  %v1001 = vadd.f32 0.0, %v1000
  %v1002 = vpop.f32.mrb[0].mxu0
  %1003 = vmatprep.mubr.bf16.mxu0 %v542
  %1004 = vmatmul.mubr.bf16.gmra.mrb[0].mxu0 %v541
  %v1005 = vpop.f32.mrb[0].mxu0
  %v1006 = vadd.f32 0.0, %v1005
  %v1007 = vpop.f32.mrb[0].mxu0
  %v1008 = vpop.f32.mrb[0].mxu0
  %v1009 = vadd.f32 0.0, %v1008
  %v1010 = vpop.f32.mrb[0].mxu0
  %1011 = vmatprep.mubr.bf16.mxu0 %v545
  %1012 = vmatmul.mubr.bf16.gmra.mrb[0].mxu0 %v544
  %v1013 = vpop.f32.mrb[0].mxu0
  %v1014 = vadd.f32 0.0, %v1013
  %v1015 = vpop.f32.mrb[0].mxu0
  %v1016 = vpop.f32.mrb[0].mxu0
  %v1017 = vadd.f32 0.0, %v1016
  %v1018 = vpop.f32.mrb[0].mxu0
  %1019 = vmatprep.mubr.bf16.mxu0 %v548
  %1020 = vmatmul.mubr.bf16.gmra.mrb[0].mxu0 %v547
  %v1021 = vpop.f32.mrb[0].mxu0
  %v1022 = vadd.f32 0.0, %v1021
  %v1023 = vpop.f32.mrb[0].mxu0
  %v1024 = vpop.f32.mrb[0].mxu0
  %v1025 = vadd.f32 0.0, %v1024
  %v1026 = vpop.f32.mrb[0].mxu0
  %1027 = vmatprep.mubr.bf16.mxu0 %v551
  %1028 = vmatmul.mubr.bf16.gmra.mrb[0].mxu0 %v550
  %v1029 = vpop.f32.mrb[0].mxu0
  %v1030 = vadd.f32 0.0, %v1029
  %v1031 = vpop.f32.mrb[0].mxu0
  %v1032 = vpop.f32.mrb[0].mxu0
  %v1033 = vadd.f32 0.0, %v1032
  %v1034 = vpop.f32.mrb[0].mxu0
  %1035 = vmatprep.mubr.bf16.mxu0 %v554
  %1036 = vmatmul.mubr.bf16.gmra.mrb[0].mxu0 %v553
  %v1037 = vpop.f32.mrb[0].mxu0
  %v1038 = vadd.f32 0.0, %v1037
  %v1039 = vpop.f32.mrb[0].mxu0
  %v1040 = vpop.f32.mrb[0].mxu0
  %v1041 = vadd.f32 0.0, %v1040
  %v1042 = vpop.f32.mrb[0].mxu0
  %1043 = vmatprep.mubr.bf16.mxu0 %v557
  %1044 = vmatmul.mubr.bf16.gmra.mrb[0].mxu0 %v556
  %v1045 = vpop.f32.mrb[0].mxu0
  %v1046 = vadd.f32 0.0, %v1045
  %v1047 = vpop.f32.mrb[0].mxu0
  %v1048 = vpop.f32.mrb[0].mxu0
  %v1049 = vadd.f32 0.0, %v1048
  %v1050 = vpop.f32.mrb[0].mxu0
  %1051 = vmatprep.mubr.bf16.mxu0 %v560
  %1052 = vmatmul.mubr.bf16.gmra.mrb[0].mxu0 %v559
  %v1053 = vpop.f32.mrb[0].mxu0
  %v1054 = vadd.f32 0.0, %v1053
  %v1055 = vpop.f32.mrb[0].mxu0
  %v1056 = vpop.f32.mrb[0].mxu0
  %v1057 = vadd.f32 0.0, %v1056
  %v1058 = vpop.f32.mrb[0].mxu0
  %1059 = vmatprep.mubr.bf16.mxu0 %v563
  %1060 = vmatmul.mubr.bf16.gmra.mrb[0].mxu0 %v562
  %v1061 = vpop.f32.mrb[0].mxu0
  %v1062 = vadd.f32 0.0, %v1061
  %v1063 = vpop.f32.mrb[0].mxu0
  %v1064 = vpop.f32.mrb[0].mxu0
  %v1065 = vadd.f32 0.0, %v1064
  %v1066 = vpop.f32.mrb[0].mxu0
  %1067 = vmatprep.mubr.bf16.mxu0 %v566
  %1068 = vmatmul.mubr.bf16.gmra.mrb[0].mxu0 %v565
  %v1069 = vpop.f32.mrb[0].mxu0
  %v1070 = vadd.f32 0.0, %v1069
  %v1071 = vpop.f32.mrb[0].mxu0
  %v1072 = vpop.f32.mrb[0].mxu0
  %v1073 = vadd.f32 0.0, %v1072
  %v1074 = vpop.f32.mrb[0].mxu0
  %1075 = vmatprep.mubr.bf16.mxu0 %v569
  %1076 = vmatmul.mubr.bf16.gmra.mrb[0].mxu0 %v568
  %v1077 = vpop.f32.mrb[0].mxu0
  %v1078 = vadd.f32 0.0, %v1077
  %v1079 = vpop.f32.mrb[0].mxu0
  %v1080 = vpop.f32.mrb[0].mxu0
  %v1081 = vadd.f32 0.0, %v1080
  %v1082 = vpop.f32.mrb[0].mxu0
  %1083 = vmatprep.mubr.bf16.mxu0 %v572
  %1084 = vmatmul.mubr.bf16.gmra.mrb[0].mxu0 %v571
  %v1085 = vpop.f32.mrb[0].mxu0
  %v1086 = vadd.f32 0.0, %v1085
  %v1087 = vpop.f32.mrb[0].mxu0
  %v1088 = vpop.f32.mrb[0].mxu0
  %v1089 = vadd.f32 0.0, %v1088
  %v1090 = vpop.f32.mrb[0].mxu0
  %1091 = vmatprep.mubr.bf16.mxu0 %v575
  %1092 = vmatmul.mubr.bf16.gmra.mrb[0].mxu0 %v574
  %v1093 = vpop.f32.mrb[0].mxu0
  %v1094 = vadd.f32 0.0, %v1093
  %v1095 = vpop.f32.mrb[0].mxu0
  %v1096 = vpop.f32.mrb[0].mxu0
  %v1097 = vadd.f32 0.0, %v1096
  %v1098 = vpop.f32.mrb[0].mxu0
  %1099 = vmatprep.mubr.bf16.mxu0 %v578
  %1100 = vmatmul.mubr.bf16.gmra.mrb[0].mxu0 %v577
  %v1101 = vpop.f32.mrb[0].mxu0
  %v1102 = vadd.f32 0.0, %v1101
  %v1103 = vpop.f32.mrb[0].mxu0
  %v1104 = vpop.f32.mrb[0].mxu0
  %v1105 = vadd.f32 0.0, %v1104
  %v1106 = vpop.f32.mrb[0].mxu0
  %1107 = vmatprep.mubr.bf16.mxu0 %v581
  %1108 = vmatmul.mubr.bf16.gmra.mrb[0].mxu0 %v580
  %v1109 = vpop.f32.mrb[0].mxu0
  %v1110 = vadd.f32 0.0, %v1109
  %v1111 = vpop.f32.mrb[0].mxu0
  %v1112 = vpop.f32.mrb[0].mxu0
  %v1113 = vadd.f32 0.0, %v1112
  %v1114 = vpop.f32.mrb[0].mxu0
  %1115 = vmatprep.mubr.bf16.mxu0 %v584
  %1116 = vmatmul.mubr.bf16.gmra.mrb[0].mxu0 %v583
  %v1117 = vpop.f32.mrb[0].mxu0
  %v1118 = vadd.f32 0.0, %v1117
  %v1119 = vpop.f32.mrb[0].mxu0
  %v1120 = vpop.f32.mrb[0].mxu0
  %v1121 = vadd.f32 0.0, %v1120
  %v1122 = vpop.f32.mrb[0].mxu0
  %1123 = vmatprep.mubr.bf16.mxu0 %v587
  %1124 = vmatmul.mubr.bf16.gmra.mrb[0].mxu0 %v586
  %v1125 = vpop.f32.mrb[0].mxu0
  %v1126 = vadd.f32 0.0, %v1125
  %v1127 = vpop.f32.mrb[0].mxu0
  %v1128 = vpop.f32.mrb[0].mxu0
  %v1129 = vadd.f32 0.0, %v1128
  %v1130 = vpop.f32.mrb[0].mxu0
  %1131 = vmatprep.mubr.bf16.mxu0 %v590
  %1132 = vmatmul.mubr.bf16.gmra.mrb[0].mxu0 %v589
  %v1133 = vpop.f32.mrb[0].mxu0
  %v1134 = vadd.f32 0.0, %v1133
  %v1135 = vpop.f32.mrb[0].mxu0
  %v1136 = vpop.f32.mrb[0].mxu0
  %v1137 = vadd.f32 0.0, %v1136
  %v1138 = vpop.f32.mrb[0].mxu0
  %1139 = vmatprep.mubr.bf16.mxu0 %v593
  %1140 = vmatmul.mubr.bf16.gmra.mrb[0].mxu0 %v592
  %v1141 = vpop.f32.mrb[0].mxu0
  %v1142 = vadd.f32 0.0, %v1141
  %v1143 = vpop.f32.mrb[0].mxu0
  %v1144 = vpop.f32.mrb[0].mxu0
  %v1145 = vadd.f32 0.0, %v1144
  %v1146 = vpop.f32.mrb[0].mxu0
  %1147 = vmatprep.mubr.bf16.mxu0 %v596
  %1148 = vmatmul.mubr.bf16.gmra.mrb[0].mxu0 %v595
  %v1149 = vpop.f32.mrb[0].mxu0
  %v1150 = vadd.f32 0.0, %v1149
  %v1151 = vpop.f32.mrb[0].mxu0
  %v1152 = vpop.f32.mrb[0].mxu0
  %v1153 = vadd.f32 0.0, %v1152
  %v1154 = vpop.f32.mrb[0].mxu0
  %1155 = vdwg.mxu0
  %1156 = vmatprep.subr.bf16.mxu0 0
  %1157 = vmatpush1.bf16.msra.mxu0 %v750
  %1158 = vmatprep.subr.bf16.mxu0 0
  %1159 = vmatpush1.bf16.msra.mxu0 %v751
  %1160 = vmatprep.subr.bf16.mxu0 0
  %1161 = vmatpush1.bf16.msra.mxu0 0
  %1162 = vmatprep.subr.bf16.mxu0 0
  %1163 = vmatpush1.bf16.msra.mxu0 0
  %1164 = vmatprep.subr.bf16.mxu0 0
  %1165 = vmatpush1.bf16.msra.mxu0 0
  %1166 = vmatprep.subr.bf16.mxu0 0
  %1167 = vmatpush1.bf16.msra.mxu0 0
  %1168 = vmatprep.subr.bf16.mxu0 0
  %1169 = vmatpush1.bf16.msra.mxu0 0
  %1170 = vmatprep.subr.bf16.mxu0 0
  %1171 = vmatpush1.bf16.msra.mxu0 0
  %1172 = vmatprep.subr.bf16.mxu0 0
  %1173 = vmatpush1.bf16.msra.mxu0 0
  %1174 = vmatprep.subr.bf16.mxu0 0
  %1175 = vmatpush1.bf16.msra.mxu0 0
  %1176 = vmatprep.subr.bf16.mxu0 0
  %1177 = vmatpush1.bf16.msra.mxu0 0
  %1178 = vmatprep.subr.bf16.mxu0 0
  %1179 = vmatpush1.bf16.msra.mxu0 0
  %1180 = vmatprep.subr.bf16.mxu0 0
  %1181 = vmatpush1.bf16.msra.mxu0 0
  %1182 = vmatprep.subr.bf16.mxu0 0
  %1183 = vmatpush1.bf16.msra.mxu0 0
  %1184 = vmatprep.subr.bf16.mxu0 0
  %1185 = vmatpush1.bf16.msra.mxu0 0
  %1186 = vmatprep.subr.bf16.mxu0 0
  %1187 = vmatpush1.bf16.msra.mxu0 0
  %1188 = vmatprep.mubr.bf16.mxu0 0
  %1189 = vmatmul.mubr.bf16.gmra.mrb[0].mxu0 %v772
  %v1190 = vpop.f32.mrb[0].mxu0
  %v1191 = vadd.f32 %v902, %v1190
  %v1192 = vpop.f32.mrb[0].mxu0
  %v1193 = vpop.f32.mrb[0].mxu0
  %v1194 = vadd.f32 %v905, %v1193
  %v1195 = vpop.f32.mrb[0].mxu0
  %1196 = vmatprep.mubr.bf16.mxu0 0
  %1197 = vmatmul.mubr.bf16.gmra.mrb[0].mxu0 %v775
  %v1198 = vpop.f32.mrb[0].mxu0
  %v1199 = vadd.f32 %v910, %v1198
  %v1200 = vpop.f32.mrb[0].mxu0
  %v1201 = vpop.f32.mrb[0].mxu0
  %v1202 = vadd.f32 %v913, %v1201
  %v1203 = vpop.f32.mrb[0].mxu0
  %1204 = vmatprep.mubr.bf16.mxu0 0
  %1205 = vmatmul.mubr.bf16.gmra.mrb[0].mxu0 %v778
  %v1206 = vpop.f32.mrb[0].mxu0
  %v1207 = vadd.f32 %v918, %v1206
  %v1208 = vpop.f32.mrb[0].mxu0
  %v1209 = vpop.f32.mrb[0].mxu0
  %v1210 = vadd.f32 %v921, %v1209
  %v1211 = vpop.f32.mrb[0].mxu0
  %1212 = vmatprep.mubr.bf16.mxu0 0
  %1213 = vmatmul.mubr.bf16.gmra.mrb[0].mxu0 %v781
  %v1214 = vpop.f32.mrb[0].mxu0
  %v1215 = vadd.f32 %v926, %v1214
  %v1216 = vpop.f32.mrb[0].mxu0
  %v1217 = vpop.f32.mrb[0].mxu0
  %v1218 = vadd.f32 %v929, %v1217
  %v1219 = vpop.f32.mrb[0].mxu0
  %1220 = vmatprep.mubr.bf16.mxu0 0
  %1221 = vmatmul.mubr.bf16.gmra.mrb[0].mxu0 %v784
  %v1222 = vpop.f32.mrb[0].mxu0
  %v1223 = vadd.f32 %v934, %v1222
  %v1224 = vpop.f32.mrb[0].mxu0
  %v1225 = vpop.f32.mrb[0].mxu0
  %v1226 = vadd.f32 %v937, %v1225
  %v1227 = vpop.f32.mrb[0].mxu0
  %1228 = vmatprep.mubr.bf16.mxu0 0
  %1229 = vmatmul.mubr.bf16.gmra.mrb[0].mxu0 %v787
  %v1230 = vpop.f32.mrb[0].mxu0
  %v1231 = vadd.f32 %v942, %v1230
  %v1232 = vpop.f32.mrb[0].mxu0
  %v1233 = vpop.f32.mrb[0].mxu0
  %v1234 = vadd.f32 %v945, %v1233
  %v1235 = vpop.f32.mrb[0].mxu0
  %1236 = vmatprep.mubr.bf16.mxu0 0
  %1237 = vmatmul.mubr.bf16.gmra.mrb[0].mxu0 %v790
  %v1238 = vpop.f32.mrb[0].mxu0
  %v1239 = vadd.f32 %v950, %v1238
  %v1240 = vpop.f32.mrb[0].mxu0
  %v1241 = vpop.f32.mrb[0].mxu0
  %v1242 = vadd.f32 %v953, %v1241
  %v1243 = vpop.f32.mrb[0].mxu0
  %1244 = vmatprep.mubr.bf16.mxu0 0
  %1245 = vmatmul.mubr.bf16.gmra.mrb[0].mxu0 %v793
  %v1246 = vpop.f32.mrb[0].mxu0
  %v1247 = vadd.f32 %v958, %v1246
  %v1248 = vpop.f32.mrb[0].mxu0
  %v1249 = vpop.f32.mrb[0].mxu0
  %v1250 = vadd.f32 %v961, %v1249
  %v1251 = vpop.f32.mrb[0].mxu0
  %1252 = vmatprep.mubr.bf16.mxu0 0
  %1253 = vmatmul.mubr.bf16.gmra.mrb[0].mxu0 %v796
  %v1254 = vpop.f32.mrb[0].mxu0
  %v1255 = vadd.f32 %v966, %v1254
  %v1256 = vpop.f32.mrb[0].mxu0
  %v1257 = vpop.f32.mrb[0].mxu0
  %v1258 = vadd.f32 %v969, %v1257
  %v1259 = vpop.f32.mrb[0].mxu0
  %1260 = vmatprep.mubr.bf16.mxu0 0
  %1261 = vmatmul.mubr.bf16.gmra.mrb[0].mxu0 %v799
  %v1262 = vpop.f32.mrb[0].mxu0
  %v1263 = vadd.f32 %v974, %v1262
  %v1264 = vpop.f32.mrb[0].mxu0
  %v1265 = vpop.f32.mrb[0].mxu0
  %v1266 = vadd.f32 %v977, %v1265
  %v1267 = vpop.f32.mrb[0].mxu0
  %1268 = vmatprep.mubr.bf16.mxu0 0
  %1269 = vmatmul.mubr.bf16.gmra.mrb[0].mxu0 %v802
  %v1270 = vpop.f32.mrb[0].mxu0
  %v1271 = vadd.f32 %v982, %v1270
  %v1272 = vpop.f32.mrb[0].mxu0
  %v1273 = vpop.f32.mrb[0].mxu0
  %v1274 = vadd.f32 %v985, %v1273
  %v1275 = vpop.f32.mrb[0].mxu0
  %1276 = vmatprep.mubr.bf16.mxu0 0
  %1277 = vmatmul.mubr.bf16.gmra.mrb[0].mxu0 %v805
  %v1278 = vpop.f32.mrb[0].mxu0
  %v1279 = vadd.f32 %v990, %v1278
  %v1280 = vpop.f32.mrb[0].mxu0
  %v1281 = vpop.f32.mrb[0].mxu0
  %v1282 = vadd.f32 %v993, %v1281
  %v1283 = vpop.f32.mrb[0].mxu0
  %1284 = vmatprep.mubr.bf16.mxu0 0
  %1285 = vmatmul.mubr.bf16.gmra.mrb[0].mxu0 %v808
  %v1286 = vpop.f32.mrb[0].mxu0
  %v1287 = vadd.f32 %v998, %v1286
  %v1288 = vpop.f32.mrb[0].mxu0
  %v1289 = vpop.f32.mrb[0].mxu0
  %v1290 = vadd.f32 %v1001, %v1289
  %v1291 = vpop.f32.mrb[0].mxu0
  %1292 = vmatprep.mubr.bf16.mxu0 0
  %1293 = vmatmul.mubr.bf16.gmra.mrb[0].mxu0 %v811
  %v1294 = vpop.f32.mrb[0].mxu0
  %v1295 = vadd.f32 %v1006, %v1294
  %v1296 = vpop.f32.mrb[0].mxu0
  %v1297 = vpop.f32.mrb[0].mxu0
  %v1298 = vadd.f32 %v1009, %v1297
  %v1299 = vpop.f32.mrb[0].mxu0
  %1300 = vmatprep.mubr.bf16.mxu0 0
  %1301 = vmatmul.mubr.bf16.gmra.mrb[0].mxu0 %v814
  %v1302 = vpop.f32.mrb[0].mxu0
  %v1303 = vadd.f32 %v1014, %v1302
  %v1304 = vpop.f32.mrb[0].mxu0
  %v1305 = vpop.f32.mrb[0].mxu0
  %v1306 = vadd.f32 %v1017, %v1305
  %v1307 = vpop.f32.mrb[0].mxu0
  %1308 = vmatprep.mubr.bf16.mxu0 0
  %1309 = vmatmul.mubr.bf16.gmra.mrb[0].mxu0 %v817
  %v1310 = vpop.f32.mrb[0].mxu0
  %v1311 = vadd.f32 %v1022, %v1310
  %v1312 = vpop.f32.mrb[0].mxu0
  %v1313 = vpop.f32.mrb[0].mxu0
  %v1314 = vadd.f32 %v1025, %v1313
  %v1315 = vpop.f32.mrb[0].mxu0
  %1316 = vmatprep.mubr.bf16.mxu0 0
  %1317 = vmatmul.mubr.bf16.gmra.mrb[0].mxu0 %v820
  %v1318 = vpop.f32.mrb[0].mxu0
  %v1319 = vadd.f32 %v1030, %v1318
  %v1320 = vpop.f32.mrb[0].mxu0
  %v1321 = vpop.f32.mrb[0].mxu0
  %v1322 = vadd.f32 %v1033, %v1321
  %v1323 = vpop.f32.mrb[0].mxu0
  %1324 = vmatprep.mubr.bf16.mxu0 0
  %1325 = vmatmul.mubr.bf16.gmra.mrb[0].mxu0 %v823
  %v1326 = vpop.f32.mrb[0].mxu0
  %v1327 = vadd.f32 %v1038, %v1326
  %v1328 = vpop.f32.mrb[0].mxu0
  %v1329 = vpop.f32.mrb[0].mxu0
  %v1330 = vadd.f32 %v1041, %v1329
  %v1331 = vpop.f32.mrb[0].mxu0
  %1332 = vmatprep.mubr.bf16.mxu0 0
  %1333 = vmatmul.mubr.bf16.gmra.mrb[0].mxu0 %v826
  %v1334 = vpop.f32.mrb[0].mxu0
  %v1335 = vadd.f32 %v1046, %v1334
  %v1336 = vpop.f32.mrb[0].mxu0
  %v1337 = vpop.f32.mrb[0].mxu0
  %v1338 = vadd.f32 %v1049, %v1337
  %v1339 = vpop.f32.mrb[0].mxu0
  %1340 = vmatprep.mubr.bf16.mxu0 0
  %1341 = vmatmul.mubr.bf16.gmra.mrb[0].mxu0 %v829
  %v1342 = vpop.f32.mrb[0].mxu0
  %v1343 = vadd.f32 %v1054, %v1342
  %v1344 = vpop.f32.mrb[0].mxu0
  %v1345 = vpop.f32.mrb[0].mxu0
  %v1346 = vadd.f32 %v1057, %v1345
  %v1347 = vpop.f32.mrb[0].mxu0
  %1348 = vmatprep.mubr.bf16.mxu0 0
  %1349 = vmatmul.mubr.bf16.gmra.mrb[0].mxu0 %v832
  %v1350 = vpop.f32.mrb[0].mxu0
  %v1351 = vadd.f32 %v1062, %v1350
  %v1352 = vpop.f32.mrb[0].mxu0
  %v1353 = vpop.f32.mrb[0].mxu0
  %v1354 = vadd.f32 %v1065, %v1353
  %v1355 = vpop.f32.mrb[0].mxu0
  %1356 = vmatprep.mubr.bf16.mxu0 0
  %1357 = vmatmul.mubr.bf16.gmra.mrb[0].mxu0 %v835
  %v1358 = vpop.f32.mrb[0].mxu0
  %v1359 = vadd.f32 %v1070, %v1358
  %v1360 = vpop.f32.mrb[0].mxu0
  %v1361 = vpop.f32.mrb[0].mxu0
  %v1362 = vadd.f32 %v1073, %v1361
  %v1363 = vpop.f32.mrb[0].mxu0
  %1364 = vmatprep.mubr.bf16.mxu0 0
  %1365 = vmatmul.mubr.bf16.gmra.mrb[0].mxu0 %v838
  %v1366 = vpop.f32.mrb[0].mxu0
  %v1367 = vadd.f32 %v1078, %v1366
  %v1368 = vpop.f32.mrb[0].mxu0
  %v1369 = vpop.f32.mrb[0].mxu0
  %v1370 = vadd.f32 %v1081, %v1369
  %v1371 = vpop.f32.mrb[0].mxu0
  %1372 = vmatprep.mubr.bf16.mxu0 0
  %1373 = vmatmul.mubr.bf16.gmra.mrb[0].mxu0 %v841
  %v1374 = vpop.f32.mrb[0].mxu0
  %v1375 = vadd.f32 %v1086, %v1374
  %v1376 = vpop.f32.mrb[0].mxu0
  %v1377 = vpop.f32.mrb[0].mxu0
  %v1378 = vadd.f32 %v1089, %v1377
  %v1379 = vpop.f32.mrb[0].mxu0
  %1380 = vmatprep.mubr.bf16.mxu0 0
  %1381 = vmatmul.mubr.bf16.gmra.mrb[0].mxu0 %v844
  %v1382 = vpop.f32.mrb[0].mxu0
  %v1383 = vadd.f32 %v1094, %v1382
  %v1384 = vpop.f32.mrb[0].mxu0
  %v1385 = vpop.f32.mrb[0].mxu0
  %v1386 = vadd.f32 %v1097, %v1385
  %v1387 = vpop.f32.mrb[0].mxu0
  %1388 = vmatprep.mubr.bf16.mxu0 0
  %1389 = vmatmul.mubr.bf16.gmra.mrb[0].mxu0 %v847
  %v1390 = vpop.f32.mrb[0].mxu0
  %v1391 = vadd.f32 %v1102, %v1390
  %v1392 = vpop.f32.mrb[0].mxu0
  %v1393 = vpop.f32.mrb[0].mxu0
  %v1394 = vadd.f32 %v1105, %v1393
  %v1395 = vpop.f32.mrb[0].mxu0
  %1396 = vmatprep.mubr.bf16.mxu0 0
  %1397 = vmatmul.mubr.bf16.gmra.mrb[0].mxu0 %v850
  %v1398 = vpop.f32.mrb[0].mxu0
  %v1399 = vadd.f32 %v1110, %v1398
  %v1400 = vpop.f32.mrb[0].mxu0
  %v1401 = vpop.f32.mrb[0].mxu0
  %v1402 = vadd.f32 %v1113, %v1401
  %v1403 = vpop.f32.mrb[0].mxu0
  %1404 = vmatprep.mubr.bf16.mxu0 0
  %1405 = vmatmul.mubr.bf16.gmra.mrb[0].mxu0 %v853
  %v1406 = vpop.f32.mrb[0].mxu0
  %v1407 = vadd.f32 %v1118, %v1406
  %v1408 = vpop.f32.mrb[0].mxu0
  %v1409 = vpop.f32.mrb[0].mxu0
  %v1410 = vadd.f32 %v1121, %v1409
  %v1411 = vpop.f32.mrb[0].mxu0
  %1412 = vmatprep.mubr.bf16.mxu0 0
  %1413 = vmatmul.mubr.bf16.gmra.mrb[0].mxu0 %v856
  %v1414 = vpop.f32.mrb[0].mxu0
  %v1415 = vadd.f32 %v1126, %v1414
  %v1416 = vpop.f32.mrb[0].mxu0
  %v1417 = vpop.f32.mrb[0].mxu0
  %v1418 = vadd.f32 %v1129, %v1417
  %v1419 = vpop.f32.mrb[0].mxu0
  %1420 = vmatprep.mubr.bf16.mxu0 0
  %1421 = vmatmul.mubr.bf16.gmra.mrb[0].mxu0 %v859
  %v1422 = vpop.f32.mrb[0].mxu0
  %v1423 = vadd.f32 %v1134, %v1422
  %v1424 = vpop.f32.mrb[0].mxu0
  %v1425 = vpop.f32.mrb[0].mxu0
  %v1426 = vadd.f32 %v1137, %v1425
  %v1427 = vpop.f32.mrb[0].mxu0
  %1428 = vmatprep.mubr.bf16.mxu0 0
  %1429 = vmatmul.mubr.bf16.gmra.mrb[0].mxu0 %v862
  %v1430 = vpop.f32.mrb[0].mxu0
  %v1431 = vadd.f32 %v1142, %v1430
  %v1432 = vpop.f32.mrb[0].mxu0
  %v1433 = vpop.f32.mrb[0].mxu0
  %v1434 = vadd.f32 %v1145, %v1433
  %v1435 = vpop.f32.mrb[0].mxu0
  %1436 = vmatprep.mubr.bf16.mxu0 0
  %1437 = vmatmul.mubr.bf16.gmra.mrb[0].mxu0 %v865
  %v1438 = vpop.f32.mrb[0].mxu0
  %v1439 = vadd.f32 %v1150, %v1438
  %v1440 = vpop.f32.mrb[0].mxu0
  %v1441 = vpop.f32.mrb[0].mxu0
  %v1442 = vadd.f32 %v1153, %v1441
  %v1443 = vpop.f32.mrb[0].mxu0
  %1444 = vdwg.mxu0
  %vm1445 = vcmask 523264
  %v1446 = vsel %vm1445, %v1191, 0.0
  %v1447 = vsel %vm1445, %v1194, 0.0
  %v1448 = vadd.f32 %v1446, %v1447
  %v1449 = vsel %vm1445, %v1199, 0.0
  %v1450 = vadd.f32 %v1448, %v1449
  %v1451 = vsel %vm1445, %v1202, 0.0
  %v1452 = vadd.f32 %v1450, %v1451
  %v1453 = vsel %vm1445, %v1207, 0.0
  %v1454 = vadd.f32 %v1452, %v1453
  %v1455 = vsel %vm1445, %v1210, 0.0
  %v1456 = vadd.f32 %v1454, %v1455
  %v1457 = vsel %vm1445, %v1215, 0.0
  %v1458 = vadd.f32 %v1456, %v1457
  %v1459 = vsel %vm1445, %v1218, 0.0
  %v1460 = vadd.f32 %v1458, %v1459
  %v1461 = vsel %vm1445, %v1223, 0.0
  %v1462 = vadd.f32 %v1460, %v1461
  %v1463 = vsel %vm1445, %v1226, 0.0
  %v1464 = vadd.f32 %v1462, %v1463
  %v1465 = vsel %vm1445, %v1231, 0.0
  %v1466 = vadd.f32 %v1464, %v1465
  %v1467 = vsel %vm1445, %v1234, 0.0
  %v1468 = vadd.f32 %v1466, %v1467
  %v1469 = vsel %vm1445, %v1239, 0.0
  %v1470 = vadd.f32 %v1468, %v1469
  %v1471 = vsel %vm1445, %v1242, 0.0
  %v1472 = vadd.f32 %v1470, %v1471
  %v1473 = vsel %vm1445, %v1247, 0.0
  %v1474 = vadd.f32 %v1472, %v1473
  %v1475 = vsel %vm1445, %v1250, 0.0
  %v1476 = vadd.f32 %v1474, %v1475
  %v1477 = vsel %vm1445, %v1255, 0.0
  %v1478 = vadd.f32 %v1476, %v1477
  %v1479 = vsel %vm1445, %v1258, 0.0
  %v1480 = vadd.f32 %v1478, %v1479
  %v1481 = vsel %vm1445, %v1263, 0.0
  %v1482 = vadd.f32 %v1480, %v1481
  %v1483 = vsel %vm1445, %v1266, 0.0
  %v1484 = vadd.f32 %v1482, %v1483
  %v1485 = vsel %vm1445, %v1271, 0.0
  %v1486 = vadd.f32 %v1484, %v1485
  %v1487 = vsel %vm1445, %v1274, 0.0
  %v1488 = vadd.f32 %v1486, %v1487
  %v1489 = vsel %vm1445, %v1279, 0.0
  %v1490 = vadd.f32 %v1488, %v1489
  %v1491 = vsel %vm1445, %v1282, 0.0
  %v1492 = vadd.f32 %v1490, %v1491
  %v1493 = vsel %vm1445, %v1287, 0.0
  %v1494 = vadd.f32 %v1492, %v1493
  %v1495 = vsel %vm1445, %v1290, 0.0
  %v1496 = vadd.f32 %v1494, %v1495
  %v1497 = vsel %vm1445, %v1295, 0.0
  %v1498 = vadd.f32 %v1496, %v1497
  %v1499 = vsel %vm1445, %v1298, 0.0
  %v1500 = vadd.f32 %v1498, %v1499
  %v1501 = vsel %vm1445, %v1303, 0.0
  %v1502 = vadd.f32 %v1500, %v1501
  %v1503 = vsel %vm1445, %v1306, 0.0
  %v1504 = vadd.f32 %v1502, %v1503
  %v1505 = vsel %vm1445, %v1311, 0.0
  %v1506 = vadd.f32 %v1504, %v1505
  %v1507 = vsel %vm1445, %v1314, 0.0
  %v1508 = vadd.f32 %v1506, %v1507
  %v1509 = vsel %vm1445, %v1319, 0.0
  %v1510 = vadd.f32 %v1508, %v1509
  %v1511 = vsel %vm1445, %v1322, 0.0
  %v1512 = vadd.f32 %v1510, %v1511
  %v1513 = vsel %vm1445, %v1327, 0.0
  %v1514 = vadd.f32 %v1512, %v1513
  %v1515 = vsel %vm1445, %v1330, 0.0
  %v1516 = vadd.f32 %v1514, %v1515
  %v1517 = vsel %vm1445, %v1335, 0.0
  %v1518 = vadd.f32 %v1516, %v1517
  %v1519 = vsel %vm1445, %v1338, 0.0
  %v1520 = vadd.f32 %v1518, %v1519
  %v1521 = vsel %vm1445, %v1343, 0.0
  %v1522 = vadd.f32 %v1520, %v1521
  %v1523 = vsel %vm1445, %v1346, 0.0
  %v1524 = vadd.f32 %v1522, %v1523
  %v1525 = vsel %vm1445, %v1351, 0.0
  %v1526 = vadd.f32 %v1524, %v1525
  %v1527 = vsel %vm1445, %v1354, 0.0
  %v1528 = vadd.f32 %v1526, %v1527
  %v1529 = vsel %vm1445, %v1359, 0.0
  %v1530 = vadd.f32 %v1528, %v1529
  %v1531 = vsel %vm1445, %v1362, 0.0
  %v1532 = vadd.f32 %v1530, %v1531
  %v1533 = vsel %vm1445, %v1367, 0.0
  %v1534 = vadd.f32 %v1532, %v1533
  %v1535 = vsel %vm1445, %v1370, 0.0
  %v1536 = vadd.f32 %v1534, %v1535
  %v1537 = vsel %vm1445, %v1375, 0.0
  %v1538 = vadd.f32 %v1536, %v1537
  %v1539 = vsel %vm1445, %v1378, 0.0
  %v1540 = vadd.f32 %v1538, %v1539
  %v1541 = vsel %vm1445, %v1383, 0.0
  %v1542 = vadd.f32 %v1540, %v1541
  %v1543 = vsel %vm1445, %v1386, 0.0
  %v1544 = vadd.f32 %v1542, %v1543
  %v1545 = vsel %vm1445, %v1391, 0.0
  %v1546 = vadd.f32 %v1544, %v1545
  %v1547 = vsel %vm1445, %v1394, 0.0
  %v1548 = vadd.f32 %v1546, %v1547
  %v1549 = vsel %vm1445, %v1399, 0.0
  %v1550 = vadd.f32 %v1548, %v1549
  %v1551 = vsel %vm1445, %v1402, 0.0
  %v1552 = vadd.f32 %v1550, %v1551
  %v1553 = vsel %vm1445, %v1407, 0.0
  %v1554 = vadd.f32 %v1552, %v1553
  %v1555 = vsel %vm1445, %v1410, 0.0
  %v1556 = vadd.f32 %v1554, %v1555
  %v1557 = vsel %vm1445, %v1415, 0.0
  %v1558 = vadd.f32 %v1556, %v1557
  %v1559 = vsel %vm1445, %v1418, 0.0
  %v1560 = vadd.f32 %v1558, %v1559
  %v1561 = vsel %vm1445, %v1423, 0.0
  %v1562 = vadd.f32 %v1560, %v1561
  %v1563 = vsel %vm1445, %v1426, 0.0
  %v1564 = vadd.f32 %v1562, %v1563
  %v1565 = vsel %vm1445, %v1431, 0.0
  %v1566 = vadd.f32 %v1564, %v1565
  %v1567 = vsel %vm1445, %v1434, 0.0
  %v1568 = vadd.f32 %v1566, %v1567
  %v1569 = vsel %vm1445, %v1439, 0.0
  %v1570 = vadd.f32 %v1568, %v1569
  %v1571 = vsel %vm1445, %v1442, 0.0
  %v1572 = vadd.f32 %v1570, %v1571
  %v1573 = vrot.slane %v1572, 4
  %v1574 = vadd.f32 %v1572, %v1573
  %v1575 = vrot.slane %v1574, 2
  %v1576 = vadd.f32 %v1574, %v1575
  %v1577 = vrot.slane %v1576, 1
  %v1578 = vadd.f32 %v1576, %v1577
  %v1579 = vmul.f32 %v1191, %v1191
  %v1580 = vmul.f32 %v1194, %v1194
  %v1581 = vmul.f32 %v1199, %v1199
  %v1582 = vmul.f32 %v1202, %v1202
  %v1583 = vmul.f32 %v1207, %v1207
  %v1584 = vmul.f32 %v1210, %v1210
  %v1585 = vmul.f32 %v1215, %v1215
  %v1586 = vmul.f32 %v1218, %v1218
  %v1587 = vmul.f32 %v1223, %v1223
  %v1588 = vmul.f32 %v1226, %v1226
  %v1589 = vmul.f32 %v1231, %v1231
  %v1590 = vmul.f32 %v1234, %v1234
  %v1591 = vmul.f32 %v1239, %v1239
  %v1592 = vmul.f32 %v1242, %v1242
  %v1593 = vmul.f32 %v1247, %v1247
  %v1594 = vmul.f32 %v1250, %v1250
  %v1595 = vmul.f32 %v1255, %v1255
  %v1596 = vmul.f32 %v1258, %v1258
  %v1597 = vmul.f32 %v1263, %v1263
  %v1598 = vmul.f32 %v1266, %v1266
  %v1599 = vmul.f32 %v1271, %v1271
  %v1600 = vmul.f32 %v1274, %v1274
  %v1601 = vmul.f32 %v1279, %v1279
  %v1602 = vmul.f32 %v1282, %v1282
  %v1603 = vmul.f32 %v1287, %v1287
  %v1604 = vmul.f32 %v1290, %v1290
  %v1605 = vmul.f32 %v1295, %v1295
  %v1606 = vmul.f32 %v1298, %v1298
  %v1607 = vmul.f32 %v1303, %v1303
  %v1608 = vmul.f32 %v1306, %v1306
  %v1609 = vmul.f32 %v1311, %v1311
  %v1610 = vmul.f32 %v1314, %v1314
  %v1611 = vmul.f32 %v1319, %v1319
  %v1612 = vmul.f32 %v1322, %v1322
  %v1613 = vmul.f32 %v1327, %v1327
  %v1614 = vmul.f32 %v1330, %v1330
  %v1615 = vmul.f32 %v1335, %v1335
  %v1616 = vmul.f32 %v1338, %v1338
  %v1617 = vmul.f32 %v1343, %v1343
  %v1618 = vmul.f32 %v1346, %v1346
  %v1619 = vmul.f32 %v1351, %v1351
  %v1620 = vmul.f32 %v1354, %v1354
  %v1621 = vmul.f32 %v1359, %v1359
  %v1622 = vmul.f32 %v1362, %v1362
  %v1623 = vmul.f32 %v1367, %v1367
  %v1624 = vmul.f32 %v1370, %v1370
  %v1625 = vmul.f32 %v1375, %v1375
  %v1626 = vmul.f32 %v1378, %v1378
  %v1627 = vmul.f32 %v1383, %v1383
  %v1628 = vmul.f32 %v1386, %v1386
  %v1629 = vmul.f32 %v1391, %v1391
  %v1630 = vmul.f32 %v1394, %v1394
  %v1631 = vmul.f32 %v1399, %v1399
  %v1632 = vmul.f32 %v1402, %v1402
  %v1633 = vmul.f32 %v1407, %v1407
  %v1634 = vmul.f32 %v1410, %v1410
  %v1635 = vmul.f32 %v1415, %v1415
  %v1636 = vmul.f32 %v1418, %v1418
  %v1637 = vmul.f32 %v1423, %v1423
  %v1638 = vmul.f32 %v1426, %v1426
  %v1639 = vmul.f32 %v1431, %v1431
  %v1640 = vmul.f32 %v1434, %v1434
  %v1641 = vmul.f32 %v1439, %v1439
  %v1642 = vmul.f32 %v1442, %v1442
  %v1643 = vsel %vm1445, %v1579, 0.0
  %v1644 = vsel %vm1445, %v1580, 0.0
  %v1645 = vadd.f32 %v1643, %v1644
  %v1646 = vsel %vm1445, %v1581, 0.0
  %v1647 = vadd.f32 %v1645, %v1646
  %v1648 = vsel %vm1445, %v1582, 0.0
  %v1649 = vadd.f32 %v1647, %v1648
  %v1650 = vsel %vm1445, %v1583, 0.0
  %v1651 = vadd.f32 %v1649, %v1650
  %v1652 = vsel %vm1445, %v1584, 0.0
  %v1653 = vadd.f32 %v1651, %v1652
  %v1654 = vsel %vm1445, %v1585, 0.0
  %v1655 = vadd.f32 %v1653, %v1654
  %v1656 = vsel %vm1445, %v1586, 0.0
  %v1657 = vadd.f32 %v1655, %v1656
  %v1658 = vsel %vm1445, %v1587, 0.0
  %v1659 = vadd.f32 %v1657, %v1658
  %v1660 = vsel %vm1445, %v1588, 0.0
  %v1661 = vadd.f32 %v1659, %v1660
  %v1662 = vsel %vm1445, %v1589, 0.0
  %v1663 = vadd.f32 %v1661, %v1662
  %v1664 = vsel %vm1445, %v1590, 0.0
  %v1665 = vadd.f32 %v1663, %v1664
  %v1666 = vsel %vm1445, %v1591, 0.0
  %v1667 = vadd.f32 %v1665, %v1666
  %v1668 = vsel %vm1445, %v1592, 0.0
  %v1669 = vadd.f32 %v1667, %v1668
  %v1670 = vsel %vm1445, %v1593, 0.0
  %v1671 = vadd.f32 %v1669, %v1670
  %v1672 = vsel %vm1445, %v1594, 0.0
  %v1673 = vadd.f32 %v1671, %v1672
  %v1674 = vsel %vm1445, %v1595, 0.0
  %v1675 = vadd.f32 %v1673, %v1674
  %v1676 = vsel %vm1445, %v1596, 0.0
  %v1677 = vadd.f32 %v1675, %v1676
  %v1678 = vsel %vm1445, %v1597, 0.0
  %v1679 = vadd.f32 %v1677, %v1678
  %v1680 = vsel %vm1445, %v1598, 0.0
  %v1681 = vadd.f32 %v1679, %v1680
  %v1682 = vsel %vm1445, %v1599, 0.0
  %v1683 = vadd.f32 %v1681, %v1682
  %v1684 = vsel %vm1445, %v1600, 0.0
  %v1685 = vadd.f32 %v1683, %v1684
  %v1686 = vsel %vm1445, %v1601, 0.0
  %v1687 = vadd.f32 %v1685, %v1686
  %v1688 = vsel %vm1445, %v1602, 0.0
  %v1689 = vadd.f32 %v1687, %v1688
  %v1690 = vsel %vm1445, %v1603, 0.0
  %v1691 = vadd.f32 %v1689, %v1690
  %v1692 = vsel %vm1445, %v1604, 0.0
  %v1693 = vadd.f32 %v1691, %v1692
  %v1694 = vsel %vm1445, %v1605, 0.0
  %v1695 = vadd.f32 %v1693, %v1694
  %v1696 = vsel %vm1445, %v1606, 0.0
  %v1697 = vadd.f32 %v1695, %v1696
  %v1698 = vsel %vm1445, %v1607, 0.0
  %v1699 = vadd.f32 %v1697, %v1698
  %v1700 = vsel %vm1445, %v1608, 0.0
  %v1701 = vadd.f32 %v1699, %v1700
  %v1702 = vsel %vm1445, %v1609, 0.0
  %v1703 = vadd.f32 %v1701, %v1702
  %v1704 = vsel %vm1445, %v1610, 0.0
  %v1705 = vadd.f32 %v1703, %v1704
  %v1706 = vsel %vm1445, %v1611, 0.0
  %v1707 = vadd.f32 %v1705, %v1706
  %v1708 = vsel %vm1445, %v1612, 0.0
  %v1709 = vadd.f32 %v1707, %v1708
  %v1710 = vsel %vm1445, %v1613, 0.0
  %v1711 = vadd.f32 %v1709, %v1710
  %v1712 = vsel %vm1445, %v1614, 0.0
  %v1713 = vadd.f32 %v1711, %v1712
  %v1714 = vsel %vm1445, %v1615, 0.0
  %v1715 = vadd.f32 %v1713, %v1714
  %v1716 = vsel %vm1445, %v1616, 0.0
  %v1717 = vadd.f32 %v1715, %v1716
  %v1718 = vsel %vm1445, %v1617, 0.0
  %v1719 = vadd.f32 %v1717, %v1718
  %v1720 = vsel %vm1445, %v1618, 0.0
  %v1721 = vadd.f32 %v1719, %v1720
  %v1722 = vsel %vm1445, %v1619, 0.0
  %v1723 = vadd.f32 %v1721, %v1722
  %v1724 = vsel %vm1445, %v1620, 0.0
  %v1725 = vadd.f32 %v1723, %v1724
  %v1726 = vsel %vm1445, %v1621, 0.0
  %v1727 = vadd.f32 %v1725, %v1726
  %v1728 = vsel %vm1445, %v1622, 0.0
  %v1729 = vadd.f32 %v1727, %v1728
  %v1730 = vsel %vm1445, %v1623, 0.0
  %v1731 = vadd.f32 %v1729, %v1730
  %v1732 = vsel %vm1445, %v1624, 0.0
  %v1733 = vadd.f32 %v1731, %v1732
  %v1734 = vsel %vm1445, %v1625, 0.0
  %v1735 = vadd.f32 %v1733, %v1734
  %v1736 = vsel %vm1445, %v1626, 0.0
  %v1737 = vadd.f32 %v1735, %v1736
  %v1738 = vsel %vm1445, %v1627, 0.0
  %v1739 = vadd.f32 %v1737, %v1738
  %v1740 = vsel %vm1445, %v1628, 0.0
  %v1741 = vadd.f32 %v1739, %v1740
  %v1742 = vsel %vm1445, %v1629, 0.0
  %v1743 = vadd.f32 %v1741, %v1742
  %v1744 = vsel %vm1445, %v1630, 0.0
  %v1745 = vadd.f32 %v1743, %v1744
  %v1746 = vsel %vm1445, %v1631, 0.0
  %v1747 = vadd.f32 %v1745, %v1746
  %v1748 = vsel %vm1445, %v1632, 0.0
  %v1749 = vadd.f32 %v1747, %v1748
  %v1750 = vsel %vm1445, %v1633, 0.0
  %v1751 = vadd.f32 %v1749, %v1750
  %v1752 = vsel %vm1445, %v1634, 0.0
  %v1753 = vadd.f32 %v1751, %v1752
  %v1754 = vsel %vm1445, %v1635, 0.0
  %v1755 = vadd.f32 %v1753, %v1754
  %v1756 = vsel %vm1445, %v1636, 0.0
  %v1757 = vadd.f32 %v1755, %v1756
  %v1758 = vsel %vm1445, %v1637, 0.0
  %v1759 = vadd.f32 %v1757, %v1758
  %v1760 = vsel %vm1445, %v1638, 0.0
  %v1761 = vadd.f32 %v1759, %v1760
  %v1762 = vsel %vm1445, %v1639, 0.0
  %v1763 = vadd.f32 %v1761, %v1762
  %v1764 = vsel %vm1445, %v1640, 0.0
  %v1765 = vadd.f32 %v1763, %v1764
  %v1766 = vsel %vm1445, %v1641, 0.0
  %v1767 = vadd.f32 %v1765, %v1766
  %v1768 = vsel %vm1445, %v1642, 0.0
  %v1769 = vadd.f32 %v1767, %v1768
  %v1770 = vrot.slane %v1769, 4
  %v1771 = vadd.f32 %v1769, %v1770
  %v1772 = vrot.slane %v1771, 2
  %v1773 = vadd.f32 %v1771, %v1772
  %v1774 = vrot.slane %v1773, 1
  %v1775 = vadd.f32 %v1773, %v1774
  %v1776 = vmul.f32 %v1578, 0.001953125
  %v1777 = vmul.f32 %v1775, 0.001953125
  %v1778 = vmul.f32 %v1776, %v1776
  %v1779 = vsub.f32 %v1777, %v1778
  %v1780 = vld [vmem:[%s2] sm:$0x1]
  %v1781 = vadd.f32 %v1779, 1e-05
  %v1782 = vrsqrt.pop %v1781
  %v1783 = vmul.f32 %v1780, %v1782
  %v1784 = vld [vmem:[%s3] sm:$0x1]
  %v1785 = vmul.f32 %v1776, %v1783
  %v1786 = vsub.f32 %v1784, %v1785
  %v1788 = vlaneseq
  %v1789 = vshrl.u32 %v1788, 7
  %v1790 = vsub.s32 0, %v1789
  %v1791 = vrot.slane %v1783, %v1790
  %v1793 = vmul.f32 %v1191, %v1791
  %v1794 = vmul.f32 %v1194, %v1791
  %v1795 = vmul.f32 %v1199, %v1791
  %v1796 = vmul.f32 %v1202, %v1791
  %v1797 = vmul.f32 %v1207, %v1791
  %v1798 = vmul.f32 %v1210, %v1791
  %v1799 = vmul.f32 %v1215, %v1791
  %v1800 = vmul.f32 %v1218, %v1791
  %v1801 = vmul.f32 %v1223, %v1791
  %v1802 = vmul.f32 %v1226, %v1791
  %v1803 = vmul.f32 %v1231, %v1791
  %v1804 = vmul.f32 %v1234, %v1791
  %v1805 = vmul.f32 %v1239, %v1791
  %v1806 = vmul.f32 %v1242, %v1791
  %v1807 = vmul.f32 %v1247, %v1791
  %v1808 = vmul.f32 %v1250, %v1791
  %v1809 = vmul.f32 %v1255, %v1791
  %v1810 = vmul.f32 %v1258, %v1791
  %v1811 = vmul.f32 %v1263, %v1791
  %v1812 = vmul.f32 %v1266, %v1791
  %v1813 = vmul.f32 %v1271, %v1791
  %v1814 = vmul.f32 %v1274, %v1791
  %v1815 = vmul.f32 %v1279, %v1791
  %v1816 = vmul.f32 %v1282, %v1791
  %v1817 = vmul.f32 %v1287, %v1791
  %v1818 = vmul.f32 %v1290, %v1791
  %v1819 = vmul.f32 %v1295, %v1791
  %v1820 = vmul.f32 %v1298, %v1791
  %v1821 = vmul.f32 %v1303, %v1791
  %v1822 = vmul.f32 %v1306, %v1791
  %v1823 = vmul.f32 %v1311, %v1791
  %v1824 = vmul.f32 %v1314, %v1791
  %v1825 = vmul.f32 %v1319, %v1791
  %v1826 = vmul.f32 %v1322, %v1791
  %v1827 = vmul.f32 %v1327, %v1791
  %v1828 = vmul.f32 %v1330, %v1791
  %v1829 = vmul.f32 %v1335, %v1791
  %v1830 = vmul.f32 %v1338, %v1791
  %v1831 = vmul.f32 %v1343, %v1791
  %v1832 = vmul.f32 %v1346, %v1791
  %v1833 = vmul.f32 %v1351, %v1791
  %v1834 = vmul.f32 %v1354, %v1791
  %v1835 = vmul.f32 %v1359, %v1791
  %v1836 = vmul.f32 %v1362, %v1791
  %v1837 = vmul.f32 %v1367, %v1791
  %v1838 = vmul.f32 %v1370, %v1791
  %v1839 = vmul.f32 %v1375, %v1791
  %v1840 = vmul.f32 %v1378, %v1791
  %v1841 = vmul.f32 %v1383, %v1791
  %v1842 = vmul.f32 %v1386, %v1791
  %v1843 = vmul.f32 %v1391, %v1791
  %v1844 = vmul.f32 %v1394, %v1791
  %v1845 = vmul.f32 %v1399, %v1791
  %v1846 = vmul.f32 %v1402, %v1791
  %v1847 = vmul.f32 %v1407, %v1791
  %v1848 = vmul.f32 %v1410, %v1791
  %v1849 = vmul.f32 %v1415, %v1791
  %v1850 = vmul.f32 %v1418, %v1791
  %v1851 = vmul.f32 %v1423, %v1791
  %v1852 = vmul.f32 %v1426, %v1791
  %v1853 = vmul.f32 %v1431, %v1791
  %v1854 = vmul.f32 %v1434, %v1791
  %v1855 = vmul.f32 %v1439, %v1791
  %v1856 = vmul.f32 %v1442, %v1791
  %v1858 = vlaneseq
  %v1859 = vshrl.u32 %v1858, 7
  %v1860 = vsub.s32 0, %v1859
  %v1861 = vrot.slane %v1786, %v1860
  %v1863 = vadd.f32 %v1793, %v1861
  %v1864 = vadd.f32 %v1794, %v1861
  %v1865 = vadd.f32 %v1795, %v1861
  %v1866 = vadd.f32 %v1796, %v1861
  %v1867 = vadd.f32 %v1797, %v1861
  %v1868 = vadd.f32 %v1798, %v1861
  %v1869 = vadd.f32 %v1799, %v1861
  %v1870 = vadd.f32 %v1800, %v1861
  %v1871 = vadd.f32 %v1801, %v1861
  %v1872 = vadd.f32 %v1802, %v1861
  %v1873 = vadd.f32 %v1803, %v1861
  %v1874 = vadd.f32 %v1804, %v1861
  %v1875 = vadd.f32 %v1805, %v1861
  %v1876 = vadd.f32 %v1806, %v1861
  %v1877 = vadd.f32 %v1807, %v1861
  %v1878 = vadd.f32 %v1808, %v1861
  %v1879 = vadd.f32 %v1809, %v1861
  %v1880 = vadd.f32 %v1810, %v1861
  %v1881 = vadd.f32 %v1811, %v1861
  %v1882 = vadd.f32 %v1812, %v1861
  %v1883 = vadd.f32 %v1813, %v1861
  %v1884 = vadd.f32 %v1814, %v1861
  %v1885 = vadd.f32 %v1815, %v1861
  %v1886 = vadd.f32 %v1816, %v1861
  %v1887 = vadd.f32 %v1817, %v1861
  %v1888 = vadd.f32 %v1818, %v1861
  %v1889 = vadd.f32 %v1819, %v1861
  %v1890 = vadd.f32 %v1820, %v1861
  %v1891 = vadd.f32 %v1821, %v1861
  %v1892 = vadd.f32 %v1822, %v1861
  %v1893 = vadd.f32 %v1823, %v1861
  %v1894 = vadd.f32 %v1824, %v1861
  %v1895 = vadd.f32 %v1825, %v1861
  %v1896 = vadd.f32 %v1826, %v1861
  %v1897 = vadd.f32 %v1827, %v1861
  %v1898 = vadd.f32 %v1828, %v1861
  %v1899 = vadd.f32 %v1829, %v1861
  %v1900 = vadd.f32 %v1830, %v1861
  %v1901 = vadd.f32 %v1831, %v1861
  %v1902 = vadd.f32 %v1832, %v1861
  %v1903 = vadd.f32 %v1833, %v1861
  %v1904 = vadd.f32 %v1834, %v1861
  %v1905 = vadd.f32 %v1835, %v1861
  %v1906 = vadd.f32 %v1836, %v1861
  %v1907 = vadd.f32 %v1837, %v1861
  %v1908 = vadd.f32 %v1838, %v1861
  %v1909 = vadd.f32 %v1839, %v1861
  %v1910 = vadd.f32 %v1840, %v1861
  %v1911 = vadd.f32 %v1841, %v1861
  %v1912 = vadd.f32 %v1842, %v1861
  %v1913 = vadd.f32 %v1843, %v1861
  %v1914 = vadd.f32 %v1844, %v1861
  %v1915 = vadd.f32 %v1845, %v1861
  %v1916 = vadd.f32 %v1846, %v1861
  %v1917 = vadd.f32 %v1847, %v1861
  %v1918 = vadd.f32 %v1848, %v1861
  %v1919 = vadd.f32 %v1849, %v1861
  %v1920 = vadd.f32 %v1850, %v1861
  %v1921 = vadd.f32 %v1851, %v1861
  %v1922 = vadd.f32 %v1852, %v1861
  %v1923 = vadd.f32 %v1853, %v1861
  %v1924 = vadd.f32 %v1854, %v1861
  %v1925 = vadd.f32 %v1855, %v1861
  %v1926 = vadd.f32 %v1856, %v1861
  %v1927 = vmax.f32 %v1863, 0.0
  %v1928 = vmax.f32 %v1864, 0.0
  %v1929 = vmax.f32 %v1865, 0.0
  %v1930 = vmax.f32 %v1866, 0.0
  %v1931 = vmax.f32 %v1867, 0.0
  %v1932 = vmax.f32 %v1868, 0.0
  %v1933 = vmax.f32 %v1869, 0.0
  %v1934 = vmax.f32 %v1870, 0.0
  %v1935 = vmax.f32 %v1871, 0.0
  %v1936 = vmax.f32 %v1872, 0.0
  %v1937 = vmax.f32 %v1873, 0.0
  %v1938 = vmax.f32 %v1874, 0.0
  %v1939 = vmax.f32 %v1875, 0.0
  %v1940 = vmax.f32 %v1876, 0.0
  %v1941 = vmax.f32 %v1877, 0.0
  %v1942 = vmax.f32 %v1878, 0.0
  %v1943 = vmax.f32 %v1879, 0.0
  %v1944 = vmax.f32 %v1880, 0.0
  %v1945 = vmax.f32 %v1881, 0.0
  %v1946 = vmax.f32 %v1882, 0.0
  %v1947 = vmax.f32 %v1883, 0.0
  %v1948 = vmax.f32 %v1884, 0.0
  %v1949 = vmax.f32 %v1885, 0.0
  %v1950 = vmax.f32 %v1886, 0.0
  %v1951 = vmax.f32 %v1887, 0.0
  %v1952 = vmax.f32 %v1888, 0.0
  %v1953 = vmax.f32 %v1889, 0.0
  %v1954 = vmax.f32 %v1890, 0.0
  %v1955 = vmax.f32 %v1891, 0.0
  %v1956 = vmax.f32 %v1892, 0.0
  %v1957 = vmax.f32 %v1893, 0.0
  %v1958 = vmax.f32 %v1894, 0.0
  %v1959 = vmax.f32 %v1895, 0.0
  %v1960 = vmax.f32 %v1896, 0.0
  %v1961 = vmax.f32 %v1897, 0.0
  %v1962 = vmax.f32 %v1898, 0.0
  %v1963 = vmax.f32 %v1899, 0.0
  %v1964 = vmax.f32 %v1900, 0.0
  %v1965 = vmax.f32 %v1901, 0.0
  %v1966 = vmax.f32 %v1902, 0.0
  %v1967 = vmax.f32 %v1903, 0.0
  %v1968 = vmax.f32 %v1904, 0.0
  %v1969 = vmax.f32 %v1905, 0.0
  %v1970 = vmax.f32 %v1906, 0.0
  %v1971 = vmax.f32 %v1907, 0.0
  %v1972 = vmax.f32 %v1908, 0.0
  %v1973 = vmax.f32 %v1909, 0.0
  %v1974 = vmax.f32 %v1910, 0.0
  %v1975 = vmax.f32 %v1911, 0.0
  %v1976 = vmax.f32 %v1912, 0.0
  %v1977 = vmax.f32 %v1913, 0.0
  %v1978 = vmax.f32 %v1914, 0.0
  %v1979 = vmax.f32 %v1915, 0.0
  %v1980 = vmax.f32 %v1916, 0.0
  %v1981 = vmax.f32 %v1917, 0.0
  %v1982 = vmax.f32 %v1918, 0.0
  %v1983 = vmax.f32 %v1919, 0.0
  %v1984 = vmax.f32 %v1920, 0.0
  %v1985 = vmax.f32 %v1921, 0.0
  %v1986 = vmax.f32 %v1922, 0.0
  %v1987 = vmax.f32 %v1923, 0.0
  %v1988 = vmax.f32 %v1924, 0.0
  %v1989 = vmax.f32 %v1925, 0.0
  %v1990 = vmax.f32 %v1926, 0.0
  %v1991 = vmax.f32 %v1927, %v1943
  %v1992 = vmax.f32 %v1928, %v1944
  %v1993 = vmax.f32 %v1929, %v1945
  %v1994 = vmax.f32 %v1930, %v1946
  %v1995 = vmax.f32 %v1931, %v1947
  %v1996 = vmax.f32 %v1932, %v1948
  %v1997 = vmax.f32 %v1933, %v1949
  %v1998 = vmax.f32 %v1934, %v1950
  %v1999 = vmax.f32 %v1935, %v1951
  %v2000 = vmax.f32 %v1936, %v1952
  %v2001 = vmax.f32 %v1937, %v1953
  %v2002 = vmax.f32 %v1938, %v1954
  %v2003 = vmax.f32 %v1939, %v1955
  %v2004 = vmax.f32 %v1940, %v1956
  %v2005 = vmax.f32 %v1941, %v1957
  %v2006 = vmax.f32 %v1942, %v1958
  %v2007 = vmax.f32 %v1959, %v1975
  %v2008 = vmax.f32 %v1960, %v1976
  %v2009 = vmax.f32 %v1961, %v1977
  %v2010 = vmax.f32 %v1962, %v1978
  %v2011 = vmax.f32 %v1963, %v1979
  %v2012 = vmax.f32 %v1964, %v1980
  %v2013 = vmax.f32 %v1965, %v1981
  %v2014 = vmax.f32 %v1966, %v1982
  %v2015 = vmax.f32 %v1967, %v1983
  %v2016 = vmax.f32 %v1968, %v1984
  %v2017 = vmax.f32 %v1969, %v1985
  %v2018 = vmax.f32 %v1970, %v1986
  %v2019 = vmax.f32 %v1971, %v1987
  %v2020 = vmax.f32 %v1972, %v1988
  %v2021 = vmax.f32 %v1973, %v1989
  %v2022 = vmax.f32 %v1974, %v1990
  %v2023 = vmax.f32 %v1991, %v2007
  %v2024 = vmax.f32 %v1992, %v2008
  %v2025 = vmax.f32 %v1993, %v2009
  %v2026 = vmax.f32 %v1994, %v2010
  %v2027 = vmax.f32 %v1995, %v2011
  %v2028 = vmax.f32 %v1996, %v2012
  %v2029 = vmax.f32 %v1997, %v2013
  %v2030 = vmax.f32 %v1998, %v2014
  %v2031 = vmax.f32 %v1999, %v2015
  %v2032 = vmax.f32 %v2000, %v2016
  %v2033 = vmax.f32 %v2001, %v2017
  %v2034 = vmax.f32 %v2002, %v2018
  %v2035 = vmax.f32 %v2003, %v2019
  %v2036 = vmax.f32 %v2004, %v2020
  %v2037 = vmax.f32 %v2005, %v2021
  %v2038 = vmax.f32 %v2006, %v2022
  %v2039 = vpack.c.bf16 %v2024, %v2023
  %v2040 = vpack.c.bf16 %v2026, %v2025
  %v2041 = vpack.c.bf16 %v2028, %v2027
  %v2042 = vpack.c.bf16 %v2030, %v2029
  %v2043 = vpack.c.bf16 %v2032, %v2031
  %v2044 = vpack.c.bf16 %v2034, %v2033
  %v2045 = vpack.c.bf16 %v2036, %v2035
  %v2046 = vpack.c.bf16 %v2038, %v2037
  %v2055 = vunpack.c.l.b16 %v2039
  %v2056 = vunpack.c.h.b16 %v2039
  %v2057 = vunpack.c.l.b16 %v2040
  %v2058 = vunpack.c.h.b16 %v2040
  %v2059 = vunpack.c.l.b16 %v2041
  %v2060 = vunpack.c.h.b16 %v2041
  %v2061 = vunpack.c.l.b16 %v2042
  %v2062 = vunpack.c.h.b16 %v2042
  %v2063 = vunpack.c.l.b16 %v2043
  %v2064 = vunpack.c.h.b16 %v2043
  %v2065 = vunpack.c.l.b16 %v2044
  %v2066 = vunpack.c.h.b16 %v2044
  %v2067 = vunpack.c.l.b16 %v2045
  %v2068 = vunpack.c.h.b16 %v2045
  %v2069 = vunpack.c.l.b16 %v2046
  %v2070 = vunpack.c.h.b16 %v2046
  %v2071 = vpack.c.b16 %v2055, %v2055
  %v2072 = vpack.c.b16 %v2056, %v2056
  %v2073 = vpack.c.b16 %v2057, %v2057
  %v2074 = vpack.c.b16 %v2058, %v2058
  %v2075 = vpack.c.b16 %v2059, %v2059
  %v2076 = vpack.c.b16 %v2060, %v2060
  %v2077 = vpack.c.b16 %v2061, %v2061
  %v2078 = vpack.c.b16 %v2062, %v2062
  %v2079 = vpack.c.b16 %v2063, %v2063
  %v2080 = vpack.c.b16 %v2064, %v2064
  %v2081 = vpack.c.b16 %v2065, %v2065
  %v2082 = vpack.c.b16 %v2066, %v2066
  %v2083 = vpack.c.b16 %v2067, %v2067
  %v2084 = vpack.c.b16 %v2068, %v2068
  %v2085 = vpack.c.b16 %v2069, %v2069
  %v2086 = vpack.c.b16 %v2070, %v2070
  %vm2103 = vcmask 519168
  %2104 = vst.msk [vmem:[%s4] sm:$0xf] %vm2103, %v2071
  %2105 = vst.msk [vmem:[%s4 + $0x4] sm:$0xf] %vm2103, %v2072
  %2106 = vst.msk [vmem:[%s4 + $0x8] sm:$0xf] %vm2103, %v2073
  %2107 = vst.msk [vmem:[%s4 + $0xc] sm:$0xf] %vm2103, %v2074
  %2108 = vst.msk [vmem:[%s4 + $0x10] sm:$0xf] %vm2103, %v2075
  %2109 = vst.msk [vmem:[%s4 + $0x14] sm:$0xf] %vm2103, %v2076
  %2110 = vst.msk [vmem:[%s4 + $0x18] sm:$0xf] %vm2103, %v2077
  %2111 = vst.msk [vmem:[%s4 + $0x1c] sm:$0xf] %vm2103, %v2078
  %2112 = vst.msk [vmem:[%s4 + $0x20] sm:$0xf] %vm2103, %v2079
  %2113 = vst.msk [vmem:[%s4 + $0x24] sm:$0xf] %vm2103, %v2080
  %2114 = vst.msk [vmem:[%s4 + $0x28] sm:$0xf] %vm2103, %v2081
  %2115 = vst.msk [vmem:[%s4 + $0x2c] sm:$0xf] %vm2103, %v2082
  %2116 = vst.msk [vmem:[%s4 + $0x30] sm:$0xf] %vm2103, %v2083
  %2117 = vst.msk [vmem:[%s4 + $0x34] sm:$0xf] %vm2103, %v2084
  %2118 = vst.msk [vmem:[%s4 + $0x38] sm:$0xf] %vm2103, %v2085
  %2119 = vst.msk [vmem:[%s4 + $0x3c] sm:$0xf] %vm2103, %v2086
  // Predicated region
  $region18: #{student_forward.5} parent=0 // pred_check
    _
  $region19: #{student_forward.5} parent=0 // pred_check_branch
    %2121 = sbr.rel (0) target = $region21
  $region20: #{student_forward.5} parent=0 // pred_region
    _
  $region21: #{student_forward.5} parent=0 // pred_fallthru
    _
  // Predicated region
  $region22: #{student_forward.5} parent=0 // pred_check
    _
  $region23: #{student_forward.5} parent=0 // pred_check_branch
    %2123 = sbr.rel (0) target = $region25
  $region24: #{student_forward.5} parent=0 // pred_region
    _
  $region25: #{student_forward.5} parent=0 // pred_fallthru
    _

// kernel: student_forward.6
$region0: #{student_forward.6}
  #allocation0 [shape = 'u32[]', space=smem, size = 0x4, offset = 0x4, fixed_abs, tag = 'smem constant byte address 0x4 - core index']
  #allocation1 [shape = 'u32[144,128]{1,0:T(1,128)}', space=vmem, size = 0x12000, scoped, tag = 'internal scratch']
  %s0 = inlined_call_operand.vmem [shape: bf16[128,576], index: 0, kind: input, shape index: {}]
  %s1 = inlined_call_operand.vmem [shape: bf16[576,128], index: 1, kind: input, shape index: {}]
  %s2 = inlined_call_operand.vmem [shape: f32[1,128], index: 2, kind: input, shape index: {}]
  %s3 = inlined_call_operand.vmem [shape: f32[1,128], index: 3, kind: input, shape index: {}]
  %s4 = inlined_call_operand.vmem [shape: bf16[32,128], index: 4, kind: output, shape index: {}]
  %s5 = sld [smem:[#allocation0]]
  $region26: #{student_forward.6} parent=0
    _
  %s7 = ssub.s32 1, %s5
  %s8 = scalar_select 0, %s7, %s5
  // Predicated region
  $region2: #{student_forward.6} parent=0 // pred_check
    _
  $region3: #{student_forward.6} parent=0 // pred_check_branch
    %10 = sbr.rel (0) target = $region5
  $region4: #{student_forward.6} parent=0 // pred_region
    _
  $region5: #{student_forward.6} parent=0 // pred_fallthru
    _
  // Predicated region
  $region6: #{student_forward.6} parent=0 // pred_check
    _
  $region7: #{student_forward.6} parent=0 // pred_check_branch
    %12 = sbr.rel (0) target = $region9
  $region8: #{student_forward.6} parent=0 // pred_region
    _
  $region9: #{student_forward.6} parent=0 // pred_fallthru
    _
  // Predicated region
  $region10: #{student_forward.6} parent=0 // pred_check
    _
  $region11: #{student_forward.6} parent=0 // pred_check_branch
    %14 = sbr.rel (0) target = $region13
  $region12: #{student_forward.6} parent=0 // pred_region
    _
  $region13: #{student_forward.6} parent=0 // pred_fallthru
    _
  // Predicated region
  $region14: #{student_forward.6} parent=0 // pred_check
    _
  $region15: #{student_forward.6} parent=0 // pred_check_branch
    %16 = sbr.rel (0) target = $region17
  $region16: #{student_forward.6} parent=0 // pred_region
    _
  $region17: #{student_forward.6} parent=0 // pred_fallthru
    _
  %v18 = vld [vmem:[%s0] sm:$0xff]
  %v19 = vld [vmem:[%s0 + $0x8] sm:$0xff]
  %v20 = vld [vmem:[%s0 + $0x10] sm:$0xf]
  %v21 = vld [vmem:[%s0 + $0x14] sm:$0xff]
  %v22 = vld [vmem:[%s0 + $0x1c] sm:$0xff]
  %v23 = vld [vmem:[%s0 + $0x24] sm:$0xf]
  %v24 = vld [vmem:[%s0 + $0x28] sm:$0xff]
  %v25 = vld [vmem:[%s0 + $0x30] sm:$0xff]
  %v26 = vld [vmem:[%s0 + $0x38] sm:$0xf]
  %v27 = vld [vmem:[%s0 + $0x3c] sm:$0xff]
  %v28 = vld [vmem:[%s0 + $0x44] sm:$0xff]
  %v29 = vld [vmem:[%s0 + $0x4c] sm:$0xf]
  %v30 = vld [vmem:[%s0 + $0x50] sm:$0xff]
  %v31 = vld [vmem:[%s0 + $0x58] sm:$0xff]
  %v32 = vld [vmem:[%s0 + $0x60] sm:$0xf]
  %v33 = vld [vmem:[%s0 + $0x64] sm:$0xff]
  %v34 = vld [vmem:[%s0 + $0x6c] sm:$0xff]
  %v35 = vld [vmem:[%s0 + $0x74] sm:$0xf]
  %v36 = vld [vmem:[%s0 + $0x78] sm:$0xff]
  %v37 = vld [vmem:[%s0 + $0x80] sm:$0xff]
  %v38 = vld [vmem:[%s0 + $0x88] sm:$0xf]
  %v39 = vld [vmem:[%s0 + $0x8c] sm:$0xff]
  %v40 = vld [vmem:[%s0 + $0x94] sm:$0xff]
  %v41 = vld [vmem:[%s0 + $0x9c] sm:$0xf]
  %v42 = vld [vmem:[%s0 + $0xa0] sm:$0xff]
  %v43 = vld [vmem:[%s0 + $0xa8] sm:$0xff]
  %v44 = vld [vmem:[%s0 + $0xb0] sm:$0xf]
  %v45 = vld [vmem:[%s0 + $0xb4] sm:$0xff]
  %v46 = vld [vmem:[%s0 + $0xbc] sm:$0xff]
  %v47 = vld [vmem:[%s0 + $0xc4] sm:$0xf]
  %v48 = vld [vmem:[%s0 + $0xc8] sm:$0xff]
  %v49 = vld [vmem:[%s0 + $0xd0] sm:$0xff]
  %v50 = vld [vmem:[%s0 + $0xd8] sm:$0xf]
  %v51 = vld [vmem:[%s0 + $0xdc] sm:$0xff]
  %v52 = vld [vmem:[%s0 + $0xe4] sm:$0xff]
  %v53 = vld [vmem:[%s0 + $0xec] sm:$0xf]
  %v54 = vld [vmem:[%s0 + $0xf0] sm:$0xff]
  %v55 = vld [vmem:[%s0 + $0xf8] sm:$0xff]
  %v56 = vld [vmem:[%s0 + $0x100] sm:$0xf]
  %v57 = vld [vmem:[%s0 + $0x104] sm:$0xff]
  %v58 = vld [vmem:[%s0 + $0x10c] sm:$0xff]
  %v59 = vld [vmem:[%s0 + $0x114] sm:$0xf]
  %v60 = vld [vmem:[%s0 + $0x118] sm:$0xff]
  %v61 = vld [vmem:[%s0 + $0x120] sm:$0xff]
  %v62 = vld [vmem:[%s0 + $0x128] sm:$0xf]
  %v63 = vld [vmem:[%s0 + $0x12c] sm:$0xff]
  %v64 = vld [vmem:[%s0 + $0x134] sm:$0xff]
  %v65 = vld [vmem:[%s0 + $0x13c] sm:$0xf]
  %v66 = vld [vmem:[%s1] sm:$0xf]
  %v67 = vld [vmem:[%s1 + $0x4] sm:$0xf]
  %v68 = vld [vmem:[%s1 + $0x8] sm:$0xf]
  %v69 = vld [vmem:[%s1 + $0xc] sm:$0xf]
  %v70 = vld [vmem:[%s1 + $0x10] sm:$0xf]
  %v71 = vld [vmem:[%s1 + $0x14] sm:$0xf]
  %v72 = vld [vmem:[%s1 + $0x18] sm:$0xf]
  %v73 = vld [vmem:[%s1 + $0x1c] sm:$0xf]
  %v74 = vld [vmem:[%s1 + $0x20] sm:$0xf]
  %v75 = vld [vmem:[%s1 + $0x24] sm:$0xf]
  %v76 = vld [vmem:[%s1 + $0x28] sm:$0xf]
  %v77 = vld [vmem:[%s1 + $0x2c] sm:$0xf]
  %v78 = vld [vmem:[%s1 + $0x30] sm:$0xf]
  %v79 = vld [vmem:[%s1 + $0x34] sm:$0xf]
  %v80 = vld [vmem:[%s1 + $0x38] sm:$0xf]
  %v81 = vld [vmem:[%s1 + $0x3c] sm:$0xf]
  %v82 = vld [vmem:[%s1 + $0x40] sm:$0xf]
  %v83 = vld [vmem:[%s1 + $0x44] sm:$0xf]
  %v84 = vld [vmem:[%s1 + $0x48] sm:$0xf]
  %v85 = vld [vmem:[%s1 + $0x4c] sm:$0xf]
  %v86 = vld [vmem:[%s1 + $0x50] sm:$0xf]
  %v87 = vld [vmem:[%s1 + $0x54] sm:$0xf]
  %v88 = vld [vmem:[%s1 + $0x58] sm:$0xf]
  %v89 = vld [vmem:[%s1 + $0x5c] sm:$0xf]
  %v90 = vld [vmem:[%s1 + $0x60] sm:$0xf]
  %v91 = vld [vmem:[%s1 + $0x64] sm:$0xf]
  %v92 = vld [vmem:[%s1 + $0x68] sm:$0xf]
  %v93 = vld [vmem:[%s1 + $0x6c] sm:$0xf]
  %v94 = vld [vmem:[%s1 + $0x70] sm:$0xf]
  %v95 = vld [vmem:[%s1 + $0x74] sm:$0xf]
  %v96 = vld [vmem:[%s1 + $0x78] sm:$0xf]
  %v97 = vld [vmem:[%s1 + $0x7c] sm:$0xf]
  %v98 = vld [vmem:[%s1 + $0x80] sm:$0xf]
  %v99 = vld [vmem:[%s1 + $0x84] sm:$0xf]
  %v100 = vld [vmem:[%s1 + $0x88] sm:$0xf]
  %v101 = vld [vmem:[%s1 + $0x8c] sm:$0xf]
  %v102 = vld [vmem:[%s1 + $0x90] sm:$0xf]
  %v103 = vld [vmem:[%s1 + $0x94] sm:$0xf]
  %v104 = vld [vmem:[%s1 + $0x98] sm:$0xf]
  %v105 = vld [vmem:[%s1 + $0x9c] sm:$0xf]
  %v106 = vld [vmem:[%s1 + $0xa0] sm:$0xf]
  %v107 = vld [vmem:[%s1 + $0xa4] sm:$0xf]
  %v108 = vld [vmem:[%s1 + $0xa8] sm:$0xf]
  %v109 = vld [vmem:[%s1 + $0xac] sm:$0xf]
  %v110 = vld [vmem:[%s1 + $0xb0] sm:$0xf]
  %v111 = vld [vmem:[%s1 + $0xb4] sm:$0xf]
  %v112 = vld [vmem:[%s1 + $0xb8] sm:$0xf]
  %v113 = vld [vmem:[%s1 + $0xbc] sm:$0xf]
  %v114 = vld [vmem:[%s1 + $0xc0] sm:$0xf]
  %v115 = vld [vmem:[%s1 + $0xc4] sm:$0xf]
  %v116 = vld [vmem:[%s1 + $0xc8] sm:$0xf]
  %v117 = vld [vmem:[%s1 + $0xcc] sm:$0xf]
  %v118 = vld [vmem:[%s1 + $0xd0] sm:$0xf]
  %v119 = vld [vmem:[%s1 + $0xd4] sm:$0xf]
  %v120 = vld [vmem:[%s1 + $0xd8] sm:$0xf]
  %v121 = vld [vmem:[%s1 + $0xdc] sm:$0xf]
  %v122 = vld [vmem:[%s1 + $0xe0] sm:$0xf]
  %v123 = vld [vmem:[%s1 + $0xe4] sm:$0xf]
  %v124 = vld [vmem:[%s1 + $0xe8] sm:$0xf]
  %v125 = vld [vmem:[%s1 + $0xec] sm:$0xf]
  %v126 = vld [vmem:[%s1 + $0xf0] sm:$0xf]
  %v127 = vld [vmem:[%s1 + $0xf4] sm:$0xf]
  %v128 = vld [vmem:[%s1 + $0xf8] sm:$0xf]
  %v129 = vld [vmem:[%s1 + $0xfc] sm:$0xf]
  %v130 = vld [vmem:[%s1 + $0x100] sm:$0xf]
  %v131 = vld [vmem:[%s1 + $0x104] sm:$0xf]
  %v132 = vld [vmem:[%s1 + $0x108] sm:$0xf]
  %v133 = vld [vmem:[%s1 + $0x10c] sm:$0xf]
  %v134 = vld [vmem:[%s1 + $0x110] sm:$0xf]
  %v135 = vld [vmem:[%s1 + $0x114] sm:$0xf]
  %v136 = vld [vmem:[%s1 + $0x118] sm:$0xf]
  %v137 = vld [vmem:[%s1 + $0x11c] sm:$0xf]
  %v186 = vunpack.c.l.b16 %v18
  %v187 = vunpack.c.h.b16 %v18
  %v188 = vunpack.c.l.b16 %v19
  %v189 = vunpack.c.h.b16 %v19
  %v190 = vunpack.c.l.b16 %v20
  %v191 = vunpack.c.l.b16 %v21
  %v192 = vunpack.c.h.b16 %v21
  %v193 = vunpack.c.l.b16 %v22
  %v194 = vunpack.c.h.b16 %v22
  %v195 = vunpack.c.l.b16 %v23
  %v196 = vunpack.c.l.b16 %v24
  %v197 = vunpack.c.h.b16 %v24
  %v198 = vunpack.c.l.b16 %v25
  %v199 = vunpack.c.h.b16 %v25
  %v200 = vunpack.c.l.b16 %v26
  %v201 = vunpack.c.l.b16 %v27
  %v202 = vunpack.c.h.b16 %v27
  %v203 = vunpack.c.l.b16 %v28
  %v204 = vunpack.c.h.b16 %v28
  %v205 = vunpack.c.l.b16 %v29
  %v206 = vunpack.c.l.b16 %v30
  %v207 = vunpack.c.h.b16 %v30
  %v208 = vunpack.c.l.b16 %v31
  %v209 = vunpack.c.h.b16 %v31
  %v210 = vunpack.c.l.b16 %v32
  %v211 = vunpack.c.l.b16 %v33
  %v212 = vunpack.c.h.b16 %v33
  %v213 = vunpack.c.l.b16 %v34
  %v214 = vunpack.c.h.b16 %v34
  %v215 = vunpack.c.l.b16 %v35
  %v216 = vunpack.c.l.b16 %v36
  %v217 = vunpack.c.h.b16 %v36
  %v218 = vunpack.c.l.b16 %v37
  %v219 = vunpack.c.h.b16 %v37
  %v220 = vunpack.c.l.b16 %v38
  %v221 = vunpack.c.l.b16 %v39
  %v222 = vunpack.c.h.b16 %v39
  %v223 = vunpack.c.l.b16 %v40
  %v224 = vunpack.c.h.b16 %v40
  %v225 = vunpack.c.l.b16 %v41
  %v226 = vunpack.c.l.b16 %v42
  %v227 = vunpack.c.h.b16 %v42
  %v228 = vunpack.c.l.b16 %v43
  %v229 = vunpack.c.h.b16 %v43
  %v230 = vunpack.c.l.b16 %v44
  %v231 = vunpack.c.l.b16 %v45
  %v232 = vunpack.c.h.b16 %v45
  %v233 = vunpack.c.l.b16 %v46
  %v234 = vunpack.c.h.b16 %v46
  %v235 = vunpack.c.l.b16 %v47
  %v236 = vunpack.c.l.b16 %v48
  %v237 = vunpack.c.h.b16 %v48
  %v238 = vunpack.c.l.b16 %v49
  %v239 = vunpack.c.h.b16 %v49
  %v240 = vunpack.c.l.b16 %v50
  %v241 = vunpack.c.l.b16 %v51
  %v242 = vunpack.c.h.b16 %v51
  %v243 = vunpack.c.l.b16 %v52
  %v244 = vunpack.c.h.b16 %v52
  %v245 = vunpack.c.l.b16 %v53
  %v246 = vunpack.c.l.b16 %v54
  %v247 = vunpack.c.h.b16 %v54
  %v248 = vunpack.c.l.b16 %v55
  %v249 = vunpack.c.h.b16 %v55
  %v250 = vunpack.c.l.b16 %v56
  %v251 = vunpack.c.l.b16 %v57
  %v252 = vunpack.c.h.b16 %v57
  %v253 = vunpack.c.l.b16 %v58
  %v254 = vunpack.c.h.b16 %v58
  %v255 = vunpack.c.l.b16 %v59
  %v256 = vunpack.c.l.b16 %v60
  %v257 = vunpack.c.h.b16 %v60
  %v258 = vunpack.c.l.b16 %v61
  %v259 = vunpack.c.h.b16 %v61
  %v260 = vunpack.c.l.b16 %v62
  %v261 = vunpack.c.l.b16 %v63
  %v262 = vunpack.c.h.b16 %v63
  %v263 = vunpack.c.l.b16 %v64
  %v264 = vunpack.c.h.b16 %v64
  %v265 = vunpack.c.l.b16 %v65
  %v266 = vpack.c.b16 %v191, %v186
  %v267 = vpack.c.b16 %v192, %v187
  %v268 = vpack.c.b16 %v193, %v188
  %v269 = vpack.c.b16 %v194, %v189
  %v270 = vpack.c.b16 %v195, %v190
  %v271 = vpack.c.b16 %v201, %v196
  %v272 = vpack.c.b16 %v202, %v197
  %v273 = vpack.c.b16 %v203, %v198
  %v274 = vpack.c.b16 %v204, %v199
  %v275 = vpack.c.b16 %v205, %v200
  %v276 = vpack.c.b16 %v211, %v206
  %v277 = vpack.c.b16 %v212, %v207
  %v278 = vpack.c.b16 %v213, %v208
  %v279 = vpack.c.b16 %v214, %v209
  %v280 = vpack.c.b16 %v215, %v210
  %v281 = vpack.c.b16 %v221, %v216
  %v282 = vpack.c.b16 %v222, %v217
  %v283 = vpack.c.b16 %v223, %v218
  %v284 = vpack.c.b16 %v224, %v219
  %v285 = vpack.c.b16 %v225, %v220
  %v286 = vpack.c.b16 %v231, %v226
  %v287 = vpack.c.b16 %v232, %v227
  %v288 = vpack.c.b16 %v233, %v228
  %v289 = vpack.c.b16 %v234, %v229
  %v290 = vpack.c.b16 %v235, %v230
  %v291 = vpack.c.b16 %v241, %v236
  %v292 = vpack.c.b16 %v242, %v237
  %v293 = vpack.c.b16 %v243, %v238
  %v294 = vpack.c.b16 %v244, %v239
  %v295 = vpack.c.b16 %v245, %v240
  %v296 = vpack.c.b16 %v251, %v246
  %v297 = vpack.c.b16 %v252, %v247
  %v298 = vpack.c.b16 %v253, %v248
  %v299 = vpack.c.b16 %v254, %v249
  %v300 = vpack.c.b16 %v255, %v250
  %v301 = vpack.c.b16 %v261, %v256
  %v302 = vpack.c.b16 %v262, %v257
  %v303 = vpack.c.b16 %v263, %v258
  %v304 = vpack.c.b16 %v264, %v259
  %v305 = vpack.c.b16 %v265, %v260
  %v410 = vunpack.c.l.b16 %v66
  %v411 = vunpack.c.l.b16 %v67
  %v412 = vunpack.c.l.b16 %v68
  %v413 = vunpack.c.l.b16 %v69
  %v414 = vunpack.c.l.b16 %v70
  %v415 = vunpack.c.l.b16 %v71
  %v416 = vunpack.c.l.b16 %v72
  %v417 = vunpack.c.l.b16 %v73
  %v418 = vunpack.c.l.b16 %v74
  %v419 = vunpack.c.l.b16 %v75
  %v420 = vunpack.c.l.b16 %v76
  %v421 = vunpack.c.l.b16 %v77
  %v422 = vunpack.c.l.b16 %v78
  %v423 = vunpack.c.l.b16 %v79
  %v424 = vunpack.c.l.b16 %v80
  %v425 = vunpack.c.l.b16 %v81
  %v426 = vunpack.c.l.b16 %v82
  %v427 = vunpack.c.l.b16 %v83
  %v428 = vunpack.c.l.b16 %v84
  %v429 = vunpack.c.l.b16 %v85
  %v430 = vunpack.c.l.b16 %v86
  %v431 = vunpack.c.l.b16 %v87
  %v432 = vunpack.c.l.b16 %v88
  %v433 = vunpack.c.l.b16 %v89
  %v434 = vunpack.c.l.b16 %v90
  %v435 = vunpack.c.l.b16 %v91
  %v436 = vunpack.c.l.b16 %v92
  %v437 = vunpack.c.l.b16 %v93
  %v438 = vunpack.c.l.b16 %v94
  %v439 = vunpack.c.l.b16 %v95
  %v440 = vunpack.c.l.b16 %v96
  %v441 = vunpack.c.l.b16 %v97
  %v442 = vunpack.c.l.b16 %v98
  %v443 = vunpack.c.l.b16 %v99
  %v444 = vunpack.c.l.b16 %v100
  %v445 = vunpack.c.l.b16 %v101
  %v446 = vunpack.c.l.b16 %v102
  %v447 = vunpack.c.l.b16 %v103
  %v448 = vunpack.c.l.b16 %v104
  %v449 = vunpack.c.l.b16 %v105
  %v450 = vunpack.c.l.b16 %v106
  %v451 = vunpack.c.l.b16 %v107
  %v452 = vunpack.c.l.b16 %v108
  %v453 = vunpack.c.l.b16 %v109
  %v454 = vunpack.c.l.b16 %v110
  %v455 = vunpack.c.l.b16 %v111
  %v456 = vunpack.c.l.b16 %v112
  %v457 = vunpack.c.l.b16 %v113
  %v458 = vunpack.c.l.b16 %v114
  %v459 = vunpack.c.l.b16 %v115
  %v460 = vunpack.c.l.b16 %v116
  %v461 = vunpack.c.l.b16 %v117
  %v462 = vunpack.c.l.b16 %v118
  %v463 = vunpack.c.l.b16 %v119
  %v464 = vunpack.c.l.b16 %v120
  %v465 = vunpack.c.l.b16 %v121
  %v466 = vunpack.c.l.b16 %v122
  %v467 = vunpack.c.l.b16 %v123
  %v468 = vunpack.c.l.b16 %v124
  %v469 = vunpack.c.l.b16 %v125
  %v470 = vunpack.c.l.b16 %v126
  %v471 = vunpack.c.l.b16 %v127
  %v472 = vunpack.c.l.b16 %v128
  %v473 = vunpack.c.l.b16 %v129
  %v474 = vunpack.c.l.b16 %v130
  %v475 = vunpack.c.l.b16 %v131
  %v476 = vunpack.c.l.b16 %v132
  %v477 = vunpack.c.l.b16 %v133
  %v478 = vunpack.c.l.b16 %v134
  %v479 = vunpack.c.l.b16 %v135
  %v480 = vunpack.c.l.b16 %v136
  %v481 = vunpack.c.l.b16 %v137
  %v482 = vpack.c.b16 %v411, %v410
  %v483 = vpack.c.b16 %v413, %v412
  %v484 = vpack.c.b16 %v415, %v414
  %v485 = vpack.c.b16 %v417, %v416
  %v486 = vpack.c.b16 %v419, %v418
  %v487 = vpack.c.b16 %v421, %v420
  %v488 = vpack.c.b16 %v423, %v422
  %v489 = vpack.c.b16 %v425, %v424
  %v490 = vpack.c.b16 %v427, %v426
  %v491 = vpack.c.b16 %v429, %v428
  %v492 = vpack.c.b16 %v431, %v430
  %v493 = vpack.c.b16 %v433, %v432
  %v494 = vpack.c.b16 %v435, %v434
  %v495 = vpack.c.b16 %v437, %v436
  %v496 = vpack.c.b16 %v439, %v438
  %v497 = vpack.c.b16 %v441, %v440
  %v498 = vpack.c.b16 %v443, %v442
  %v499 = vpack.c.b16 %v445, %v444
  %v500 = vpack.c.b16 %v447, %v446
  %v501 = vpack.c.b16 %v449, %v448
  %v502 = vpack.c.b16 %v451, %v450
  %v503 = vpack.c.b16 %v453, %v452
  %v504 = vpack.c.b16 %v455, %v454
  %v505 = vpack.c.b16 %v457, %v456
  %v506 = vpack.c.b16 %v459, %v458
  %v507 = vpack.c.b16 %v461, %v460
  %v508 = vpack.c.b16 %v463, %v462
  %v509 = vpack.c.b16 %v465, %v464
  %v510 = vpack.c.b16 %v467, %v466
  %v511 = vpack.c.b16 %v469, %v468
  %v512 = vpack.c.b16 %v471, %v470
  %v513 = vpack.c.b16 %v473, %v472
  %v514 = vpack.c.b16 %v475, %v474
  %v515 = vpack.c.b16 %v477, %v476
  %v516 = vpack.c.b16 %v479, %v478
  %v517 = vpack.c.b16 %v481, %v480
  %vm554 = vcmask 523264
  %v556 = vsel %vm554, %v270, 0
  %v559 = vsel %vm554, %v275, 0
  %v562 = vsel %vm554, %v280, 0
  %v565 = vsel %vm554, %v285, 0
  %v568 = vsel %vm554, %v290, 0
  %v571 = vsel %vm554, %v295, 0
  %v574 = vsel %vm554, %v300, 0
  %v577 = vsel %vm554, %v305, 0
  %579 = vmatprep.subr.bf16.mxu0 0
  %580 = vmatpush1.bf16.msra.mxu0 %v482
  %581 = vmatprep.subr.bf16.mxu0 0
  %582 = vmatpush1.bf16.msra.mxu0 %v483
  %583 = vmatprep.subr.bf16.mxu0 0
  %584 = vmatpush1.bf16.msra.mxu0 %v484
  %585 = vmatprep.subr.bf16.mxu0 0
  %586 = vmatpush1.bf16.msra.mxu0 %v485
  %587 = vmatprep.subr.bf16.mxu0 0
  %588 = vmatpush1.bf16.msra.mxu0 %v486
  %589 = vmatprep.subr.bf16.mxu0 0
  %590 = vmatpush1.bf16.msra.mxu0 %v487
  %591 = vmatprep.subr.bf16.mxu0 0
  %592 = vmatpush1.bf16.msra.mxu0 %v488
  %593 = vmatprep.subr.bf16.mxu0 0
  %594 = vmatpush1.bf16.msra.mxu0 %v489
  %595 = vmatprep.subr.bf16.mxu0 0
  %596 = vmatpush1.bf16.msra.mxu0 %v490
  %597 = vmatprep.subr.bf16.mxu0 0
  %598 = vmatpush1.bf16.msra.mxu0 %v491
  %599 = vmatprep.subr.bf16.mxu0 0
  %600 = vmatpush1.bf16.msra.mxu0 %v492
  %601 = vmatprep.subr.bf16.mxu0 0
  %602 = vmatpush1.bf16.msra.mxu0 %v493
  %603 = vmatprep.subr.bf16.mxu0 0
  %604 = vmatpush1.bf16.msra.mxu0 %v494
  %605 = vmatprep.subr.bf16.mxu0 0
  %606 = vmatpush1.bf16.msra.mxu0 %v495
  %607 = vmatprep.subr.bf16.mxu0 0
  %608 = vmatpush1.bf16.msra.mxu0 %v496
  %609 = vmatprep.subr.bf16.mxu0 0
  %610 = vmatpush1.bf16.msra.mxu0 %v497
  %611 = vmatprep.mubr.bf16.mxu0 %v267
  %612 = vmatmul.mubr.bf16.gmra.mrb[0].mxu0 %v266
  %v613 = vpop.f32.mrb[0].mxu0
  %v614 = vadd.f32 0.0, %v613
  %v615 = vpop.f32.mrb[0].mxu0
  %v616 = vpop.f32.mrb[0].mxu0
  %v617 = vadd.f32 0.0, %v616
  %v618 = vpop.f32.mrb[0].mxu0
  %619 = vmatprep.mubr.bf16.mxu0 %v272
  %620 = vmatmul.mubr.bf16.gmra.mrb[0].mxu0 %v271
  %v621 = vpop.f32.mrb[0].mxu0
  %v622 = vadd.f32 0.0, %v621
  %v623 = vpop.f32.mrb[0].mxu0
  %v624 = vpop.f32.mrb[0].mxu0
  %v625 = vadd.f32 0.0, %v624
  %v626 = vpop.f32.mrb[0].mxu0
  %627 = vmatprep.mubr.bf16.mxu0 %v277
  %628 = vmatmul.mubr.bf16.gmra.mrb[0].mxu0 %v276
  %v629 = vpop.f32.mrb[0].mxu0
  %v630 = vadd.f32 0.0, %v629
  %v631 = vpop.f32.mrb[0].mxu0
  %v632 = vpop.f32.mrb[0].mxu0
  %v633 = vadd.f32 0.0, %v632
  %v634 = vpop.f32.mrb[0].mxu0
  %635 = vmatprep.mubr.bf16.mxu0 %v282
  %636 = vmatmul.mubr.bf16.gmra.mrb[0].mxu0 %v281
  %v637 = vpop.f32.mrb[0].mxu0
  %v638 = vadd.f32 0.0, %v637
  %v639 = vpop.f32.mrb[0].mxu0
  %v640 = vpop.f32.mrb[0].mxu0
  %v641 = vadd.f32 0.0, %v640
  %v642 = vpop.f32.mrb[0].mxu0
  %643 = vmatprep.mubr.bf16.mxu0 %v287
  %644 = vmatmul.mubr.bf16.gmra.mrb[0].mxu0 %v286
  %v645 = vpop.f32.mrb[0].mxu0
  %v646 = vadd.f32 0.0, %v645
  %v647 = vpop.f32.mrb[0].mxu0
  %v648 = vpop.f32.mrb[0].mxu0
  %v649 = vadd.f32 0.0, %v648
  %v650 = vpop.f32.mrb[0].mxu0
  %651 = vmatprep.mubr.bf16.mxu0 %v292
  %652 = vmatmul.mubr.bf16.gmra.mrb[0].mxu0 %v291
  %v653 = vpop.f32.mrb[0].mxu0
  %v654 = vadd.f32 0.0, %v653
  %v655 = vpop.f32.mrb[0].mxu0
  %v656 = vpop.f32.mrb[0].mxu0
  %v657 = vadd.f32 0.0, %v656
  %v658 = vpop.f32.mrb[0].mxu0
  %659 = vmatprep.mubr.bf16.mxu0 %v297
  %660 = vmatmul.mubr.bf16.gmra.mrb[0].mxu0 %v296
  %v661 = vpop.f32.mrb[0].mxu0
  %v662 = vadd.f32 0.0, %v661
  %v663 = vpop.f32.mrb[0].mxu0
  %v664 = vpop.f32.mrb[0].mxu0
  %v665 = vadd.f32 0.0, %v664
  %v666 = vpop.f32.mrb[0].mxu0
  %667 = vmatprep.mubr.bf16.mxu0 %v302
  %668 = vmatmul.mubr.bf16.gmra.mrb[0].mxu0 %v301
  %v669 = vpop.f32.mrb[0].mxu0
  %v670 = vadd.f32 0.0, %v669
  %v671 = vpop.f32.mrb[0].mxu0
  %v672 = vpop.f32.mrb[0].mxu0
  %v673 = vadd.f32 0.0, %v672
  %v674 = vpop.f32.mrb[0].mxu0
  %675 = vdwg.mxu0
  %676 = vmatprep.subr.bf16.mxu0 0
  %677 = vmatpush1.bf16.msra.mxu0 %v498
  %678 = vmatprep.subr.bf16.mxu0 0
  %679 = vmatpush1.bf16.msra.mxu0 %v499
  %680 = vmatprep.subr.bf16.mxu0 0
  %681 = vmatpush1.bf16.msra.mxu0 %v500
  %682 = vmatprep.subr.bf16.mxu0 0
  %683 = vmatpush1.bf16.msra.mxu0 %v501
  %684 = vmatprep.subr.bf16.mxu0 0
  %685 = vmatpush1.bf16.msra.mxu0 %v502
  %686 = vmatprep.subr.bf16.mxu0 0
  %687 = vmatpush1.bf16.msra.mxu0 %v503
  %688 = vmatprep.subr.bf16.mxu0 0
  %689 = vmatpush1.bf16.msra.mxu0 %v504
  %690 = vmatprep.subr.bf16.mxu0 0
  %691 = vmatpush1.bf16.msra.mxu0 %v505
  %692 = vmatprep.subr.bf16.mxu0 0
  %693 = vmatpush1.bf16.msra.mxu0 %v506
  %694 = vmatprep.subr.bf16.mxu0 0
  %695 = vmatpush1.bf16.msra.mxu0 %v507
  %696 = vmatprep.subr.bf16.mxu0 0
  %697 = vmatpush1.bf16.msra.mxu0 %v508
  %698 = vmatprep.subr.bf16.mxu0 0
  %699 = vmatpush1.bf16.msra.mxu0 %v509
  %700 = vmatprep.subr.bf16.mxu0 0
  %701 = vmatpush1.bf16.msra.mxu0 %v510
  %702 = vmatprep.subr.bf16.mxu0 0
  %703 = vmatpush1.bf16.msra.mxu0 %v511
  %704 = vmatprep.subr.bf16.mxu0 0
  %705 = vmatpush1.bf16.msra.mxu0 %v512
  %706 = vmatprep.subr.bf16.mxu0 0
  %707 = vmatpush1.bf16.msra.mxu0 %v513
  %708 = vmatprep.mubr.bf16.mxu0 %v269
  %709 = vmatmul.mubr.bf16.gmra.mrb[0].mxu0 %v268
  %v710 = vpop.f32.mrb[0].mxu0
  %v711 = vadd.f32 %v614, %v710
  %v712 = vpop.f32.mrb[0].mxu0
  %v713 = vpop.f32.mrb[0].mxu0
  %v714 = vadd.f32 %v617, %v713
  %v715 = vpop.f32.mrb[0].mxu0
  %716 = vmatprep.mubr.bf16.mxu0 %v274
  %717 = vmatmul.mubr.bf16.gmra.mrb[0].mxu0 %v273
  %v718 = vpop.f32.mrb[0].mxu0
  %v719 = vadd.f32 %v622, %v718
  %v720 = vpop.f32.mrb[0].mxu0
  %v721 = vpop.f32.mrb[0].mxu0
  %v722 = vadd.f32 %v625, %v721
  %v723 = vpop.f32.mrb[0].mxu0
  %724 = vmatprep.mubr.bf16.mxu0 %v279
  %725 = vmatmul.mubr.bf16.gmra.mrb[0].mxu0 %v278
  %v726 = vpop.f32.mrb[0].mxu0
  %v727 = vadd.f32 %v630, %v726
  %v728 = vpop.f32.mrb[0].mxu0
  %v729 = vpop.f32.mrb[0].mxu0
  %v730 = vadd.f32 %v633, %v729
  %v731 = vpop.f32.mrb[0].mxu0
  %732 = vmatprep.mubr.bf16.mxu0 %v284
  %733 = vmatmul.mubr.bf16.gmra.mrb[0].mxu0 %v283
  %v734 = vpop.f32.mrb[0].mxu0
  %v735 = vadd.f32 %v638, %v734
  %v736 = vpop.f32.mrb[0].mxu0
  %v737 = vpop.f32.mrb[0].mxu0
  %v738 = vadd.f32 %v641, %v737
  %v739 = vpop.f32.mrb[0].mxu0
  %740 = vmatprep.mubr.bf16.mxu0 %v289
  %741 = vmatmul.mubr.bf16.gmra.mrb[0].mxu0 %v288
  %v742 = vpop.f32.mrb[0].mxu0
  %v743 = vadd.f32 %v646, %v742
  %v744 = vpop.f32.mrb[0].mxu0
  %v745 = vpop.f32.mrb[0].mxu0
  %v746 = vadd.f32 %v649, %v745
  %v747 = vpop.f32.mrb[0].mxu0
  %748 = vmatprep.mubr.bf16.mxu0 %v294
  %749 = vmatmul.mubr.bf16.gmra.mrb[0].mxu0 %v293
  %v750 = vpop.f32.mrb[0].mxu0
  %v751 = vadd.f32 %v654, %v750
  %v752 = vpop.f32.mrb[0].mxu0
  %v753 = vpop.f32.mrb[0].mxu0
  %v754 = vadd.f32 %v657, %v753
  %v755 = vpop.f32.mrb[0].mxu0
  %756 = vmatprep.mubr.bf16.mxu0 %v299
  %757 = vmatmul.mubr.bf16.gmra.mrb[0].mxu0 %v298
  %v758 = vpop.f32.mrb[0].mxu0
  %v759 = vadd.f32 %v662, %v758
  %v760 = vpop.f32.mrb[0].mxu0
  %v761 = vpop.f32.mrb[0].mxu0
  %v762 = vadd.f32 %v665, %v761
  %v763 = vpop.f32.mrb[0].mxu0
  %764 = vmatprep.mubr.bf16.mxu0 %v304
  %765 = vmatmul.mubr.bf16.gmra.mrb[0].mxu0 %v303
  %v766 = vpop.f32.mrb[0].mxu0
  %v767 = vadd.f32 %v670, %v766
  %v768 = vpop.f32.mrb[0].mxu0
  %v769 = vpop.f32.mrb[0].mxu0
  %v770 = vadd.f32 %v673, %v769
  %v771 = vpop.f32.mrb[0].mxu0
  %772 = vdwg.mxu0
  %773 = vmatprep.subr.bf16.mxu0 0
  %774 = vmatpush1.bf16.msra.mxu0 %v514
  %775 = vmatprep.subr.bf16.mxu0 0
  %776 = vmatpush1.bf16.msra.mxu0 %v515
  %777 = vmatprep.subr.bf16.mxu0 0
  %778 = vmatpush1.bf16.msra.mxu0 %v516
  %779 = vmatprep.subr.bf16.mxu0 0
  %780 = vmatpush1.bf16.msra.mxu0 %v517
  %781 = vmatprep.subr.bf16.mxu0 0
  %782 = vmatpush1.bf16.msra.mxu0 0
  %783 = vmatprep.subr.bf16.mxu0 0
  %784 = vmatpush1.bf16.msra.mxu0 0
  %785 = vmatprep.subr.bf16.mxu0 0
  %786 = vmatpush1.bf16.msra.mxu0 0
  %787 = vmatprep.subr.bf16.mxu0 0
  %788 = vmatpush1.bf16.msra.mxu0 0
  %789 = vmatprep.subr.bf16.mxu0 0
  %790 = vmatpush1.bf16.msra.mxu0 0
  %791 = vmatprep.subr.bf16.mxu0 0
  %792 = vmatpush1.bf16.msra.mxu0 0
  %793 = vmatprep.subr.bf16.mxu0 0
  %794 = vmatpush1.bf16.msra.mxu0 0
  %795 = vmatprep.subr.bf16.mxu0 0
  %796 = vmatpush1.bf16.msra.mxu0 0
  %797 = vmatprep.subr.bf16.mxu0 0
  %798 = vmatpush1.bf16.msra.mxu0 0
  %799 = vmatprep.subr.bf16.mxu0 0
  %800 = vmatpush1.bf16.msra.mxu0 0
  %801 = vmatprep.subr.bf16.mxu0 0
  %802 = vmatpush1.bf16.msra.mxu0 0
  %803 = vmatprep.subr.bf16.mxu0 0
  %804 = vmatpush1.bf16.msra.mxu0 0
  %805 = vmatprep.mubr.bf16.mxu0 0
  %806 = vmatmul.mubr.bf16.gmra.mrb[0].mxu0 %v556
  %v807 = vpop.f32.mrb[0].mxu0
  %v808 = vadd.f32 %v711, %v807
  %v809 = vpop.f32.mrb[0].mxu0
  %v810 = vpop.f32.mrb[0].mxu0
  %v811 = vadd.f32 %v714, %v810
  %v812 = vpop.f32.mrb[0].mxu0
  %813 = vmatprep.mubr.bf16.mxu0 0
  %814 = vmatmul.mubr.bf16.gmra.mrb[0].mxu0 %v559
  %v815 = vpop.f32.mrb[0].mxu0
  %v816 = vadd.f32 %v719, %v815
  %v817 = vpop.f32.mrb[0].mxu0
  %v818 = vpop.f32.mrb[0].mxu0
  %v819 = vadd.f32 %v722, %v818
  %v820 = vpop.f32.mrb[0].mxu0
  %821 = vmatprep.mubr.bf16.mxu0 0
  %822 = vmatmul.mubr.bf16.gmra.mrb[0].mxu0 %v562
  %v823 = vpop.f32.mrb[0].mxu0
  %v824 = vadd.f32 %v727, %v823
  %v825 = vpop.f32.mrb[0].mxu0
  %v826 = vpop.f32.mrb[0].mxu0
  %v827 = vadd.f32 %v730, %v826
  %v828 = vpop.f32.mrb[0].mxu0
  %829 = vmatprep.mubr.bf16.mxu0 0
  %830 = vmatmul.mubr.bf16.gmra.mrb[0].mxu0 %v565
  %v831 = vpop.f32.mrb[0].mxu0
  %v832 = vadd.f32 %v735, %v831
  %v833 = vpop.f32.mrb[0].mxu0
  %v834 = vpop.f32.mrb[0].mxu0
  %v835 = vadd.f32 %v738, %v834
  %v836 = vpop.f32.mrb[0].mxu0
  %837 = vmatprep.mubr.bf16.mxu0 0
  %838 = vmatmul.mubr.bf16.gmra.mrb[0].mxu0 %v568
  %v839 = vpop.f32.mrb[0].mxu0
  %v840 = vadd.f32 %v743, %v839
  %v841 = vpop.f32.mrb[0].mxu0
  %v842 = vpop.f32.mrb[0].mxu0
  %v843 = vadd.f32 %v746, %v842
  %v844 = vpop.f32.mrb[0].mxu0
  %845 = vmatprep.mubr.bf16.mxu0 0
  %846 = vmatmul.mubr.bf16.gmra.mrb[0].mxu0 %v571
  %v847 = vpop.f32.mrb[0].mxu0
  %v848 = vadd.f32 %v751, %v847
  %v849 = vpop.f32.mrb[0].mxu0
  %v850 = vpop.f32.mrb[0].mxu0
  %v851 = vadd.f32 %v754, %v850
  %v852 = vpop.f32.mrb[0].mxu0
  %853 = vmatprep.mubr.bf16.mxu0 0
  %854 = vmatmul.mubr.bf16.gmra.mrb[0].mxu0 %v574
  %v855 = vpop.f32.mrb[0].mxu0
  %v856 = vadd.f32 %v759, %v855
  %v857 = vpop.f32.mrb[0].mxu0
  %v858 = vpop.f32.mrb[0].mxu0
  %v859 = vadd.f32 %v762, %v858
  %v860 = vpop.f32.mrb[0].mxu0
  %861 = vmatprep.mubr.bf16.mxu0 0
  %862 = vmatmul.mubr.bf16.gmra.mrb[0].mxu0 %v577
  %v863 = vpop.f32.mrb[0].mxu0
  %v864 = vadd.f32 %v767, %v863
  %v865 = vpop.f32.mrb[0].mxu0
  %v866 = vpop.f32.mrb[0].mxu0
  %v867 = vadd.f32 %v770, %v866
  %v868 = vpop.f32.mrb[0].mxu0
  %869 = vdwg.mxu0
  %v870 = vadd.f32 %v808, %v811
  %v871 = vadd.f32 %v870, %v816
  %v872 = vadd.f32 %v871, %v819
  %v873 = vadd.f32 %v872, %v824
  %v874 = vadd.f32 %v873, %v827
  %v875 = vadd.f32 %v874, %v832
  %v876 = vadd.f32 %v875, %v835
  %v877 = vadd.f32 %v876, %v840
  %v878 = vadd.f32 %v877, %v843
  %v879 = vadd.f32 %v878, %v848
  %v880 = vadd.f32 %v879, %v851
  %v881 = vadd.f32 %v880, %v856
  %v882 = vadd.f32 %v881, %v859
  %v883 = vadd.f32 %v882, %v864
  %v884 = vadd.f32 %v883, %v867
  %v885 = vrot.slane %v884, 4
  %v886 = vadd.f32 %v884, %v885
  %v887 = vrot.slane %v886, 2
  %v888 = vadd.f32 %v886, %v887
  %v889 = vrot.slane %v888, 1
  %v890 = vadd.f32 %v888, %v889
  %v891 = vmul.f32 %v808, %v808
  %v892 = vmul.f32 %v811, %v811
  %v893 = vmul.f32 %v816, %v816
  %v894 = vmul.f32 %v819, %v819
  %v895 = vmul.f32 %v824, %v824
  %v896 = vmul.f32 %v827, %v827
  %v897 = vmul.f32 %v832, %v832
  %v898 = vmul.f32 %v835, %v835
  %v899 = vmul.f32 %v840, %v840
  %v900 = vmul.f32 %v843, %v843
  %v901 = vmul.f32 %v848, %v848
  %v902 = vmul.f32 %v851, %v851
  %v903 = vmul.f32 %v856, %v856
  %v904 = vmul.f32 %v859, %v859
  %v905 = vmul.f32 %v864, %v864
  %v906 = vmul.f32 %v867, %v867
  %v907 = vadd.f32 %v891, %v892
  %v908 = vadd.f32 %v907, %v893
  %v909 = vadd.f32 %v908, %v894
  %v910 = vadd.f32 %v909, %v895
  %v911 = vadd.f32 %v910, %v896
  %v912 = vadd.f32 %v911, %v897
  %v913 = vadd.f32 %v912, %v898
  %v914 = vadd.f32 %v913, %v899
  %v915 = vadd.f32 %v914, %v900
  %v916 = vadd.f32 %v915, %v901
  %v917 = vadd.f32 %v916, %v902
  %v918 = vadd.f32 %v917, %v903
  %v919 = vadd.f32 %v918, %v904
  %v920 = vadd.f32 %v919, %v905
  %v921 = vadd.f32 %v920, %v906
  %v922 = vrot.slane %v921, 4
  %v923 = vadd.f32 %v921, %v922
  %v924 = vrot.slane %v923, 2
  %v925 = vadd.f32 %v923, %v924
  %v926 = vrot.slane %v925, 1
  %v927 = vadd.f32 %v925, %v926
  %v928 = vmul.f32 %v890, 0.0078125
  %v929 = vmul.f32 %v927, 0.0078125
  %v930 = vmul.f32 %v928, %v928
  %v931 = vsub.f32 %v929, %v930
  %v932 = vld [vmem:[%s2] sm:$0x1]
  %v933 = vadd.f32 %v931, 1e-05
  %v934 = vrsqrt.pop %v933
  %v935 = vmul.f32 %v932, %v934
  %v936 = vld [vmem:[%s3] sm:$0x1]
  %v937 = vmul.f32 %v928, %v935
  %v938 = vsub.f32 %v936, %v937
  %v940 = vlaneseq
  %v941 = vshrl.u32 %v940, 7
  %v942 = vsub.s32 0, %v941
  %v943 = vrot.slane %v935, %v942
  %v945 = vmul.f32 %v808, %v943
  %v946 = vmul.f32 %v811, %v943
  %v947 = vmul.f32 %v816, %v943
  %v948 = vmul.f32 %v819, %v943
  %v949 = vmul.f32 %v824, %v943
  %v950 = vmul.f32 %v827, %v943
  %v951 = vmul.f32 %v832, %v943
  %v952 = vmul.f32 %v835, %v943
  %v953 = vmul.f32 %v840, %v943
  %v954 = vmul.f32 %v843, %v943
  %v955 = vmul.f32 %v848, %v943
  %v956 = vmul.f32 %v851, %v943
  %v957 = vmul.f32 %v856, %v943
  %v958 = vmul.f32 %v859, %v943
  %v959 = vmul.f32 %v864, %v943
  %v960 = vmul.f32 %v867, %v943
  %v962 = vlaneseq
  %v963 = vshrl.u32 %v962, 7
  %v964 = vsub.s32 0, %v963
  %v965 = vrot.slane %v938, %v964
  %v967 = vadd.f32 %v945, %v965
  %v968 = vadd.f32 %v946, %v965
  %v969 = vadd.f32 %v947, %v965
  %v970 = vadd.f32 %v948, %v965
  %v971 = vadd.f32 %v949, %v965
  %v972 = vadd.f32 %v950, %v965
  %v973 = vadd.f32 %v951, %v965
  %v974 = vadd.f32 %v952, %v965
  %v975 = vadd.f32 %v953, %v965
  %v976 = vadd.f32 %v954, %v965
  %v977 = vadd.f32 %v955, %v965
  %v978 = vadd.f32 %v956, %v965
  %v979 = vadd.f32 %v957, %v965
  %v980 = vadd.f32 %v958, %v965
  %v981 = vadd.f32 %v959, %v965
  %v982 = vadd.f32 %v960, %v965
  %v983 = vmax.f32 %v967, 0.0
  %v984 = vmax.f32 %v968, 0.0
  %v985 = vmax.f32 %v969, 0.0
  %v986 = vmax.f32 %v970, 0.0
  %v987 = vmax.f32 %v971, 0.0
  %v988 = vmax.f32 %v972, 0.0
  %v989 = vmax.f32 %v973, 0.0
  %v990 = vmax.f32 %v974, 0.0
  %v991 = vmax.f32 %v975, 0.0
  %v992 = vmax.f32 %v976, 0.0
  %v993 = vmax.f32 %v977, 0.0
  %v994 = vmax.f32 %v978, 0.0
  %v995 = vmax.f32 %v979, 0.0
  %v996 = vmax.f32 %v980, 0.0
  %v997 = vmax.f32 %v981, 0.0
  %v998 = vmax.f32 %v982, 0.0
  %v999 = vmax.f32 %v983, %v987
  %v1000 = vmax.f32 %v984, %v988
  %v1001 = vmax.f32 %v985, %v989
  %v1002 = vmax.f32 %v986, %v990
  %v1003 = vmax.f32 %v991, %v995
  %v1004 = vmax.f32 %v992, %v996
  %v1005 = vmax.f32 %v993, %v997
  %v1006 = vmax.f32 %v994, %v998
  %v1007 = vmax.f32 %v999, %v1003
  %v1008 = vmax.f32 %v1000, %v1004
  %v1009 = vmax.f32 %v1001, %v1005
  %v1010 = vmax.f32 %v1002, %v1006
  %v1011 = vpack.c.bf16 %v1008, %v1007
  %v1012 = vpack.c.bf16 %v1010, %v1009
  %v1015 = vunpack.c.l.b16 %v1011
  %v1016 = vunpack.c.h.b16 %v1011
  %v1017 = vunpack.c.l.b16 %v1012
  %v1018 = vunpack.c.h.b16 %v1012
  %v1019 = vpack.c.b16 %v1015, %v1015
  %v1020 = vpack.c.b16 %v1016, %v1016
  %v1021 = vpack.c.b16 %v1017, %v1017
  %v1022 = vpack.c.b16 %v1018, %v1018
  %1027 = vst [vmem:[%s4] sm:$0xf] %v1019
  %1028 = vst [vmem:[%s4 + $0x4] sm:$0xf] %v1020
  %1029 = vst [vmem:[%s4 + $0x8] sm:$0xf] %v1021
  %1030 = vst [vmem:[%s4 + $0xc] sm:$0xf] %v1022
  // Predicated region
  $region18: #{student_forward.6} parent=0 // pred_check
    _
  $region19: #{student_forward.6} parent=0 // pred_check_branch
    %1032 = sbr.rel (0) target = $region21
  $region20: #{student_forward.6} parent=0 // pred_region
    _
  $region21: #{student_forward.6} parent=0 // pred_fallthru
    _
  // Predicated region
  $region22: #{student_forward.6} parent=0 // pred_check
    _
  $region23: #{student_forward.6} parent=0 // pred_check_branch
    %1034 = sbr.rel (0) target = $region25
  $region24: #{student_forward.6} parent=0 // pred_region
    _
  $region25: #{student_forward.6} parent=0 // pred_fallthru
    _

// kernel: student_forward.7
$region0: #{student_forward.7}
  #allocation0 [shape = 'u32[]', space=smem, size = 0x4, offset = 0x4, fixed_abs, tag = 'smem constant byte address 0x4 - core index']
  #allocation1 [shape = 'u32[144,128]{1,0:T(1,128)}', space=vmem, size = 0x12000, scoped, tag = 'internal scratch']
  %s0 = inlined_call_operand.vmem [shape: bf16[2,2048], index: 0, kind: input, shape index: {}]
  %s1 = inlined_call_operand.vmem [shape: bf16[2048,256], index: 1, kind: input, shape index: {}]
  %s2 = inlined_call_operand.vmem [shape: f32[1,256], index: 2, kind: input, shape index: {}]
  %s3 = inlined_call_operand.vmem [shape: bf16[256,10], index: 3, kind: input, shape index: {}]
  %s4 = inlined_call_operand.vmem [shape: f32[1,10], index: 4, kind: input, shape index: {}]
  %s5 = inlined_call_operand.hbm [shape: f32[2,10], index: 5, kind: output, shape index: {}]
  %s6 = sld [smem:[#allocation0]]
  $region30: #{student_forward.7} parent=0
    _
  %s8 = ssub.s32 1, %s6
  %s9 = scalar_select 0, %s8, %s6
  $region1: #{student_forward.7} parent=0
    #allocation2 [shape = 'u8[1024]{0}', space=vmem, size = 0x400, scoped, tag = 'output window, operand 0, single buffered']
    #allocation3 [shape = 's32[1]{0}', space=sflag, size = 0x4, scoped, tag = 'scoped memory for student_forward.7']
    %10 = vsyncpa [#allocation3], 0
    // Predicated region
    $region2: #{student_forward.7} parent=1 // pred_check
      _
    $region3: #{student_forward.7} parent=1 // pred_check_branch
      %12 = sbr.rel (0) target = $region5
    $region4: #{student_forward.7} parent=1 // pred_region
      _
    $region5: #{student_forward.7} parent=1 // pred_fallthru
      _
    // Predicated region
    $region6: #{student_forward.7} parent=1 // pred_check
      _
    $region7: #{student_forward.7} parent=1 // pred_check_branch
      %14 = sbr.rel (0) target = $region9
    $region8: #{student_forward.7} parent=1 // pred_region
      _
    $region9: #{student_forward.7} parent=1 // pred_fallthru
      _
    // Predicated region
    $region10: #{student_forward.7} parent=1 // pred_check
      _
    $region11: #{student_forward.7} parent=1 // pred_check_branch
      %16 = sbr.rel (0) target = $region13
    $region12: #{student_forward.7} parent=1 // pred_region
      _
    $region13: #{student_forward.7} parent=1 // pred_fallthru
      _
    // Predicated region
    $region14: #{student_forward.7} parent=1 // pred_check
      _
    $region15: #{student_forward.7} parent=1 // pred_check_branch
      %18 = sbr.rel (0) target = $region17
    $region16: #{student_forward.7} parent=1 // pred_region
      _
    $region17: #{student_forward.7} parent=1 // pred_fallthru
      _
    // Predicated region
    $region18: #{student_forward.7} parent=1 // pred_check
      _
    $region19: #{student_forward.7} parent=1 // pred_check_branch
      %20 = sbr.rel (0) target = $region21
    $region20: #{student_forward.7} parent=1 // pred_region
      _
    $region21: #{student_forward.7} parent=1 // pred_fallthru
      _
    %v22 = vld [vmem:[%s0] sm:$0xff]
    %v23 = vld [vmem:[%s0 + $0x8] sm:$0xff]
    %v24 = vld [vmem:[%s1] sm:$0xff]
    %v25 = vld [vmem:[%s1 + $0x8] sm:$0xff]
    %v26 = vld [vmem:[%s1 + $0x10] sm:$0xff]
    %v27 = vld [vmem:[%s1 + $0x18] sm:$0xff]
    %v28 = vld [vmem:[%s1 + $0x20] sm:$0xff]
    %v29 = vld [vmem:[%s1 + $0x28] sm:$0xff]
    %v30 = vld [vmem:[%s1 + $0x30] sm:$0xff]
    %v31 = vld [vmem:[%s1 + $0x38] sm:$0xff]
    %v32 = vld [vmem:[%s1 + $0x40] sm:$0xff]
    %v33 = vld [vmem:[%s1 + $0x48] sm:$0xff]
    %v34 = vld [vmem:[%s1 + $0x50] sm:$0xff]
    %v35 = vld [vmem:[%s1 + $0x58] sm:$0xff]
    %v36 = vld [vmem:[%s1 + $0x60] sm:$0xff]
    %v37 = vld [vmem:[%s1 + $0x68] sm:$0xff]
    %v38 = vld [vmem:[%s1 + $0x70] sm:$0xff]
    %v39 = vld [vmem:[%s1 + $0x78] sm:$0xff]
    %v40 = vld [vmem:[%s1 + $0x80] sm:$0xff]
    %v41 = vld [vmem:[%s1 + $0x88] sm:$0xff]
    %v42 = vld [vmem:[%s1 + $0x90] sm:$0xff]
    %v43 = vld [vmem:[%s1 + $0x98] sm:$0xff]
    %v44 = vld [vmem:[%s1 + $0xa0] sm:$0xff]
    %v45 = vld [vmem:[%s1 + $0xa8] sm:$0xff]
    %v46 = vld [vmem:[%s1 + $0xb0] sm:$0xff]
    %v47 = vld [vmem:[%s1 + $0xb8] sm:$0xff]
    %v48 = vld [vmem:[%s1 + $0xc0] sm:$0xff]
    %v49 = vld [vmem:[%s1 + $0xc8] sm:$0xff]
    %v50 = vld [vmem:[%s1 + $0xd0] sm:$0xff]
    %v51 = vld [vmem:[%s1 + $0xd8] sm:$0xff]
    %v52 = vld [vmem:[%s1 + $0xe0] sm:$0xff]
    %v53 = vld [vmem:[%s1 + $0xe8] sm:$0xff]
    %v54 = vld [vmem:[%s1 + $0xf0] sm:$0xff]
    %v55 = vld [vmem:[%s1 + $0xf8] sm:$0xff]
    %v56 = vld [vmem:[%s1 + $0x100] sm:$0xff]
    %v57 = vld [vmem:[%s1 + $0x108] sm:$0xff]
    %v58 = vld [vmem:[%s1 + $0x110] sm:$0xff]
    %v59 = vld [vmem:[%s1 + $0x118] sm:$0xff]
    %v60 = vld [vmem:[%s1 + $0x120] sm:$0xff]
    %v61 = vld [vmem:[%s1 + $0x128] sm:$0xff]
    %v62 = vld [vmem:[%s1 + $0x130] sm:$0xff]
    %v63 = vld [vmem:[%s1 + $0x138] sm:$0xff]
    %v64 = vld [vmem:[%s1 + $0x140] sm:$0xff]
    %v65 = vld [vmem:[%s1 + $0x148] sm:$0xff]
    %v66 = vld [vmem:[%s1 + $0x150] sm:$0xff]
    %v67 = vld [vmem:[%s1 + $0x158] sm:$0xff]
    %v68 = vld [vmem:[%s1 + $0x160] sm:$0xff]
    %v69 = vld [vmem:[%s1 + $0x168] sm:$0xff]
    %v70 = vld [vmem:[%s1 + $0x170] sm:$0xff]
    %v71 = vld [vmem:[%s1 + $0x178] sm:$0xff]
    %v72 = vld [vmem:[%s1 + $0x180] sm:$0xff]
    %v73 = vld [vmem:[%s1 + $0x188] sm:$0xff]
    %v74 = vld [vmem:[%s1 + $0x190] sm:$0xff]
    %v75 = vld [vmem:[%s1 + $0x198] sm:$0xff]
    %v76 = vld [vmem:[%s1 + $0x1a0] sm:$0xff]
    %v77 = vld [vmem:[%s1 + $0x1a8] sm:$0xff]
    %v78 = vld [vmem:[%s1 + $0x1b0] sm:$0xff]
    %v79 = vld [vmem:[%s1 + $0x1b8] sm:$0xff]
    %v80 = vld [vmem:[%s1 + $0x1c0] sm:$0xff]
    %v81 = vld [vmem:[%s1 + $0x1c8] sm:$0xff]
    %v82 = vld [vmem:[%s1 + $0x1d0] sm:$0xff]
    %v83 = vld [vmem:[%s1 + $0x1d8] sm:$0xff]
    %v84 = vld [vmem:[%s1 + $0x1e0] sm:$0xff]
    %v85 = vld [vmem:[%s1 + $0x1e8] sm:$0xff]
    %v86 = vld [vmem:[%s1 + $0x1f0] sm:$0xff]
    %v87 = vld [vmem:[%s1 + $0x1f8] sm:$0xff]
    %v88 = vld [vmem:[%s1 + $0x200] sm:$0xff]
    %v89 = vld [vmem:[%s1 + $0x208] sm:$0xff]
    %v90 = vld [vmem:[%s1 + $0x210] sm:$0xff]
    %v91 = vld [vmem:[%s1 + $0x218] sm:$0xff]
    %v92 = vld [vmem:[%s1 + $0x220] sm:$0xff]
    %v93 = vld [vmem:[%s1 + $0x228] sm:$0xff]
    %v94 = vld [vmem:[%s1 + $0x230] sm:$0xff]
    %v95 = vld [vmem:[%s1 + $0x238] sm:$0xff]
    %v96 = vld [vmem:[%s1 + $0x240] sm:$0xff]
    %v97 = vld [vmem:[%s1 + $0x248] sm:$0xff]
    %v98 = vld [vmem:[%s1 + $0x250] sm:$0xff]
    %v99 = vld [vmem:[%s1 + $0x258] sm:$0xff]
    %v100 = vld [vmem:[%s1 + $0x260] sm:$0xff]
    %v101 = vld [vmem:[%s1 + $0x268] sm:$0xff]
    %v102 = vld [vmem:[%s1 + $0x270] sm:$0xff]
    %v103 = vld [vmem:[%s1 + $0x278] sm:$0xff]
    %v104 = vld [vmem:[%s1 + $0x280] sm:$0xff]
    %v105 = vld [vmem:[%s1 + $0x288] sm:$0xff]
    %v106 = vld [vmem:[%s1 + $0x290] sm:$0xff]
    %v107 = vld [vmem:[%s1 + $0x298] sm:$0xff]
    %v108 = vld [vmem:[%s1 + $0x2a0] sm:$0xff]
    %v109 = vld [vmem:[%s1 + $0x2a8] sm:$0xff]
    %v110 = vld [vmem:[%s1 + $0x2b0] sm:$0xff]
    %v111 = vld [vmem:[%s1 + $0x2b8] sm:$0xff]
    %v112 = vld [vmem:[%s1 + $0x2c0] sm:$0xff]
    %v113 = vld [vmem:[%s1 + $0x2c8] sm:$0xff]
    %v114 = vld [vmem:[%s1 + $0x2d0] sm:$0xff]
    %v115 = vld [vmem:[%s1 + $0x2d8] sm:$0xff]
    %v116 = vld [vmem:[%s1 + $0x2e0] sm:$0xff]
    %v117 = vld [vmem:[%s1 + $0x2e8] sm:$0xff]
    %v118 = vld [vmem:[%s1 + $0x2f0] sm:$0xff]
    %v119 = vld [vmem:[%s1 + $0x2f8] sm:$0xff]
    %v120 = vld [vmem:[%s1 + $0x300] sm:$0xff]
    %v121 = vld [vmem:[%s1 + $0x308] sm:$0xff]
    %v122 = vld [vmem:[%s1 + $0x310] sm:$0xff]
    %v123 = vld [vmem:[%s1 + $0x318] sm:$0xff]
    %v124 = vld [vmem:[%s1 + $0x320] sm:$0xff]
    %v125 = vld [vmem:[%s1 + $0x328] sm:$0xff]
    %v126 = vld [vmem:[%s1 + $0x330] sm:$0xff]
    %v127 = vld [vmem:[%s1 + $0x338] sm:$0xff]
    %v128 = vld [vmem:[%s1 + $0x340] sm:$0xff]
    %v129 = vld [vmem:[%s1 + $0x348] sm:$0xff]
    %v130 = vld [vmem:[%s1 + $0x350] sm:$0xff]
    %v131 = vld [vmem:[%s1 + $0x358] sm:$0xff]
    %v132 = vld [vmem:[%s1 + $0x360] sm:$0xff]
    %v133 = vld [vmem:[%s1 + $0x368] sm:$0xff]
    %v134 = vld [vmem:[%s1 + $0x370] sm:$0xff]
    %v135 = vld [vmem:[%s1 + $0x378] sm:$0xff]
    %v136 = vld [vmem:[%s1 + $0x380] sm:$0xff]
    %v137 = vld [vmem:[%s1 + $0x388] sm:$0xff]
    %v138 = vld [vmem:[%s1 + $0x390] sm:$0xff]
    %v139 = vld [vmem:[%s1 + $0x398] sm:$0xff]
    %v140 = vld [vmem:[%s1 + $0x3a0] sm:$0xff]
    %v141 = vld [vmem:[%s1 + $0x3a8] sm:$0xff]
    %v142 = vld [vmem:[%s1 + $0x3b0] sm:$0xff]
    %v143 = vld [vmem:[%s1 + $0x3b8] sm:$0xff]
    %v144 = vld [vmem:[%s1 + $0x3c0] sm:$0xff]
    %v145 = vld [vmem:[%s1 + $0x3c8] sm:$0xff]
    %v146 = vld [vmem:[%s1 + $0x3d0] sm:$0xff]
    %v147 = vld [vmem:[%s1 + $0x3d8] sm:$0xff]
    %v148 = vld [vmem:[%s1 + $0x3e0] sm:$0xff]
    %v149 = vld [vmem:[%s1 + $0x3e8] sm:$0xff]
    %v150 = vld [vmem:[%s1 + $0x3f0] sm:$0xff]
    %v151 = vld [vmem:[%s1 + $0x3f8] sm:$0xff]
    %v152 = vld [vmem:[%s1 + $0x400] sm:$0xff]
    %v153 = vld [vmem:[%s1 + $0x408] sm:$0xff]
    %v154 = vld [vmem:[%s1 + $0x410] sm:$0xff]
    %v155 = vld [vmem:[%s1 + $0x418] sm:$0xff]
    %v156 = vld [vmem:[%s1 + $0x420] sm:$0xff]
    %v157 = vld [vmem:[%s1 + $0x428] sm:$0xff]
    %v158 = vld [vmem:[%s1 + $0x430] sm:$0xff]
    %v159 = vld [vmem:[%s1 + $0x438] sm:$0xff]
    %v160 = vld [vmem:[%s1 + $0x440] sm:$0xff]
    %v161 = vld [vmem:[%s1 + $0x448] sm:$0xff]
    %v162 = vld [vmem:[%s1 + $0x450] sm:$0xff]
    %v163 = vld [vmem:[%s1 + $0x458] sm:$0xff]
    %v164 = vld [vmem:[%s1 + $0x460] sm:$0xff]
    %v165 = vld [vmem:[%s1 + $0x468] sm:$0xff]
    %v166 = vld [vmem:[%s1 + $0x470] sm:$0xff]
    %v167 = vld [vmem:[%s1 + $0x478] sm:$0xff]
    %v168 = vld [vmem:[%s1 + $0x480] sm:$0xff]
    %v169 = vld [vmem:[%s1 + $0x488] sm:$0xff]
    %v170 = vld [vmem:[%s1 + $0x490] sm:$0xff]
    %v171 = vld [vmem:[%s1 + $0x498] sm:$0xff]
    %v172 = vld [vmem:[%s1 + $0x4a0] sm:$0xff]
    %v173 = vld [vmem:[%s1 + $0x4a8] sm:$0xff]
    %v174 = vld [vmem:[%s1 + $0x4b0] sm:$0xff]
    %v175 = vld [vmem:[%s1 + $0x4b8] sm:$0xff]
    %v176 = vld [vmem:[%s1 + $0x4c0] sm:$0xff]
    %v177 = vld [vmem:[%s1 + $0x4c8] sm:$0xff]
    %v178 = vld [vmem:[%s1 + $0x4d0] sm:$0xff]
    %v179 = vld [vmem:[%s1 + $0x4d8] sm:$0xff]
    %v180 = vld [vmem:[%s1 + $0x4e0] sm:$0xff]
    %v181 = vld [vmem:[%s1 + $0x4e8] sm:$0xff]
    %v182 = vld [vmem:[%s1 + $0x4f0] sm:$0xff]
    %v183 = vld [vmem:[%s1 + $0x4f8] sm:$0xff]
    %v184 = vld [vmem:[%s1 + $0x500] sm:$0xff]
    %v185 = vld [vmem:[%s1 + $0x508] sm:$0xff]
    %v186 = vld [vmem:[%s1 + $0x510] sm:$0xff]
    %v187 = vld [vmem:[%s1 + $0x518] sm:$0xff]
    %v188 = vld [vmem:[%s1 + $0x520] sm:$0xff]
    %v189 = vld [vmem:[%s1 + $0x528] sm:$0xff]
    %v190 = vld [vmem:[%s1 + $0x530] sm:$0xff]
    %v191 = vld [vmem:[%s1 + $0x538] sm:$0xff]
    %v192 = vld [vmem:[%s1 + $0x540] sm:$0xff]
    %v193 = vld [vmem:[%s1 + $0x548] sm:$0xff]
    %v194 = vld [vmem:[%s1 + $0x550] sm:$0xff]
    %v195 = vld [vmem:[%s1 + $0x558] sm:$0xff]
    %v196 = vld [vmem:[%s1 + $0x560] sm:$0xff]
    %v197 = vld [vmem:[%s1 + $0x568] sm:$0xff]
    %v198 = vld [vmem:[%s1 + $0x570] sm:$0xff]
    %v199 = vld [vmem:[%s1 + $0x578] sm:$0xff]
    %v200 = vld [vmem:[%s1 + $0x580] sm:$0xff]
    %v201 = vld [vmem:[%s1 + $0x588] sm:$0xff]
    %v202 = vld [vmem:[%s1 + $0x590] sm:$0xff]
    %v203 = vld [vmem:[%s1 + $0x598] sm:$0xff]
    %v204 = vld [vmem:[%s1 + $0x5a0] sm:$0xff]
    %v205 = vld [vmem:[%s1 + $0x5a8] sm:$0xff]
    %v206 = vld [vmem:[%s1 + $0x5b0] sm:$0xff]
    %v207 = vld [vmem:[%s1 + $0x5b8] sm:$0xff]
    %v208 = vld [vmem:[%s1 + $0x5c0] sm:$0xff]
    %v209 = vld [vmem:[%s1 + $0x5c8] sm:$0xff]
    %v210 = vld [vmem:[%s1 + $0x5d0] sm:$0xff]
    %v211 = vld [vmem:[%s1 + $0x5d8] sm:$0xff]
    %v212 = vld [vmem:[%s1 + $0x5e0] sm:$0xff]
    %v213 = vld [vmem:[%s1 + $0x5e8] sm:$0xff]
    %v214 = vld [vmem:[%s1 + $0x5f0] sm:$0xff]
    %v215 = vld [vmem:[%s1 + $0x5f8] sm:$0xff]
    %v216 = vld [vmem:[%s1 + $0x600] sm:$0xff]
    %v217 = vld [vmem:[%s1 + $0x608] sm:$0xff]
    %v218 = vld [vmem:[%s1 + $0x610] sm:$0xff]
    %v219 = vld [vmem:[%s1 + $0x618] sm:$0xff]
    %v220 = vld [vmem:[%s1 + $0x620] sm:$0xff]
    %v221 = vld [vmem:[%s1 + $0x628] sm:$0xff]
    %v222 = vld [vmem:[%s1 + $0x630] sm:$0xff]
    %v223 = vld [vmem:[%s1 + $0x638] sm:$0xff]
    %v224 = vld [vmem:[%s1 + $0x640] sm:$0xff]
    %v225 = vld [vmem:[%s1 + $0x648] sm:$0xff]
    %v226 = vld [vmem:[%s1 + $0x650] sm:$0xff]
    %v227 = vld [vmem:[%s1 + $0x658] sm:$0xff]
    %v228 = vld [vmem:[%s1 + $0x660] sm:$0xff]
    %v229 = vld [vmem:[%s1 + $0x668] sm:$0xff]
    %v230 = vld [vmem:[%s1 + $0x670] sm:$0xff]
    %v231 = vld [vmem:[%s1 + $0x678] sm:$0xff]
    %v232 = vld [vmem:[%s1 + $0x680] sm:$0xff]
    %v233 = vld [vmem:[%s1 + $0x688] sm:$0xff]
    %v234 = vld [vmem:[%s1 + $0x690] sm:$0xff]
    %v235 = vld [vmem:[%s1 + $0x698] sm:$0xff]
    %v236 = vld [vmem:[%s1 + $0x6a0] sm:$0xff]
    %v237 = vld [vmem:[%s1 + $0x6a8] sm:$0xff]
    %v238 = vld [vmem:[%s1 + $0x6b0] sm:$0xff]
    %v239 = vld [vmem:[%s1 + $0x6b8] sm:$0xff]
    %v240 = vld [vmem:[%s1 + $0x6c0] sm:$0xff]
    %v241 = vld [vmem:[%s1 + $0x6c8] sm:$0xff]
    %v242 = vld [vmem:[%s1 + $0x6d0] sm:$0xff]
    %v243 = vld [vmem:[%s1 + $0x6d8] sm:$0xff]
    %v244 = vld [vmem:[%s1 + $0x6e0] sm:$0xff]
    %v245 = vld [vmem:[%s1 + $0x6e8] sm:$0xff]
    %v246 = vld [vmem:[%s1 + $0x6f0] sm:$0xff]
    %v247 = vld [vmem:[%s1 + $0x6f8] sm:$0xff]
    %v248 = vld [vmem:[%s1 + $0x700] sm:$0xff]
    %v249 = vld [vmem:[%s1 + $0x708] sm:$0xff]
    %v250 = vld [vmem:[%s1 + $0x710] sm:$0xff]
    %v251 = vld [vmem:[%s1 + $0x718] sm:$0xff]
    %v252 = vld [vmem:[%s1 + $0x720] sm:$0xff]
    %v253 = vld [vmem:[%s1 + $0x728] sm:$0xff]
    %v254 = vld [vmem:[%s1 + $0x730] sm:$0xff]
    %v255 = vld [vmem:[%s1 + $0x738] sm:$0xff]
    %v256 = vld [vmem:[%s1 + $0x740] sm:$0xff]
    %v257 = vld [vmem:[%s1 + $0x748] sm:$0xff]
    %v258 = vld [vmem:[%s1 + $0x750] sm:$0xff]
    %v259 = vld [vmem:[%s1 + $0x758] sm:$0xff]
    %v260 = vld [vmem:[%s1 + $0x760] sm:$0xff]
    %v261 = vld [vmem:[%s1 + $0x768] sm:$0xff]
    %v262 = vld [vmem:[%s1 + $0x770] sm:$0xff]
    %v263 = vld [vmem:[%s1 + $0x778] sm:$0xff]
    %v264 = vld [vmem:[%s1 + $0x780] sm:$0xff]
    %v265 = vld [vmem:[%s1 + $0x788] sm:$0xff]
    %v266 = vld [vmem:[%s1 + $0x790] sm:$0xff]
    %v267 = vld [vmem:[%s1 + $0x798] sm:$0xff]
    %v268 = vld [vmem:[%s1 + $0x7a0] sm:$0xff]
    %v269 = vld [vmem:[%s1 + $0x7a8] sm:$0xff]
    %v270 = vld [vmem:[%s1 + $0x7b0] sm:$0xff]
    %v271 = vld [vmem:[%s1 + $0x7b8] sm:$0xff]
    %v272 = vld [vmem:[%s1 + $0x7c0] sm:$0xff]
    %v273 = vld [vmem:[%s1 + $0x7c8] sm:$0xff]
    %v274 = vld [vmem:[%s1 + $0x7d0] sm:$0xff]
    %v275 = vld [vmem:[%s1 + $0x7d8] sm:$0xff]
    %v276 = vld [vmem:[%s1 + $0x7e0] sm:$0xff]
    %v277 = vld [vmem:[%s1 + $0x7e8] sm:$0xff]
    %v278 = vld [vmem:[%s1 + $0x7f0] sm:$0xff]
    %v279 = vld [vmem:[%s1 + $0x7f8] sm:$0xff]
    %v280 = vld [vmem:[%s2] sm:$0x3]
    %v282 = vlaneseq
    %v283 = vshrl.u32 %v282, 7
    %v284 = vsub.s32 0, %v283
    %v285 = vrot.slane %v280, %v284
    %v286 = vlaneseq
    %v287 = vshrl.u32 %v286, 7
    %v288 = vsub.s32 1, %v287
    %v289 = vrot.slane %v280, %v288
    %v294 = vcombine.high %v22, %v22
    %v296 = vunpack.c.l.s4 1966171168
    %v297 = vunpack.c.0.s8 %v296
    %v298 = vlaneseq
    %v299 = vshrl.u32 %v298, 7
    %v300 = vsub.s32 %v297, %v299
    %v301 = vrot.slane %v22, %v300
    %v303 = vunpack.c.l.s4 1966171168
    %v304 = vunpack.c.0.s8 %v303
    %v305 = vlaneseq
    %v306 = vshrl.u32 %v305, 7
    %v307 = vsub.s32 %v304, %v306
    %v308 = vrot.slane %v294, %v307
    %v309 = vcombine.high %v301, %v301
    %v310 = vcombine.high %v308, %v308
    %v312 = vunpack.c.l.s4 1966171168
    %v313 = vunpack.c.0.s8 %v312
    %v314 = vlaneseq
    %v315 = vshrl.u32 %v314, 7
    %v316 = vsub.s32 %v313, %v315
    %v317 = vrot.slane %v301, %v316
    %v319 = vunpack.c.l.s4 1966171168
    %v320 = vunpack.c.0.s8 %v319
    %v321 = vlaneseq
    %v322 = vshrl.u32 %v321, 7
    %v323 = vsub.s32 %v320, %v322
    %v324 = vrot.slane %v308, %v323
    %v326 = vunpack.c.l.s4 1966171168
    %v327 = vunpack.c.0.s8 %v326
    %v328 = vlaneseq
    %v329 = vshrl.u32 %v328, 7
    %v330 = vsub.s32 %v327, %v329
    %v331 = vrot.slane %v309, %v330
    %v333 = vunpack.c.l.s4 1966171168
    %v334 = vunpack.c.0.s8 %v333
    %v335 = vlaneseq
    %v336 = vshrl.u32 %v335, 7
    %v337 = vsub.s32 %v334, %v336
    %v338 = vrot.slane %v310, %v337
    %v339 = vcombine.high %v317, %v317
    %v340 = vcombine.high %v324, %v324
    %v341 = vcombine.high %v331, %v331
    %v342 = vcombine.high %v338, %v338
    %v343 = vcombine.high %v23, %v23
    %v345 = vunpack.c.l.s4 1966171168
    %v346 = vunpack.c.0.s8 %v345
    %v347 = vlaneseq
    %v348 = vshrl.u32 %v347, 7
    %v349 = vsub.s32 %v346, %v348
    %v350 = vrot.slane %v23, %v349
    %v352 = vunpack.c.l.s4 1966171168
    %v353 = vunpack.c.0.s8 %v352
    %v354 = vlaneseq
    %v355 = vshrl.u32 %v354, 7
    %v356 = vsub.s32 %v353, %v355
    %v357 = vrot.slane %v343, %v356
    %v358 = vcombine.high %v350, %v350
    %v359 = vcombine.high %v357, %v357
    %v361 = vunpack.c.l.s4 1966171168
    %v362 = vunpack.c.0.s8 %v361
    %v363 = vlaneseq
    %v364 = vshrl.u32 %v363, 7
    %v365 = vsub.s32 %v362, %v364
    %v366 = vrot.slane %v350, %v365
    %v368 = vunpack.c.l.s4 1966171168
    %v369 = vunpack.c.0.s8 %v368
    %v370 = vlaneseq
    %v371 = vshrl.u32 %v370, 7
    %v372 = vsub.s32 %v369, %v371
    %v373 = vrot.slane %v357, %v372
    %v375 = vunpack.c.l.s4 1966171168
    %v376 = vunpack.c.0.s8 %v375
    %v377 = vlaneseq
    %v378 = vshrl.u32 %v377, 7
    %v379 = vsub.s32 %v376, %v378
    %v380 = vrot.slane %v358, %v379
    %v382 = vunpack.c.l.s4 1966171168
    %v383 = vunpack.c.0.s8 %v382
    %v384 = vlaneseq
    %v385 = vshrl.u32 %v384, 7
    %v386 = vsub.s32 %v383, %v385
    %v387 = vrot.slane %v359, %v386
    %v388 = vcombine.high %v366, %v366
    %v389 = vcombine.high %v373, %v373
    %v390 = vcombine.high %v380, %v380
    %v391 = vcombine.high %v387, %v387
    %v664 = vunpack.c.l.b16 %v24
    %v665 = vunpack.c.h.b16 %v24
    %v666 = vunpack.c.l.b16 %v25
    %v667 = vunpack.c.h.b16 %v25
    %v668 = vunpack.c.l.b16 %v26
    %v669 = vunpack.c.h.b16 %v26
    %v670 = vunpack.c.l.b16 %v27
    %v671 = vunpack.c.h.b16 %v27
    %v672 = vunpack.c.l.b16 %v28
    %v673 = vunpack.c.h.b16 %v28
    %v674 = vunpack.c.l.b16 %v29
    %v675 = vunpack.c.h.b16 %v29
    %v676 = vunpack.c.l.b16 %v30
    %v677 = vunpack.c.h.b16 %v30
    %v678 = vunpack.c.l.b16 %v31
    %v679 = vunpack.c.h.b16 %v31
    %v680 = vunpack.c.l.b16 %v32
    %v681 = vunpack.c.h.b16 %v32
    %v682 = vunpack.c.l.b16 %v33
    %v683 = vunpack.c.h.b16 %v33
    %v684 = vunpack.c.l.b16 %v34
    %v685 = vunpack.c.h.b16 %v34
    %v686 = vunpack.c.l.b16 %v35
    %v687 = vunpack.c.h.b16 %v35
    %v688 = vunpack.c.l.b16 %v36
    %v689 = vunpack.c.h.b16 %v36
    %v690 = vunpack.c.l.b16 %v37
    %v691 = vunpack.c.h.b16 %v37
    %v692 = vunpack.c.l.b16 %v38
    %v693 = vunpack.c.h.b16 %v38
    %v694 = vunpack.c.l.b16 %v39
    %v695 = vunpack.c.h.b16 %v39
    %v696 = vunpack.c.l.b16 %v40
    %v697 = vunpack.c.h.b16 %v40
    %v698 = vunpack.c.l.b16 %v41
    %v699 = vunpack.c.h.b16 %v41
    %v700 = vunpack.c.l.b16 %v42
    %v701 = vunpack.c.h.b16 %v42
    %v702 = vunpack.c.l.b16 %v43
    %v703 = vunpack.c.h.b16 %v43
    %v704 = vunpack.c.l.b16 %v44
    %v705 = vunpack.c.h.b16 %v44
    %v706 = vunpack.c.l.b16 %v45
    %v707 = vunpack.c.h.b16 %v45
    %v708 = vunpack.c.l.b16 %v46
    %v709 = vunpack.c.h.b16 %v46
    %v710 = vunpack.c.l.b16 %v47
    %v711 = vunpack.c.h.b16 %v47
    %v712 = vunpack.c.l.b16 %v48
    %v713 = vunpack.c.h.b16 %v48
    %v714 = vunpack.c.l.b16 %v49
    %v715 = vunpack.c.h.b16 %v49
    %v716 = vunpack.c.l.b16 %v50
    %v717 = vunpack.c.h.b16 %v50
    %v718 = vunpack.c.l.b16 %v51
    %v719 = vunpack.c.h.b16 %v51
    %v720 = vunpack.c.l.b16 %v52
    %v721 = vunpack.c.h.b16 %v52
    %v722 = vunpack.c.l.b16 %v53
    %v723 = vunpack.c.h.b16 %v53
    %v724 = vunpack.c.l.b16 %v54
    %v725 = vunpack.c.h.b16 %v54
    %v726 = vunpack.c.l.b16 %v55
    %v727 = vunpack.c.h.b16 %v55
    %v728 = vunpack.c.l.b16 %v56
    %v729 = vunpack.c.h.b16 %v56
    %v730 = vunpack.c.l.b16 %v57
    %v731 = vunpack.c.h.b16 %v57
    %v732 = vunpack.c.l.b16 %v58
    %v733 = vunpack.c.h.b16 %v58
    %v734 = vunpack.c.l.b16 %v59
    %v735 = vunpack.c.h.b16 %v59
    %v736 = vunpack.c.l.b16 %v60
    %v737 = vunpack.c.h.b16 %v60
    %v738 = vunpack.c.l.b16 %v61
    %v739 = vunpack.c.h.b16 %v61
    %v740 = vunpack.c.l.b16 %v62
    %v741 = vunpack.c.h.b16 %v62
    %v742 = vunpack.c.l.b16 %v63
    %v743 = vunpack.c.h.b16 %v63
    %v744 = vunpack.c.l.b16 %v64
    %v745 = vunpack.c.h.b16 %v64
    %v746 = vunpack.c.l.b16 %v65
    %v747 = vunpack.c.h.b16 %v65
    %v748 = vunpack.c.l.b16 %v66
    %v749 = vunpack.c.h.b16 %v66
    %v750 = vunpack.c.l.b16 %v67
    %v751 = vunpack.c.h.b16 %v67
    %v752 = vunpack.c.l.b16 %v68
    %v753 = vunpack.c.h.b16 %v68
    %v754 = vunpack.c.l.b16 %v69
    %v755 = vunpack.c.h.b16 %v69
    %v756 = vunpack.c.l.b16 %v70
    %v757 = vunpack.c.h.b16 %v70
    %v758 = vunpack.c.l.b16 %v71
    %v759 = vunpack.c.h.b16 %v71
    %v760 = vunpack.c.l.b16 %v72
    %v761 = vunpack.c.h.b16 %v72
    %v762 = vunpack.c.l.b16 %v73
    %v763 = vunpack.c.h.b16 %v73
    %v764 = vunpack.c.l.b16 %v74
    %v765 = vunpack.c.h.b16 %v74
    %v766 = vunpack.c.l.b16 %v75
    %v767 = vunpack.c.h.b16 %v75
    %v768 = vunpack.c.l.b16 %v76
    %v769 = vunpack.c.h.b16 %v76
    %v770 = vunpack.c.l.b16 %v77
    %v771 = vunpack.c.h.b16 %v77
    %v772 = vunpack.c.l.b16 %v78
    %v773 = vunpack.c.h.b16 %v78
    %v774 = vunpack.c.l.b16 %v79
    %v775 = vunpack.c.h.b16 %v79
    %v776 = vunpack.c.l.b16 %v80
    %v777 = vunpack.c.h.b16 %v80
    %v778 = vunpack.c.l.b16 %v81
    %v779 = vunpack.c.h.b16 %v81
    %v780 = vunpack.c.l.b16 %v82
    %v781 = vunpack.c.h.b16 %v82
    %v782 = vunpack.c.l.b16 %v83
    %v783 = vunpack.c.h.b16 %v83
    %v784 = vunpack.c.l.b16 %v84
    %v785 = vunpack.c.h.b16 %v84
    %v786 = vunpack.c.l.b16 %v85
    %v787 = vunpack.c.h.b16 %v85
    %v788 = vunpack.c.l.b16 %v86
    %v789 = vunpack.c.h.b16 %v86
    %v790 = vunpack.c.l.b16 %v87
    %v791 = vunpack.c.h.b16 %v87
    %v792 = vunpack.c.l.b16 %v88
    %v793 = vunpack.c.h.b16 %v88
    %v794 = vunpack.c.l.b16 %v89
    %v795 = vunpack.c.h.b16 %v89
    %v796 = vunpack.c.l.b16 %v90
    %v797 = vunpack.c.h.b16 %v90
    %v798 = vunpack.c.l.b16 %v91
    %v799 = vunpack.c.h.b16 %v91
    %v800 = vunpack.c.l.b16 %v92
    %v801 = vunpack.c.h.b16 %v92
    %v802 = vunpack.c.l.b16 %v93
    %v803 = vunpack.c.h.b16 %v93
    %v804 = vunpack.c.l.b16 %v94
    %v805 = vunpack.c.h.b16 %v94
    %v806 = vunpack.c.l.b16 %v95
    %v807 = vunpack.c.h.b16 %v95
    %v808 = vunpack.c.l.b16 %v96
    %v809 = vunpack.c.h.b16 %v96
    %v810 = vunpack.c.l.b16 %v97
    %v811 = vunpack.c.h.b16 %v97
    %v812 = vunpack.c.l.b16 %v98
    %v813 = vunpack.c.h.b16 %v98
    %v814 = vunpack.c.l.b16 %v99
    %v815 = vunpack.c.h.b16 %v99
    %v816 = vunpack.c.l.b16 %v100
    %v817 = vunpack.c.h.b16 %v100
    %v818 = vunpack.c.l.b16 %v101
    %v819 = vunpack.c.h.b16 %v101
    %v820 = vunpack.c.l.b16 %v102
    %v821 = vunpack.c.h.b16 %v102
    %v822 = vunpack.c.l.b16 %v103
    %v823 = vunpack.c.h.b16 %v103
    %v824 = vunpack.c.l.b16 %v104
    %v825 = vunpack.c.h.b16 %v104
    %v826 = vunpack.c.l.b16 %v105
    %v827 = vunpack.c.h.b16 %v105
    %v828 = vunpack.c.l.b16 %v106
    %v829 = vunpack.c.h.b16 %v106
    %v830 = vunpack.c.l.b16 %v107
    %v831 = vunpack.c.h.b16 %v107
    %v832 = vunpack.c.l.b16 %v108
    %v833 = vunpack.c.h.b16 %v108
    %v834 = vunpack.c.l.b16 %v109
    %v835 = vunpack.c.h.b16 %v109
    %v836 = vunpack.c.l.b16 %v110
    %v837 = vunpack.c.h.b16 %v110
    %v838 = vunpack.c.l.b16 %v111
    %v839 = vunpack.c.h.b16 %v111
    %v840 = vunpack.c.l.b16 %v112
    %v841 = vunpack.c.h.b16 %v112
    %v842 = vunpack.c.l.b16 %v113
    %v843 = vunpack.c.h.b16 %v113
    %v844 = vunpack.c.l.b16 %v114
    %v845 = vunpack.c.h.b16 %v114
    %v846 = vunpack.c.l.b16 %v115
    %v847 = vunpack.c.h.b16 %v115
    %v848 = vunpack.c.l.b16 %v116
    %v849 = vunpack.c.h.b16 %v116
    %v850 = vunpack.c.l.b16 %v117
    %v851 = vunpack.c.h.b16 %v117
    %v852 = vunpack.c.l.b16 %v118
    %v853 = vunpack.c.h.b16 %v118
    %v854 = vunpack.c.l.b16 %v119
    %v855 = vunpack.c.h.b16 %v119
    %v856 = vunpack.c.l.b16 %v120
    %v857 = vunpack.c.h.b16 %v120
    %v858 = vunpack.c.l.b16 %v121
    %v859 = vunpack.c.h.b16 %v121
    %v860 = vunpack.c.l.b16 %v122
    %v861 = vunpack.c.h.b16 %v122
    %v862 = vunpack.c.l.b16 %v123
    %v863 = vunpack.c.h.b16 %v123
    %v864 = vunpack.c.l.b16 %v124
    %v865 = vunpack.c.h.b16 %v124
    %v866 = vunpack.c.l.b16 %v125
    %v867 = vunpack.c.h.b16 %v125
    %v868 = vunpack.c.l.b16 %v126
    %v869 = vunpack.c.h.b16 %v126
    %v870 = vunpack.c.l.b16 %v127
    %v871 = vunpack.c.h.b16 %v127
    %v872 = vunpack.c.l.b16 %v128
    %v873 = vunpack.c.h.b16 %v128
    %v874 = vunpack.c.l.b16 %v129
    %v875 = vunpack.c.h.b16 %v129
    %v876 = vunpack.c.l.b16 %v130
    %v877 = vunpack.c.h.b16 %v130
    %v878 = vunpack.c.l.b16 %v131
    %v879 = vunpack.c.h.b16 %v131
    %v880 = vunpack.c.l.b16 %v132
    %v881 = vunpack.c.h.b16 %v132
    %v882 = vunpack.c.l.b16 %v133
    %v883 = vunpack.c.h.b16 %v133
    %v884 = vunpack.c.l.b16 %v134
    %v885 = vunpack.c.h.b16 %v134
    %v886 = vunpack.c.l.b16 %v135
    %v887 = vunpack.c.h.b16 %v135
    %v888 = vunpack.c.l.b16 %v136
    %v889 = vunpack.c.h.b16 %v136
    %v890 = vunpack.c.l.b16 %v137
    %v891 = vunpack.c.h.b16 %v137
    %v892 = vunpack.c.l.b16 %v138
    %v893 = vunpack.c.h.b16 %v138
    %v894 = vunpack.c.l.b16 %v139
    %v895 = vunpack.c.h.b16 %v139
    %v896 = vunpack.c.l.b16 %v140
    %v897 = vunpack.c.h.b16 %v140
    %v898 = vunpack.c.l.b16 %v141
    %v899 = vunpack.c.h.b16 %v141
    %v900 = vunpack.c.l.b16 %v142
    %v901 = vunpack.c.h.b16 %v142
    %v902 = vunpack.c.l.b16 %v143
    %v903 = vunpack.c.h.b16 %v143
    %v904 = vunpack.c.l.b16 %v144
    %v905 = vunpack.c.h.b16 %v144
    %v906 = vunpack.c.l.b16 %v145
    %v907 = vunpack.c.h.b16 %v145
    %v908 = vunpack.c.l.b16 %v146
    %v909 = vunpack.c.h.b16 %v146
    %v910 = vunpack.c.l.b16 %v147
    %v911 = vunpack.c.h.b16 %v147
    %v912 = vunpack.c.l.b16 %v148
    %v913 = vunpack.c.h.b16 %v148
    %v914 = vunpack.c.l.b16 %v149
    %v915 = vunpack.c.h.b16 %v149
    %v916 = vunpack.c.l.b16 %v150
    %v917 = vunpack.c.h.b16 %v150
    %v918 = vunpack.c.l.b16 %v151
    %v919 = vunpack.c.h.b16 %v151
    %v920 = vunpack.c.l.b16 %v152
    %v921 = vunpack.c.h.b16 %v152
    %v922 = vunpack.c.l.b16 %v153
    %v923 = vunpack.c.h.b16 %v153
    %v924 = vunpack.c.l.b16 %v154
    %v925 = vunpack.c.h.b16 %v154
    %v926 = vunpack.c.l.b16 %v155
    %v927 = vunpack.c.h.b16 %v155
    %v928 = vunpack.c.l.b16 %v156
    %v929 = vunpack.c.h.b16 %v156
    %v930 = vunpack.c.l.b16 %v157
    %v931 = vunpack.c.h.b16 %v157
    %v932 = vunpack.c.l.b16 %v158
    %v933 = vunpack.c.h.b16 %v158
    %v934 = vunpack.c.l.b16 %v159
    %v935 = vunpack.c.h.b16 %v159
    %v936 = vunpack.c.l.b16 %v160
    %v937 = vunpack.c.h.b16 %v160
    %v938 = vunpack.c.l.b16 %v161
    %v939 = vunpack.c.h.b16 %v161
    %v940 = vunpack.c.l.b16 %v162
    %v941 = vunpack.c.h.b16 %v162
    %v942 = vunpack.c.l.b16 %v163
    %v943 = vunpack.c.h.b16 %v163
    %v944 = vunpack.c.l.b16 %v164
    %v945 = vunpack.c.h.b16 %v164
    %v946 = vunpack.c.l.b16 %v165
    %v947 = vunpack.c.h.b16 %v165
    %v948 = vunpack.c.l.b16 %v166
    %v949 = vunpack.c.h.b16 %v166
    %v950 = vunpack.c.l.b16 %v167
    %v951 = vunpack.c.h.b16 %v167
    %v952 = vunpack.c.l.b16 %v168
    %v953 = vunpack.c.h.b16 %v168
    %v954 = vunpack.c.l.b16 %v169
    %v955 = vunpack.c.h.b16 %v169
    %v956 = vunpack.c.l.b16 %v170
    %v957 = vunpack.c.h.b16 %v170
    %v958 = vunpack.c.l.b16 %v171
    %v959 = vunpack.c.h.b16 %v171
    %v960 = vunpack.c.l.b16 %v172
    %v961 = vunpack.c.h.b16 %v172
    %v962 = vunpack.c.l.b16 %v173
    %v963 = vunpack.c.h.b16 %v173
    %v964 = vunpack.c.l.b16 %v174
    %v965 = vunpack.c.h.b16 %v174
    %v966 = vunpack.c.l.b16 %v175
    %v967 = vunpack.c.h.b16 %v175
    %v968 = vunpack.c.l.b16 %v176
    %v969 = vunpack.c.h.b16 %v176
    %v970 = vunpack.c.l.b16 %v177
    %v971 = vunpack.c.h.b16 %v177
    %v972 = vunpack.c.l.b16 %v178
    %v973 = vunpack.c.h.b16 %v178
    %v974 = vunpack.c.l.b16 %v179
    %v975 = vunpack.c.h.b16 %v179
    %v976 = vunpack.c.l.b16 %v180
    %v977 = vunpack.c.h.b16 %v180
    %v978 = vunpack.c.l.b16 %v181
    %v979 = vunpack.c.h.b16 %v181
    %v980 = vunpack.c.l.b16 %v182
    %v981 = vunpack.c.h.b16 %v182
    %v982 = vunpack.c.l.b16 %v183
    %v983 = vunpack.c.h.b16 %v183
    %v984 = vunpack.c.l.b16 %v184
    %v985 = vunpack.c.h.b16 %v184
    %v986 = vunpack.c.l.b16 %v185
    %v987 = vunpack.c.h.b16 %v185
    %v988 = vunpack.c.l.b16 %v186
    %v989 = vunpack.c.h.b16 %v186
    %v990 = vunpack.c.l.b16 %v187
    %v991 = vunpack.c.h.b16 %v187
    %v992 = vunpack.c.l.b16 %v188
    %v993 = vunpack.c.h.b16 %v188
    %v994 = vunpack.c.l.b16 %v189
    %v995 = vunpack.c.h.b16 %v189
    %v996 = vunpack.c.l.b16 %v190
    %v997 = vunpack.c.h.b16 %v190
    %v998 = vunpack.c.l.b16 %v191
    %v999 = vunpack.c.h.b16 %v191
    %v1000 = vunpack.c.l.b16 %v192
    %v1001 = vunpack.c.h.b16 %v192
    %v1002 = vunpack.c.l.b16 %v193
    %v1003 = vunpack.c.h.b16 %v193
    %v1004 = vunpack.c.l.b16 %v194
    %v1005 = vunpack.c.h.b16 %v194
    %v1006 = vunpack.c.l.b16 %v195
    %v1007 = vunpack.c.h.b16 %v195
    %v1008 = vunpack.c.l.b16 %v196
    %v1009 = vunpack.c.h.b16 %v196
    %v1010 = vunpack.c.l.b16 %v197
    %v1011 = vunpack.c.h.b16 %v197
    %v1012 = vunpack.c.l.b16 %v198
    %v1013 = vunpack.c.h.b16 %v198
    %v1014 = vunpack.c.l.b16 %v199
    %v1015 = vunpack.c.h.b16 %v199
    %v1016 = vunpack.c.l.b16 %v200
    %v1017 = vunpack.c.h.b16 %v200
    %v1018 = vunpack.c.l.b16 %v201
    %v1019 = vunpack.c.h.b16 %v201
    %v1020 = vunpack.c.l.b16 %v202
    %v1021 = vunpack.c.h.b16 %v202
    %v1022 = vunpack.c.l.b16 %v203
    %v1023 = vunpack.c.h.b16 %v203
    %v1024 = vunpack.c.l.b16 %v204
    %v1025 = vunpack.c.h.b16 %v204
    %v1026 = vunpack.c.l.b16 %v205
    %v1027 = vunpack.c.h.b16 %v205
    %v1028 = vunpack.c.l.b16 %v206
    %v1029 = vunpack.c.h.b16 %v206
    %v1030 = vunpack.c.l.b16 %v207
    %v1031 = vunpack.c.h.b16 %v207
    %v1032 = vunpack.c.l.b16 %v208
    %v1033 = vunpack.c.h.b16 %v208
    %v1034 = vunpack.c.l.b16 %v209
    %v1035 = vunpack.c.h.b16 %v209
    %v1036 = vunpack.c.l.b16 %v210
    %v1037 = vunpack.c.h.b16 %v210
    %v1038 = vunpack.c.l.b16 %v211
    %v1039 = vunpack.c.h.b16 %v211
    %v1040 = vunpack.c.l.b16 %v212
    %v1041 = vunpack.c.h.b16 %v212
    %v1042 = vunpack.c.l.b16 %v213
    %v1043 = vunpack.c.h.b16 %v213
    %v1044 = vunpack.c.l.b16 %v214
    %v1045 = vunpack.c.h.b16 %v214
    %v1046 = vunpack.c.l.b16 %v215
    %v1047 = vunpack.c.h.b16 %v215
    %v1048 = vunpack.c.l.b16 %v216
    %v1049 = vunpack.c.h.b16 %v216
    %v1050 = vunpack.c.l.b16 %v217
    %v1051 = vunpack.c.h.b16 %v217
    %v1052 = vunpack.c.l.b16 %v218
    %v1053 = vunpack.c.h.b16 %v218
    %v1054 = vunpack.c.l.b16 %v219
    %v1055 = vunpack.c.h.b16 %v219
    %v1056 = vunpack.c.l.b16 %v220
    %v1057 = vunpack.c.h.b16 %v220
    %v1058 = vunpack.c.l.b16 %v221
    %v1059 = vunpack.c.h.b16 %v221
    %v1060 = vunpack.c.l.b16 %v222
    %v1061 = vunpack.c.h.b16 %v222
    %v1062 = vunpack.c.l.b16 %v223
    %v1063 = vunpack.c.h.b16 %v223
    %v1064 = vunpack.c.l.b16 %v224
    %v1065 = vunpack.c.h.b16 %v224
    %v1066 = vunpack.c.l.b16 %v225
    %v1067 = vunpack.c.h.b16 %v225
    %v1068 = vunpack.c.l.b16 %v226
    %v1069 = vunpack.c.h.b16 %v226
    %v1070 = vunpack.c.l.b16 %v227
    %v1071 = vunpack.c.h.b16 %v227
    %v1072 = vunpack.c.l.b16 %v228
    %v1073 = vunpack.c.h.b16 %v228
    %v1074 = vunpack.c.l.b16 %v229
    %v1075 = vunpack.c.h.b16 %v229
    %v1076 = vunpack.c.l.b16 %v230
    %v1077 = vunpack.c.h.b16 %v230
    %v1078 = vunpack.c.l.b16 %v231
    %v1079 = vunpack.c.h.b16 %v231
    %v1080 = vunpack.c.l.b16 %v232
    %v1081 = vunpack.c.h.b16 %v232
    %v1082 = vunpack.c.l.b16 %v233
    %v1083 = vunpack.c.h.b16 %v233
    %v1084 = vunpack.c.l.b16 %v234
    %v1085 = vunpack.c.h.b16 %v234
    %v1086 = vunpack.c.l.b16 %v235
    %v1087 = vunpack.c.h.b16 %v235
    %v1088 = vunpack.c.l.b16 %v236
    %v1089 = vunpack.c.h.b16 %v236
    %v1090 = vunpack.c.l.b16 %v237
    %v1091 = vunpack.c.h.b16 %v237
    %v1092 = vunpack.c.l.b16 %v238
    %v1093 = vunpack.c.h.b16 %v238
    %v1094 = vunpack.c.l.b16 %v239
    %v1095 = vunpack.c.h.b16 %v239
    %v1096 = vunpack.c.l.b16 %v240
    %v1097 = vunpack.c.h.b16 %v240
    %v1098 = vunpack.c.l.b16 %v241
    %v1099 = vunpack.c.h.b16 %v241
    %v1100 = vunpack.c.l.b16 %v242
    %v1101 = vunpack.c.h.b16 %v242
    %v1102 = vunpack.c.l.b16 %v243
    %v1103 = vunpack.c.h.b16 %v243
    %v1104 = vunpack.c.l.b16 %v244
    %v1105 = vunpack.c.h.b16 %v244
    %v1106 = vunpack.c.l.b16 %v245
    %v1107 = vunpack.c.h.b16 %v245
    %v1108 = vunpack.c.l.b16 %v246
    %v1109 = vunpack.c.h.b16 %v246
    %v1110 = vunpack.c.l.b16 %v247
    %v1111 = vunpack.c.h.b16 %v247
    %v1112 = vunpack.c.l.b16 %v248
    %v1113 = vunpack.c.h.b16 %v248
    %v1114 = vunpack.c.l.b16 %v249
    %v1115 = vunpack.c.h.b16 %v249
    %v1116 = vunpack.c.l.b16 %v250
    %v1117 = vunpack.c.h.b16 %v250
    %v1118 = vunpack.c.l.b16 %v251
    %v1119 = vunpack.c.h.b16 %v251
    %v1120 = vunpack.c.l.b16 %v252
    %v1121 = vunpack.c.h.b16 %v252
    %v1122 = vunpack.c.l.b16 %v253
    %v1123 = vunpack.c.h.b16 %v253
    %v1124 = vunpack.c.l.b16 %v254
    %v1125 = vunpack.c.h.b16 %v254
    %v1126 = vunpack.c.l.b16 %v255
    %v1127 = vunpack.c.h.b16 %v255
    %v1128 = vunpack.c.l.b16 %v256
    %v1129 = vunpack.c.h.b16 %v256
    %v1130 = vunpack.c.l.b16 %v257
    %v1131 = vunpack.c.h.b16 %v257
    %v1132 = vunpack.c.l.b16 %v258
    %v1133 = vunpack.c.h.b16 %v258
    %v1134 = vunpack.c.l.b16 %v259
    %v1135 = vunpack.c.h.b16 %v259
    %v1136 = vunpack.c.l.b16 %v260
    %v1137 = vunpack.c.h.b16 %v260
    %v1138 = vunpack.c.l.b16 %v261
    %v1139 = vunpack.c.h.b16 %v261
    %v1140 = vunpack.c.l.b16 %v262
    %v1141 = vunpack.c.h.b16 %v262
    %v1142 = vunpack.c.l.b16 %v263
    %v1143 = vunpack.c.h.b16 %v263
    %v1144 = vunpack.c.l.b16 %v264
    %v1145 = vunpack.c.h.b16 %v264
    %v1146 = vunpack.c.l.b16 %v265
    %v1147 = vunpack.c.h.b16 %v265
    %v1148 = vunpack.c.l.b16 %v266
    %v1149 = vunpack.c.h.b16 %v266
    %v1150 = vunpack.c.l.b16 %v267
    %v1151 = vunpack.c.h.b16 %v267
    %v1152 = vunpack.c.l.b16 %v268
    %v1153 = vunpack.c.h.b16 %v268
    %v1154 = vunpack.c.l.b16 %v269
    %v1155 = vunpack.c.h.b16 %v269
    %v1156 = vunpack.c.l.b16 %v270
    %v1157 = vunpack.c.h.b16 %v270
    %v1158 = vunpack.c.l.b16 %v271
    %v1159 = vunpack.c.h.b16 %v271
    %v1160 = vunpack.c.l.b16 %v272
    %v1161 = vunpack.c.h.b16 %v272
    %v1162 = vunpack.c.l.b16 %v273
    %v1163 = vunpack.c.h.b16 %v273
    %v1164 = vunpack.c.l.b16 %v274
    %v1165 = vunpack.c.h.b16 %v274
    %v1166 = vunpack.c.l.b16 %v275
    %v1167 = vunpack.c.h.b16 %v275
    %v1168 = vunpack.c.l.b16 %v276
    %v1169 = vunpack.c.h.b16 %v276
    %v1170 = vunpack.c.l.b16 %v277
    %v1171 = vunpack.c.h.b16 %v277
    %v1172 = vunpack.c.l.b16 %v278
    %v1173 = vunpack.c.h.b16 %v278
    %v1174 = vunpack.c.l.b16 %v279
    %v1175 = vunpack.c.h.b16 %v279
    %v1176 = vpack.c.b16 %v666, %v664
    %v1177 = vpack.c.b16 %v667, %v665
    %v1178 = vpack.c.b16 %v670, %v668
    %v1179 = vpack.c.b16 %v671, %v669
    %v1180 = vpack.c.b16 %v674, %v672
    %v1181 = vpack.c.b16 %v675, %v673
    %v1182 = vpack.c.b16 %v678, %v676
    %v1183 = vpack.c.b16 %v679, %v677
    %v1184 = vpack.c.b16 %v682, %v680
    %v1185 = vpack.c.b16 %v683, %v681
    %v1186 = vpack.c.b16 %v686, %v684
    %v1187 = vpack.c.b16 %v687, %v685
    %v1188 = vpack.c.b16 %v690, %v688
    %v1189 = vpack.c.b16 %v691, %v689
    %v1190 = vpack.c.b16 %v694, %v692
    %v1191 = vpack.c.b16 %v695, %v693
    %v1192 = vpack.c.b16 %v698, %v696
    %v1193 = vpack.c.b16 %v699, %v697
    %v1194 = vpack.c.b16 %v702, %v700
    %v1195 = vpack.c.b16 %v703, %v701
    %v1196 = vpack.c.b16 %v706, %v704
    %v1197 = vpack.c.b16 %v707, %v705
    %v1198 = vpack.c.b16 %v710, %v708
    %v1199 = vpack.c.b16 %v711, %v709
    %v1200 = vpack.c.b16 %v714, %v712
    %v1201 = vpack.c.b16 %v715, %v713
    %v1202 = vpack.c.b16 %v718, %v716
    %v1203 = vpack.c.b16 %v719, %v717
    %v1204 = vpack.c.b16 %v722, %v720
    %v1205 = vpack.c.b16 %v723, %v721
    %v1206 = vpack.c.b16 %v726, %v724
    %v1207 = vpack.c.b16 %v727, %v725
    %v1208 = vpack.c.b16 %v730, %v728
    %v1209 = vpack.c.b16 %v731, %v729
    %v1210 = vpack.c.b16 %v734, %v732
    %v1211 = vpack.c.b16 %v735, %v733
    %v1212 = vpack.c.b16 %v738, %v736
    %v1213 = vpack.c.b16 %v739, %v737
    %v1214 = vpack.c.b16 %v742, %v740
    %v1215 = vpack.c.b16 %v743, %v741
    %v1216 = vpack.c.b16 %v746, %v744
    %v1217 = vpack.c.b16 %v747, %v745
    %v1218 = vpack.c.b16 %v750, %v748
    %v1219 = vpack.c.b16 %v751, %v749
    %v1220 = vpack.c.b16 %v754, %v752
    %v1221 = vpack.c.b16 %v755, %v753
    %v1222 = vpack.c.b16 %v758, %v756
    %v1223 = vpack.c.b16 %v759, %v757
    %v1224 = vpack.c.b16 %v762, %v760
    %v1225 = vpack.c.b16 %v763, %v761
    %v1226 = vpack.c.b16 %v766, %v764
    %v1227 = vpack.c.b16 %v767, %v765
    %v1228 = vpack.c.b16 %v770, %v768
    %v1229 = vpack.c.b16 %v771, %v769
    %v1230 = vpack.c.b16 %v774, %v772
    %v1231 = vpack.c.b16 %v775, %v773
    %v1232 = vpack.c.b16 %v778, %v776
    %v1233 = vpack.c.b16 %v779, %v777
    %v1234 = vpack.c.b16 %v782, %v780
    %v1235 = vpack.c.b16 %v783, %v781
    %v1236 = vpack.c.b16 %v786, %v784
    %v1237 = vpack.c.b16 %v787, %v785
    %v1238 = vpack.c.b16 %v790, %v788
    %v1239 = vpack.c.b16 %v791, %v789
    %v1240 = vpack.c.b16 %v794, %v792
    %v1241 = vpack.c.b16 %v795, %v793
    %v1242 = vpack.c.b16 %v798, %v796
    %v1243 = vpack.c.b16 %v799, %v797
    %v1244 = vpack.c.b16 %v802, %v800
    %v1245 = vpack.c.b16 %v803, %v801
    %v1246 = vpack.c.b16 %v806, %v804
    %v1247 = vpack.c.b16 %v807, %v805
    %v1248 = vpack.c.b16 %v810, %v808
    %v1249 = vpack.c.b16 %v811, %v809
    %v1250 = vpack.c.b16 %v814, %v812
    %v1251 = vpack.c.b16 %v815, %v813
    %v1252 = vpack.c.b16 %v818, %v816
    %v1253 = vpack.c.b16 %v819, %v817
    %v1254 = vpack.c.b16 %v822, %v820
    %v1255 = vpack.c.b16 %v823, %v821
    %v1256 = vpack.c.b16 %v826, %v824
    %v1257 = vpack.c.b16 %v827, %v825
    %v1258 = vpack.c.b16 %v830, %v828
    %v1259 = vpack.c.b16 %v831, %v829
    %v1260 = vpack.c.b16 %v834, %v832
    %v1261 = vpack.c.b16 %v835, %v833
    %v1262 = vpack.c.b16 %v838, %v836
    %v1263 = vpack.c.b16 %v839, %v837
    %v1264 = vpack.c.b16 %v842, %v840
    %v1265 = vpack.c.b16 %v843, %v841
    %v1266 = vpack.c.b16 %v846, %v844
    %v1267 = vpack.c.b16 %v847, %v845
    %v1268 = vpack.c.b16 %v850, %v848
    %v1269 = vpack.c.b16 %v851, %v849
    %v1270 = vpack.c.b16 %v854, %v852
    %v1271 = vpack.c.b16 %v855, %v853
    %v1272 = vpack.c.b16 %v858, %v856
    %v1273 = vpack.c.b16 %v859, %v857
    %v1274 = vpack.c.b16 %v862, %v860
    %v1275 = vpack.c.b16 %v863, %v861
    %v1276 = vpack.c.b16 %v866, %v864
    %v1277 = vpack.c.b16 %v867, %v865
    %v1278 = vpack.c.b16 %v870, %v868
    %v1279 = vpack.c.b16 %v871, %v869
    %v1280 = vpack.c.b16 %v874, %v872
    %v1281 = vpack.c.b16 %v875, %v873
    %v1282 = vpack.c.b16 %v878, %v876
    %v1283 = vpack.c.b16 %v879, %v877
    %v1284 = vpack.c.b16 %v882, %v880
    %v1285 = vpack.c.b16 %v883, %v881
    %v1286 = vpack.c.b16 %v886, %v884
    %v1287 = vpack.c.b16 %v887, %v885
    %v1288 = vpack.c.b16 %v890, %v888
    %v1289 = vpack.c.b16 %v891, %v889
    %v1290 = vpack.c.b16 %v894, %v892
    %v1291 = vpack.c.b16 %v895, %v893
    %v1292 = vpack.c.b16 %v898, %v896
    %v1293 = vpack.c.b16 %v899, %v897
    %v1294 = vpack.c.b16 %v902, %v900
    %v1295 = vpack.c.b16 %v903, %v901
    %v1296 = vpack.c.b16 %v906, %v904
    %v1297 = vpack.c.b16 %v907, %v905
    %v1298 = vpack.c.b16 %v910, %v908
    %v1299 = vpack.c.b16 %v911, %v909
    %v1300 = vpack.c.b16 %v914, %v912
    %v1301 = vpack.c.b16 %v915, %v913
    %v1302 = vpack.c.b16 %v918, %v916
    %v1303 = vpack.c.b16 %v919, %v917
    %v1304 = vpack.c.b16 %v922, %v920
    %v1305 = vpack.c.b16 %v923, %v921
    %v1306 = vpack.c.b16 %v926, %v924
    %v1307 = vpack.c.b16 %v927, %v925
    %v1308 = vpack.c.b16 %v930, %v928
    %v1309 = vpack.c.b16 %v931, %v929
    %v1310 = vpack.c.b16 %v934, %v932
    %v1311 = vpack.c.b16 %v935, %v933
    %v1312 = vpack.c.b16 %v938, %v936
    %v1313 = vpack.c.b16 %v939, %v937
    %v1314 = vpack.c.b16 %v942, %v940
    %v1315 = vpack.c.b16 %v943, %v941
    %v1316 = vpack.c.b16 %v946, %v944
    %v1317 = vpack.c.b16 %v947, %v945
    %v1318 = vpack.c.b16 %v950, %v948
    %v1319 = vpack.c.b16 %v951, %v949
    %v1320 = vpack.c.b16 %v954, %v952
    %v1321 = vpack.c.b16 %v955, %v953
    %v1322 = vpack.c.b16 %v958, %v956
    %v1323 = vpack.c.b16 %v959, %v957
    %v1324 = vpack.c.b16 %v962, %v960
    %v1325 = vpack.c.b16 %v963, %v961
    %v1326 = vpack.c.b16 %v966, %v964
    %v1327 = vpack.c.b16 %v967, %v965
    %v1328 = vpack.c.b16 %v970, %v968
    %v1329 = vpack.c.b16 %v971, %v969
    %v1330 = vpack.c.b16 %v974, %v972
    %v1331 = vpack.c.b16 %v975, %v973
    %v1332 = vpack.c.b16 %v978, %v976
    %v1333 = vpack.c.b16 %v979, %v977
    %v1334 = vpack.c.b16 %v982, %v980
    %v1335 = vpack.c.b16 %v983, %v981
    %v1336 = vpack.c.b16 %v986, %v984
    %v1337 = vpack.c.b16 %v987, %v985
    %v1338 = vpack.c.b16 %v990, %v988
    %v1339 = vpack.c.b16 %v991, %v989
    %v1340 = vpack.c.b16 %v994, %v992
    %v1341 = vpack.c.b16 %v995, %v993
    %v1342 = vpack.c.b16 %v998, %v996
    %v1343 = vpack.c.b16 %v999, %v997
    %v1344 = vpack.c.b16 %v1002, %v1000
    %v1345 = vpack.c.b16 %v1003, %v1001
    %v1346 = vpack.c.b16 %v1006, %v1004
    %v1347 = vpack.c.b16 %v1007, %v1005
    %v1348 = vpack.c.b16 %v1010, %v1008
    %v1349 = vpack.c.b16 %v1011, %v1009
    %v1350 = vpack.c.b16 %v1014, %v1012
    %v1351 = vpack.c.b16 %v1015, %v1013
    %v1352 = vpack.c.b16 %v1018, %v1016
    %v1353 = vpack.c.b16 %v1019, %v1017
    %v1354 = vpack.c.b16 %v1022, %v1020
    %v1355 = vpack.c.b16 %v1023, %v1021
    %v1356 = vpack.c.b16 %v1026, %v1024
    %v1357 = vpack.c.b16 %v1027, %v1025
    %v1358 = vpack.c.b16 %v1030, %v1028
    %v1359 = vpack.c.b16 %v1031, %v1029
    %v1360 = vpack.c.b16 %v1034, %v1032
    %v1361 = vpack.c.b16 %v1035, %v1033
    %v1362 = vpack.c.b16 %v1038, %v1036
    %v1363 = vpack.c.b16 %v1039, %v1037
    %v1364 = vpack.c.b16 %v1042, %v1040
    %v1365 = vpack.c.b16 %v1043, %v1041
    %v1366 = vpack.c.b16 %v1046, %v1044
    %v1367 = vpack.c.b16 %v1047, %v1045
    %v1368 = vpack.c.b16 %v1050, %v1048
    %v1369 = vpack.c.b16 %v1051, %v1049
    %v1370 = vpack.c.b16 %v1054, %v1052
    %v1371 = vpack.c.b16 %v1055, %v1053
    %v1372 = vpack.c.b16 %v1058, %v1056
    %v1373 = vpack.c.b16 %v1059, %v1057
    %v1374 = vpack.c.b16 %v1062, %v1060
    %v1375 = vpack.c.b16 %v1063, %v1061
    %v1376 = vpack.c.b16 %v1066, %v1064
    %v1377 = vpack.c.b16 %v1067, %v1065
    %v1378 = vpack.c.b16 %v1070, %v1068
    %v1379 = vpack.c.b16 %v1071, %v1069
    %v1380 = vpack.c.b16 %v1074, %v1072
    %v1381 = vpack.c.b16 %v1075, %v1073
    %v1382 = vpack.c.b16 %v1078, %v1076
    %v1383 = vpack.c.b16 %v1079, %v1077
    %v1384 = vpack.c.b16 %v1082, %v1080
    %v1385 = vpack.c.b16 %v1083, %v1081
    %v1386 = vpack.c.b16 %v1086, %v1084
    %v1387 = vpack.c.b16 %v1087, %v1085
    %v1388 = vpack.c.b16 %v1090, %v1088
    %v1389 = vpack.c.b16 %v1091, %v1089
    %v1390 = vpack.c.b16 %v1094, %v1092
    %v1391 = vpack.c.b16 %v1095, %v1093
    %v1392 = vpack.c.b16 %v1098, %v1096
    %v1393 = vpack.c.b16 %v1099, %v1097
    %v1394 = vpack.c.b16 %v1102, %v1100
    %v1395 = vpack.c.b16 %v1103, %v1101
    %v1396 = vpack.c.b16 %v1106, %v1104
    %v1397 = vpack.c.b16 %v1107, %v1105
    %v1398 = vpack.c.b16 %v1110, %v1108
    %v1399 = vpack.c.b16 %v1111, %v1109
    %v1400 = vpack.c.b16 %v1114, %v1112
    %v1401 = vpack.c.b16 %v1115, %v1113
    %v1402 = vpack.c.b16 %v1118, %v1116
    %v1403 = vpack.c.b16 %v1119, %v1117
    %v1404 = vpack.c.b16 %v1122, %v1120
    %v1405 = vpack.c.b16 %v1123, %v1121
    %v1406 = vpack.c.b16 %v1126, %v1124
    %v1407 = vpack.c.b16 %v1127, %v1125
    %v1408 = vpack.c.b16 %v1130, %v1128
    %v1409 = vpack.c.b16 %v1131, %v1129
    %v1410 = vpack.c.b16 %v1134, %v1132
    %v1411 = vpack.c.b16 %v1135, %v1133
    %v1412 = vpack.c.b16 %v1138, %v1136
    %v1413 = vpack.c.b16 %v1139, %v1137
    %v1414 = vpack.c.b16 %v1142, %v1140
    %v1415 = vpack.c.b16 %v1143, %v1141
    %v1416 = vpack.c.b16 %v1146, %v1144
    %v1417 = vpack.c.b16 %v1147, %v1145
    %v1418 = vpack.c.b16 %v1150, %v1148
    %v1419 = vpack.c.b16 %v1151, %v1149
    %v1420 = vpack.c.b16 %v1154, %v1152
    %v1421 = vpack.c.b16 %v1155, %v1153
    %v1422 = vpack.c.b16 %v1158, %v1156
    %v1423 = vpack.c.b16 %v1159, %v1157
    %v1424 = vpack.c.b16 %v1162, %v1160
    %v1425 = vpack.c.b16 %v1163, %v1161
    %v1426 = vpack.c.b16 %v1166, %v1164
    %v1427 = vpack.c.b16 %v1167, %v1165
    %v1428 = vpack.c.b16 %v1170, %v1168
    %v1429 = vpack.c.b16 %v1171, %v1169
    %v1430 = vpack.c.b16 %v1174, %v1172
    %v1431 = vpack.c.b16 %v1175, %v1173
    %1688 = vmatprep.subr.bf16.mxu0 %v1177
    %1689 = vmatpush1.bf16.msra.mxu0 %v1176
    %1690 = vmatprep.subr.bf16.mxu0 %v1179
    %1691 = vmatpush1.bf16.msra.mxu0 %v1178
    %1692 = vmatprep.subr.bf16.mxu0 %v1181
    %1693 = vmatpush1.bf16.msra.mxu0 %v1180
    %1694 = vmatprep.subr.bf16.mxu0 %v1183
    %1695 = vmatpush1.bf16.msra.mxu0 %v1182
    %1696 = vmatprep.subr.bf16.mxu0 %v1185
    %1697 = vmatpush1.bf16.msra.mxu0 %v1184
    %1698 = vmatprep.subr.bf16.mxu0 %v1187
    %1699 = vmatpush1.bf16.msra.mxu0 %v1186
    %1700 = vmatprep.subr.bf16.mxu0 %v1189
    %1701 = vmatpush1.bf16.msra.mxu0 %v1188
    %1702 = vmatprep.subr.bf16.mxu0 %v1191
    %1703 = vmatpush1.bf16.msra.mxu0 %v1190
    %1704 = vmatprep.subr.bf16.mxu0 %v1193
    %1705 = vmatpush1.bf16.msra.mxu0 %v1192
    %1706 = vmatprep.subr.bf16.mxu0 %v1195
    %1707 = vmatpush1.bf16.msra.mxu0 %v1194
    %1708 = vmatprep.subr.bf16.mxu0 %v1197
    %1709 = vmatpush1.bf16.msra.mxu0 %v1196
    %1710 = vmatprep.subr.bf16.mxu0 %v1199
    %1711 = vmatpush1.bf16.msra.mxu0 %v1198
    %1712 = vmatprep.subr.bf16.mxu0 %v1201
    %1713 = vmatpush1.bf16.msra.mxu0 %v1200
    %1714 = vmatprep.subr.bf16.mxu0 %v1203
    %1715 = vmatpush1.bf16.msra.mxu0 %v1202
    %1716 = vmatprep.subr.bf16.mxu0 %v1205
    %1717 = vmatpush1.bf16.msra.mxu0 %v1204
    %1718 = vmatprep.subr.bf16.mxu0 %v1207
    %1719 = vmatpush1.bf16.msra.mxu0 %v1206
    %1720 = vmatprep.mubr.bf16.mxu0 %v331
    %1721 = vmatmul.mubr.bf16.gmra.mrb[0].mxu0 %v317
    %v1722 = vpop.f32.mrb[0].mxu0
    %v1723 = vadd.f32 %v285, %v1722
    %v1724 = vpop.f32.mrb[0].mxu0
    %v1725 = vadd.f32 %v289, %v1724
    %v1726 = vpop.f32.mrb[0].mxu0
    %v1727 = vpop.f32.mrb[0].mxu0
    %1728 = vdwg.mxu0
    %1729 = vmatprep.subr.bf16.mxu0 %v1209
    %1730 = vmatpush1.bf16.msra.mxu0 %v1208
    %1731 = vmatprep.subr.bf16.mxu0 %v1211
    %1732 = vmatpush1.bf16.msra.mxu0 %v1210
    %1733 = vmatprep.subr.bf16.mxu0 %v1213
    %1734 = vmatpush1.bf16.msra.mxu0 %v1212
    %1735 = vmatprep.subr.bf16.mxu0 %v1215
    %1736 = vmatpush1.bf16.msra.mxu0 %v1214
    %1737 = vmatprep.subr.bf16.mxu0 %v1217
    %1738 = vmatpush1.bf16.msra.mxu0 %v1216
    %1739 = vmatprep.subr.bf16.mxu0 %v1219
    %1740 = vmatpush1.bf16.msra.mxu0 %v1218
    %1741 = vmatprep.subr.bf16.mxu0 %v1221
    %1742 = vmatpush1.bf16.msra.mxu0 %v1220
    %1743 = vmatprep.subr.bf16.mxu0 %v1223
    %1744 = vmatpush1.bf16.msra.mxu0 %v1222
    %1745 = vmatprep.subr.bf16.mxu0 %v1225
    %1746 = vmatpush1.bf16.msra.mxu0 %v1224
    %1747 = vmatprep.subr.bf16.mxu0 %v1227
    %1748 = vmatpush1.bf16.msra.mxu0 %v1226
    %1749 = vmatprep.subr.bf16.mxu0 %v1229
    %1750 = vmatpush1.bf16.msra.mxu0 %v1228
    %1751 = vmatprep.subr.bf16.mxu0 %v1231
    %1752 = vmatpush1.bf16.msra.mxu0 %v1230
    %1753 = vmatprep.subr.bf16.mxu0 %v1233
    %1754 = vmatpush1.bf16.msra.mxu0 %v1232
    %1755 = vmatprep.subr.bf16.mxu0 %v1235
    %1756 = vmatpush1.bf16.msra.mxu0 %v1234
    %1757 = vmatprep.subr.bf16.mxu0 %v1237
    %1758 = vmatpush1.bf16.msra.mxu0 %v1236
    %1759 = vmatprep.subr.bf16.mxu0 %v1239
    %1760 = vmatpush1.bf16.msra.mxu0 %v1238
    %1761 = vmatprep.mubr.bf16.mxu0 %v341
    %1762 = vmatmul.mubr.bf16.gmra.mrb[0].mxu0 %v339
    %v1763 = vpop.f32.mrb[0].mxu0
    %v1764 = vadd.f32 %v1723, %v1763
    %v1765 = vpop.f32.mrb[0].mxu0
    %v1766 = vadd.f32 %v1725, %v1765
    %v1767 = vpop.f32.mrb[0].mxu0
    %v1768 = vpop.f32.mrb[0].mxu0
    %1769 = vdwg.mxu0
    %1770 = vmatprep.subr.bf16.mxu0 %v1241
    %1771 = vmatpush1.bf16.msra.mxu0 %v1240
    %1772 = vmatprep.subr.bf16.mxu0 %v1243
    %1773 = vmatpush1.bf16.msra.mxu0 %v1242
    %1774 = vmatprep.subr.bf16.mxu0 %v1245
    %1775 = vmatpush1.bf16.msra.mxu0 %v1244
    %1776 = vmatprep.subr.bf16.mxu0 %v1247
    %1777 = vmatpush1.bf16.msra.mxu0 %v1246
    %1778 = vmatprep.subr.bf16.mxu0 %v1249
    %1779 = vmatpush1.bf16.msra.mxu0 %v1248
    %1780 = vmatprep.subr.bf16.mxu0 %v1251
    %1781 = vmatpush1.bf16.msra.mxu0 %v1250
    %1782 = vmatprep.subr.bf16.mxu0 %v1253
    %1783 = vmatpush1.bf16.msra.mxu0 %v1252
    %1784 = vmatprep.subr.bf16.mxu0 %v1255
    %1785 = vmatpush1.bf16.msra.mxu0 %v1254
    %1786 = vmatprep.subr.bf16.mxu0 %v1257
    %1787 = vmatpush1.bf16.msra.mxu0 %v1256
    %1788 = vmatprep.subr.bf16.mxu0 %v1259
    %1789 = vmatpush1.bf16.msra.mxu0 %v1258
    %1790 = vmatprep.subr.bf16.mxu0 %v1261
    %1791 = vmatpush1.bf16.msra.mxu0 %v1260
    %1792 = vmatprep.subr.bf16.mxu0 %v1263
    %1793 = vmatpush1.bf16.msra.mxu0 %v1262
    %1794 = vmatprep.subr.bf16.mxu0 %v1265
    %1795 = vmatpush1.bf16.msra.mxu0 %v1264
    %1796 = vmatprep.subr.bf16.mxu0 %v1267
    %1797 = vmatpush1.bf16.msra.mxu0 %v1266
    %1798 = vmatprep.subr.bf16.mxu0 %v1269
    %1799 = vmatpush1.bf16.msra.mxu0 %v1268
    %1800 = vmatprep.subr.bf16.mxu0 %v1271
    %1801 = vmatpush1.bf16.msra.mxu0 %v1270
    %1802 = vmatprep.mubr.bf16.mxu0 %v338
    %1803 = vmatmul.mubr.bf16.gmra.mrb[0].mxu0 %v324
    %v1804 = vpop.f32.mrb[0].mxu0
    %v1805 = vadd.f32 %v1764, %v1804
    %v1806 = vpop.f32.mrb[0].mxu0
    %v1807 = vadd.f32 %v1766, %v1806
    %v1808 = vpop.f32.mrb[0].mxu0
    %v1809 = vpop.f32.mrb[0].mxu0
    %1810 = vdwg.mxu0
    %1811 = vmatprep.subr.bf16.mxu0 %v1273
    %1812 = vmatpush1.bf16.msra.mxu0 %v1272
    %1813 = vmatprep.subr.bf16.mxu0 %v1275
    %1814 = vmatpush1.bf16.msra.mxu0 %v1274
    %1815 = vmatprep.subr.bf16.mxu0 %v1277
    %1816 = vmatpush1.bf16.msra.mxu0 %v1276
    %1817 = vmatprep.subr.bf16.mxu0 %v1279
    %1818 = vmatpush1.bf16.msra.mxu0 %v1278
    %1819 = vmatprep.subr.bf16.mxu0 %v1281
    %1820 = vmatpush1.bf16.msra.mxu0 %v1280
    %1821 = vmatprep.subr.bf16.mxu0 %v1283
    %1822 = vmatpush1.bf16.msra.mxu0 %v1282
    %1823 = vmatprep.subr.bf16.mxu0 %v1285
    %1824 = vmatpush1.bf16.msra.mxu0 %v1284
    %1825 = vmatprep.subr.bf16.mxu0 %v1287
    %1826 = vmatpush1.bf16.msra.mxu0 %v1286
    %1827 = vmatprep.subr.bf16.mxu0 %v1289
    %1828 = vmatpush1.bf16.msra.mxu0 %v1288
    %1829 = vmatprep.subr.bf16.mxu0 %v1291
    %1830 = vmatpush1.bf16.msra.mxu0 %v1290
    %1831 = vmatprep.subr.bf16.mxu0 %v1293
    %1832 = vmatpush1.bf16.msra.mxu0 %v1292
    %1833 = vmatprep.subr.bf16.mxu0 %v1295
    %1834 = vmatpush1.bf16.msra.mxu0 %v1294
    %1835 = vmatprep.subr.bf16.mxu0 %v1297
    %1836 = vmatpush1.bf16.msra.mxu0 %v1296
    %1837 = vmatprep.subr.bf16.mxu0 %v1299
    %1838 = vmatpush1.bf16.msra.mxu0 %v1298
    %1839 = vmatprep.subr.bf16.mxu0 %v1301
    %1840 = vmatpush1.bf16.msra.mxu0 %v1300
    %1841 = vmatprep.subr.bf16.mxu0 %v1303
    %1842 = vmatpush1.bf16.msra.mxu0 %v1302
    %1843 = vmatprep.mubr.bf16.mxu0 %v342
    %1844 = vmatmul.mubr.bf16.gmra.mrb[0].mxu0 %v340
    %v1845 = vpop.f32.mrb[0].mxu0
    %v1846 = vadd.f32 %v1805, %v1845
    %v1847 = vpop.f32.mrb[0].mxu0
    %v1848 = vadd.f32 %v1807, %v1847
    %v1849 = vpop.f32.mrb[0].mxu0
    %v1850 = vpop.f32.mrb[0].mxu0
    %1851 = vdwg.mxu0
    %1852 = vmatprep.subr.bf16.mxu0 %v1305
    %1853 = vmatpush1.bf16.msra.mxu0 %v1304
    %1854 = vmatprep.subr.bf16.mxu0 %v1307
    %1855 = vmatpush1.bf16.msra.mxu0 %v1306
    %1856 = vmatprep.subr.bf16.mxu0 %v1309
    %1857 = vmatpush1.bf16.msra.mxu0 %v1308
    %1858 = vmatprep.subr.bf16.mxu0 %v1311
    %1859 = vmatpush1.bf16.msra.mxu0 %v1310
    %1860 = vmatprep.subr.bf16.mxu0 %v1313
    %1861 = vmatpush1.bf16.msra.mxu0 %v1312
    %1862 = vmatprep.subr.bf16.mxu0 %v1315
    %1863 = vmatpush1.bf16.msra.mxu0 %v1314
    %1864 = vmatprep.subr.bf16.mxu0 %v1317
    %1865 = vmatpush1.bf16.msra.mxu0 %v1316
    %1866 = vmatprep.subr.bf16.mxu0 %v1319
    %1867 = vmatpush1.bf16.msra.mxu0 %v1318
    %1868 = vmatprep.subr.bf16.mxu0 %v1321
    %1869 = vmatpush1.bf16.msra.mxu0 %v1320
    %1870 = vmatprep.subr.bf16.mxu0 %v1323
    %1871 = vmatpush1.bf16.msra.mxu0 %v1322
    %1872 = vmatprep.subr.bf16.mxu0 %v1325
    %1873 = vmatpush1.bf16.msra.mxu0 %v1324
    %1874 = vmatprep.subr.bf16.mxu0 %v1327
    %1875 = vmatpush1.bf16.msra.mxu0 %v1326
    %1876 = vmatprep.subr.bf16.mxu0 %v1329
    %1877 = vmatpush1.bf16.msra.mxu0 %v1328
    %1878 = vmatprep.subr.bf16.mxu0 %v1331
    %1879 = vmatpush1.bf16.msra.mxu0 %v1330
    %1880 = vmatprep.subr.bf16.mxu0 %v1333
    %1881 = vmatpush1.bf16.msra.mxu0 %v1332
    %1882 = vmatprep.subr.bf16.mxu0 %v1335
    %1883 = vmatpush1.bf16.msra.mxu0 %v1334
    %1884 = vmatprep.mubr.bf16.mxu0 %v380
    %1885 = vmatmul.mubr.bf16.gmra.mrb[0].mxu0 %v366
    %v1886 = vpop.f32.mrb[0].mxu0
    %v1887 = vadd.f32 %v1846, %v1886
    %v1888 = vpop.f32.mrb[0].mxu0
    %v1889 = vadd.f32 %v1848, %v1888
    %v1890 = vpop.f32.mrb[0].mxu0
    %v1891 = vpop.f32.mrb[0].mxu0
    %1892 = vdwg.mxu0
    %1893 = vmatprep.subr.bf16.mxu0 %v1337
    %1894 = vmatpush1.bf16.msra.mxu0 %v1336
    %1895 = vmatprep.subr.bf16.mxu0 %v1339
    %1896 = vmatpush1.bf16.msra.mxu0 %v1338
    %1897 = vmatprep.subr.bf16.mxu0 %v1341
    %1898 = vmatpush1.bf16.msra.mxu0 %v1340
    %1899 = vmatprep.subr.bf16.mxu0 %v1343
    %1900 = vmatpush1.bf16.msra.mxu0 %v1342
    %1901 = vmatprep.subr.bf16.mxu0 %v1345
    %1902 = vmatpush1.bf16.msra.mxu0 %v1344
    %1903 = vmatprep.subr.bf16.mxu0 %v1347
    %1904 = vmatpush1.bf16.msra.mxu0 %v1346
    %1905 = vmatprep.subr.bf16.mxu0 %v1349
    %1906 = vmatpush1.bf16.msra.mxu0 %v1348
    %1907 = vmatprep.subr.bf16.mxu0 %v1351
    %1908 = vmatpush1.bf16.msra.mxu0 %v1350
    %1909 = vmatprep.subr.bf16.mxu0 %v1353
    %1910 = vmatpush1.bf16.msra.mxu0 %v1352
    %1911 = vmatprep.subr.bf16.mxu0 %v1355
    %1912 = vmatpush1.bf16.msra.mxu0 %v1354
    %1913 = vmatprep.subr.bf16.mxu0 %v1357
    %1914 = vmatpush1.bf16.msra.mxu0 %v1356
    %1915 = vmatprep.subr.bf16.mxu0 %v1359
    %1916 = vmatpush1.bf16.msra.mxu0 %v1358
    %1917 = vmatprep.subr.bf16.mxu0 %v1361
    %1918 = vmatpush1.bf16.msra.mxu0 %v1360
    %1919 = vmatprep.subr.bf16.mxu0 %v1363
    %1920 = vmatpush1.bf16.msra.mxu0 %v1362
    %1921 = vmatprep.subr.bf16.mxu0 %v1365
    %1922 = vmatpush1.bf16.msra.mxu0 %v1364
    %1923 = vmatprep.subr.bf16.mxu0 %v1367
    %1924 = vmatpush1.bf16.msra.mxu0 %v1366
    %1925 = vmatprep.mubr.bf16.mxu0 %v390
    %1926 = vmatmul.mubr.bf16.gmra.mrb[0].mxu0 %v388
    %v1927 = vpop.f32.mrb[0].mxu0
    %v1928 = vadd.f32 %v1887, %v1927
    %v1929 = vpop.f32.mrb[0].mxu0
    %v1930 = vadd.f32 %v1889, %v1929
    %v1931 = vpop.f32.mrb[0].mxu0
    %v1932 = vpop.f32.mrb[0].mxu0
    %1933 = vdwg.mxu0
    %1934 = vmatprep.subr.bf16.mxu0 %v1369
    %1935 = vmatpush1.bf16.msra.mxu0 %v1368
    %1936 = vmatprep.subr.bf16.mxu0 %v1371
    %1937 = vmatpush1.bf16.msra.mxu0 %v1370
    %1938 = vmatprep.subr.bf16.mxu0 %v1373
    %1939 = vmatpush1.bf16.msra.mxu0 %v1372
    %1940 = vmatprep.subr.bf16.mxu0 %v1375
    %1941 = vmatpush1.bf16.msra.mxu0 %v1374
    %1942 = vmatprep.subr.bf16.mxu0 %v1377
    %1943 = vmatpush1.bf16.msra.mxu0 %v1376
    %1944 = vmatprep.subr.bf16.mxu0 %v1379
    %1945 = vmatpush1.bf16.msra.mxu0 %v1378
    %1946 = vmatprep.subr.bf16.mxu0 %v1381
    %1947 = vmatpush1.bf16.msra.mxu0 %v1380
    %1948 = vmatprep.subr.bf16.mxu0 %v1383
    %1949 = vmatpush1.bf16.msra.mxu0 %v1382
    %1950 = vmatprep.subr.bf16.mxu0 %v1385
    %1951 = vmatpush1.bf16.msra.mxu0 %v1384
    %1952 = vmatprep.subr.bf16.mxu0 %v1387
    %1953 = vmatpush1.bf16.msra.mxu0 %v1386
    %1954 = vmatprep.subr.bf16.mxu0 %v1389
    %1955 = vmatpush1.bf16.msra.mxu0 %v1388
    %1956 = vmatprep.subr.bf16.mxu0 %v1391
    %1957 = vmatpush1.bf16.msra.mxu0 %v1390
    %1958 = vmatprep.subr.bf16.mxu0 %v1393
    %1959 = vmatpush1.bf16.msra.mxu0 %v1392
    %1960 = vmatprep.subr.bf16.mxu0 %v1395
    %1961 = vmatpush1.bf16.msra.mxu0 %v1394
    %1962 = vmatprep.subr.bf16.mxu0 %v1397
    %1963 = vmatpush1.bf16.msra.mxu0 %v1396
    %1964 = vmatprep.subr.bf16.mxu0 %v1399
    %1965 = vmatpush1.bf16.msra.mxu0 %v1398
    %1966 = vmatprep.mubr.bf16.mxu0 %v387
    %1967 = vmatmul.mubr.bf16.gmra.mrb[0].mxu0 %v373
    %v1968 = vpop.f32.mrb[0].mxu0
    %v1969 = vadd.f32 %v1928, %v1968
    %v1970 = vpop.f32.mrb[0].mxu0
    %v1971 = vadd.f32 %v1930, %v1970
    %v1972 = vpop.f32.mrb[0].mxu0
    %v1973 = vpop.f32.mrb[0].mxu0
    %1974 = vdwg.mxu0
    %1975 = vmatprep.subr.bf16.mxu0 %v1401
    %1976 = vmatpush1.bf16.msra.mxu0 %v1400
    %1977 = vmatprep.subr.bf16.mxu0 %v1403
    %1978 = vmatpush1.bf16.msra.mxu0 %v1402
    %1979 = vmatprep.subr.bf16.mxu0 %v1405
    %1980 = vmatpush1.bf16.msra.mxu0 %v1404
    %1981 = vmatprep.subr.bf16.mxu0 %v1407
    %1982 = vmatpush1.bf16.msra.mxu0 %v1406
    %1983 = vmatprep.subr.bf16.mxu0 %v1409
    %1984 = vmatpush1.bf16.msra.mxu0 %v1408
    %1985 = vmatprep.subr.bf16.mxu0 %v1411
    %1986 = vmatpush1.bf16.msra.mxu0 %v1410
    %1987 = vmatprep.subr.bf16.mxu0 %v1413
    %1988 = vmatpush1.bf16.msra.mxu0 %v1412
    %1989 = vmatprep.subr.bf16.mxu0 %v1415
    %1990 = vmatpush1.bf16.msra.mxu0 %v1414
    %1991 = vmatprep.subr.bf16.mxu0 %v1417
    %1992 = vmatpush1.bf16.msra.mxu0 %v1416
    %1993 = vmatprep.subr.bf16.mxu0 %v1419
    %1994 = vmatpush1.bf16.msra.mxu0 %v1418
    %1995 = vmatprep.subr.bf16.mxu0 %v1421
    %1996 = vmatpush1.bf16.msra.mxu0 %v1420
    %1997 = vmatprep.subr.bf16.mxu0 %v1423
    %1998 = vmatpush1.bf16.msra.mxu0 %v1422
    %1999 = vmatprep.subr.bf16.mxu0 %v1425
    %2000 = vmatpush1.bf16.msra.mxu0 %v1424
    %2001 = vmatprep.subr.bf16.mxu0 %v1427
    %2002 = vmatpush1.bf16.msra.mxu0 %v1426
    %2003 = vmatprep.subr.bf16.mxu0 %v1429
    %2004 = vmatpush1.bf16.msra.mxu0 %v1428
    %2005 = vmatprep.subr.bf16.mxu0 %v1431
    %2006 = vmatpush1.bf16.msra.mxu0 %v1430
    %2007 = vmatprep.mubr.bf16.mxu0 %v391
    %2008 = vmatmul.mubr.bf16.gmra.mrb[0].mxu0 %v389
    %v2009 = vpop.f32.mrb[0].mxu0
    %v2010 = vadd.f32 %v1969, %v2009
    %v2011 = vpop.f32.mrb[0].mxu0
    %v2012 = vadd.f32 %v1971, %v2011
    %v2013 = vpop.f32.mrb[0].mxu0
    %v2014 = vpop.f32.mrb[0].mxu0
    %2015 = vdwg.mxu0
    %v2016 = vmax.f32 %v2010, 0.0
    %v2017 = vmax.f32 %v2012, 0.0
    %v2018 = vpack.c.bf16 %v2016, %v2016
    %v2019 = vpack.c.bf16 %v2017, %v2017
    %v2020 = vld [vmem:[%s3] sm:$0xf]
    %v2021 = vld [vmem:[%s3 + $0x4] sm:$0xf]
    %v2022 = vld [vmem:[%s3 + $0x8] sm:$0xf]
    %v2023 = vld [vmem:[%s3 + $0xc] sm:$0xf]
    %v2024 = vld [vmem:[%s3 + $0x10] sm:$0xf]
    %v2025 = vld [vmem:[%s3 + $0x14] sm:$0xf]
    %v2026 = vld [vmem:[%s3 + $0x18] sm:$0xf]
    %v2027 = vld [vmem:[%s3 + $0x1c] sm:$0xf]
    %v2028 = vld [vmem:[%s3 + $0x20] sm:$0xf]
    %v2029 = vld [vmem:[%s3 + $0x24] sm:$0xf]
    %v2030 = vld [vmem:[%s3 + $0x28] sm:$0xf]
    %v2031 = vld [vmem:[%s3 + $0x2c] sm:$0xf]
    %v2032 = vld [vmem:[%s3 + $0x30] sm:$0xf]
    %v2033 = vld [vmem:[%s3 + $0x34] sm:$0xf]
    %v2034 = vld [vmem:[%s3 + $0x38] sm:$0xf]
    %v2035 = vld [vmem:[%s3 + $0x3c] sm:$0xf]
    %v2036 = vld [vmem:[%s3 + $0x40] sm:$0xf]
    %v2037 = vld [vmem:[%s3 + $0x44] sm:$0xf]
    %v2038 = vld [vmem:[%s3 + $0x48] sm:$0xf]
    %v2039 = vld [vmem:[%s3 + $0x4c] sm:$0xf]
    %v2040 = vld [vmem:[%s3 + $0x50] sm:$0xf]
    %v2041 = vld [vmem:[%s3 + $0x54] sm:$0xf]
    %v2042 = vld [vmem:[%s3 + $0x58] sm:$0xf]
    %v2043 = vld [vmem:[%s3 + $0x5c] sm:$0xf]
    %v2044 = vld [vmem:[%s3 + $0x60] sm:$0xf]
    %v2045 = vld [vmem:[%s3 + $0x64] sm:$0xf]
    %v2046 = vld [vmem:[%s3 + $0x68] sm:$0xf]
    %v2047 = vld [vmem:[%s3 + $0x6c] sm:$0xf]
    %v2048 = vld [vmem:[%s3 + $0x70] sm:$0xf]
    %v2049 = vld [vmem:[%s3 + $0x74] sm:$0xf]
    %v2050 = vld [vmem:[%s3 + $0x78] sm:$0xf]
    %v2051 = vld [vmem:[%s3 + $0x7c] sm:$0xf]
    %v2052 = vld [vmem:[%s4] sm:$0x1]
    %v2054 = vlaneseq
    %v2055 = vshrl.u32 %v2054, 7
    %v2056 = vsub.s32 0, %v2055
    %v2057 = vrot.slane %v2052, %v2056
    %v2091 = vunpack.c.l.b16 %v2020
    %v2092 = vunpack.c.l.b16 %v2021
    %v2093 = vunpack.c.l.b16 %v2022
    %v2094 = vunpack.c.l.b16 %v2023
    %v2095 = vunpack.c.l.b16 %v2024
    %v2096 = vunpack.c.l.b16 %v2025
    %v2097 = vunpack.c.l.b16 %v2026
    %v2098 = vunpack.c.l.b16 %v2027
    %v2099 = vunpack.c.l.b16 %v2028
    %v2100 = vunpack.c.l.b16 %v2029
    %v2101 = vunpack.c.l.b16 %v2030
    %v2102 = vunpack.c.l.b16 %v2031
    %v2103 = vunpack.c.l.b16 %v2032
    %v2104 = vunpack.c.l.b16 %v2033
    %v2105 = vunpack.c.l.b16 %v2034
    %v2106 = vunpack.c.l.b16 %v2035
    %v2107 = vunpack.c.l.b16 %v2036
    %v2108 = vunpack.c.l.b16 %v2037
    %v2109 = vunpack.c.l.b16 %v2038
    %v2110 = vunpack.c.l.b16 %v2039
    %v2111 = vunpack.c.l.b16 %v2040
    %v2112 = vunpack.c.l.b16 %v2041
    %v2113 = vunpack.c.l.b16 %v2042
    %v2114 = vunpack.c.l.b16 %v2043
    %v2115 = vunpack.c.l.b16 %v2044
    %v2116 = vunpack.c.l.b16 %v2045
    %v2117 = vunpack.c.l.b16 %v2046
    %v2118 = vunpack.c.l.b16 %v2047
    %v2119 = vunpack.c.l.b16 %v2048
    %v2120 = vunpack.c.l.b16 %v2049
    %v2121 = vunpack.c.l.b16 %v2050
    %v2122 = vunpack.c.l.b16 %v2051
    %v2123 = vpack.c.b16 %v2092, %v2091
    %v2124 = vpack.c.b16 %v2094, %v2093
    %v2125 = vpack.c.b16 %v2096, %v2095
    %v2126 = vpack.c.b16 %v2098, %v2097
    %v2127 = vpack.c.b16 %v2100, %v2099
    %v2128 = vpack.c.b16 %v2102, %v2101
    %v2129 = vpack.c.b16 %v2104, %v2103
    %v2130 = vpack.c.b16 %v2106, %v2105
    %v2131 = vpack.c.b16 %v2108, %v2107
    %v2132 = vpack.c.b16 %v2110, %v2109
    %v2133 = vpack.c.b16 %v2112, %v2111
    %v2134 = vpack.c.b16 %v2114, %v2113
    %v2135 = vpack.c.b16 %v2116, %v2115
    %v2136 = vpack.c.b16 %v2118, %v2117
    %v2137 = vpack.c.b16 %v2120, %v2119
    %v2138 = vpack.c.b16 %v2122, %v2121
    %2155 = vmatprep.subr.bf16.mxu0 0
    %2156 = vmatpush1.bf16.msra.mxu0 %v2123
    %2157 = vmatprep.subr.bf16.mxu0 0
    %2158 = vmatpush1.bf16.msra.mxu0 %v2124
    %2159 = vmatprep.subr.bf16.mxu0 0
    %2160 = vmatpush1.bf16.msra.mxu0 %v2125
    %2161 = vmatprep.subr.bf16.mxu0 0
    %2162 = vmatpush1.bf16.msra.mxu0 %v2126
    %2163 = vmatprep.subr.bf16.mxu0 0
    %2164 = vmatpush1.bf16.msra.mxu0 %v2127
    %2165 = vmatprep.subr.bf16.mxu0 0
    %2166 = vmatpush1.bf16.msra.mxu0 %v2128
    %2167 = vmatprep.subr.bf16.mxu0 0
    %2168 = vmatpush1.bf16.msra.mxu0 %v2129
    %2169 = vmatprep.subr.bf16.mxu0 0
    %2170 = vmatpush1.bf16.msra.mxu0 %v2130
    %2171 = vmatprep.subr.bf16.mxu0 0
    %2172 = vmatpush1.bf16.msra.mxu0 %v2131
    %2173 = vmatprep.subr.bf16.mxu0 0
    %2174 = vmatpush1.bf16.msra.mxu0 %v2132
    %2175 = vmatprep.subr.bf16.mxu0 0
    %2176 = vmatpush1.bf16.msra.mxu0 %v2133
    %2177 = vmatprep.subr.bf16.mxu0 0
    %2178 = vmatpush1.bf16.msra.mxu0 %v2134
    %2179 = vmatprep.subr.bf16.mxu0 0
    %2180 = vmatpush1.bf16.msra.mxu0 %v2135
    %2181 = vmatprep.subr.bf16.mxu0 0
    %2182 = vmatpush1.bf16.msra.mxu0 %v2136
    %2183 = vmatprep.subr.bf16.mxu0 0
    %2184 = vmatpush1.bf16.msra.mxu0 %v2137
    %2185 = vmatprep.subr.bf16.mxu0 0
    %2186 = vmatpush1.bf16.msra.mxu0 %v2138
    %2187 = vmatprep.mubr.bf16.mxu0 %v2019
    %2188 = vmatmul.mubr.bf16.gmra.mrb[0].mxu0 %v2018
    %v2189 = vpop.f32.mrb[0].mxu0
    %v2190 = vadd.f32 %v2057, %v2189
    %v2191 = vpop.f32.mrb[0].mxu0
    %v2192 = vpop.f32.mrb[0].mxu0
    %v2193 = vpop.f32.mrb[0].mxu0
    %2194 = vdwg.mxu0
    %vm2195 = vcmask 74752
    %2196 = vst.msk [vmem:[#allocation2] sm:$0x3] %vm2195, %v2190
    // Predicated region
    $region22: #{student_forward.7} parent=1 // pred_check
      _
    $region23: #{student_forward.7} parent=1 // pred_check_branch
      %2198 = sbr.rel (0) target = $region25
    $region24: #{student_forward.7} parent=1 // pred_region
      %s2200 = ssub.s32 32, 32
      %2201 = vsyncadd [#allocation3], %s2200
      %s2203 = sshll.u32 [#allocation2], 4
      %s2204 = int_to_ptr.vmem [resolvable:$true] %s2203
      %2206 = dma.vmem_to_hbm [thread:$0]  %s2204, 32, %s5, [#allocation3]
    $region25: #{student_forward.7} parent=1 // pred_fallthru
      _
    // Predicated region
    $region26: #{student_forward.7} parent=1 // pred_check
      _
    $region27: #{student_forward.7} parent=1 // pred_check_branch
      %2208 = sbr.rel (0) target = $region29
    $region28: #{student_forward.7} parent=1 // pred_region
      %2209 = dma.done [#allocation3], 32
    $region29: #{student_forward.7} parent=1 // pred_fallthru
      _
    %2210 = vsyncpa [#allocation3], 1

</llo_original>
